<compile_context>
chip_gen: v7x
topology: tpu7x:2x2x1
jax: 0.10.0
libtpu: 0.0.40
codegen_flags: <defaults>
</compile_context>

<pallas_src>
import functools

import jax
import jax.numpy as jnp
import numpy as np
from jax.experimental import pallas as pl
from jax.experimental.pallas import tpu as pltpu

# W halo width.  8 (instead of 1) keeps every scratch store sublane-aligned; only halo
# columns _WPAD-1 and _WPAD+W are ever read by the 3x3 taps, the rest are padding.
_WPAD = 8


# ----------------------------------------------------------------------------
# Fused kernel: one batch element per grid step, everything in VMEM.
# ----------------------------------------------------------------------------
def _fused_cnn_kernel(*refs, H, W, chans, n_fc_hidden):
    # refs layout (inputs, then output, then scratch):
    #   x_ref                                   (1, H, W, Cin)
    #   [conv_w (9, cin, cout), conv_b (1, cout)] * n_conv
    #   [fc_w (din, dout),      fc_b (1, dout)]   * (n_fc_hidden + 1)
    #   o_ref                                   (1, 1, O)
    #   pad_ref                                 VMEM (H+2, W+2*_WPAD, Cmax) halo scratch
    n_conv = len(chans) - 1
    x_ref = refs[0]
    idx = 1
    conv_params = []
    for _ in range(n_conv):
        conv_params.append((refs[idx], refs[idx + 1]))
        idx += 2
    fc_params = []
    for _ in range(n_fc_hidden + 1):
        fc_params.append((refs[idx], refs[idx + 1]))
        idx += 2
    o_ref = refs[idx]
    pad_ref = refs[idx + 1]

    # Zero the halo buffer each step (cheap VPU work; keeps steps independent so the
    # batch grid axis can be scheduled fully in parallel across cores).
    pad_ref[...] = jnp.zeros_like(pad_ref)

    # Place the input tile in the interior of the halo buffer (aligned sublane offset).
    cin0 = chans[0]
    pad_ref[1:1 + H, _WPAD:_WPAD + W, :cin0] = x_ref[0]

    # --- conv stack: conv3x3(same) + bias + ReLU, all VMEM-resident ---
    h_flat = None
    for li in range(n_conv):
        cin, cout = chans[li], chans[li + 1]
        w_ref, b_ref = conv_params[li]
        xp = pad_ref[:, :, :cin]                       # (H+2, W+2*_WPAD, cin) value
        acc = jnp.zeros((H * W, cout), jnp.float32)
        for dy in range(3):                            # static 3x3 unroll -> 9 MXU matmuls
            for dx in range(3):
                patch = xp[dy:dy + H, _WPAD - 1 + dx:_WPAD - 1 + dx + W, :]
                acc += jnp.dot(patch.reshape(H * W, cin), w_ref[dy * 3 + dx],
                               preferred_element_type=jnp.float32)
        acc = jnp.maximum(acc + b_ref[...], 0.0)       # bias + ReLU
        if li + 1 < n_conv:
            # Intermediate activation stays in VMEM: write back into the halo interior.
            pad_ref[1:1 + H, _WPAD:_WPAD + W, :cout] = acc.reshape(H, W, cout)
        else:
            h_flat = acc                               # (H*W, C_last) feeds the head directly

    # --- head: global average pool -> fc1 -> fc2 -> ReLU -> output layer ---
    pooled = jnp.sum(h_flat, axis=0, keepdims=True) * (1.0 / (H * W))   # (1, C_last)
    f = pooled
    for (w_ref, b_ref) in fc_params[:-1]:              # fc_layers: Linear stack, no act between
        f = jnp.dot(f, w_ref[...], preferred_element_type=jnp.float32) + b_ref[...]
    f = jnp.maximum(f, 0.0)                            # single activation after fc_layers
    w_out, b_out = fc_params[-1]
    out = jnp.dot(f, w_out[...], preferred_element_type=jnp.float32) + b_out[...]
    o_ref[...] = out.reshape(1, 1, -1).astype(o_ref.dtype)


def _forward_pallas(x_nhwc, params):
    B, H, W, Cin = x_nhwc.shape
    conv_ws = [w for (w, _) in params["conv"]]
    conv_bs = [b for (_, b) in params["conv"]]
    fc_ws = [w for (w, _) in params["fc"]]
    fc_bs = [b for (_, b) in params["fc"]]

    chans = (int(Cin),) + tuple(int(w.shape[-1]) for w in conv_ws)
    cmax = max(chans)
    out_dim = int(fc_ws[-1].shape[-1])
    n_fc_hidden = len(fc_ws) - 1

    inputs = [x_nhwc.astype(jnp.float32)]
    in_specs = [pl.BlockSpec((1, H, W, Cin), lambda b: (b, 0, 0, 0))]
    for li, (w, bias) in enumerate(zip(conv_ws, conv_bs)):
        cin, cout = chans[li], chans[li + 1]
        inputs.append(w.reshape(9, cin, cout))                       # HWIO -> (9, Cin, Cout)
        in_specs.append(pl.BlockSpec((9, cin, cout), lambda b: (0, 0, 0)))
        inputs.append(bias.reshape(1, cout))
        in_specs.append(pl.BlockSpec((1, cout), lambda b: (0, 0)))
    for (w, bias) in zip(fc_ws, fc_bs):
        din, dout = int(w.shape[0]), int(w.shape[1])
        inputs.append(w)
        in_specs.append(pl.BlockSpec((din, dout), lambda b: (0, 0)))
        inputs.append(bias.reshape(1, dout))
        in_specs.append(pl.BlockSpec((1, dout), lambda b: (0, 0)))

    kernel = functools.partial(_fused_cnn_kernel, H=H, W=W, chans=chans,
                               n_fc_hidden=n_fc_hidden)
    out3 = pl.pallas_call(
        kernel,
        out_shape=jax.ShapeDtypeStruct((B, 1, out_dim), jnp.float32),
        grid_spec=pltpu.PrefetchScalarGridSpec(
            num_scalar_prefetch=0,
            grid=(B,),
            in_specs=in_specs,
            out_specs=pl.BlockSpec((1, 1, out_dim), lambda b: (b, 0, 0)),
            scratch_shapes=[pltpu.VMEM((H + 2, W + 2 * _WPAD, cmax), jnp.float32)],
        ),
        compiler_params=pltpu.CompilerParams(dimension_semantics=("parallel",)),
    )(*inputs)
    return out3.reshape(B, out_dim)


# ----------------------------------------------------------------------------
# Full network
# ----------------------------------------------------------------------------
def init_params(key, input_channels, conv_dims, fc_dims, output_dim):
    params = {"conv": [], "fc": []}
    cin = input_channels
    for cout in conv_dims:
        key, kw = jax.random.split(key)
        fan_in = 3 * 3 * cin
        w = jax.random.normal(kw, (3, 3, cin, cout), jnp.float32) / np.sqrt(fan_in)
        b = jnp.zeros((cout,), jnp.float32)
        params["conv"].append((w, b))
        cin = cout
    prev = conv_dims[-1]
    for hdim in list(fc_dims) + [output_dim]:
        key, kw = jax.random.split(key)
        w = jax.random.normal(kw, (prev, hdim), jnp.float32) / np.sqrt(prev)
        b = jnp.zeros((hdim,), jnp.float32)
        params["fc"].append((w, b))
        prev = hdim
    return params


@jax.jit
def cn_policy_forward(x_nchw, params):
    # Accepts NCHW like PyTorch; the fused kernel runs in NHWC.
    x_nhwc = jnp.transpose(x_nchw, (0, 2, 3, 1)).astype(jnp.float32)
    return _forward_pallas(x_nhwc, params)


def reference_forward(x_nchw, params):
    # Pure-JAX reference matching PyTorch semantics exactly.
    h = jnp.transpose(x_nchw, (0, 2, 3, 1)).astype(jnp.float32)
    for (w, b) in params["conv"]:
        h = jax.lax.conv_general_dilated(
            h, w, window_strides=(1, 1), padding="SAME",
            dimension_numbers=("NHWC", "HWIO", "NHWC"))
        h = jax.nn.relu(h + b)
    pooled = jnp.mean(h, axis=(1, 2))
    (w1, b1), (w2, b2), (w3, b3) = params["fc"]
    f = pooled @ w1 + b1
    f = f @ w2 + b2
    f = jax.nn.relu(f)
    return f @ w3 + b3


if __name__ == "__main__":
    # Small config consistent with the module: CNPolicyNetwork(input_channels=4, output_dim=6,
    # conv_dims=[8,16,32], fc_dims=[32,32]) with defaults activation='relu', dropout=0,
    # layer_norm=False.
    B, Cin, H, W = 2, 4, 16, 16
    conv_dims = [8, 16, 32]
    fc_dims = [32, 32]
    output_dim = 6

    key = jax.random.PRNGKey(0)
    key, kx = jax.random.split(key)
    x = jax.random.normal(kx, (B, Cin, H, W), jnp.float32)   # NCHW like PyTorch
    params = init_params(key, Cin, conv_dims, fc_dims, output_dim)

    out = cn_policy_forward(x, params)
    out = jax.block_until_ready(out)

    ref = reference_forward(x, params)
    np.testing.assert_allclose(np.asarray(out), np.asarray(ref), rtol=1e-3, atol=1e-3)
    assert out.shape == (B, output_dim)
    print("KERNEL_OK")
</pallas_src>

<mosaic_0001>
module attributes {stable_mosaic.version = 11 : i64} {
  func.func @_fused_cnn_kernel(%arg0: i32, %arg1: memref<1x16x16x4xf32, #tpu.memory_space<vmem>>, %arg2: memref<9x4x8xf32, #tpu.memory_space<vmem>>, %arg3: memref<1x8xf32, #tpu.memory_space<vmem>>, %arg4: memref<9x8x16xf32, #tpu.memory_space<vmem>>, %arg5: memref<1x16xf32, #tpu.memory_space<vmem>>, %arg6: memref<9x16x32xf32, #tpu.memory_space<vmem>>, %arg7: memref<1x32xf32, #tpu.memory_space<vmem>>, %arg8: memref<32x32xf32, #tpu.memory_space<vmem>>, %arg9: memref<1x32xf32, #tpu.memory_space<vmem>>, %arg10: memref<32x32xf32, #tpu.memory_space<vmem>>, %arg11: memref<1x32xf32, #tpu.memory_space<vmem>>, %arg12: memref<32x6xf32, #tpu.memory_space<vmem>>, %arg13: memref<1x6xf32, #tpu.memory_space<vmem>>, %arg14: memref<1x1x6xf32, #tpu.memory_space<vmem>>, %arg15: memref<18x32x32xf32, #tpu.memory_space<vmem>>) attributes {dimension_semantics = [#tpu.dimension_semantics<parallel>], iteration_bounds = array<i64: 2>, scalar_prefetch = 0 : i64, scratch_operands = 1 : i64, tpu.core_type = #tpu.core_type<tc>, window_params = [{transform_indices = @transform_0, window_bounds = array<i64: 1, 16, 16, 4>}, {pipeline_mode = #tpu.pipeline_mode<synchronous>, transform_indices = @transform_1, window_bounds = array<i64: 9, 4, 8>}, {pipeline_mode = #tpu.pipeline_mode<synchronous>, transform_indices = @transform_2, window_bounds = array<i64: 1, 8>}, {pipeline_mode = #tpu.pipeline_mode<synchronous>, transform_indices = @transform_3, window_bounds = array<i64: 9, 8, 16>}, {pipeline_mode = #tpu.pipeline_mode<synchronous>, transform_indices = @transform_4, window_bounds = array<i64: 1, 16>}, {pipeline_mode = #tpu.pipeline_mode<synchronous>, transform_indices = @transform_5, window_bounds = array<i64: 9, 16, 32>}, {pipeline_mode = #tpu.pipeline_mode<synchronous>, transform_indices = @transform_6, window_bounds = array<i64: 1, 32>}, {pipeline_mode = #tpu.pipeline_mode<synchronous>, transform_indices = @transform_7, window_bounds = array<i64: 32, 32>}, {pipeline_mode = #tpu.pipeline_mode<synchronous>, transform_indices = @transform_8, window_bounds = array<i64: 1, 32>}, {pipeline_mode = #tpu.pipeline_mode<synchronous>, transform_indices = @transform_9, window_bounds = array<i64: 32, 32>}, {pipeline_mode = #tpu.pipeline_mode<synchronous>, transform_indices = @transform_10, window_bounds = array<i64: 1, 32>}, {pipeline_mode = #tpu.pipeline_mode<synchronous>, transform_indices = @transform_11, window_bounds = array<i64: 32, 6>}, {pipeline_mode = #tpu.pipeline_mode<synchronous>, transform_indices = @transform_12, window_bounds = array<i64: 1, 6>}, {transform_indices = @transform_13, window_bounds = array<i64: 1, 1, 6>}]} {
    %cst = arith.constant 0.000000e+00 : f32
    %0 = vector.broadcast %cst : f32 to vector<18x32x32xf32>
    %c0 = arith.constant 0 : index
    %c0_0 = arith.constant 0 : index
    %c0_1 = arith.constant 0 : index
    %1 = vector.load %arg15[%c0, %c0_0, %c0_1] : memref<18x32x32xf32, #tpu.memory_space<vmem>>, vector<18x32x32xf32>
    tpu.vector_store %arg15[%c0, %c0_0, %c0_1], %0 {strides = array<i32>} : memref<18x32x32xf32, #tpu.memory_space<vmem>>, vector<18x32x32xf32>,
    %c0_2 = arith.constant 0 : index
    %c0_3 = arith.constant 0 : index
    %c0_4 = arith.constant 0 : index
    %c0_5 = arith.constant 0 : index
    %2 = vector.load %arg1[%c0_2, %c0_3, %c0_4, %c0_5] : memref<1x16x16x4xf32, #tpu.memory_space<vmem>>, vector<1x16x16x4xf32>
    %3 = vector.shape_cast %2 : vector<1x16x16x4xf32> to vector<16x16x4xf32>
    %c1 = arith.constant 1 : index
    %c8 = arith.constant 8 : index
    %c0_6 = arith.constant 0 : index
    %4 = vector.load %arg15[%c1, %c8, %c0_6] : memref<18x32x32xf32, #tpu.memory_space<vmem>>, vector<16x16x4xf32>
    tpu.vector_store %arg15[%c1, %c8, %c0_6], %3 {strides = array<i32>} : memref<18x32x32xf32, #tpu.memory_space<vmem>>, vector<16x16x4xf32>,
    %c0_7 = arith.constant 0 : index
    %c0_8 = arith.constant 0 : index
    %c0_9 = arith.constant 0 : index
    %5 = vector.load %arg15[%c0_7, %c0_8, %c0_9] : memref<18x32x32xf32, #tpu.memory_space<vmem>>, vector<18x32x4xf32>
    %cst_10 = arith.constant 0.000000e+00 : f32
    %6 = vector.broadcast %cst_10 : f32 to vector<256x8xf32>
    %7 = vector.extract_strided_slice %5 {offsets = [0, 7, 0], sizes = [16, 16, 4], strides = [1, 1, 1]} : vector<18x32x4xf32> to vector<16x16x4xf32>
    %8 = vector.shape_cast %7 : vector<16x16x4xf32> to vector<256x4xf32>
    %c0_11 = arith.constant 0 : index
    %c0_12 = arith.constant 0 : index
    %c0_13 = arith.constant 0 : index
    %9 = vector.load %arg2[%c0_11, %c0_12, %c0_13] : memref<9x4x8xf32, #tpu.memory_space<vmem>>, vector<1x4x8xf32>
    %10 = vector.shape_cast %9 : vector<1x4x8xf32> to vector<4x8xf32>
    %cst_14 = arith.constant dense<0.000000e+00> : vector<256x8xf32>
    %11 = tpu.matmul %8, %10, %cst_14 {dimension_numbers = #tpu.dot_dimension_numbers<[1], [0], [0], [1], [0, 0, 1, 1], [], []>} : vector<256x4xf32>, vector<4x8xf32>, vector<256x8xf32> -> vector<256x8xf32>
    %12 = arith.addf %6, %11 : vector<256x8xf32>
    %13 = vector.extract_strided_slice %5 {offsets = [0, 8, 0], sizes = [16, 16, 4], strides = [1, 1, 1]} : vector<18x32x4xf32> to vector<16x16x4xf32>
    %14 = vector.shape_cast %13 : vector<16x16x4xf32> to vector<256x4xf32>
    %c1_15 = arith.constant 1 : index
    %c0_16 = arith.constant 0 : index
    %c0_17 = arith.constant 0 : index
    %15 = vector.load %arg2[%c1_15, %c0_16, %c0_17] : memref<9x4x8xf32, #tpu.memory_space<vmem>>, vector<1x4x8xf32>
    %16 = vector.shape_cast %15 : vector<1x4x8xf32> to vector<4x8xf32>
    %cst_18 = arith.constant dense<0.000000e+00> : vector<256x8xf32>
    %17 = tpu.matmul %14, %16, %cst_18 {dimension_numbers = #tpu.dot_dimension_numbers<[1], [0], [0], [1], [0, 0, 1, 1], [], []>} : vector<256x4xf32>, vector<4x8xf32>, vector<256x8xf32> -> vector<256x8xf32>
    %18 = arith.addf %12, %17 : vector<256x8xf32>
    %19 = vector.extract_strided_slice %5 {offsets = [0, 9, 0], sizes = [16, 16, 4], strides = [1, 1, 1]} : vector<18x32x4xf32> to vector<16x16x4xf32>
    %20 = vector.shape_cast %19 : vector<16x16x4xf32> to vector<256x4xf32>
    %c2 = arith.constant 2 : index
    %c0_19 = arith.constant 0 : index
    %c0_20 = arith.constant 0 : index
    %21 = vector.load %arg2[%c2, %c0_19, %c0_20] : memref<9x4x8xf32, #tpu.memory_space<vmem>>, vector<1x4x8xf32>
    %22 = vector.shape_cast %21 : vector<1x4x8xf32> to vector<4x8xf32>
    %cst_21 = arith.constant dense<0.000000e+00> : vector<256x8xf32>
    %23 = tpu.matmul %20, %22, %cst_21 {dimension_numbers = #tpu.dot_dimension_numbers<[1], [0], [0], [1], [0, 0, 1, 1], [], []>} : vector<256x4xf32>, vector<4x8xf32>, vector<256x8xf32> -> vector<256x8xf32>
    %24 = arith.addf %18, %23 : vector<256x8xf32>
    %25 = vector.extract_strided_slice %5 {offsets = [1, 7, 0], sizes = [16, 16, 4], strides = [1, 1, 1]} : vector<18x32x4xf32> to vector<16x16x4xf32>
    %26 = vector.shape_cast %25 : vector<16x16x4xf32> to vector<256x4xf32>
    %c3 = arith.constant 3 : index
    %c0_22 = arith.constant 0 : index
    %c0_23 = arith.constant 0 : index
    %27 = vector.load %arg2[%c3, %c0_22, %c0_23] : memref<9x4x8xf32, #tpu.memory_space<vmem>>, vector<1x4x8xf32>
    %28 = vector.shape_cast %27 : vector<1x4x8xf32> to vector<4x8xf32>
    %cst_24 = arith.constant dense<0.000000e+00> : vector<256x8xf32>
    %29 = tpu.matmul %26, %28, %cst_24 {dimension_numbers = #tpu.dot_dimension_numbers<[1], [0], [0], [1], [0, 0, 1, 1], [], []>} : vector<256x4xf32>, vector<4x8xf32>, vector<256x8xf32> -> vector<256x8xf32>
    %30 = arith.addf %24, %29 : vector<256x8xf32>
    %31 = vector.extract_strided_slice %5 {offsets = [1, 8, 0], sizes = [16, 16, 4], strides = [1, 1, 1]} : vector<18x32x4xf32> to vector<16x16x4xf32>
    %32 = vector.shape_cast %31 : vector<16x16x4xf32> to vector<256x4xf32>
    %c4 = arith.constant 4 : index
    %c0_25 = arith.constant 0 : index
    %c0_26 = arith.constant 0 : index
    %33 = vector.load %arg2[%c4, %c0_25, %c0_26] : memref<9x4x8xf32, #tpu.memory_space<vmem>>, vector<1x4x8xf32>
    %34 = vector.shape_cast %33 : vector<1x4x8xf32> to vector<4x8xf32>
    %cst_27 = arith.constant dense<0.000000e+00> : vector<256x8xf32>
    %35 = tpu.matmul %32, %34, %cst_27 {dimension_numbers = #tpu.dot_dimension_numbers<[1], [0], [0], [1], [0, 0, 1, 1], [], []>} : vector<256x4xf32>, vector<4x8xf32>, vector<256x8xf32> -> vector<256x8xf32>
    %36 = arith.addf %30, %35 : vector<256x8xf32>
    %37 = vector.extract_strided_slice %5 {offsets = [1, 9, 0], sizes = [16, 16, 4], strides = [1, 1, 1]} : vector<18x32x4xf32> to vector<16x16x4xf32>
    %38 = vector.shape_cast %37 : vector<16x16x4xf32> to vector<256x4xf32>
    %c5 = arith.constant 5 : index
    %c0_28 = arith.constant 0 : index
    %c0_29 = arith.constant 0 : index
    %39 = vector.load %arg2[%c5, %c0_28, %c0_29] : memref<9x4x8xf32, #tpu.memory_space<vmem>>, vector<1x4x8xf32>
    %40 = vector.shape_cast %39 : vector<1x4x8xf32> to vector<4x8xf32>
    %cst_30 = arith.constant dense<0.000000e+00> : vector<256x8xf32>
    %41 = tpu.matmul %38, %40, %cst_30 {dimension_numbers = #tpu.dot_dimension_numbers<[1], [0], [0], [1], [0, 0, 1, 1], [], []>} : vector<256x4xf32>, vector<4x8xf32>, vector<256x8xf32> -> vector<256x8xf32>
    %42 = arith.addf %36, %41 : vector<256x8xf32>
    %43 = vector.extract_strided_slice %5 {offsets = [2, 7, 0], sizes = [16, 16, 4], strides = [1, 1, 1]} : vector<18x32x4xf32> to vector<16x16x4xf32>
    %44 = vector.shape_cast %43 : vector<16x16x4xf32> to vector<256x4xf32>
    %c6 = arith.constant 6 : index
    %c0_31 = arith.constant 0 : index
    %c0_32 = arith.constant 0 : index
    %45 = vector.load %arg2[%c6, %c0_31, %c0_32] : memref<9x4x8xf32, #tpu.memory_space<vmem>>, vector<1x4x8xf32>
    %46 = vector.shape_cast %45 : vector<1x4x8xf32> to vector<4x8xf32>
    %cst_33 = arith.constant dense<0.000000e+00> : vector<256x8xf32>
    %47 = tpu.matmul %44, %46, %cst_33 {dimension_numbers = #tpu.dot_dimension_numbers<[1], [0], [0], [1], [0, 0, 1, 1], [], []>} : vector<256x4xf32>, vector<4x8xf32>, vector<256x8xf32> -> vector<256x8xf32>
    %48 = arith.addf %42, %47 : vector<256x8xf32>
    %49 = vector.extract_strided_slice %5 {offsets = [2, 8, 0], sizes = [16, 16, 4], strides = [1, 1, 1]} : vector<18x32x4xf32> to vector<16x16x4xf32>
    %50 = vector.shape_cast %49 : vector<16x16x4xf32> to vector<256x4xf32>
    %c7 = arith.constant 7 : index
    %c0_34 = arith.constant 0 : index
    %c0_35 = arith.constant 0 : index
    %51 = vector.load %arg2[%c7, %c0_34, %c0_35] : memref<9x4x8xf32, #tpu.memory_space<vmem>>, vector<1x4x8xf32>
    %52 = vector.shape_cast %51 : vector<1x4x8xf32> to vector<4x8xf32>
    %cst_36 = arith.constant dense<0.000000e+00> : vector<256x8xf32>
    %53 = tpu.matmul %50, %52, %cst_36 {dimension_numbers = #tpu.dot_dimension_numbers<[1], [0], [0], [1], [0, 0, 1, 1], [], []>} : vector<256x4xf32>, vector<4x8xf32>, vector<256x8xf32> -> vector<256x8xf32>
    %54 = arith.addf %48, %53 : vector<256x8xf32>
    %55 = vector.extract_strided_slice %5 {offsets = [2, 9, 0], sizes = [16, 16, 4], strides = [1, 1, 1]} : vector<18x32x4xf32> to vector<16x16x4xf32>
    %56 = vector.shape_cast %55 : vector<16x16x4xf32> to vector<256x4xf32>
    %c8_37 = arith.constant 8 : index
    %c0_38 = arith.constant 0 : index
    %c0_39 = arith.constant 0 : index
    %57 = vector.load %arg2[%c8_37, %c0_38, %c0_39] : memref<9x4x8xf32, #tpu.memory_space<vmem>>, vector<1x4x8xf32>
    %58 = vector.shape_cast %57 : vector<1x4x8xf32> to vector<4x8xf32>
    %cst_40 = arith.constant dense<0.000000e+00> : vector<256x8xf32>
    %59 = tpu.matmul %56, %58, %cst_40 {dimension_numbers = #tpu.dot_dimension_numbers<[1], [0], [0], [1], [0, 0, 1, 1], [], []>} : vector<256x4xf32>, vector<4x8xf32>, vector<256x8xf32> -> vector<256x8xf32>
    %60 = arith.addf %54, %59 : vector<256x8xf32>
    %c0_41 = arith.constant 0 : index
    %c0_42 = arith.constant 0 : index
    %61 = vector.load %arg3[%c0_41, %c0_42] : memref<1x8xf32, #tpu.memory_space<vmem>>, vector<1x8xf32>
    %62 = vector.broadcast %61 : vector<1x8xf32> to vector<256x8xf32>
    %63 = arith.addf %60, %62 : vector<256x8xf32>
    %cst_43 = arith.constant 0.000000e+00 : f32
    %64 = vector.broadcast %cst_43 : f32 to vector<256x8xf32>
    %65 = arith.maximumf %63, %64 : vector<256x8xf32>
    %66 = vector.shape_cast %65 : vector<256x8xf32> to vector<16x16x8xf32>
    %c1_44 = arith.constant 1 : index
    %c8_45 = arith.constant 8 : index
    %c0_46 = arith.constant 0 : index
    %67 = vector.load %arg15[%c1_44, %c8_45, %c0_46] : memref<18x32x32xf32, #tpu.memory_space<vmem>>, vector<16x16x8xf32>
    tpu.vector_store %arg15[%c1_44, %c8_45, %c0_46], %66 {strides = array<i32>} : memref<18x32x32xf32, #tpu.memory_space<vmem>>, vector<16x16x8xf32>,
    %c0_47 = arith.constant 0 : index
    %c0_48 = arith.constant 0 : index
    %c0_49 = arith.constant 0 : index
    %68 = vector.load %arg15[%c0_47, %c0_48, %c0_49] : memref<18x32x32xf32, #tpu.memory_space<vmem>>, vector<18x32x8xf32>
    %cst_50 = arith.constant 0.000000e+00 : f32
    %69 = vector.broadcast %cst_50 : f32 to vector<256x16xf32>
    %70 = vector.extract_strided_slice %68 {offsets = [0, 7, 0], sizes = [16, 16, 8], strides = [1, 1, 1]} : vector<18x32x8xf32> to vector<16x16x8xf32>
    %71 = vector.shape_cast %70 : vector<16x16x8xf32> to vector<256x8xf32>
    %c0_51 = arith.constant 0 : index
    %c0_52 = arith.constant 0 : index
    %c0_53 = arith.constant 0 : index
    %72 = vector.load %arg4[%c0_51, %c0_52, %c0_53] : memref<9x8x16xf32, #tpu.memory_space<vmem>>, vector<1x8x16xf32>
    %73 = vector.shape_cast %72 : vector<1x8x16xf32> to vector<8x16xf32>
    %cst_54 = arith.constant dense<0.000000e+00> : vector<256x16xf32>
    %74 = tpu.matmul %71, %73, %cst_54 {dimension_numbers = #tpu.dot_dimension_numbers<[1], [0], [0], [1], [0, 0, 1, 1], [], []>} : vector<256x8xf32>, vector<8x16xf32>, vector<256x16xf32> -> vector<256x16xf32>
    %75 = arith.addf %69, %74 : vector<256x16xf32>
    %76 = vector.extract_strided_slice %68 {offsets = [0, 8, 0], sizes = [16, 16, 8], strides = [1, 1, 1]} : vector<18x32x8xf32> to vector<16x16x8xf32>
    %77 = vector.shape_cast %76 : vector<16x16x8xf32> to vector<256x8xf32>
    %c1_55 = arith.constant 1 : index
    %c0_56 = arith.constant 0 : index
    %c0_57 = arith.constant 0 : index
    %78 = vector.load %arg4[%c1_55, %c0_56, %c0_57] : memref<9x8x16xf32, #tpu.memory_space<vmem>>, vector<1x8x16xf32>
    %79 = vector.shape_cast %78 : vector<1x8x16xf32> to vector<8x16xf32>
    %cst_58 = arith.constant dense<0.000000e+00> : vector<256x16xf32>
    %80 = tpu.matmul %77, %79, %cst_58 {dimension_numbers = #tpu.dot_dimension_numbers<[1], [0], [0], [1], [0, 0, 1, 1], [], []>} : vector<256x8xf32>, vector<8x16xf32>, vector<256x16xf32> -> vector<256x16xf32>
    %81 = arith.addf %75, %80 : vector<256x16xf32>
    %82 = vector.extract_strided_slice %68 {offsets = [0, 9, 0], sizes = [16, 16, 8], strides = [1, 1, 1]} : vector<18x32x8xf32> to vector<16x16x8xf32>
    %83 = vector.shape_cast %82 : vector<16x16x8xf32> to vector<256x8xf32>
    %c2_59 = arith.constant 2 : index
    %c0_60 = arith.constant 0 : index
    %c0_61 = arith.constant 0 : index
    %84 = vector.load %arg4[%c2_59, %c0_60, %c0_61] : memref<9x8x16xf32, #tpu.memory_space<vmem>>, vector<1x8x16xf32>
    %85 = vector.shape_cast %84 : vector<1x8x16xf32> to vector<8x16xf32>
    %cst_62 = arith.constant dense<0.000000e+00> : vector<256x16xf32>
    %86 = tpu.matmul %83, %85, %cst_62 {dimension_numbers = #tpu.dot_dimension_numbers<[1], [0], [0], [1], [0, 0, 1, 1], [], []>} : vector<256x8xf32>, vector<8x16xf32>, vector<256x16xf32> -> vector<256x16xf32>
    %87 = arith.addf %81, %86 : vector<256x16xf32>
    %88 = vector.extract_strided_slice %68 {offsets = [1, 7, 0], sizes = [16, 16, 8], strides = [1, 1, 1]} : vector<18x32x8xf32> to vector<16x16x8xf32>
    %89 = vector.shape_cast %88 : vector<16x16x8xf32> to vector<256x8xf32>
    %c3_63 = arith.constant 3 : index
    %c0_64 = arith.constant 0 : index
    %c0_65 = arith.constant 0 : index
    %90 = vector.load %arg4[%c3_63, %c0_64, %c0_65] : memref<9x8x16xf32, #tpu.memory_space<vmem>>, vector<1x8x16xf32>
    %91 = vector.shape_cast %90 : vector<1x8x16xf32> to vector<8x16xf32>
    %cst_66 = arith.constant dense<0.000000e+00> : vector<256x16xf32>
    %92 = tpu.matmul %89, %91, %cst_66 {dimension_numbers = #tpu.dot_dimension_numbers<[1], [0], [0], [1], [0, 0, 1, 1], [], []>} : vector<256x8xf32>, vector<8x16xf32>, vector<256x16xf32> -> vector<256x16xf32>
    %93 = arith.addf %87, %92 : vector<256x16xf32>
    %94 = vector.extract_strided_slice %68 {offsets = [1, 8, 0], sizes = [16, 16, 8], strides = [1, 1, 1]} : vector<18x32x8xf32> to vector<16x16x8xf32>
    %95 = vector.shape_cast %94 : vector<16x16x8xf32> to vector<256x8xf32>
    %c4_67 = arith.constant 4 : index
    %c0_68 = arith.constant 0 : index
    %c0_69 = arith.constant 0 : index
    %96 = vector.load %arg4[%c4_67, %c0_68, %c0_69] : memref<9x8x16xf32, #tpu.memory_space<vmem>>, vector<1x8x16xf32>
    %97 = vector.shape_cast %96 : vector<1x8x16xf32> to vector<8x16xf32>
    %cst_70 = arith.constant dense<0.000000e+00> : vector<256x16xf32>
    %98 = tpu.matmul %95, %97, %cst_70 {dimension_numbers = #tpu.dot_dimension_numbers<[1], [0], [0], [1], [0, 0, 1, 1], [], []>} : vector<256x8xf32>, vector<8x16xf32>, vector<256x16xf32> -> vector<256x16xf32>
    %99 = arith.addf %93, %98 : vector<256x16xf32>
    %100 = vector.extract_strided_slice %68 {offsets = [1, 9, 0], sizes = [16, 16, 8], strides = [1, 1, 1]} : vector<18x32x8xf32> to vector<16x16x8xf32>
    %101 = vector.shape_cast %100 : vector<16x16x8xf32> to vector<256x8xf32>
    %c5_71 = arith.constant 5 : index
    %c0_72 = arith.constant 0 : index
    %c0_73 = arith.constant 0 : index
    %102 = vector.load %arg4[%c5_71, %c0_72, %c0_73] : memref<9x8x16xf32, #tpu.memory_space<vmem>>, vector<1x8x16xf32>
    %103 = vector.shape_cast %102 : vector<1x8x16xf32> to vector<8x16xf32>
    %cst_74 = arith.constant dense<0.000000e+00> : vector<256x16xf32>
    %104 = tpu.matmul %101, %103, %cst_74 {dimension_numbers = #tpu.dot_dimension_numbers<[1], [0], [0], [1], [0, 0, 1, 1], [], []>} : vector<256x8xf32>, vector<8x16xf32>, vector<256x16xf32> -> vector<256x16xf32>
    %105 = arith.addf %99, %104 : vector<256x16xf32>
    %106 = vector.extract_strided_slice %68 {offsets = [2, 7, 0], sizes = [16, 16, 8], strides = [1, 1, 1]} : vector<18x32x8xf32> to vector<16x16x8xf32>
    %107 = vector.shape_cast %106 : vector<16x16x8xf32> to vector<256x8xf32>
    %c6_75 = arith.constant 6 : index
    %c0_76 = arith.constant 0 : index
    %c0_77 = arith.constant 0 : index
    %108 = vector.load %arg4[%c6_75, %c0_76, %c0_77] : memref<9x8x16xf32, #tpu.memory_space<vmem>>, vector<1x8x16xf32>
    %109 = vector.shape_cast %108 : vector<1x8x16xf32> to vector<8x16xf32>
    %cst_78 = arith.constant dense<0.000000e+00> : vector<256x16xf32>
    %110 = tpu.matmul %107, %109, %cst_78 {dimension_numbers = #tpu.dot_dimension_numbers<[1], [0], [0], [1], [0, 0, 1, 1], [], []>} : vector<256x8xf32>, vector<8x16xf32>, vector<256x16xf32> -> vector<256x16xf32>
    %111 = arith.addf %105, %110 : vector<256x16xf32>
    %112 = vector.extract_strided_slice %68 {offsets = [2, 8, 0], sizes = [16, 16, 8], strides = [1, 1, 1]} : vector<18x32x8xf32> to vector<16x16x8xf32>
    %113 = vector.shape_cast %112 : vector<16x16x8xf32> to vector<256x8xf32>
    %c7_79 = arith.constant 7 : index
    %c0_80 = arith.constant 0 : index
    %c0_81 = arith.constant 0 : index
    %114 = vector.load %arg4[%c7_79, %c0_80, %c0_81] : memref<9x8x16xf32, #tpu.memory_space<vmem>>, vector<1x8x16xf32>
    %115 = vector.shape_cast %114 : vector<1x8x16xf32> to vector<8x16xf32>
    %cst_82 = arith.constant dense<0.000000e+00> : vector<256x16xf32>
    %116 = tpu.matmul %113, %115, %cst_82 {dimension_numbers = #tpu.dot_dimension_numbers<[1], [0], [0], [1], [0, 0, 1, 1], [], []>} : vector<256x8xf32>, vector<8x16xf32>, vector<256x16xf32> -> vector<256x16xf32>
    %117 = arith.addf %111, %116 : vector<256x16xf32>
    %118 = vector.extract_strided_slice %68 {offsets = [2, 9, 0], sizes = [16, 16, 8], strides = [1, 1, 1]} : vector<18x32x8xf32> to vector<16x16x8xf32>
    %119 = vector.shape_cast %118 : vector<16x16x8xf32> to vector<256x8xf32>
    %c8_83 = arith.constant 8 : index
    %c0_84 = arith.constant 0 : index
    %c0_85 = arith.constant 0 : index
    %120 = vector.load %arg4[%c8_83, %c0_84, %c0_85] : memref<9x8x16xf32, #tpu.memory_space<vmem>>, vector<1x8x16xf32>
    %121 = vector.shape_cast %120 : vector<1x8x16xf32> to vector<8x16xf32>
    %cst_86 = arith.constant dense<0.000000e+00> : vector<256x16xf32>
    %122 = tpu.matmul %119, %121, %cst_86 {dimension_numbers = #tpu.dot_dimension_numbers<[1], [0], [0], [1], [0, 0, 1, 1], [], []>} : vector<256x8xf32>, vector<8x16xf32>, vector<256x16xf32> -> vector<256x16xf32>
    %123 = arith.addf %117, %122 : vector<256x16xf32>
    %c0_87 = arith.constant 0 : index
    %c0_88 = arith.constant 0 : index
    %124 = vector.load %arg5[%c0_87, %c0_88] : memref<1x16xf32, #tpu.memory_space<vmem>>, vector<1x16xf32>
    %125 = vector.broadcast %124 : vector<1x16xf32> to vector<256x16xf32>
    %126 = arith.addf %123, %125 : vector<256x16xf32>
    %cst_89 = arith.constant 0.000000e+00 : f32
    %127 = vector.broadcast %cst_89 : f32 to vector<256x16xf32>
    %128 = arith.maximumf %126, %127 : vector<256x16xf32>
    %129 = vector.shape_cast %128 : vector<256x16xf32> to vector<16x16x16xf32>
    %c1_90 = arith.constant 1 : index
    %c8_91 = arith.constant 8 : index
    %c0_92 = arith.constant 0 : index
    %130 = vector.load %arg15[%c1_90, %c8_91, %c0_92] : memref<18x32x32xf32, #tpu.memory_space<vmem>>, vector<16x16x16xf32>
    tpu.vector_store %arg15[%c1_90, %c8_91, %c0_92], %129 {strides = array<i32>} : memref<18x32x32xf32, #tpu.memory_space<vmem>>, vector<16x16x16xf32>,
    %c0_93 = arith.constant 0 : index
    %c0_94 = arith.constant 0 : index
    %c0_95 = arith.constant 0 : index
    %131 = vector.load %arg15[%c0_93, %c0_94, %c0_95] : memref<18x32x32xf32, #tpu.memory_space<vmem>>, vector<18x32x16xf32>
    %cst_96 = arith.constant 0.000000e+00 : f32
    %132 = vector.broadcast %cst_96 : f32 to vector<256x32xf32>
    %133 = vector.extract_strided_slice %131 {offsets = [0, 7, 0], sizes = [16, 16, 16], strides = [1, 1, 1]} : vector<18x32x16xf32> to vector<16x16x16xf32>
    %134 = vector.shape_cast %133 : vector<16x16x16xf32> to vector<256x16xf32>
    %c0_97 = arith.constant 0 : index
    %c0_98 = arith.constant 0 : index
    %c0_99 = arith.constant 0 : index
    %135 = vector.load %arg6[%c0_97, %c0_98, %c0_99] : memref<9x16x32xf32, #tpu.memory_space<vmem>>, vector<1x16x32xf32>
    %136 = vector.shape_cast %135 : vector<1x16x32xf32> to vector<16x32xf32>
    %cst_100 = arith.constant dense<0.000000e+00> : vector<256x32xf32>
    %137 = tpu.matmul %134, %136, %cst_100 {dimension_numbers = #tpu.dot_dimension_numbers<[1], [0], [0], [1], [0, 0, 1, 1], [], []>} : vector<256x16xf32>, vector<16x32xf32>, vector<256x32xf32> -> vector<256x32xf32>
    %138 = arith.addf %132, %137 : vector<256x32xf32>
    %139 = vector.extract_strided_slice %131 {offsets = [0, 8, 0], sizes = [16, 16, 16], strides = [1, 1, 1]} : vector<18x32x16xf32> to vector<16x16x16xf32>
    %140 = vector.shape_cast %139 : vector<16x16x16xf32> to vector<256x16xf32>
    %c1_101 = arith.constant 1 : index
    %c0_102 = arith.constant 0 : index
    %c0_103 = arith.constant 0 : index
    %141 = vector.load %arg6[%c1_101, %c0_102, %c0_103] : memref<9x16x32xf32, #tpu.memory_space<vmem>>, vector<1x16x32xf32>
    %142 = vector.shape_cast %141 : vector<1x16x32xf32> to vector<16x32xf32>
    %cst_104 = arith.constant dense<0.000000e+00> : vector<256x32xf32>
    %143 = tpu.matmul %140, %142, %cst_104 {dimension_numbers = #tpu.dot_dimension_numbers<[1], [0], [0], [1], [0, 0, 1, 1], [], []>} : vector<256x16xf32>, vector<16x32xf32>, vector<256x32xf32> -> vector<256x32xf32>
    %144 = arith.addf %138, %143 : vector<256x32xf32>
    %145 = vector.extract_strided_slice %131 {offsets = [0, 9, 0], sizes = [16, 16, 16], strides = [1, 1, 1]} : vector<18x32x16xf32> to vector<16x16x16xf32>
    %146 = vector.shape_cast %145 : vector<16x16x16xf32> to vector<256x16xf32>
    %c2_105 = arith.constant 2 : index
    %c0_106 = arith.constant 0 : index
    %c0_107 = arith.constant 0 : index
    %147 = vector.load %arg6[%c2_105, %c0_106, %c0_107] : memref<9x16x32xf32, #tpu.memory_space<vmem>>, vector<1x16x32xf32>
    %148 = vector.shape_cast %147 : vector<1x16x32xf32> to vector<16x32xf32>
    %cst_108 = arith.constant dense<0.000000e+00> : vector<256x32xf32>
    %149 = tpu.matmul %146, %148, %cst_108 {dimension_numbers = #tpu.dot_dimension_numbers<[1], [0], [0], [1], [0, 0, 1, 1], [], []>} : vector<256x16xf32>, vector<16x32xf32>, vector<256x32xf32> -> vector<256x32xf32>
    %150 = arith.addf %144, %149 : vector<256x32xf32>
    %151 = vector.extract_strided_slice %131 {offsets = [1, 7, 0], sizes = [16, 16, 16], strides = [1, 1, 1]} : vector<18x32x16xf32> to vector<16x16x16xf32>
    %152 = vector.shape_cast %151 : vector<16x16x16xf32> to vector<256x16xf32>
    %c3_109 = arith.constant 3 : index
    %c0_110 = arith.constant 0 : index
    %c0_111 = arith.constant 0 : index
    %153 = vector.load %arg6[%c3_109, %c0_110, %c0_111] : memref<9x16x32xf32, #tpu.memory_space<vmem>>, vector<1x16x32xf32>
    %154 = vector.shape_cast %153 : vector<1x16x32xf32> to vector<16x32xf32>
    %cst_112 = arith.constant dense<0.000000e+00> : vector<256x32xf32>
    %155 = tpu.matmul %152, %154, %cst_112 {dimension_numbers = #tpu.dot_dimension_numbers<[1], [0], [0], [1], [0, 0, 1, 1], [], []>} : vector<256x16xf32>, vector<16x32xf32>, vector<256x32xf32> -> vector<256x32xf32>
    %156 = arith.addf %150, %155 : vector<256x32xf32>
    %157 = vector.extract_strided_slice %131 {offsets = [1, 8, 0], sizes = [16, 16, 16], strides = [1, 1, 1]} : vector<18x32x16xf32> to vector<16x16x16xf32>
    %158 = vector.shape_cast %157 : vector<16x16x16xf32> to vector<256x16xf32>
    %c4_113 = arith.constant 4 : index
    %c0_114 = arith.constant 0 : index
    %c0_115 = arith.constant 0 : index
    %159 = vector.load %arg6[%c4_113, %c0_114, %c0_115] : memref<9x16x32xf32, #tpu.memory_space<vmem>>, vector<1x16x32xf32>
    %160 = vector.shape_cast %159 : vector<1x16x32xf32> to vector<16x32xf32>
    %cst_116 = arith.constant dense<0.000000e+00> : vector<256x32xf32>
    %161 = tpu.matmul %158, %160, %cst_116 {dimension_numbers = #tpu.dot_dimension_numbers<[1], [0], [0], [1], [0, 0, 1, 1], [], []>} : vector<256x16xf32>, vector<16x32xf32>, vector<256x32xf32> -> vector<256x32xf32>
    %162 = arith.addf %156, %161 : vector<256x32xf32>
    %163 = vector.extract_strided_slice %131 {offsets = [1, 9, 0], sizes = [16, 16, 16], strides = [1, 1, 1]} : vector<18x32x16xf32> to vector<16x16x16xf32>
    %164 = vector.shape_cast %163 : vector<16x16x16xf32> to vector<256x16xf32>
    %c5_117 = arith.constant 5 : index
    %c0_118 = arith.constant 0 : index
    %c0_119 = arith.constant 0 : index
    %165 = vector.load %arg6[%c5_117, %c0_118, %c0_119] : memref<9x16x32xf32, #tpu.memory_space<vmem>>, vector<1x16x32xf32>
    %166 = vector.shape_cast %165 : vector<1x16x32xf32> to vector<16x32xf32>
    %cst_120 = arith.constant dense<0.000000e+00> : vector<256x32xf32>
    %167 = tpu.matmul %164, %166, %cst_120 {dimension_numbers = #tpu.dot_dimension_numbers<[1], [0], [0], [1], [0, 0, 1, 1], [], []>} : vector<256x16xf32>, vector<16x32xf32>, vector<256x32xf32> -> vector<256x32xf32>
    %168 = arith.addf %162, %167 : vector<256x32xf32>
    %169 = vector.extract_strided_slice %131 {offsets = [2, 7, 0], sizes = [16, 16, 16], strides = [1, 1, 1]} : vector<18x32x16xf32> to vector<16x16x16xf32>
    %170 = vector.shape_cast %169 : vector<16x16x16xf32> to vector<256x16xf32>
    %c6_121 = arith.constant 6 : index
    %c0_122 = arith.constant 0 : index
    %c0_123 = arith.constant 0 : index
    %171 = vector.load %arg6[%c6_121, %c0_122, %c0_123] : memref<9x16x32xf32, #tpu.memory_space<vmem>>, vector<1x16x32xf32>
    %172 = vector.shape_cast %171 : vector<1x16x32xf32> to vector<16x32xf32>
    %cst_124 = arith.constant dense<0.000000e+00> : vector<256x32xf32>
    %173 = tpu.matmul %170, %172, %cst_124 {dimension_numbers = #tpu.dot_dimension_numbers<[1], [0], [0], [1], [0, 0, 1, 1], [], []>} : vector<256x16xf32>, vector<16x32xf32>, vector<256x32xf32> -> vector<256x32xf32>
    %174 = arith.addf %168, %173 : vector<256x32xf32>
    %175 = vector.extract_strided_slice %131 {offsets = [2, 8, 0], sizes = [16, 16, 16], strides = [1, 1, 1]} : vector<18x32x16xf32> to vector<16x16x16xf32>
    %176 = vector.shape_cast %175 : vector<16x16x16xf32> to vector<256x16xf32>
    %c7_125 = arith.constant 7 : index
    %c0_126 = arith.constant 0 : index
    %c0_127 = arith.constant 0 : index
    %177 = vector.load %arg6[%c7_125, %c0_126, %c0_127] : memref<9x16x32xf32, #tpu.memory_space<vmem>>, vector<1x16x32xf32>
    %178 = vector.shape_cast %177 : vector<1x16x32xf32> to vector<16x32xf32>
    %cst_128 = arith.constant dense<0.000000e+00> : vector<256x32xf32>
    %179 = tpu.matmul %176, %178, %cst_128 {dimension_numbers = #tpu.dot_dimension_numbers<[1], [0], [0], [1], [0, 0, 1, 1], [], []>} : vector<256x16xf32>, vector<16x32xf32>, vector<256x32xf32> -> vector<256x32xf32>
    %180 = arith.addf %174, %179 : vector<256x32xf32>
    %181 = vector.extract_strided_slice %131 {offsets = [2, 9, 0], sizes = [16, 16, 16], strides = [1, 1, 1]} : vector<18x32x16xf32> to vector<16x16x16xf32>
    %182 = vector.shape_cast %181 : vector<16x16x16xf32> to vector<256x16xf32>
    %c8_129 = arith.constant 8 : index
    %c0_130 = arith.constant 0 : index
    %c0_131 = arith.constant 0 : index
    %183 = vector.load %arg6[%c8_129, %c0_130, %c0_131] : memref<9x16x32xf32, #tpu.memory_space<vmem>>, vector<1x16x32xf32>
    %184 = vector.shape_cast %183 : vector<1x16x32xf32> to vector<16x32xf32>
    %cst_132 = arith.constant dense<0.000000e+00> : vector<256x32xf32>
    %185 = tpu.matmul %182, %184, %cst_132 {dimension_numbers = #tpu.dot_dimension_numbers<[1], [0], [0], [1], [0, 0, 1, 1], [], []>} : vector<256x16xf32>, vector<16x32xf32>, vector<256x32xf32> -> vector<256x32xf32>
    %186 = arith.addf %180, %185 : vector<256x32xf32>
    %c0_133 = arith.constant 0 : index
    %c0_134 = arith.constant 0 : index
    %187 = vector.load %arg7[%c0_133, %c0_134] : memref<1x32xf32, #tpu.memory_space<vmem>>, vector<1x32xf32>
    %188 = vector.broadcast %187 : vector<1x32xf32> to vector<256x32xf32>
    %189 = arith.addf %186, %188 : vector<256x32xf32>
    %cst_135 = arith.constant 0.000000e+00 : f32
    %190 = vector.broadcast %cst_135 : f32 to vector<256x32xf32>
    %191 = arith.maximumf %189, %190 : vector<256x32xf32>
    %cst_136 = arith.constant dense<0.000000e+00> : vector<32xf32>
    %192 = vector.multi_reduction <add>, %191, %cst_136 [0] : vector<256x32xf32> to vector<32xf32>
    %193 = vector.shape_cast %192 : vector<32xf32> to vector<1x32xf32>
    %cst_137 = arith.constant 3.906250e-03 : f32
    %194 = vector.broadcast %cst_137 : f32 to vector<1x32xf32>
    %195 = arith.mulf %193, %194 : vector<1x32xf32>
    %c0_138 = arith.constant 0 : index
    %c0_139 = arith.constant 0 : index
    %196 = vector.load %arg8[%c0_138, %c0_139] : memref<32x32xf32, #tpu.memory_space<vmem>>, vector<32x32xf32>
    %cst_140 = arith.constant dense<0.000000e+00> : vector<1x32xf32>
    %197 = tpu.matmul %195, %196, %cst_140 {dimension_numbers = #tpu.dot_dimension_numbers<[1], [0], [0], [1], [0, 0, 1, 1], [], []>} : vector<1x32xf32>, vector<32x32xf32>, vector<1x32xf32> -> vector<1x32xf32>
    %c0_141 = arith.constant 0 : index
    %c0_142 = arith.constant 0 : index
    %198 = vector.load %arg9[%c0_141, %c0_142] : memref<1x32xf32, #tpu.memory_space<vmem>>, vector<1x32xf32>
    %199 = arith.addf %197, %198 : vector<1x32xf32>
    %c0_143 = arith.constant 0 : index
    %c0_144 = arith.constant 0 : index
    %200 = vector.load %arg10[%c0_143, %c0_144] : memref<32x32xf32, #tpu.memory_space<vmem>>, vector<32x32xf32>
    %cst_145 = arith.constant dense<0.000000e+00> : vector<1x32xf32>
    %201 = tpu.matmul %199, %200, %cst_145 {dimension_numbers = #tpu.dot_dimension_numbers<[1], [0], [0], [1], [0, 0, 1, 1], [], []>} : vector<1x32xf32>, vector<32x32xf32>, vector<1x32xf32> -> vector<1x32xf32>
    %c0_146 = arith.constant 0 : index
    %c0_147 = arith.constant 0 : index
    %202 = vector.load %arg11[%c0_146, %c0_147] : memref<1x32xf32, #tpu.memory_space<vmem>>, vector<1x32xf32>
    %203 = arith.addf %201, %202 : vector<1x32xf32>
    %cst_148 = arith.constant 0.000000e+00 : f32
    %204 = vector.broadcast %cst_148 : f32 to vector<1x32xf32>
    %205 = arith.maximumf %203, %204 : vector<1x32xf32>
    %c0_149 = arith.constant 0 : index
    %c0_150 = arith.constant 0 : index
    %206 = vector.load %arg12[%c0_149, %c0_150] : memref<32x6xf32, #tpu.memory_space<vmem>>, vector<32x6xf32>
    %cst_151 = arith.constant dense<0.000000e+00> : vector<1x6xf32>
    %207 = tpu.matmul %205, %206, %cst_151 {dimension_numbers = #tpu.dot_dimension_numbers<[1], [0], [0], [1], [0, 0, 1, 1], [], []>} : vector<1x32xf32>, vector<32x6xf32>, vector<1x6xf32> -> vector<1x6xf32>
    %c0_152 = arith.constant 0 : index
    %c0_153 = arith.constant 0 : index
    %208 = vector.load %arg13[%c0_152, %c0_153] : memref<1x6xf32, #tpu.memory_space<vmem>>, vector<1x6xf32>
    %209 = arith.addf %207, %208 : vector<1x6xf32>
    %210 = vector.shape_cast %209 : vector<1x6xf32> to vector<1x1x6xf32>
    %c0_154 = arith.constant 0 : index
    %c0_155 = arith.constant 0 : index
    %c0_156 = arith.constant 0 : index
    %211 = vector.load %arg14[%c0_154, %c0_155, %c0_156] : memref<1x1x6xf32, #tpu.memory_space<vmem>>, vector<1x1x6xf32>
    tpu.vector_store %arg14[%c0_154, %c0_155, %c0_156], %210 {strides = array<i32>} : memref<1x1x6xf32, #tpu.memory_space<vmem>>, vector<1x1x6xf32>,
    return
  }
  func.func @transform_0(%arg0: i32) -> (i32, i32, i32, i32) {
    %c0_i32 = arith.constant 0 : i32
    %c0_i32_0 = arith.constant 0 : i32
    %c0_i32_1 = arith.constant 0 : i32
    %c0_i32_2 = arith.constant 0 : i32
    return %arg0, %c0_i32, %c0_i32_0, %c0_i32_1 : i32, i32, i32, i32
  }
  func.func @transform_1(%arg0: i32) -> (i32, i32, i32) {
    %c0_i32 = arith.constant 0 : i32
    %c0_i32_0 = arith.constant 0 : i32
    %c0_i32_1 = arith.constant 0 : i32
    %c0_i32_2 = arith.constant 0 : i32
    return %c0_i32, %c0_i32_0, %c0_i32_1 : i32, i32, i32
  }
  func.func @transform_2(%arg0: i32) -> (i32, i32) {
    %c0_i32 = arith.constant 0 : i32
    %c0_i32_0 = arith.constant 0 : i32
    %c0_i32_1 = arith.constant 0 : i32
    return %c0_i32, %c0_i32_0 : i32, i32
  }
  func.func @transform_3(%arg0: i32) -> (i32, i32, i32) {
    %c0_i32 = arith.constant 0 : i32
    %c0_i32_0 = arith.constant 0 : i32
    %c0_i32_1 = arith.constant 0 : i32
    %c0_i32_2 = arith.constant 0 : i32
    return %c0_i32, %c0_i32_0, %c0_i32_1 : i32, i32, i32
  }
  func.func @transform_4(%arg0: i32) -> (i32, i32) {
    %c0_i32 = arith.constant 0 : i32
    %c0_i32_0 = arith.constant 0 : i32
    %c0_i32_1 = arith.constant 0 : i32
    return %c0_i32, %c0_i32_0 : i32, i32
  }
  func.func @transform_5(%arg0: i32) -> (i32, i32, i32) {
    %c0_i32 = arith.constant 0 : i32
    %c0_i32_0 = arith.constant 0 : i32
    %c0_i32_1 = arith.constant 0 : i32
    %c0_i32_2 = arith.constant 0 : i32
    return %c0_i32, %c0_i32_0, %c0_i32_1 : i32, i32, i32
  }
  func.func @transform_6(%arg0: i32) -> (i32, i32) {
    %c0_i32 = arith.constant 0 : i32
    %c0_i32_0 = arith.constant 0 : i32
    %c0_i32_1 = arith.constant 0 : i32
    return %c0_i32, %c0_i32_0 : i32, i32
  }
  func.func @transform_7(%arg0: i32) -> (i32, i32) {
    %c0_i32 = arith.constant 0 : i32
    %c0_i32_0 = arith.constant 0 : i32
    %c0_i32_1 = arith.constant 0 : i32
    return %c0_i32, %c0_i32_0 : i32, i32
  }
  func.func @transform_8(%arg0: i32) -> (i32, i32) {
    %c0_i32 = arith.constant 0 : i32
    %c0_i32_0 = arith.constant 0 : i32
    %c0_i32_1 = arith.constant 0 : i32
    return %c0_i32, %c0_i32_0 : i32, i32
  }
  func.func @transform_9(%arg0: i32) -> (i32, i32) {
    %c0_i32 = arith.constant 0 : i32
    %c0_i32_0 = arith.constant 0 : i32
    %c0_i32_1 = arith.constant 0 : i32
    return %c0_i32, %c0_i32_0 : i32, i32
  }
  func.func @transform_10(%arg0: i32) -> (i32, i32) {
    %c0_i32 = arith.constant 0 : i32
    %c0_i32_0 = arith.constant 0 : i32
    %c0_i32_1 = arith.constant 0 : i32
    return %c0_i32, %c0_i32_0 : i32, i32
  }
  func.func @transform_11(%arg0: i32) -> (i32, i32) {
    %c0_i32 = arith.constant 0 : i32
    %c0_i32_0 = arith.constant 0 : i32
    %c0_i32_1 = arith.constant 0 : i32
    return %c0_i32, %c0_i32_0 : i32, i32
  }
  func.func @transform_12(%arg0: i32) -> (i32, i32) {
    %c0_i32 = arith.constant 0 : i32
    %c0_i32_0 = arith.constant 0 : i32
    %c0_i32_1 = arith.constant 0 : i32
    return %c0_i32, %c0_i32_0 : i32, i32
  }
  func.func @transform_13(%arg0: i32) -> (i32, i32, i32) {
    %c0_i32 = arith.constant 0 : i32
    %c0_i32_0 = arith.constant 0 : i32
    %c0_i32_1 = arith.constant 0 : i32
    return %arg0, %c0_i32, %c0_i32_0 : i32, i32, i32
  }
}

</mosaic_0001>

<llo_original>
// kernel: cn_policy_forward.1
$region0: #{cn_policy_forward.1}
  #allocation0 [shape = 'u32[]', space=smem, size = 0x4, offset = 0x4, fixed_abs, tag = 'smem constant byte address 0x4 - core index']
  #allocation1 [shape = 'u32[144,128]{1,0:T(1,128)}', space=vmem, size = 0x12000, scoped, tag = 'internal scratch']
  #allocation2 [shape = 'f32[18,32,32]{2,1,0:T(8,128)}', space=vmem, size = 0x48000, scoped, tag = 'scratch operand']
  %s0 = inlined_call_operand.vmem [shape: f32[2,16,16,4], index: 0, kind: input, shape index: {}]
  %s1 = inlined_call_operand.vmem [shape: f32[9,4,8], index: 1, kind: input, shape index: {}]
  %s2 = inlined_call_operand.vmem [shape: f32[1,8], index: 2, kind: input, shape index: {}]
  %s3 = inlined_call_operand.vmem [shape: f32[9,8,16], index: 3, kind: input, shape index: {}]
  %s4 = inlined_call_operand.vmem [shape: f32[1,16], index: 4, kind: input, shape index: {}]
  %s5 = inlined_call_operand.vmem [shape: f32[9,16,32], index: 5, kind: input, shape index: {}]
  %s6 = inlined_call_operand.vmem [shape: f32[1,32], index: 6, kind: input, shape index: {}]
  %s7 = inlined_call_operand.vmem [shape: f32[32,32], index: 7, kind: input, shape index: {}]
  %s8 = inlined_call_operand.vmem [shape: f32[1,32], index: 8, kind: input, shape index: {}]
  %s9 = inlined_call_operand.vmem [shape: f32[32,32], index: 9, kind: input, shape index: {}]
  %s10 = inlined_call_operand.vmem [shape: f32[1,32], index: 10, kind: input, shape index: {}]
  %s11 = inlined_call_operand.vmem [shape: f32[32,6], index: 11, kind: input, shape index: {}]
  %s12 = inlined_call_operand.vmem [shape: f32[1,6], index: 12, kind: input, shape index: {}]
  %s13 = inlined_call_operand.hbm [shape: f32[2,1,6], index: 13, kind: output, shape index: {}]
  %s14 = sld [smem:[#allocation0]]
  $region85: #{cn_policy_forward.1} parent=0
    _
  %s16 = ssub.s32 1, %s14
  %s17 = scalar_select 0, %s16, %s14
  $region1: #{cn_policy_forward.1} parent=0
    #allocation3 [shape = 'u8[1024]{0}', space=vmem, size = 0x400, scoped, tag = 'output window, operand 0']
    #allocation4 [shape = 's32[2]{0}', space=sflag, size = 0x8, scoped, tag = 'scoped memory for cn_policy_forward.1']
    %18 = vsyncpa [#allocation4], 0
    %s19 = scalar_lea.sflag [#allocation4], 1
    %20 = vsyncpa %s19, 0
    loop: start=0, step=1, limit=4
    $region2: #{cn_policy_forward.1} parent=1 // loop_pre_header
      _
    $region3: #{cn_policy_forward.1} parent=1 // loop_header
      %s22 = sphi 0, %s26
      %p23 = scmp.ge.s32.totalorder %s22, 4
      %s32 = sphi 0, %s34
      %s35 = sphi 0, %s32
      %s36 = sphi 0, %s35
      %s52 = sphi 0, %s36
      %s56 = sphi 0, %s56
      %s58 = sphi 0, %s56
      %s59 = sphi 0, %s58
      %s73 = sphi 0, %s59
      %s77 = sphi 0, %s77
      %s79 = sphi 0, %s77
      %s80 = sphi 0, %s79
      %s94 = sphi 0, %s80
      %s98 = sphi 0, %s98
      %s100 = sphi 0, %s98
      %s101 = sphi 0, %s100
      %s115 = sphi 0, %s101
      %s119 = sphi 0, %s119
      %s121 = sphi 0, %s119
      %s122 = sphi 0, %s121
      %s136 = sphi 0, %s122
      %s140 = sphi 0, %s140
      %s142 = sphi 0, %s140
      %s143 = sphi 0, %s142
      %s157 = sphi 0, %s143
      %s161 = sphi 0, %s161
      %s163 = sphi 0, %s161
      %s164 = sphi 0, %s163
      %s178 = sphi 0, %s164
      %s182 = sphi 0, %s182
      %s184 = sphi 0, %s182
      %s185 = sphi 0, %s184
      %s199 = sphi 0, %s185
      %s203 = sphi 0, %s203
      %s205 = sphi 0, %s203
      %s206 = sphi 0, %s205
      %s220 = sphi 0, %s206
      %s224 = sphi 0, %s224
      %s226 = sphi 0, %s224
      %s227 = sphi 0, %s226
      %s241 = sphi 0, %s227
      %s245 = sphi 0, %s245
      %s247 = sphi 0, %s245
      %s248 = sphi 0, %s247
      %s262 = sphi 0, %s248
      %s266 = sphi 0, %s266
      %s268 = sphi 0, %s266
      %s269 = sphi 0, %s268
      %s283 = sphi 0, %s269
      %s287 = sphi 0, %s287
      %s289 = sphi 0, %s287
      %s290 = sphi 0, %s289
      %s304 = sphi 0, %s290
      %s310 = sphi 0, %s312
      %s313 = sphi 0, %s310
      %s314 = sphi 0, %s313
      %s330 = sphi 0, %s314
    $region4: #{cn_policy_forward.1} parent=1 // loop_header_branch
      %25 = sbr.rel (%p23) target = $region8
    $region5: #{cn_policy_forward.1} parent=1 // loop_body
      %s27 = ssub.s32 %s22, 1
      %s28 = ssub.s32 %s22, 2
      %s29 = sadd.s32 %s22, 1
      %s30 = ssub.s32 %s22, %s29
      %p31 = scmp.eq.s32.totalorder %s30, 0
      %s33 = sadd.s32 %s32, 1
      %s34 = scalar_select %p31, %s32, %s33
      %p37 = pneg %p31
      %p38 = scmp.eq.s32.totalorder %s22, 1
      %p39 = por %p37, %p38
      %p40 = scmp.ne.s32.totalorder %s32, %s35
      %p41 = scmp.eq.s32.totalorder %s22, 0
      %p42 = por %p40, %p41
      %p43 = scmp.ne.s32.totalorder %s32, %s35
      %p44 = scmp.eq.s32.totalorder %s27, 1
      %p45 = por %p43, %p44
      %p46 = scmp.ne.s32.totalorder %s35, %s36
      %p47 = scmp.eq.s32.totalorder %s27, 0
      %p48 = por %p46, %p47
      %p49 = scmp.ne.s32.totalorder %s35, %s36
      %p50 = scmp.eq.s32.totalorder %s28, 1
      %p51 = por %p49, %p50
      %p53 = scmp.ne.s32.totalorder %s36, %s52
      %p54 = scmp.eq.s32.totalorder %s28, 0
      %p55 = por %p53, %p54
      %s57 = sadd.s32 %s56, 1
      %p60 = scmp.eq.s32.totalorder %s22, 1
      %p61 = scmp.ne.s32.totalorder %s56, %s58
      %p62 = scmp.eq.s32.totalorder %s22, 0
      %p63 = por %p61, %p62
      %p64 = scmp.ne.s32.totalorder %s56, %s58
      %p65 = scmp.eq.s32.totalorder %s27, 1
      %p66 = por %p64, %p65
      %p67 = scmp.ne.s32.totalorder %s58, %s59
      %p68 = scmp.eq.s32.totalorder %s27, 0
      %p69 = por %p67, %p68
      %p70 = scmp.ne.s32.totalorder %s58, %s59
      %p71 = scmp.eq.s32.totalorder %s28, 1
      %p72 = por %p70, %p71
      %p74 = scmp.ne.s32.totalorder %s59, %s73
      %p75 = scmp.eq.s32.totalorder %s28, 0
      %p76 = por %p74, %p75
      %s78 = sadd.s32 %s77, 1
      %p81 = scmp.eq.s32.totalorder %s22, 1
      %p82 = scmp.ne.s32.totalorder %s77, %s79
      %p83 = scmp.eq.s32.totalorder %s22, 0
      %p84 = por %p82, %p83
      %p85 = scmp.ne.s32.totalorder %s77, %s79
      %p86 = scmp.eq.s32.totalorder %s27, 1
      %p87 = por %p85, %p86
      %p88 = scmp.ne.s32.totalorder %s79, %s80
      %p89 = scmp.eq.s32.totalorder %s27, 0
      %p90 = por %p88, %p89
      %p91 = scmp.ne.s32.totalorder %s79, %s80
      %p92 = scmp.eq.s32.totalorder %s28, 1
      %p93 = por %p91, %p92
      %p95 = scmp.ne.s32.totalorder %s80, %s94
      %p96 = scmp.eq.s32.totalorder %s28, 0
      %p97 = por %p95, %p96
      %s99 = sadd.s32 %s98, 1
      %p102 = scmp.eq.s32.totalorder %s22, 1
      %p103 = scmp.ne.s32.totalorder %s98, %s100
      %p104 = scmp.eq.s32.totalorder %s22, 0
      %p105 = por %p103, %p104
      %p106 = scmp.ne.s32.totalorder %s98, %s100
      %p107 = scmp.eq.s32.totalorder %s27, 1
      %p108 = por %p106, %p107
      %p109 = scmp.ne.s32.totalorder %s100, %s101
      %p110 = scmp.eq.s32.totalorder %s27, 0
      %p111 = por %p109, %p110
      %p112 = scmp.ne.s32.totalorder %s100, %s101
      %p113 = scmp.eq.s32.totalorder %s28, 1
      %p114 = por %p112, %p113
      %p116 = scmp.ne.s32.totalorder %s101, %s115
      %p117 = scmp.eq.s32.totalorder %s28, 0
      %p118 = por %p116, %p117
      %s120 = sadd.s32 %s119, 1
      %p123 = scmp.eq.s32.totalorder %s22, 1
      %p124 = scmp.ne.s32.totalorder %s119, %s121
      %p125 = scmp.eq.s32.totalorder %s22, 0
      %p126 = por %p124, %p125
      %p127 = scmp.ne.s32.totalorder %s119, %s121
      %p128 = scmp.eq.s32.totalorder %s27, 1
      %p129 = por %p127, %p128
      %p130 = scmp.ne.s32.totalorder %s121, %s122
      %p131 = scmp.eq.s32.totalorder %s27, 0
      %p132 = por %p130, %p131
      %p133 = scmp.ne.s32.totalorder %s121, %s122
      %p134 = scmp.eq.s32.totalorder %s28, 1
      %p135 = por %p133, %p134
      %p137 = scmp.ne.s32.totalorder %s122, %s136
      %p138 = scmp.eq.s32.totalorder %s28, 0
      %p139 = por %p137, %p138
      %s141 = sadd.s32 %s140, 1
      %p144 = scmp.eq.s32.totalorder %s22, 1
      %p145 = scmp.ne.s32.totalorder %s140, %s142
      %p146 = scmp.eq.s32.totalorder %s22, 0
      %p147 = por %p145, %p146
      %p148 = scmp.ne.s32.totalorder %s140, %s142
      %p149 = scmp.eq.s32.totalorder %s27, 1
      %p150 = por %p148, %p149
      %p151 = scmp.ne.s32.totalorder %s142, %s143
      %p152 = scmp.eq.s32.totalorder %s27, 0
      %p153 = por %p151, %p152
      %p154 = scmp.ne.s32.totalorder %s142, %s143
      %p155 = scmp.eq.s32.totalorder %s28, 1
      %p156 = por %p154, %p155
      %p158 = scmp.ne.s32.totalorder %s143, %s157
      %p159 = scmp.eq.s32.totalorder %s28, 0
      %p160 = por %p158, %p159
      %s162 = sadd.s32 %s161, 1
      %p165 = scmp.eq.s32.totalorder %s22, 1
      %p166 = scmp.ne.s32.totalorder %s161, %s163
      %p167 = scmp.eq.s32.totalorder %s22, 0
      %p168 = por %p166, %p167
      %p169 = scmp.ne.s32.totalorder %s161, %s163
      %p170 = scmp.eq.s32.totalorder %s27, 1
      %p171 = por %p169, %p170
      %p172 = scmp.ne.s32.totalorder %s163, %s164
      %p173 = scmp.eq.s32.totalorder %s27, 0
      %p174 = por %p172, %p173
      %p175 = scmp.ne.s32.totalorder %s163, %s164
      %p176 = scmp.eq.s32.totalorder %s28, 1
      %p177 = por %p175, %p176
      %p179 = scmp.ne.s32.totalorder %s164, %s178
      %p180 = scmp.eq.s32.totalorder %s28, 0
      %p181 = por %p179, %p180
      %s183 = sadd.s32 %s182, 1
      %p186 = scmp.eq.s32.totalorder %s22, 1
      %p187 = scmp.ne.s32.totalorder %s182, %s184
      %p188 = scmp.eq.s32.totalorder %s22, 0
      %p189 = por %p187, %p188
      %p190 = scmp.ne.s32.totalorder %s182, %s184
      %p191 = scmp.eq.s32.totalorder %s27, 1
      %p192 = por %p190, %p191
      %p193 = scmp.ne.s32.totalorder %s184, %s185
      %p194 = scmp.eq.s32.totalorder %s27, 0
      %p195 = por %p193, %p194
      %p196 = scmp.ne.s32.totalorder %s184, %s185
      %p197 = scmp.eq.s32.totalorder %s28, 1
      %p198 = por %p196, %p197
      %p200 = scmp.ne.s32.totalorder %s185, %s199
      %p201 = scmp.eq.s32.totalorder %s28, 0
      %p202 = por %p200, %p201
      %s204 = sadd.s32 %s203, 1
      %p207 = scmp.eq.s32.totalorder %s22, 1
      %p208 = scmp.ne.s32.totalorder %s203, %s205
      %p209 = scmp.eq.s32.totalorder %s22, 0
      %p210 = por %p208, %p209
      %p211 = scmp.ne.s32.totalorder %s203, %s205
      %p212 = scmp.eq.s32.totalorder %s27, 1
      %p213 = por %p211, %p212
      %p214 = scmp.ne.s32.totalorder %s205, %s206
      %p215 = scmp.eq.s32.totalorder %s27, 0
      %p216 = por %p214, %p215
      %p217 = scmp.ne.s32.totalorder %s205, %s206
      %p218 = scmp.eq.s32.totalorder %s28, 1
      %p219 = por %p217, %p218
      %p221 = scmp.ne.s32.totalorder %s206, %s220
      %p222 = scmp.eq.s32.totalorder %s28, 0
      %p223 = por %p221, %p222
      %s225 = sadd.s32 %s224, 1
      %p228 = scmp.eq.s32.totalorder %s22, 1
      %p229 = scmp.ne.s32.totalorder %s224, %s226
      %p230 = scmp.eq.s32.totalorder %s22, 0
      %p231 = por %p229, %p230
      %p232 = scmp.ne.s32.totalorder %s224, %s226
      %p233 = scmp.eq.s32.totalorder %s27, 1
      %p234 = por %p232, %p233
      %p235 = scmp.ne.s32.totalorder %s226, %s227
      %p236 = scmp.eq.s32.totalorder %s27, 0
      %p237 = por %p235, %p236
      %p238 = scmp.ne.s32.totalorder %s226, %s227
      %p239 = scmp.eq.s32.totalorder %s28, 1
      %p240 = por %p238, %p239
      %p242 = scmp.ne.s32.totalorder %s227, %s241
      %p243 = scmp.eq.s32.totalorder %s28, 0
      %p244 = por %p242, %p243
      %s246 = sadd.s32 %s245, 1
      %p249 = scmp.eq.s32.totalorder %s22, 1
      %p250 = scmp.ne.s32.totalorder %s245, %s247
      %p251 = scmp.eq.s32.totalorder %s22, 0
      %p252 = por %p250, %p251
      %p253 = scmp.ne.s32.totalorder %s245, %s247
      %p254 = scmp.eq.s32.totalorder %s27, 1
      %p255 = por %p253, %p254
      %p256 = scmp.ne.s32.totalorder %s247, %s248
      %p257 = scmp.eq.s32.totalorder %s27, 0
      %p258 = por %p256, %p257
      %p259 = scmp.ne.s32.totalorder %s247, %s248
      %p260 = scmp.eq.s32.totalorder %s28, 1
      %p261 = por %p259, %p260
      %p263 = scmp.ne.s32.totalorder %s248, %s262
      %p264 = scmp.eq.s32.totalorder %s28, 0
      %p265 = por %p263, %p264
      %s267 = sadd.s32 %s266, 1
      %p270 = scmp.eq.s32.totalorder %s22, 1
      %p271 = scmp.ne.s32.totalorder %s266, %s268
      %p272 = scmp.eq.s32.totalorder %s22, 0
      %p273 = por %p271, %p272
      %p274 = scmp.ne.s32.totalorder %s266, %s268
      %p275 = scmp.eq.s32.totalorder %s27, 1
      %p276 = por %p274, %p275
      %p277 = scmp.ne.s32.totalorder %s268, %s269
      %p278 = scmp.eq.s32.totalorder %s27, 0
      %p279 = por %p277, %p278
      %p280 = scmp.ne.s32.totalorder %s268, %s269
      %p281 = scmp.eq.s32.totalorder %s28, 1
      %p282 = por %p280, %p281
      %p284 = scmp.ne.s32.totalorder %s269, %s283
      %p285 = scmp.eq.s32.totalorder %s28, 0
      %p286 = por %p284, %p285
      %s288 = sadd.s32 %s287, 1
      %p291 = scmp.eq.s32.totalorder %s22, 1
      %p292 = scmp.ne.s32.totalorder %s287, %s289
      %p293 = scmp.eq.s32.totalorder %s22, 0
      %p294 = por %p292, %p293
      %p295 = scmp.ne.s32.totalorder %s287, %s289
      %p296 = scmp.eq.s32.totalorder %s27, 1
      %p297 = por %p295, %p296
      %p298 = scmp.ne.s32.totalorder %s289, %s290
      %p299 = scmp.eq.s32.totalorder %s27, 0
      %p300 = por %p298, %p299
      %p301 = scmp.ne.s32.totalorder %s289, %s290
      %p302 = scmp.eq.s32.totalorder %s28, 1
      %p303 = por %p301, %p302
      %p305 = scmp.ne.s32.totalorder %s290, %s304
      %p306 = scmp.eq.s32.totalorder %s28, 0
      %p307 = por %p305, %p306
      %s308 = ssub.s32 %s22, %s29
      %p309 = scmp.eq.s32.totalorder %s308, 0
      %s311 = sadd.s32 %s310, 1
      %s312 = scalar_select %p309, %s310, %s311
      %p315 = pneg %p309
      %p316 = scmp.eq.s32.totalorder %s22, 1
      %p317 = por %p315, %p316
      %p318 = scmp.ne.s32.totalorder %s310, %s313
      %p319 = scmp.eq.s32.totalorder %s22, 0
      %p320 = por %p318, %p319
      %p321 = scmp.ne.s32.totalorder %s310, %s313
      %p322 = scmp.eq.s32.totalorder %s27, 1
      %p323 = por %p321, %p322
      %p324 = scmp.ne.s32.totalorder %s313, %s314
      %p325 = scmp.eq.s32.totalorder %s27, 0
      %p326 = por %p324, %p325
      %p327 = scmp.ne.s32.totalorder %s313, %s314
      %p328 = scmp.eq.s32.totalorder %s28, 1
      %p329 = por %p327, %p328
      %p331 = scmp.ne.s32.totalorder %s314, %s330
      %p332 = scmp.eq.s32.totalorder %s28, 0
      %p333 = por %p331, %p332
      %p334 = scmp.le.s32.totalorder 1, %s22
      %p335 = scmp.lt.s32.totalorder %s22, 3
      %p336 = pnand %p334, %p335
      %p337 = pneg %p336
      // Predicated region
      $region9: #{cn_policy_forward.1} parent=5 // pred_check
        _
      $region10: #{cn_policy_forward.1} parent=5 // pred_check_branch
        %339 = sbr.rel (%p336) target = $region12
      $region11: #{cn_policy_forward.1} parent=5 // pred_region
        %s340 = ssub.s32 %s22, 1
        // Predicated region
        $region13: #{cn_policy_forward.1} parent=11 // pred_check
          %p341 = pneg %p69
        $region14: #{cn_policy_forward.1} parent=11 // pred_check_branch
          %343 = sbr.rel (%p341) target = $region16
        $region15: #{cn_policy_forward.1} parent=11 // pred_region
          _
        $region16: #{cn_policy_forward.1} parent=11 // pred_fallthru
          _
        // Predicated region
        $region17: #{cn_policy_forward.1} parent=11 // pred_check
          %p344 = pneg %p90
        $region18: #{cn_policy_forward.1} parent=11 // pred_check_branch
          %346 = sbr.rel (%p344) target = $region20
        $region19: #{cn_policy_forward.1} parent=11 // pred_region
          _
        $region20: #{cn_policy_forward.1} parent=11 // pred_fallthru
          _
        // Predicated region
        $region21: #{cn_policy_forward.1} parent=11 // pred_check
          %p347 = pneg %p111
        $region22: #{cn_policy_forward.1} parent=11 // pred_check_branch
          %349 = sbr.rel (%p347) target = $region24
        $region23: #{cn_policy_forward.1} parent=11 // pred_region
          _
        $region24: #{cn_policy_forward.1} parent=11 // pred_fallthru
          _
        // Predicated region
        $region25: #{cn_policy_forward.1} parent=11 // pred_check
          %p350 = pneg %p132
        $region26: #{cn_policy_forward.1} parent=11 // pred_check_branch
          %352 = sbr.rel (%p350) target = $region28
        $region27: #{cn_policy_forward.1} parent=11 // pred_region
          _
        $region28: #{cn_policy_forward.1} parent=11 // pred_fallthru
          _
        // Predicated region
        $region29: #{cn_policy_forward.1} parent=11 // pred_check
          %p353 = pneg %p153
        $region30: #{cn_policy_forward.1} parent=11 // pred_check_branch
          %355 = sbr.rel (%p353) target = $region32
        $region31: #{cn_policy_forward.1} parent=11 // pred_region
          _
        $region32: #{cn_policy_forward.1} parent=11 // pred_fallthru
          _
        // Predicated region
        $region33: #{cn_policy_forward.1} parent=11 // pred_check
          %p356 = pneg %p174
        $region34: #{cn_policy_forward.1} parent=11 // pred_check_branch
          %358 = sbr.rel (%p356) target = $region36
        $region35: #{cn_policy_forward.1} parent=11 // pred_region
          _
        $region36: #{cn_policy_forward.1} parent=11 // pred_fallthru
          _
        // Predicated region
        $region37: #{cn_policy_forward.1} parent=11 // pred_check
          %p359 = pneg %p195
        $region38: #{cn_policy_forward.1} parent=11 // pred_check_branch
          %361 = sbr.rel (%p359) target = $region40
        $region39: #{cn_policy_forward.1} parent=11 // pred_region
          _
        $region40: #{cn_policy_forward.1} parent=11 // pred_fallthru
          _
        // Predicated region
        $region41: #{cn_policy_forward.1} parent=11 // pred_check
          %p362 = pneg %p216
        $region42: #{cn_policy_forward.1} parent=11 // pred_check_branch
          %364 = sbr.rel (%p362) target = $region44
        $region43: #{cn_policy_forward.1} parent=11 // pred_region
          _
        $region44: #{cn_policy_forward.1} parent=11 // pred_fallthru
          _
        // Predicated region
        $region45: #{cn_policy_forward.1} parent=11 // pred_check
          %p365 = pneg %p237
        $region46: #{cn_policy_forward.1} parent=11 // pred_check_branch
          %367 = sbr.rel (%p365) target = $region48
        $region47: #{cn_policy_forward.1} parent=11 // pred_region
          _
        $region48: #{cn_policy_forward.1} parent=11 // pred_fallthru
          _
        // Predicated region
        $region49: #{cn_policy_forward.1} parent=11 // pred_check
          %p368 = pneg %p258
        $region50: #{cn_policy_forward.1} parent=11 // pred_check_branch
          %370 = sbr.rel (%p368) target = $region52
        $region51: #{cn_policy_forward.1} parent=11 // pred_region
          _
        $region52: #{cn_policy_forward.1} parent=11 // pred_fallthru
          _
        // Predicated region
        $region53: #{cn_policy_forward.1} parent=11 // pred_check
          %p371 = pneg %p279
        $region54: #{cn_policy_forward.1} parent=11 // pred_check_branch
          %373 = sbr.rel (%p371) target = $region56
        $region55: #{cn_policy_forward.1} parent=11 // pred_region
          _
        $region56: #{cn_policy_forward.1} parent=11 // pred_fallthru
          _
        // Predicated region
        $region57: #{cn_policy_forward.1} parent=11 // pred_check
          %p374 = pneg %p300
        $region58: #{cn_policy_forward.1} parent=11 // pred_check_branch
          %376 = sbr.rel (%p374) target = $region60
        $region59: #{cn_policy_forward.1} parent=11 // pred_region
          _
        $region60: #{cn_policy_forward.1} parent=11 // pred_fallthru
          _
      $region12: #{cn_policy_forward.1} parent=5 // pred_fallthru
        _
      %p377 = scmp.lt.s32.totalorder %s22, 2
      // Predicated region
      $region61: #{cn_policy_forward.1} parent=5 // pred_check
        %p378 = pneg %p377
      $region62: #{cn_policy_forward.1} parent=5 // pred_check_branch
        %380 = sbr.rel (%p378) target = $region64
      $region63: #{cn_policy_forward.1} parent=5 // pred_region
        // Predicated region
        $region65: #{cn_policy_forward.1} parent=63 // pred_check
          %p381 = pneg %p42
        $region66: #{cn_policy_forward.1} parent=63 // pred_check_branch
          %383 = sbr.rel (%p381) target = $region68
        $region67: #{cn_policy_forward.1} parent=63 // pred_region
          %p384 = scmp.lt.s32.totalorder %s22, 1
          %s385 = scalar_select %p384, %s22, 1
          %s386 = smul.addr %s385, 32
          %s387 = smul.addr %s386, 8
          %s388 = scalar_lea.vmem %s0, %s387
        $region68: #{cn_policy_forward.1} parent=63 // pred_fallthru
          _
      $region64: #{cn_policy_forward.1} parent=5 // pred_fallthru
        _
      %p389 = scmp.le.s32.totalorder 1, %s22
      %p390 = scmp.lt.s32.totalorder %s22, 3
      %p391 = pnand %p389, %p390
      %p392 = pneg %p391
      // Predicated region
      $region69: #{cn_policy_forward.1} parent=5 // pred_check
        _
      $region70: #{cn_policy_forward.1} parent=5 // pred_check_branch
        %394 = sbr.rel (%p391) target = $region72
      $region71: #{cn_policy_forward.1} parent=5 // pred_region
        %s395 = ssub.s32 %s22, 1
        %p396 = scmp.lt.s32.totalorder %s27, 1
        %s397 = scalar_select %p396, %s27, 1
        %s398 = smul.addr %s397, 32
        %s399 = smul.addr %s398, 8
        %s400 = scalar_lea.vmem %s0, %s399
        %p401 = pneg %p48
        %p402 = pneg %p45
        %p403 = pneg %p69
        %p404 = pneg %p66
        %p405 = pneg %p90
        %p406 = pneg %p87
        %p407 = pneg %p111
        %p408 = pneg %p108
        %p409 = pneg %p132
        %p410 = pneg %p129
        %p411 = pneg %p153
        %p412 = pneg %p150
        %p413 = pneg %p174
        %p414 = pneg %p171
        %p415 = pneg %p195
        %p416 = pneg %p192
        %p417 = pneg %p216
        %p418 = pneg %p213
        %p419 = pneg %p237
        %p420 = pneg %p234
        %p421 = pneg %p258
        %p422 = pneg %p255
        %p423 = pneg %p279
        %p424 = pneg %p276
        %p425 = pneg %p300
        %p426 = pneg %p297
        %p427 = pneg %p326
        %p428 = pneg %p323
        %s429 = sand.u32 %s313, 1
        %s430 = scalar_lea.sflag [#allocation4], %s429
        %s431 = sand.u32 %s313, 1
        %s432 = scalar_lea.vmem [#allocation3], %s431
        %p433 = scmp.lt.s32.totalorder %s27, 1
        %s434 = scalar_select %p433, %s27, 1
        %s435 = smul.addr %s434, 32
        %s436 = smul.addr %s435, 8
        %s437 = scalar_lea.vmem %s0, %s436
        %vm438 = vcmask 261120
        %439 = vst.msk [vmem:[#allocation2] sm:$0xff] %vm438, 0.0
        %440 = vst.msk [vmem:[#allocation2 + $0x8] sm:$0xff] %vm438, 0.0
        %441 = vst.msk [vmem:[#allocation2 + $0x10] sm:$0xff] %vm438, 0.0
        %442 = vst.msk [vmem:[#allocation2 + $0x18] sm:$0xff] %vm438, 0.0
        %443 = vst.msk [vmem:[#allocation2 + $0x20] sm:$0xff] %vm438, 0.0
        %444 = vst.msk [vmem:[#allocation2 + $0x28] sm:$0xff] %vm438, 0.0
        %445 = vst.msk [vmem:[#allocation2 + $0x30] sm:$0xff] %vm438, 0.0
        %446 = vst.msk [vmem:[#allocation2 + $0x38] sm:$0xff] %vm438, 0.0
        %447 = vst.msk [vmem:[#allocation2 + $0x40] sm:$0xff] %vm438, 0.0
        %448 = vst.msk [vmem:[#allocation2 + $0x48] sm:$0xff] %vm438, 0.0
        %449 = vst.msk [vmem:[#allocation2 + $0x50] sm:$0xff] %vm438, 0.0
        %450 = vst.msk [vmem:[#allocation2 + $0x58] sm:$0xff] %vm438, 0.0
        %451 = vst.msk [vmem:[#allocation2 + $0x60] sm:$0xff] %vm438, 0.0
        %452 = vst.msk [vmem:[#allocation2 + $0x68] sm:$0xff] %vm438, 0.0
        %453 = vst.msk [vmem:[#allocation2 + $0x70] sm:$0xff] %vm438, 0.0
        %454 = vst.msk [vmem:[#allocation2 + $0x78] sm:$0xff] %vm438, 0.0
        %455 = vst.msk [vmem:[#allocation2 + $0x80] sm:$0xff] %vm438, 0.0
        %456 = vst.msk [vmem:[#allocation2 + $0x88] sm:$0xff] %vm438, 0.0
        %457 = vst.msk [vmem:[#allocation2 + $0x90] sm:$0xff] %vm438, 0.0
        %458 = vst.msk [vmem:[#allocation2 + $0x98] sm:$0xff] %vm438, 0.0
        %459 = vst.msk [vmem:[#allocation2 + $0xa0] sm:$0xff] %vm438, 0.0
        %460 = vst.msk [vmem:[#allocation2 + $0xa8] sm:$0xff] %vm438, 0.0
        %461 = vst.msk [vmem:[#allocation2 + $0xb0] sm:$0xff] %vm438, 0.0
        %462 = vst.msk [vmem:[#allocation2 + $0xb8] sm:$0xff] %vm438, 0.0
        %463 = vst.msk [vmem:[#allocation2 + $0xc0] sm:$0xff] %vm438, 0.0
        %464 = vst.msk [vmem:[#allocation2 + $0xc8] sm:$0xff] %vm438, 0.0
        %465 = vst.msk [vmem:[#allocation2 + $0xd0] sm:$0xff] %vm438, 0.0
        %466 = vst.msk [vmem:[#allocation2 + $0xd8] sm:$0xff] %vm438, 0.0
        %467 = vst.msk [vmem:[#allocation2 + $0xe0] sm:$0xff] %vm438, 0.0
        %468 = vst.msk [vmem:[#allocation2 + $0xe8] sm:$0xff] %vm438, 0.0
        %469 = vst.msk [vmem:[#allocation2 + $0xf0] sm:$0xff] %vm438, 0.0
        %470 = vst.msk [vmem:[#allocation2 + $0xf8] sm:$0xff] %vm438, 0.0
        %471 = vst.msk [vmem:[#allocation2 + $0x100] sm:$0xff] %vm438, 0.0
        %472 = vst.msk [vmem:[#allocation2 + $0x108] sm:$0xff] %vm438, 0.0
        %473 = vst.msk [vmem:[#allocation2 + $0x110] sm:$0xff] %vm438, 0.0
        %474 = vst.msk [vmem:[#allocation2 + $0x118] sm:$0xff] %vm438, 0.0
        %475 = vst.msk [vmem:[#allocation2 + $0x120] sm:$0xff] %vm438, 0.0
        %476 = vst.msk [vmem:[#allocation2 + $0x128] sm:$0xff] %vm438, 0.0
        %477 = vst.msk [vmem:[#allocation2 + $0x130] sm:$0xff] %vm438, 0.0
        %478 = vst.msk [vmem:[#allocation2 + $0x138] sm:$0xff] %vm438, 0.0
        %479 = vst.msk [vmem:[#allocation2 + $0x140] sm:$0xff] %vm438, 0.0
        %480 = vst.msk [vmem:[#allocation2 + $0x148] sm:$0xff] %vm438, 0.0
        %481 = vst.msk [vmem:[#allocation2 + $0x150] sm:$0xff] %vm438, 0.0
        %482 = vst.msk [vmem:[#allocation2 + $0x158] sm:$0xff] %vm438, 0.0
        %483 = vst.msk [vmem:[#allocation2 + $0x160] sm:$0xff] %vm438, 0.0
        %484 = vst.msk [vmem:[#allocation2 + $0x168] sm:$0xff] %vm438, 0.0
        %485 = vst.msk [vmem:[#allocation2 + $0x170] sm:$0xff] %vm438, 0.0
        %486 = vst.msk [vmem:[#allocation2 + $0x178] sm:$0xff] %vm438, 0.0
        %487 = vst.msk [vmem:[#allocation2 + $0x180] sm:$0xff] %vm438, 0.0
        %488 = vst.msk [vmem:[#allocation2 + $0x188] sm:$0xff] %vm438, 0.0
        %489 = vst.msk [vmem:[#allocation2 + $0x190] sm:$0xff] %vm438, 0.0
        %490 = vst.msk [vmem:[#allocation2 + $0x198] sm:$0xff] %vm438, 0.0
        %491 = vst.msk [vmem:[#allocation2 + $0x1a0] sm:$0xff] %vm438, 0.0
        %492 = vst.msk [vmem:[#allocation2 + $0x1a8] sm:$0xff] %vm438, 0.0
        %493 = vst.msk [vmem:[#allocation2 + $0x1b0] sm:$0xff] %vm438, 0.0
        %494 = vst.msk [vmem:[#allocation2 + $0x1b8] sm:$0xff] %vm438, 0.0
        %495 = vst.msk [vmem:[#allocation2 + $0x1c0] sm:$0xff] %vm438, 0.0
        %496 = vst.msk [vmem:[#allocation2 + $0x1c8] sm:$0xff] %vm438, 0.0
        %497 = vst.msk [vmem:[#allocation2 + $0x1d0] sm:$0xff] %vm438, 0.0
        %498 = vst.msk [vmem:[#allocation2 + $0x1d8] sm:$0xff] %vm438, 0.0
        %499 = vst.msk [vmem:[#allocation2 + $0x1e0] sm:$0xff] %vm438, 0.0
        %500 = vst.msk [vmem:[#allocation2 + $0x1e8] sm:$0xff] %vm438, 0.0
        %501 = vst.msk [vmem:[#allocation2 + $0x1f0] sm:$0xff] %vm438, 0.0
        %502 = vst.msk [vmem:[#allocation2 + $0x1f8] sm:$0xff] %vm438, 0.0
        %503 = vst.msk [vmem:[#allocation2 + $0x200] sm:$0xff] %vm438, 0.0
        %504 = vst.msk [vmem:[#allocation2 + $0x208] sm:$0xff] %vm438, 0.0
        %505 = vst.msk [vmem:[#allocation2 + $0x210] sm:$0xff] %vm438, 0.0
        %506 = vst.msk [vmem:[#allocation2 + $0x218] sm:$0xff] %vm438, 0.0
        %507 = vst.msk [vmem:[#allocation2 + $0x220] sm:$0xff] %vm438, 0.0
        %508 = vst.msk [vmem:[#allocation2 + $0x228] sm:$0xff] %vm438, 0.0
        %509 = vst.msk [vmem:[#allocation2 + $0x230] sm:$0xff] %vm438, 0.0
        %510 = vst.msk [vmem:[#allocation2 + $0x238] sm:$0xff] %vm438, 0.0
        %v511 = vld [vmem:[%s437] sm:$0xff]
        %v512 = vld [vmem:[%s437 + $0x8] sm:$0xff]
        %v513 = vld [vmem:[%s437 + $0x10] sm:$0xff]
        %v514 = vld [vmem:[%s437 + $0x18] sm:$0xff]
        %v515 = vld [vmem:[%s437 + $0x20] sm:$0xff]
        %v516 = vld [vmem:[%s437 + $0x28] sm:$0xff]
        %v517 = vld [vmem:[%s437 + $0x30] sm:$0xff]
        %v518 = vld [vmem:[%s437 + $0x38] sm:$0xff]
        %v519 = vld [vmem:[%s437 + $0x40] sm:$0xff]
        %v520 = vld [vmem:[%s437 + $0x48] sm:$0xff]
        %v521 = vld [vmem:[%s437 + $0x50] sm:$0xff]
        %v522 = vld [vmem:[%s437 + $0x58] sm:$0xff]
        %v523 = vld [vmem:[%s437 + $0x60] sm:$0xff]
        %v524 = vld [vmem:[%s437 + $0x68] sm:$0xff]
        %v525 = vld [vmem:[%s437 + $0x70] sm:$0xff]
        %v526 = vld [vmem:[%s437 + $0x78] sm:$0xff]
        %v527 = vld [vmem:[%s437 + $0x80] sm:$0xff]
        %v528 = vld [vmem:[%s437 + $0x88] sm:$0xff]
        %v529 = vld [vmem:[%s437 + $0x90] sm:$0xff]
        %v530 = vld [vmem:[%s437 + $0x98] sm:$0xff]
        %v531 = vld [vmem:[%s437 + $0xa0] sm:$0xff]
        %v532 = vld [vmem:[%s437 + $0xa8] sm:$0xff]
        %v533 = vld [vmem:[%s437 + $0xb0] sm:$0xff]
        %v534 = vld [vmem:[%s437 + $0xb8] sm:$0xff]
        %v535 = vld [vmem:[%s437 + $0xc0] sm:$0xff]
        %v536 = vld [vmem:[%s437 + $0xc8] sm:$0xff]
        %v537 = vld [vmem:[%s437 + $0xd0] sm:$0xff]
        %v538 = vld [vmem:[%s437 + $0xd8] sm:$0xff]
        %v539 = vld [vmem:[%s437 + $0xe0] sm:$0xff]
        %v540 = vld [vmem:[%s437 + $0xe8] sm:$0xff]
        %v541 = vld [vmem:[%s437 + $0xf0] sm:$0xff]
        %v542 = vld [vmem:[%s437 + $0xf8] sm:$0xff]
        %s543 = scalar_lea.vmem [#allocation2], 32
        %vm544 = vcmask 31744
        %545 = vst.msk [vmem:[%s543 + $0x8] sm:$0xff] %vm544, %v511
        %546 = vst.msk [vmem:[%s543 + $0x10] sm:$0xff] %vm544, %v512
        %547 = vst.msk [vmem:[%s543 + $0x28] sm:$0xff] %vm544, %v513
        %548 = vst.msk [vmem:[%s543 + $0x30] sm:$0xff] %vm544, %v514
        %549 = vst.msk [vmem:[%s543 + $0x48] sm:$0xff] %vm544, %v515
        %550 = vst.msk [vmem:[%s543 + $0x50] sm:$0xff] %vm544, %v516
        %551 = vst.msk [vmem:[%s543 + $0x68] sm:$0xff] %vm544, %v517
        %552 = vst.msk [vmem:[%s543 + $0x70] sm:$0xff] %vm544, %v518
        %553 = vst.msk [vmem:[%s543 + $0x88] sm:$0xff] %vm544, %v519
        %554 = vst.msk [vmem:[%s543 + $0x90] sm:$0xff] %vm544, %v520
        %555 = vst.msk [vmem:[%s543 + $0xa8] sm:$0xff] %vm544, %v521
        %556 = vst.msk [vmem:[%s543 + $0xb0] sm:$0xff] %vm544, %v522
        %557 = vst.msk [vmem:[%s543 + $0xc8] sm:$0xff] %vm544, %v523
        %558 = vst.msk [vmem:[%s543 + $0xd0] sm:$0xff] %vm544, %v524
        %559 = vst.msk [vmem:[%s543 + $0xe8] sm:$0xff] %vm544, %v525
        %560 = vst.msk [vmem:[%s543 + $0xf0] sm:$0xff] %vm544, %v526
        %561 = vst.msk [vmem:[%s543 + $0x108] sm:$0xff] %vm544, %v527
        %562 = vst.msk [vmem:[%s543 + $0x110] sm:$0xff] %vm544, %v528
        %563 = vst.msk [vmem:[%s543 + $0x128] sm:$0xff] %vm544, %v529
        %564 = vst.msk [vmem:[%s543 + $0x130] sm:$0xff] %vm544, %v530
        %565 = vst.msk [vmem:[%s543 + $0x148] sm:$0xff] %vm544, %v531
        %566 = vst.msk [vmem:[%s543 + $0x150] sm:$0xff] %vm544, %v532
        %567 = vst.msk [vmem:[%s543 + $0x168] sm:$0xff] %vm544, %v533
        %568 = vst.msk [vmem:[%s543 + $0x170] sm:$0xff] %vm544, %v534
        %569 = vst.msk [vmem:[%s543 + $0x188] sm:$0xff] %vm544, %v535
        %570 = vst.msk [vmem:[%s543 + $0x190] sm:$0xff] %vm544, %v536
        %571 = vst.msk [vmem:[%s543 + $0x1a8] sm:$0xff] %vm544, %v537
        %572 = vst.msk [vmem:[%s543 + $0x1b0] sm:$0xff] %vm544, %v538
        %573 = vst.msk [vmem:[%s543 + $0x1c8] sm:$0xff] %vm544, %v539
        %574 = vst.msk [vmem:[%s543 + $0x1d0] sm:$0xff] %vm544, %v540
        %575 = vst.msk [vmem:[%s543 + $0x1e8] sm:$0xff] %vm544, %v541
        %576 = vst.msk [vmem:[%s543 + $0x1f0] sm:$0xff] %vm544, %v542
        %v577 = vld [vmem:[#allocation2] sm:$0xff]
        %v578 = vld [vmem:[#allocation2 + $0x8] sm:$0xff]
        %v579 = vld [vmem:[#allocation2 + $0x10] sm:$0xff]
        %v580 = vld [vmem:[#allocation2 + $0x18] sm:$0xff]
        %v581 = vld [vmem:[#allocation2 + $0x20] sm:$0xff]
        %v582 = vld [vmem:[#allocation2 + $0x28] sm:$0xff]
        %v583 = vld [vmem:[#allocation2 + $0x30] sm:$0xff]
        %v584 = vld [vmem:[#allocation2 + $0x38] sm:$0xff]
        %v585 = vld [vmem:[#allocation2 + $0x40] sm:$0xff]
        %v586 = vld [vmem:[#allocation2 + $0x48] sm:$0xff]
        %v587 = vld [vmem:[#allocation2 + $0x50] sm:$0xff]
        %v588 = vld [vmem:[#allocation2 + $0x58] sm:$0xff]
        %v589 = vld [vmem:[#allocation2 + $0x60] sm:$0xff]
        %v590 = vld [vmem:[#allocation2 + $0x68] sm:$0xff]
        %v591 = vld [vmem:[#allocation2 + $0x70] sm:$0xff]
        %v592 = vld [vmem:[#allocation2 + $0x78] sm:$0xff]
        %v593 = vld [vmem:[#allocation2 + $0x80] sm:$0xff]
        %v594 = vld [vmem:[#allocation2 + $0x88] sm:$0xff]
        %v595 = vld [vmem:[#allocation2 + $0x90] sm:$0xff]
        %v596 = vld [vmem:[#allocation2 + $0x98] sm:$0xff]
        %v597 = vld [vmem:[#allocation2 + $0xa0] sm:$0xff]
        %v598 = vld [vmem:[#allocation2 + $0xa8] sm:$0xff]
        %v599 = vld [vmem:[#allocation2 + $0xb0] sm:$0xff]
        %v600 = vld [vmem:[#allocation2 + $0xb8] sm:$0xff]
        %v601 = vld [vmem:[#allocation2 + $0xc0] sm:$0xff]
        %v602 = vld [vmem:[#allocation2 + $0xc8] sm:$0xff]
        %v603 = vld [vmem:[#allocation2 + $0xd0] sm:$0xff]
        %v604 = vld [vmem:[#allocation2 + $0xd8] sm:$0xff]
        %v605 = vld [vmem:[#allocation2 + $0xe0] sm:$0xff]
        %v606 = vld [vmem:[#allocation2 + $0xe8] sm:$0xff]
        %v607 = vld [vmem:[#allocation2 + $0xf0] sm:$0xff]
        %v608 = vld [vmem:[#allocation2 + $0xf8] sm:$0xff]
        %v609 = vld [vmem:[#allocation2 + $0x100] sm:$0xff]
        %v610 = vld [vmem:[#allocation2 + $0x108] sm:$0xff]
        %v611 = vld [vmem:[#allocation2 + $0x110] sm:$0xff]
        %v612 = vld [vmem:[#allocation2 + $0x118] sm:$0xff]
        %v613 = vld [vmem:[#allocation2 + $0x120] sm:$0xff]
        %v614 = vld [vmem:[#allocation2 + $0x128] sm:$0xff]
        %v615 = vld [vmem:[#allocation2 + $0x130] sm:$0xff]
        %v616 = vld [vmem:[#allocation2 + $0x138] sm:$0xff]
        %v617 = vld [vmem:[#allocation2 + $0x140] sm:$0xff]
        %v618 = vld [vmem:[#allocation2 + $0x148] sm:$0xff]
        %v619 = vld [vmem:[#allocation2 + $0x150] sm:$0xff]
        %v620 = vld [vmem:[#allocation2 + $0x158] sm:$0xff]
        %v621 = vld [vmem:[#allocation2 + $0x160] sm:$0xff]
        %v622 = vld [vmem:[#allocation2 + $0x168] sm:$0xff]
        %v623 = vld [vmem:[#allocation2 + $0x170] sm:$0xff]
        %v624 = vld [vmem:[#allocation2 + $0x178] sm:$0xff]
        %v625 = vld [vmem:[#allocation2 + $0x180] sm:$0xff]
        %v626 = vld [vmem:[#allocation2 + $0x188] sm:$0xff]
        %v627 = vld [vmem:[#allocation2 + $0x190] sm:$0xff]
        %v628 = vld [vmem:[#allocation2 + $0x198] sm:$0xff]
        %v629 = vld [vmem:[#allocation2 + $0x1a0] sm:$0xff]
        %v630 = vld [vmem:[#allocation2 + $0x1a8] sm:$0xff]
        %v631 = vld [vmem:[#allocation2 + $0x1b0] sm:$0xff]
        %v632 = vld [vmem:[#allocation2 + $0x1b8] sm:$0xff]
        %v633 = vld [vmem:[#allocation2 + $0x1c0] sm:$0xff]
        %v634 = vld [vmem:[#allocation2 + $0x1c8] sm:$0xff]
        %v635 = vld [vmem:[#allocation2 + $0x1d0] sm:$0xff]
        %v636 = vld [vmem:[#allocation2 + $0x1d8] sm:$0xff]
        %v637 = vld [vmem:[#allocation2 + $0x1e0] sm:$0xff]
        %v638 = vld [vmem:[#allocation2 + $0x1e8] sm:$0xff]
        %v639 = vld [vmem:[#allocation2 + $0x1f0] sm:$0xff]
        %v640 = vld [vmem:[#allocation2 + $0x1f8] sm:$0xff]
        %v641 = vld [vmem:[#allocation2 + $0x200] sm:$0xff]
        %v642 = vld [vmem:[#allocation2 + $0x208] sm:$0xff]
        %v643 = vld [vmem:[#allocation2 + $0x210] sm:$0xff]
        %v644 = vld [vmem:[#allocation2 + $0x218] sm:$0xff]
        %v645 = vld [vmem:[#allocation2 + $0x220] sm:$0xff]
        %v646 = vld [vmem:[#allocation2 + $0x228] sm:$0xff]
        %v647 = vld [vmem:[#allocation2 + $0x230] sm:$0xff]
        %v648 = vld [vmem:[#allocation2 + $0x238] sm:$0xff]
        %vm697 = vcmask 1040384
        %v698 = vrot.slane %v577, 7
        %v699 = vrot.slane %v578, 7
        %v700 = vsel %vm697, %v698, %v699
        %v701 = vrot.slane %v579, 7
        %v702 = vsel %vm697, %v699, %v701
        %v703 = vrot.slane %v581, 7
        %v704 = vrot.slane %v582, 7
        %v705 = vsel %vm697, %v703, %v704
        %v706 = vrot.slane %v583, 7
        %v707 = vsel %vm697, %v704, %v706
        %v708 = vrot.slane %v585, 7
        %v709 = vrot.slane %v586, 7
        %v710 = vsel %vm697, %v708, %v709
        %v711 = vrot.slane %v587, 7
        %v712 = vsel %vm697, %v709, %v711
        %v713 = vrot.slane %v589, 7
        %v714 = vrot.slane %v590, 7
        %v715 = vsel %vm697, %v713, %v714
        %v716 = vrot.slane %v591, 7
        %v717 = vsel %vm697, %v714, %v716
        %v718 = vrot.slane %v593, 7
        %v719 = vrot.slane %v594, 7
        %v720 = vsel %vm697, %v718, %v719
        %v721 = vrot.slane %v595, 7
        %v722 = vsel %vm697, %v719, %v721
        %v723 = vrot.slane %v597, 7
        %v724 = vrot.slane %v598, 7
        %v725 = vsel %vm697, %v723, %v724
        %v726 = vrot.slane %v599, 7
        %v727 = vsel %vm697, %v724, %v726
        %v728 = vrot.slane %v601, 7
        %v729 = vrot.slane %v602, 7
        %v730 = vsel %vm697, %v728, %v729
        %v731 = vrot.slane %v603, 7
        %v732 = vsel %vm697, %v729, %v731
        %v733 = vrot.slane %v605, 7
        %v734 = vrot.slane %v606, 7
        %v735 = vsel %vm697, %v733, %v734
        %v736 = vrot.slane %v607, 7
        %v737 = vsel %vm697, %v734, %v736
        %v738 = vrot.slane %v609, 7
        %v739 = vrot.slane %v610, 7
        %v740 = vsel %vm697, %v738, %v739
        %v741 = vrot.slane %v611, 7
        %v742 = vsel %vm697, %v739, %v741
        %v743 = vrot.slane %v613, 7
        %v744 = vrot.slane %v614, 7
        %v745 = vsel %vm697, %v743, %v744
        %v746 = vrot.slane %v615, 7
        %v747 = vsel %vm697, %v744, %v746
        %v748 = vrot.slane %v617, 7
        %v749 = vrot.slane %v618, 7
        %v750 = vsel %vm697, %v748, %v749
        %v751 = vrot.slane %v619, 7
        %v752 = vsel %vm697, %v749, %v751
        %v753 = vrot.slane %v621, 7
        %v754 = vrot.slane %v622, 7
        %v755 = vsel %vm697, %v753, %v754
        %v756 = vrot.slane %v623, 7
        %v757 = vsel %vm697, %v754, %v756
        %v758 = vrot.slane %v625, 7
        %v759 = vrot.slane %v626, 7
        %v760 = vsel %vm697, %v758, %v759
        %v761 = vrot.slane %v627, 7
        %v762 = vsel %vm697, %v759, %v761
        %v763 = vrot.slane %v629, 7
        %v764 = vrot.slane %v630, 7
        %v765 = vsel %vm697, %v763, %v764
        %v766 = vrot.slane %v631, 7
        %v767 = vsel %vm697, %v764, %v766
        %v768 = vrot.slane %v633, 7
        %v769 = vrot.slane %v634, 7
        %v770 = vsel %vm697, %v768, %v769
        %v771 = vrot.slane %v635, 7
        %v772 = vsel %vm697, %v769, %v771
        %v773 = vrot.slane %v637, 7
        %v774 = vrot.slane %v638, 7
        %v775 = vsel %vm697, %v773, %v774
        %v776 = vrot.slane %v639, 7
        %v777 = vsel %vm697, %v774, %v776
        %v778 = vld [vmem:[%s1] sm:$0xf]
        %s779 = scalar_lea.vmem %s1, 4
        %v780 = vld [vmem:[%s779] sm:$0xf]
        %v781 = vsel %vm544, %v578, 0
        %v783 = vsel %vm544, %v579, 0
        %v785 = vsel %vm544, %v582, 0
        %v787 = vsel %vm544, %v583, 0
        %v789 = vsel %vm544, %v586, 0
        %v791 = vsel %vm544, %v587, 0
        %v793 = vsel %vm544, %v590, 0
        %v795 = vsel %vm544, %v591, 0
        %v797 = vsel %vm544, %v594, 0
        %v799 = vsel %vm544, %v595, 0
        %v801 = vsel %vm544, %v598, 0
        %v803 = vsel %vm544, %v599, 0
        %v805 = vsel %vm544, %v602, 0
        %v807 = vsel %vm544, %v603, 0
        %v809 = vsel %vm544, %v606, 0
        %v811 = vsel %vm544, %v607, 0
        %v813 = vsel %vm544, %v610, 0
        %v815 = vsel %vm544, %v611, 0
        %v817 = vsel %vm544, %v614, 0
        %v819 = vsel %vm544, %v615, 0
        %v821 = vsel %vm544, %v618, 0
        %v823 = vsel %vm544, %v619, 0
        %v825 = vsel %vm544, %v622, 0
        %v827 = vsel %vm544, %v623, 0
        %v829 = vsel %vm544, %v626, 0
        %v831 = vsel %vm544, %v627, 0
        %v833 = vsel %vm544, %v630, 0
        %v835 = vsel %vm544, %v631, 0
        %v837 = vsel %vm544, %v634, 0
        %v839 = vsel %vm544, %v635, 0
        %v841 = vsel %vm544, %v638, 0
        %v843 = vsel %vm544, %v639, 0
        %vm845 = vcmask 1043456
        %v847 = vsel %vm845, %v780, 0
        %849 = vmatprep.subr.mxu0 0.0
        %850 = vmatpush1.msra.mxu0 %v847
        %851 = vmatprep.subr.mxu0 0.0
        %852 = vmatpush1.msra.mxu0 0.0
        %853 = vmatprep.subr.mxu0 0.0
        %854 = vmatpush1.msra.mxu0 0.0
        %855 = vmatprep.subr.mxu0 0.0
        %856 = vmatpush1.msra.mxu0 0.0
        %857 = vmatprep.subr.mxu0 0.0
        %858 = vmatpush1.msra.mxu0 0.0
        %859 = vmatprep.subr.mxu0 0.0
        %860 = vmatpush1.msra.mxu0 0.0
        %861 = vmatprep.subr.mxu0 0.0
        %862 = vmatpush1.msra.mxu0 0.0
        %863 = vmatprep.subr.mxu0 0.0
        %864 = vmatpush1.msra.mxu0 0.0
        %865 = vmatprep.subr.mxu0 0.0
        %866 = vmatpush1.msra.mxu0 0.0
        %867 = vmatprep.subr.mxu0 0.0
        %868 = vmatpush1.msra.mxu0 0.0
        %869 = vmatprep.subr.mxu0 0.0
        %870 = vmatpush1.msra.mxu0 0.0
        %871 = vmatprep.subr.mxu0 0.0
        %872 = vmatpush1.msra.mxu0 0.0
        %873 = vmatprep.subr.mxu0 0.0
        %874 = vmatpush1.msra.mxu0 0.0
        %875 = vmatprep.subr.mxu0 0.0
        %876 = vmatpush1.msra.mxu0 0.0
        %877 = vmatprep.subr.mxu0 0.0
        %878 = vmatpush1.msra.mxu0 0.0
        %879 = vmatprep.subr.mxu0 0.0
        %880 = vmatpush1.msra.mxu0 0.0
        %881 = vmatprep.subr.mxu0 0.0
        %882 = vmatpush1.msra.mxu0 0.0
        %883 = vmatprep.subr.mxu0 0.0
        %884 = vmatpush1.msra.mxu0 0.0
        %885 = vmatprep.subr.mxu0 0.0
        %886 = vmatpush1.msra.mxu0 0.0
        %887 = vmatprep.subr.mxu0 0.0
        %888 = vmatpush1.msra.mxu0 0.0
        %889 = vmatprep.subr.mxu0 0.0
        %890 = vmatpush1.msra.mxu0 0.0
        %891 = vmatprep.subr.mxu0 0.0
        %892 = vmatpush1.msra.mxu0 0.0
        %893 = vmatprep.subr.mxu0 0.0
        %894 = vmatpush1.msra.mxu0 0.0
        %895 = vmatprep.subr.mxu0 0.0
        %896 = vmatpush1.msra.mxu0 0.0
        %897 = vmatprep.subr.mxu0 0.0
        %898 = vmatpush1.msra.mxu0 0.0
        %899 = vmatprep.subr.mxu0 0.0
        %900 = vmatpush1.msra.mxu0 0.0
        %901 = vmatprep.subr.mxu0 0.0
        %902 = vmatpush1.msra.mxu0 0.0
        %903 = vmatprep.subr.mxu0 0.0
        %904 = vmatpush1.msra.mxu0 0.0
        %905 = vmatprep.subr.mxu0 0.0
        %906 = vmatpush1.msra.mxu0 0.0
        %907 = vmatprep.subr.mxu0 0.0
        %908 = vmatpush1.msra.mxu0 0.0
        %909 = vmatprep.subr.mxu0 0.0
        %910 = vmatpush1.msra.mxu0 0.0
        %911 = vmatprep.subr.mxu0 0.0
        %912 = vmatpush1.msra.mxu0 0.0
        %913 = vmatprep.mubr.f32.mxu0 0.0
        %914 = vmatmul.mubr.f32.gmra.mrb[0].mxu0 %v781
        %v915 = vpop.f32.mrb[0].mxu0
        %v916 = vadd.f32 0.0, %v915
        %v917 = vpop.f32.mrb[0].mxu0
        %918 = vmatprep.mubr.f32.mxu0 0.0
        %919 = vmatmul.mubr.f32.gmra.mrb[0].mxu0 %v783
        %v920 = vpop.f32.mrb[0].mxu0
        %v921 = vadd.f32 0.0, %v920
        %v922 = vpop.f32.mrb[0].mxu0
        %923 = vmatprep.mubr.f32.mxu0 0.0
        %924 = vmatmul.mubr.f32.gmra.mrb[0].mxu0 %v785
        %v925 = vpop.f32.mrb[0].mxu0
        %v926 = vadd.f32 0.0, %v925
        %v927 = vpop.f32.mrb[0].mxu0
        %928 = vmatprep.mubr.f32.mxu0 0.0
        %929 = vmatmul.mubr.f32.gmra.mrb[0].mxu0 %v787
        %v930 = vpop.f32.mrb[0].mxu0
        %v931 = vadd.f32 0.0, %v930
        %v932 = vpop.f32.mrb[0].mxu0
        %933 = vmatprep.mubr.f32.mxu0 0.0
        %934 = vmatmul.mubr.f32.gmra.mrb[0].mxu0 %v789
        %v935 = vpop.f32.mrb[0].mxu0
        %v936 = vadd.f32 0.0, %v935
        %v937 = vpop.f32.mrb[0].mxu0
        %938 = vmatprep.mubr.f32.mxu0 0.0
        %939 = vmatmul.mubr.f32.gmra.mrb[0].mxu0 %v791
        %v940 = vpop.f32.mrb[0].mxu0
        %v941 = vadd.f32 0.0, %v940
        %v942 = vpop.f32.mrb[0].mxu0
        %943 = vmatprep.mubr.f32.mxu0 0.0
        %944 = vmatmul.mubr.f32.gmra.mrb[0].mxu0 %v793
        %v945 = vpop.f32.mrb[0].mxu0
        %v946 = vadd.f32 0.0, %v945
        %v947 = vpop.f32.mrb[0].mxu0
        %948 = vmatprep.mubr.f32.mxu0 0.0
        %949 = vmatmul.mubr.f32.gmra.mrb[0].mxu0 %v795
        %v950 = vpop.f32.mrb[0].mxu0
        %v951 = vadd.f32 0.0, %v950
        %v952 = vpop.f32.mrb[0].mxu0
        %953 = vmatprep.mubr.f32.mxu0 0.0
        %954 = vmatmul.mubr.f32.gmra.mrb[0].mxu0 %v797
        %v955 = vpop.f32.mrb[0].mxu0
        %v956 = vadd.f32 0.0, %v955
        %v957 = vpop.f32.mrb[0].mxu0
        %958 = vmatprep.mubr.f32.mxu0 0.0
        %959 = vmatmul.mubr.f32.gmra.mrb[0].mxu0 %v799
        %v960 = vpop.f32.mrb[0].mxu0
        %v961 = vadd.f32 0.0, %v960
        %v962 = vpop.f32.mrb[0].mxu0
        %963 = vmatprep.mubr.f32.mxu0 0.0
        %964 = vmatmul.mubr.f32.gmra.mrb[0].mxu0 %v801
        %v965 = vpop.f32.mrb[0].mxu0
        %v966 = vadd.f32 0.0, %v965
        %v967 = vpop.f32.mrb[0].mxu0
        %968 = vmatprep.mubr.f32.mxu0 0.0
        %969 = vmatmul.mubr.f32.gmra.mrb[0].mxu0 %v803
        %v970 = vpop.f32.mrb[0].mxu0
        %v971 = vadd.f32 0.0, %v970
        %v972 = vpop.f32.mrb[0].mxu0
        %973 = vmatprep.mubr.f32.mxu0 0.0
        %974 = vmatmul.mubr.f32.gmra.mrb[0].mxu0 %v805
        %v975 = vpop.f32.mrb[0].mxu0
        %v976 = vadd.f32 0.0, %v975
        %v977 = vpop.f32.mrb[0].mxu0
        %978 = vmatprep.mubr.f32.mxu0 0.0
        %979 = vmatmul.mubr.f32.gmra.mrb[0].mxu0 %v807
        %v980 = vpop.f32.mrb[0].mxu0
        %v981 = vadd.f32 0.0, %v980
        %v982 = vpop.f32.mrb[0].mxu0
        %983 = vmatprep.mubr.f32.mxu0 0.0
        %984 = vmatmul.mubr.f32.gmra.mrb[0].mxu0 %v809
        %v985 = vpop.f32.mrb[0].mxu0
        %v986 = vadd.f32 0.0, %v985
        %v987 = vpop.f32.mrb[0].mxu0
        %988 = vmatprep.mubr.f32.mxu0 0.0
        %989 = vmatmul.mubr.f32.gmra.mrb[0].mxu0 %v811
        %v990 = vpop.f32.mrb[0].mxu0
        %v991 = vadd.f32 0.0, %v990
        %v992 = vpop.f32.mrb[0].mxu0
        %993 = vmatprep.mubr.f32.mxu0 0.0
        %994 = vmatmul.mubr.f32.gmra.mrb[0].mxu0 %v813
        %v995 = vpop.f32.mrb[0].mxu0
        %v996 = vadd.f32 0.0, %v995
        %v997 = vpop.f32.mrb[0].mxu0
        %998 = vmatprep.mubr.f32.mxu0 0.0
        %999 = vmatmul.mubr.f32.gmra.mrb[0].mxu0 %v815
        %v1000 = vpop.f32.mrb[0].mxu0
        %v1001 = vadd.f32 0.0, %v1000
        %v1002 = vpop.f32.mrb[0].mxu0
        %1003 = vmatprep.mubr.f32.mxu0 0.0
        %1004 = vmatmul.mubr.f32.gmra.mrb[0].mxu0 %v817
        %v1005 = vpop.f32.mrb[0].mxu0
        %v1006 = vadd.f32 0.0, %v1005
        %v1007 = vpop.f32.mrb[0].mxu0
        %1008 = vmatprep.mubr.f32.mxu0 0.0
        %1009 = vmatmul.mubr.f32.gmra.mrb[0].mxu0 %v819
        %v1010 = vpop.f32.mrb[0].mxu0
        %v1011 = vadd.f32 0.0, %v1010
        %v1012 = vpop.f32.mrb[0].mxu0
        %1013 = vmatprep.mubr.f32.mxu0 0.0
        %1014 = vmatmul.mubr.f32.gmra.mrb[0].mxu0 %v821
        %v1015 = vpop.f32.mrb[0].mxu0
        %v1016 = vadd.f32 0.0, %v1015
        %v1017 = vpop.f32.mrb[0].mxu0
        %1018 = vmatprep.mubr.f32.mxu0 0.0
        %1019 = vmatmul.mubr.f32.gmra.mrb[0].mxu0 %v823
        %v1020 = vpop.f32.mrb[0].mxu0
        %v1021 = vadd.f32 0.0, %v1020
        %v1022 = vpop.f32.mrb[0].mxu0
        %1023 = vmatprep.mubr.f32.mxu0 0.0
        %1024 = vmatmul.mubr.f32.gmra.mrb[0].mxu0 %v825
        %v1025 = vpop.f32.mrb[0].mxu0
        %v1026 = vadd.f32 0.0, %v1025
        %v1027 = vpop.f32.mrb[0].mxu0
        %1028 = vmatprep.mubr.f32.mxu0 0.0
        %1029 = vmatmul.mubr.f32.gmra.mrb[0].mxu0 %v827
        %v1030 = vpop.f32.mrb[0].mxu0
        %v1031 = vadd.f32 0.0, %v1030
        %v1032 = vpop.f32.mrb[0].mxu0
        %1033 = vmatprep.mubr.f32.mxu0 0.0
        %1034 = vmatmul.mubr.f32.gmra.mrb[0].mxu0 %v829
        %v1035 = vpop.f32.mrb[0].mxu0
        %v1036 = vadd.f32 0.0, %v1035
        %v1037 = vpop.f32.mrb[0].mxu0
        %1038 = vmatprep.mubr.f32.mxu0 0.0
        %1039 = vmatmul.mubr.f32.gmra.mrb[0].mxu0 %v831
        %v1040 = vpop.f32.mrb[0].mxu0
        %v1041 = vadd.f32 0.0, %v1040
        %v1042 = vpop.f32.mrb[0].mxu0
        %1043 = vmatprep.mubr.f32.mxu0 0.0
        %1044 = vmatmul.mubr.f32.gmra.mrb[0].mxu0 %v833
        %v1045 = vpop.f32.mrb[0].mxu0
        %v1046 = vadd.f32 0.0, %v1045
        %v1047 = vpop.f32.mrb[0].mxu0
        %1048 = vmatprep.mubr.f32.mxu0 0.0
        %1049 = vmatmul.mubr.f32.gmra.mrb[0].mxu0 %v835
        %v1050 = vpop.f32.mrb[0].mxu0
        %v1051 = vadd.f32 0.0, %v1050
        %v1052 = vpop.f32.mrb[0].mxu0
        %1053 = vmatprep.mubr.f32.mxu0 0.0
        %1054 = vmatmul.mubr.f32.gmra.mrb[0].mxu0 %v837
        %v1055 = vpop.f32.mrb[0].mxu0
        %v1056 = vadd.f32 0.0, %v1055
        %v1057 = vpop.f32.mrb[0].mxu0
        %1058 = vmatprep.mubr.f32.mxu0 0.0
        %1059 = vmatmul.mubr.f32.gmra.mrb[0].mxu0 %v839
        %v1060 = vpop.f32.mrb[0].mxu0
        %v1061 = vadd.f32 0.0, %v1060
        %v1062 = vpop.f32.mrb[0].mxu0
        %1063 = vmatprep.mubr.f32.mxu0 0.0
        %1064 = vmatmul.mubr.f32.gmra.mrb[0].mxu0 %v841
        %v1065 = vpop.f32.mrb[0].mxu0
        %v1066 = vadd.f32 0.0, %v1065
        %v1067 = vpop.f32.mrb[0].mxu0
        %1068 = vmatprep.mubr.f32.mxu0 0.0
        %1069 = vmatmul.mubr.f32.gmra.mrb[0].mxu0 %v843
        %v1070 = vpop.f32.mrb[0].mxu0
        %v1071 = vadd.f32 0.0, %v1070
        %v1072 = vpop.f32.mrb[0].mxu0
        %1073 = vdwg.mxu0
        %v1074 = vsel %vm544, %v700, 0
        %v1076 = vsel %vm544, %v702, 0
        %v1078 = vsel %vm544, %v705, 0
        %v1080 = vsel %vm544, %v707, 0
        %v1082 = vsel %vm544, %v710, 0
        %v1084 = vsel %vm544, %v712, 0
        %v1086 = vsel %vm544, %v715, 0
        %v1088 = vsel %vm544, %v717, 0
        %v1090 = vsel %vm544, %v720, 0
        %v1092 = vsel %vm544, %v722, 0
        %v1094 = vsel %vm544, %v725, 0
        %v1096 = vsel %vm544, %v727, 0
        %v1098 = vsel %vm544, %v730, 0
        %v1100 = vsel %vm544, %v732, 0
        %v1102 = vsel %vm544, %v735, 0
        %v1104 = vsel %vm544, %v737, 0
        %v1106 = vsel %vm544, %v740, 0
        %v1108 = vsel %vm544, %v742, 0
        %v1110 = vsel %vm544, %v745, 0
        %v1112 = vsel %vm544, %v747, 0
        %v1114 = vsel %vm544, %v750, 0
        %v1116 = vsel %vm544, %v752, 0
        %v1118 = vsel %vm544, %v755, 0
        %v1120 = vsel %vm544, %v757, 0
        %v1122 = vsel %vm544, %v760, 0
        %v1124 = vsel %vm544, %v762, 0
        %v1126 = vsel %vm544, %v765, 0
        %v1128 = vsel %vm544, %v767, 0
        %v1130 = vsel %vm544, %v770, 0
        %v1132 = vsel %vm544, %v772, 0
        %v1134 = vsel %vm544, %v775, 0
        %v1136 = vsel %vm544, %v777, 0
        %v1139 = vsel %vm845, %v778, 0
        %1141 = vmatprep.subr.mxu0 0.0
        %1142 = vmatpush1.msra.mxu0 %v1139
        %1143 = vmatprep.subr.mxu0 0.0
        %1144 = vmatpush1.msra.mxu0 0.0
        %1145 = vmatprep.subr.mxu0 0.0
        %1146 = vmatpush1.msra.mxu0 0.0
        %1147 = vmatprep.subr.mxu0 0.0
        %1148 = vmatpush1.msra.mxu0 0.0
        %1149 = vmatprep.subr.mxu0 0.0
        %1150 = vmatpush1.msra.mxu0 0.0
        %1151 = vmatprep.subr.mxu0 0.0
        %1152 = vmatpush1.msra.mxu0 0.0
        %1153 = vmatprep.subr.mxu0 0.0
        %1154 = vmatpush1.msra.mxu0 0.0
        %1155 = vmatprep.subr.mxu0 0.0
        %1156 = vmatpush1.msra.mxu0 0.0
        %1157 = vmatprep.subr.mxu0 0.0
        %1158 = vmatpush1.msra.mxu0 0.0
        %1159 = vmatprep.subr.mxu0 0.0
        %1160 = vmatpush1.msra.mxu0 0.0
        %1161 = vmatprep.subr.mxu0 0.0
        %1162 = vmatpush1.msra.mxu0 0.0
        %1163 = vmatprep.subr.mxu0 0.0
        %1164 = vmatpush1.msra.mxu0 0.0
        %1165 = vmatprep.subr.mxu0 0.0
        %1166 = vmatpush1.msra.mxu0 0.0
        %1167 = vmatprep.subr.mxu0 0.0
        %1168 = vmatpush1.msra.mxu0 0.0
        %1169 = vmatprep.subr.mxu0 0.0
        %1170 = vmatpush1.msra.mxu0 0.0
        %1171 = vmatprep.subr.mxu0 0.0
        %1172 = vmatpush1.msra.mxu0 0.0
        %1173 = vmatprep.subr.mxu0 0.0
        %1174 = vmatpush1.msra.mxu0 0.0
        %1175 = vmatprep.subr.mxu0 0.0
        %1176 = vmatpush1.msra.mxu0 0.0
        %1177 = vmatprep.subr.mxu0 0.0
        %1178 = vmatpush1.msra.mxu0 0.0
        %1179 = vmatprep.subr.mxu0 0.0
        %1180 = vmatpush1.msra.mxu0 0.0
        %1181 = vmatprep.subr.mxu0 0.0
        %1182 = vmatpush1.msra.mxu0 0.0
        %1183 = vmatprep.subr.mxu0 0.0
        %1184 = vmatpush1.msra.mxu0 0.0
        %1185 = vmatprep.subr.mxu0 0.0
        %1186 = vmatpush1.msra.mxu0 0.0
        %1187 = vmatprep.subr.mxu0 0.0
        %1188 = vmatpush1.msra.mxu0 0.0
        %1189 = vmatprep.subr.mxu0 0.0
        %1190 = vmatpush1.msra.mxu0 0.0
        %1191 = vmatprep.subr.mxu0 0.0
        %1192 = vmatpush1.msra.mxu0 0.0
        %1193 = vmatprep.subr.mxu0 0.0
        %1194 = vmatpush1.msra.mxu0 0.0
        %1195 = vmatprep.subr.mxu0 0.0
        %1196 = vmatpush1.msra.mxu0 0.0
        %1197 = vmatprep.subr.mxu0 0.0
        %1198 = vmatpush1.msra.mxu0 0.0
        %1199 = vmatprep.subr.mxu0 0.0
        %1200 = vmatpush1.msra.mxu0 0.0
        %1201 = vmatprep.subr.mxu0 0.0
        %1202 = vmatpush1.msra.mxu0 0.0
        %1203 = vmatprep.subr.mxu0 0.0
        %1204 = vmatpush1.msra.mxu0 0.0
        %1205 = vmatprep.mubr.f32.mxu0 0.0
        %1206 = vmatmul.mubr.f32.gmra.mrb[0].mxu0 %v1074
        %v1207 = vpop.f32.mrb[0].mxu0
        %v1208 = vadd.f32 %v916, %v1207
        %v1209 = vpop.f32.mrb[0].mxu0
        %1210 = vmatprep.mubr.f32.mxu0 0.0
        %1211 = vmatmul.mubr.f32.gmra.mrb[0].mxu0 %v1076
        %v1212 = vpop.f32.mrb[0].mxu0
        %v1213 = vadd.f32 %v921, %v1212
        %v1214 = vpop.f32.mrb[0].mxu0
        %1215 = vmatprep.mubr.f32.mxu0 0.0
        %1216 = vmatmul.mubr.f32.gmra.mrb[0].mxu0 %v1078
        %v1217 = vpop.f32.mrb[0].mxu0
        %v1218 = vadd.f32 %v926, %v1217
        %v1219 = vpop.f32.mrb[0].mxu0
        %1220 = vmatprep.mubr.f32.mxu0 0.0
        %1221 = vmatmul.mubr.f32.gmra.mrb[0].mxu0 %v1080
        %v1222 = vpop.f32.mrb[0].mxu0
        %v1223 = vadd.f32 %v931, %v1222
        %v1224 = vpop.f32.mrb[0].mxu0
        %1225 = vmatprep.mubr.f32.mxu0 0.0
        %1226 = vmatmul.mubr.f32.gmra.mrb[0].mxu0 %v1082
        %v1227 = vpop.f32.mrb[0].mxu0
        %v1228 = vadd.f32 %v936, %v1227
        %v1229 = vpop.f32.mrb[0].mxu0
        %1230 = vmatprep.mubr.f32.mxu0 0.0
        %1231 = vmatmul.mubr.f32.gmra.mrb[0].mxu0 %v1084
        %v1232 = vpop.f32.mrb[0].mxu0
        %v1233 = vadd.f32 %v941, %v1232
        %v1234 = vpop.f32.mrb[0].mxu0
        %1235 = vmatprep.mubr.f32.mxu0 0.0
        %1236 = vmatmul.mubr.f32.gmra.mrb[0].mxu0 %v1086
        %v1237 = vpop.f32.mrb[0].mxu0
        %v1238 = vadd.f32 %v946, %v1237
        %v1239 = vpop.f32.mrb[0].mxu0
        %1240 = vmatprep.mubr.f32.mxu0 0.0
        %1241 = vmatmul.mubr.f32.gmra.mrb[0].mxu0 %v1088
        %v1242 = vpop.f32.mrb[0].mxu0
        %v1243 = vadd.f32 %v951, %v1242
        %v1244 = vpop.f32.mrb[0].mxu0
        %1245 = vmatprep.mubr.f32.mxu0 0.0
        %1246 = vmatmul.mubr.f32.gmra.mrb[0].mxu0 %v1090
        %v1247 = vpop.f32.mrb[0].mxu0
        %v1248 = vadd.f32 %v956, %v1247
        %v1249 = vpop.f32.mrb[0].mxu0
        %1250 = vmatprep.mubr.f32.mxu0 0.0
        %1251 = vmatmul.mubr.f32.gmra.mrb[0].mxu0 %v1092
        %v1252 = vpop.f32.mrb[0].mxu0
        %v1253 = vadd.f32 %v961, %v1252
        %v1254 = vpop.f32.mrb[0].mxu0
        %1255 = vmatprep.mubr.f32.mxu0 0.0
        %1256 = vmatmul.mubr.f32.gmra.mrb[0].mxu0 %v1094
        %v1257 = vpop.f32.mrb[0].mxu0
        %v1258 = vadd.f32 %v966, %v1257
        %v1259 = vpop.f32.mrb[0].mxu0
        %1260 = vmatprep.mubr.f32.mxu0 0.0
        %1261 = vmatmul.mubr.f32.gmra.mrb[0].mxu0 %v1096
        %v1262 = vpop.f32.mrb[0].mxu0
        %v1263 = vadd.f32 %v971, %v1262
        %v1264 = vpop.f32.mrb[0].mxu0
        %1265 = vmatprep.mubr.f32.mxu0 0.0
        %1266 = vmatmul.mubr.f32.gmra.mrb[0].mxu0 %v1098
        %v1267 = vpop.f32.mrb[0].mxu0
        %v1268 = vadd.f32 %v976, %v1267
        %v1269 = vpop.f32.mrb[0].mxu0
        %1270 = vmatprep.mubr.f32.mxu0 0.0
        %1271 = vmatmul.mubr.f32.gmra.mrb[0].mxu0 %v1100
        %v1272 = vpop.f32.mrb[0].mxu0
        %v1273 = vadd.f32 %v981, %v1272
        %v1274 = vpop.f32.mrb[0].mxu0
        %1275 = vmatprep.mubr.f32.mxu0 0.0
        %1276 = vmatmul.mubr.f32.gmra.mrb[0].mxu0 %v1102
        %v1277 = vpop.f32.mrb[0].mxu0
        %v1278 = vadd.f32 %v986, %v1277
        %v1279 = vpop.f32.mrb[0].mxu0
        %1280 = vmatprep.mubr.f32.mxu0 0.0
        %1281 = vmatmul.mubr.f32.gmra.mrb[0].mxu0 %v1104
        %v1282 = vpop.f32.mrb[0].mxu0
        %v1283 = vadd.f32 %v991, %v1282
        %v1284 = vpop.f32.mrb[0].mxu0
        %1285 = vmatprep.mubr.f32.mxu0 0.0
        %1286 = vmatmul.mubr.f32.gmra.mrb[0].mxu0 %v1106
        %v1287 = vpop.f32.mrb[0].mxu0
        %v1288 = vadd.f32 %v996, %v1287
        %v1289 = vpop.f32.mrb[0].mxu0
        %1290 = vmatprep.mubr.f32.mxu0 0.0
        %1291 = vmatmul.mubr.f32.gmra.mrb[0].mxu0 %v1108
        %v1292 = vpop.f32.mrb[0].mxu0
        %v1293 = vadd.f32 %v1001, %v1292
        %v1294 = vpop.f32.mrb[0].mxu0
        %1295 = vmatprep.mubr.f32.mxu0 0.0
        %1296 = vmatmul.mubr.f32.gmra.mrb[0].mxu0 %v1110
        %v1297 = vpop.f32.mrb[0].mxu0
        %v1298 = vadd.f32 %v1006, %v1297
        %v1299 = vpop.f32.mrb[0].mxu0
        %1300 = vmatprep.mubr.f32.mxu0 0.0
        %1301 = vmatmul.mubr.f32.gmra.mrb[0].mxu0 %v1112
        %v1302 = vpop.f32.mrb[0].mxu0
        %v1303 = vadd.f32 %v1011, %v1302
        %v1304 = vpop.f32.mrb[0].mxu0
        %1305 = vmatprep.mubr.f32.mxu0 0.0
        %1306 = vmatmul.mubr.f32.gmra.mrb[0].mxu0 %v1114
        %v1307 = vpop.f32.mrb[0].mxu0
        %v1308 = vadd.f32 %v1016, %v1307
        %v1309 = vpop.f32.mrb[0].mxu0
        %1310 = vmatprep.mubr.f32.mxu0 0.0
        %1311 = vmatmul.mubr.f32.gmra.mrb[0].mxu0 %v1116
        %v1312 = vpop.f32.mrb[0].mxu0
        %v1313 = vadd.f32 %v1021, %v1312
        %v1314 = vpop.f32.mrb[0].mxu0
        %1315 = vmatprep.mubr.f32.mxu0 0.0
        %1316 = vmatmul.mubr.f32.gmra.mrb[0].mxu0 %v1118
        %v1317 = vpop.f32.mrb[0].mxu0
        %v1318 = vadd.f32 %v1026, %v1317
        %v1319 = vpop.f32.mrb[0].mxu0
        %1320 = vmatprep.mubr.f32.mxu0 0.0
        %1321 = vmatmul.mubr.f32.gmra.mrb[0].mxu0 %v1120
        %v1322 = vpop.f32.mrb[0].mxu0
        %v1323 = vadd.f32 %v1031, %v1322
        %v1324 = vpop.f32.mrb[0].mxu0
        %1325 = vmatprep.mubr.f32.mxu0 0.0
        %1326 = vmatmul.mubr.f32.gmra.mrb[0].mxu0 %v1122
        %v1327 = vpop.f32.mrb[0].mxu0
        %v1328 = vadd.f32 %v1036, %v1327
        %v1329 = vpop.f32.mrb[0].mxu0
        %1330 = vmatprep.mubr.f32.mxu0 0.0
        %1331 = vmatmul.mubr.f32.gmra.mrb[0].mxu0 %v1124
        %v1332 = vpop.f32.mrb[0].mxu0
        %v1333 = vadd.f32 %v1041, %v1332
        %v1334 = vpop.f32.mrb[0].mxu0
        %1335 = vmatprep.mubr.f32.mxu0 0.0
        %1336 = vmatmul.mubr.f32.gmra.mrb[0].mxu0 %v1126
        %v1337 = vpop.f32.mrb[0].mxu0
        %v1338 = vadd.f32 %v1046, %v1337
        %v1339 = vpop.f32.mrb[0].mxu0
        %1340 = vmatprep.mubr.f32.mxu0 0.0
        %1341 = vmatmul.mubr.f32.gmra.mrb[0].mxu0 %v1128
        %v1342 = vpop.f32.mrb[0].mxu0
        %v1343 = vadd.f32 %v1051, %v1342
        %v1344 = vpop.f32.mrb[0].mxu0
        %1345 = vmatprep.mubr.f32.mxu0 0.0
        %1346 = vmatmul.mubr.f32.gmra.mrb[0].mxu0 %v1130
        %v1347 = vpop.f32.mrb[0].mxu0
        %v1348 = vadd.f32 %v1056, %v1347
        %v1349 = vpop.f32.mrb[0].mxu0
        %1350 = vmatprep.mubr.f32.mxu0 0.0
        %1351 = vmatmul.mubr.f32.gmra.mrb[0].mxu0 %v1132
        %v1352 = vpop.f32.mrb[0].mxu0
        %v1353 = vadd.f32 %v1061, %v1352
        %v1354 = vpop.f32.mrb[0].mxu0
        %1355 = vmatprep.mubr.f32.mxu0 0.0
        %1356 = vmatmul.mubr.f32.gmra.mrb[0].mxu0 %v1134
        %v1357 = vpop.f32.mrb[0].mxu0
        %v1358 = vadd.f32 %v1066, %v1357
        %v1359 = vpop.f32.mrb[0].mxu0
        %1360 = vmatprep.mubr.f32.mxu0 0.0
        %1361 = vmatmul.mubr.f32.gmra.mrb[0].mxu0 %v1136
        %v1362 = vpop.f32.mrb[0].mxu0
        %v1363 = vadd.f32 %v1071, %v1362
        %v1364 = vpop.f32.mrb[0].mxu0
        %1365 = vdwg.mxu0
        %vm1382 = vcmask 1046528
        %v1383 = vrot.slane %v578, 1
        %v1384 = vrot.slane %v579, 1
        %v1385 = vsel %vm1382, %v1383, %v1384
        %v1386 = vrot.slane %v580, 1
        %v1387 = vsel %vm1382, %v1384, %v1386
        %v1388 = vrot.slane %v582, 1
        %v1389 = vrot.slane %v583, 1
        %v1390 = vsel %vm1382, %v1388, %v1389
        %v1391 = vrot.slane %v584, 1
        %v1392 = vsel %vm1382, %v1389, %v1391
        %v1393 = vrot.slane %v586, 1
        %v1394 = vrot.slane %v587, 1
        %v1395 = vsel %vm1382, %v1393, %v1394
        %v1396 = vrot.slane %v588, 1
        %v1397 = vsel %vm1382, %v1394, %v1396
        %v1398 = vrot.slane %v590, 1
        %v1399 = vrot.slane %v591, 1
        %v1400 = vsel %vm1382, %v1398, %v1399
        %v1401 = vrot.slane %v592, 1
        %v1402 = vsel %vm1382, %v1399, %v1401
        %v1403 = vrot.slane %v594, 1
        %v1404 = vrot.slane %v595, 1
        %v1405 = vsel %vm1382, %v1403, %v1404
        %v1406 = vrot.slane %v596, 1
        %v1407 = vsel %vm1382, %v1404, %v1406
        %v1408 = vrot.slane %v598, 1
        %v1409 = vrot.slane %v599, 1
        %v1410 = vsel %vm1382, %v1408, %v1409
        %v1411 = vrot.slane %v600, 1
        %v1412 = vsel %vm1382, %v1409, %v1411
        %v1413 = vrot.slane %v602, 1
        %v1414 = vrot.slane %v603, 1
        %v1415 = vsel %vm1382, %v1413, %v1414
        %v1416 = vrot.slane %v604, 1
        %v1417 = vsel %vm1382, %v1414, %v1416
        %v1418 = vrot.slane %v606, 1
        %v1419 = vrot.slane %v607, 1
        %v1420 = vsel %vm1382, %v1418, %v1419
        %v1421 = vrot.slane %v608, 1
        %v1422 = vsel %vm1382, %v1419, %v1421
        %v1423 = vrot.slane %v610, 1
        %v1424 = vrot.slane %v611, 1
        %v1425 = vsel %vm1382, %v1423, %v1424
        %v1426 = vrot.slane %v612, 1
        %v1427 = vsel %vm1382, %v1424, %v1426
        %v1428 = vrot.slane %v614, 1
        %v1429 = vrot.slane %v615, 1
        %v1430 = vsel %vm1382, %v1428, %v1429
        %v1431 = vrot.slane %v616, 1
        %v1432 = vsel %vm1382, %v1429, %v1431
        %v1433 = vrot.slane %v618, 1
        %v1434 = vrot.slane %v619, 1
        %v1435 = vsel %vm1382, %v1433, %v1434
        %v1436 = vrot.slane %v620, 1
        %v1437 = vsel %vm1382, %v1434, %v1436
        %v1438 = vrot.slane %v622, 1
        %v1439 = vrot.slane %v623, 1
        %v1440 = vsel %vm1382, %v1438, %v1439
        %v1441 = vrot.slane %v624, 1
        %v1442 = vsel %vm1382, %v1439, %v1441
        %v1443 = vrot.slane %v626, 1
        %v1444 = vrot.slane %v627, 1
        %v1445 = vsel %vm1382, %v1443, %v1444
        %v1446 = vrot.slane %v628, 1
        %v1447 = vsel %vm1382, %v1444, %v1446
        %v1448 = vrot.slane %v630, 1
        %v1449 = vrot.slane %v631, 1
        %v1450 = vsel %vm1382, %v1448, %v1449
        %v1451 = vrot.slane %v632, 1
        %v1452 = vsel %vm1382, %v1449, %v1451
        %v1453 = vrot.slane %v634, 1
        %v1454 = vrot.slane %v635, 1
        %v1455 = vsel %vm1382, %v1453, %v1454
        %v1456 = vrot.slane %v636, 1
        %v1457 = vsel %vm1382, %v1454, %v1456
        %v1458 = vrot.slane %v638, 1
        %v1459 = vrot.slane %v639, 1
        %v1460 = vsel %vm1382, %v1458, %v1459
        %v1461 = vrot.slane %v640, 1
        %v1462 = vsel %vm1382, %v1459, %v1461
        %s1463 = scalar_lea.vmem %s1, 8
        %v1464 = vld [vmem:[%s1463] sm:$0xf]
        %v1465 = vsel %vm544, %v1385, 0
        %v1467 = vsel %vm544, %v1387, 0
        %v1469 = vsel %vm544, %v1390, 0
        %v1471 = vsel %vm544, %v1392, 0
        %v1473 = vsel %vm544, %v1395, 0
        %v1475 = vsel %vm544, %v1397, 0
        %v1477 = vsel %vm544, %v1400, 0
        %v1479 = vsel %vm544, %v1402, 0
        %v1481 = vsel %vm544, %v1405, 0
        %v1483 = vsel %vm544, %v1407, 0
        %v1485 = vsel %vm544, %v1410, 0
        %v1487 = vsel %vm544, %v1412, 0
        %v1489 = vsel %vm544, %v1415, 0
        %v1491 = vsel %vm544, %v1417, 0
        %v1493 = vsel %vm544, %v1420, 0
        %v1495 = vsel %vm544, %v1422, 0
        %v1497 = vsel %vm544, %v1425, 0
        %v1499 = vsel %vm544, %v1427, 0
        %v1501 = vsel %vm544, %v1430, 0
        %v1503 = vsel %vm544, %v1432, 0
        %v1505 = vsel %vm544, %v1435, 0
        %v1507 = vsel %vm544, %v1437, 0
        %v1509 = vsel %vm544, %v1440, 0
        %v1511 = vsel %vm544, %v1442, 0
        %v1513 = vsel %vm544, %v1445, 0
        %v1515 = vsel %vm544, %v1447, 0
        %v1517 = vsel %vm544, %v1450, 0
        %v1519 = vsel %vm544, %v1452, 0
        %v1521 = vsel %vm544, %v1455, 0
        %v1523 = vsel %vm544, %v1457, 0
        %v1525 = vsel %vm544, %v1460, 0
        %v1527 = vsel %vm544, %v1462, 0
        %v1530 = vsel %vm845, %v1464, 0
        %1532 = vmatprep.subr.mxu0 0.0
        %1533 = vmatpush1.msra.mxu0 %v1530
        %1534 = vmatprep.subr.mxu0 0.0
        %1535 = vmatpush1.msra.mxu0 0.0
        %1536 = vmatprep.subr.mxu0 0.0
        %1537 = vmatpush1.msra.mxu0 0.0
        %1538 = vmatprep.subr.mxu0 0.0
        %1539 = vmatpush1.msra.mxu0 0.0
        %1540 = vmatprep.subr.mxu0 0.0
        %1541 = vmatpush1.msra.mxu0 0.0
        %1542 = vmatprep.subr.mxu0 0.0
        %1543 = vmatpush1.msra.mxu0 0.0
        %1544 = vmatprep.subr.mxu0 0.0
        %1545 = vmatpush1.msra.mxu0 0.0
        %1546 = vmatprep.subr.mxu0 0.0
        %1547 = vmatpush1.msra.mxu0 0.0
        %1548 = vmatprep.subr.mxu0 0.0
        %1549 = vmatpush1.msra.mxu0 0.0
        %1550 = vmatprep.subr.mxu0 0.0
        %1551 = vmatpush1.msra.mxu0 0.0
        %1552 = vmatprep.subr.mxu0 0.0
        %1553 = vmatpush1.msra.mxu0 0.0
        %1554 = vmatprep.subr.mxu0 0.0
        %1555 = vmatpush1.msra.mxu0 0.0
        %1556 = vmatprep.subr.mxu0 0.0
        %1557 = vmatpush1.msra.mxu0 0.0
        %1558 = vmatprep.subr.mxu0 0.0
        %1559 = vmatpush1.msra.mxu0 0.0
        %1560 = vmatprep.subr.mxu0 0.0
        %1561 = vmatpush1.msra.mxu0 0.0
        %1562 = vmatprep.subr.mxu0 0.0
        %1563 = vmatpush1.msra.mxu0 0.0
        %1564 = vmatprep.subr.mxu0 0.0
        %1565 = vmatpush1.msra.mxu0 0.0
        %1566 = vmatprep.subr.mxu0 0.0
        %1567 = vmatpush1.msra.mxu0 0.0
        %1568 = vmatprep.subr.mxu0 0.0
        %1569 = vmatpush1.msra.mxu0 0.0
        %1570 = vmatprep.subr.mxu0 0.0
        %1571 = vmatpush1.msra.mxu0 0.0
        %1572 = vmatprep.subr.mxu0 0.0
        %1573 = vmatpush1.msra.mxu0 0.0
        %1574 = vmatprep.subr.mxu0 0.0
        %1575 = vmatpush1.msra.mxu0 0.0
        %1576 = vmatprep.subr.mxu0 0.0
        %1577 = vmatpush1.msra.mxu0 0.0
        %1578 = vmatprep.subr.mxu0 0.0
        %1579 = vmatpush1.msra.mxu0 0.0
        %1580 = vmatprep.subr.mxu0 0.0
        %1581 = vmatpush1.msra.mxu0 0.0
        %1582 = vmatprep.subr.mxu0 0.0
        %1583 = vmatpush1.msra.mxu0 0.0
        %1584 = vmatprep.subr.mxu0 0.0
        %1585 = vmatpush1.msra.mxu0 0.0
        %1586 = vmatprep.subr.mxu0 0.0
        %1587 = vmatpush1.msra.mxu0 0.0
        %1588 = vmatprep.subr.mxu0 0.0
        %1589 = vmatpush1.msra.mxu0 0.0
        %1590 = vmatprep.subr.mxu0 0.0
        %1591 = vmatpush1.msra.mxu0 0.0
        %1592 = vmatprep.subr.mxu0 0.0
        %1593 = vmatpush1.msra.mxu0 0.0
        %1594 = vmatprep.subr.mxu0 0.0
        %1595 = vmatpush1.msra.mxu0 0.0
        %1596 = vmatprep.mubr.f32.mxu0 0.0
        %1597 = vmatmul.mubr.f32.gmra.mrb[0].mxu0 %v1465
        %v1598 = vpop.f32.mrb[0].mxu0
        %v1599 = vadd.f32 0.0, %v1598
        %v1600 = vpop.f32.mrb[0].mxu0
        %1601 = vmatprep.mubr.f32.mxu0 0.0
        %1602 = vmatmul.mubr.f32.gmra.mrb[0].mxu0 %v1467
        %v1603 = vpop.f32.mrb[0].mxu0
        %v1604 = vadd.f32 0.0, %v1603
        %v1605 = vpop.f32.mrb[0].mxu0
        %1606 = vmatprep.mubr.f32.mxu0 0.0
        %1607 = vmatmul.mubr.f32.gmra.mrb[0].mxu0 %v1469
        %v1608 = vpop.f32.mrb[0].mxu0
        %v1609 = vadd.f32 0.0, %v1608
        %v1610 = vpop.f32.mrb[0].mxu0
        %1611 = vmatprep.mubr.f32.mxu0 0.0
        %1612 = vmatmul.mubr.f32.gmra.mrb[0].mxu0 %v1471
        %v1613 = vpop.f32.mrb[0].mxu0
        %v1614 = vadd.f32 0.0, %v1613
        %v1615 = vpop.f32.mrb[0].mxu0
        %1616 = vmatprep.mubr.f32.mxu0 0.0
        %1617 = vmatmul.mubr.f32.gmra.mrb[0].mxu0 %v1473
        %v1618 = vpop.f32.mrb[0].mxu0
        %v1619 = vadd.f32 0.0, %v1618
        %v1620 = vpop.f32.mrb[0].mxu0
        %1621 = vmatprep.mubr.f32.mxu0 0.0
        %1622 = vmatmul.mubr.f32.gmra.mrb[0].mxu0 %v1475
        %v1623 = vpop.f32.mrb[0].mxu0
        %v1624 = vadd.f32 0.0, %v1623
        %v1625 = vpop.f32.mrb[0].mxu0
        %1626 = vmatprep.mubr.f32.mxu0 0.0
        %1627 = vmatmul.mubr.f32.gmra.mrb[0].mxu0 %v1477
        %v1628 = vpop.f32.mrb[0].mxu0
        %v1629 = vadd.f32 0.0, %v1628
        %v1630 = vpop.f32.mrb[0].mxu0
        %1631 = vmatprep.mubr.f32.mxu0 0.0
        %1632 = vmatmul.mubr.f32.gmra.mrb[0].mxu0 %v1479
        %v1633 = vpop.f32.mrb[0].mxu0
        %v1634 = vadd.f32 0.0, %v1633
        %v1635 = vpop.f32.mrb[0].mxu0
        %1636 = vmatprep.mubr.f32.mxu0 0.0
        %1637 = vmatmul.mubr.f32.gmra.mrb[0].mxu0 %v1481
        %v1638 = vpop.f32.mrb[0].mxu0
        %v1639 = vadd.f32 0.0, %v1638
        %v1640 = vpop.f32.mrb[0].mxu0
        %1641 = vmatprep.mubr.f32.mxu0 0.0
        %1642 = vmatmul.mubr.f32.gmra.mrb[0].mxu0 %v1483
        %v1643 = vpop.f32.mrb[0].mxu0
        %v1644 = vadd.f32 0.0, %v1643
        %v1645 = vpop.f32.mrb[0].mxu0
        %1646 = vmatprep.mubr.f32.mxu0 0.0
        %1647 = vmatmul.mubr.f32.gmra.mrb[0].mxu0 %v1485
        %v1648 = vpop.f32.mrb[0].mxu0
        %v1649 = vadd.f32 0.0, %v1648
        %v1650 = vpop.f32.mrb[0].mxu0
        %1651 = vmatprep.mubr.f32.mxu0 0.0
        %1652 = vmatmul.mubr.f32.gmra.mrb[0].mxu0 %v1487
        %v1653 = vpop.f32.mrb[0].mxu0
        %v1654 = vadd.f32 0.0, %v1653
        %v1655 = vpop.f32.mrb[0].mxu0
        %1656 = vmatprep.mubr.f32.mxu0 0.0
        %1657 = vmatmul.mubr.f32.gmra.mrb[0].mxu0 %v1489
        %v1658 = vpop.f32.mrb[0].mxu0
        %v1659 = vadd.f32 0.0, %v1658
        %v1660 = vpop.f32.mrb[0].mxu0
        %1661 = vmatprep.mubr.f32.mxu0 0.0
        %1662 = vmatmul.mubr.f32.gmra.mrb[0].mxu0 %v1491
        %v1663 = vpop.f32.mrb[0].mxu0
        %v1664 = vadd.f32 0.0, %v1663
        %v1665 = vpop.f32.mrb[0].mxu0
        %1666 = vmatprep.mubr.f32.mxu0 0.0
        %1667 = vmatmul.mubr.f32.gmra.mrb[0].mxu0 %v1493
        %v1668 = vpop.f32.mrb[0].mxu0
        %v1669 = vadd.f32 0.0, %v1668
        %v1670 = vpop.f32.mrb[0].mxu0
        %1671 = vmatprep.mubr.f32.mxu0 0.0
        %1672 = vmatmul.mubr.f32.gmra.mrb[0].mxu0 %v1495
        %v1673 = vpop.f32.mrb[0].mxu0
        %v1674 = vadd.f32 0.0, %v1673
        %v1675 = vpop.f32.mrb[0].mxu0
        %1676 = vmatprep.mubr.f32.mxu0 0.0
        %1677 = vmatmul.mubr.f32.gmra.mrb[0].mxu0 %v1497
        %v1678 = vpop.f32.mrb[0].mxu0
        %v1679 = vadd.f32 0.0, %v1678
        %v1680 = vpop.f32.mrb[0].mxu0
        %1681 = vmatprep.mubr.f32.mxu0 0.0
        %1682 = vmatmul.mubr.f32.gmra.mrb[0].mxu0 %v1499
        %v1683 = vpop.f32.mrb[0].mxu0
        %v1684 = vadd.f32 0.0, %v1683
        %v1685 = vpop.f32.mrb[0].mxu0
        %1686 = vmatprep.mubr.f32.mxu0 0.0
        %1687 = vmatmul.mubr.f32.gmra.mrb[0].mxu0 %v1501
        %v1688 = vpop.f32.mrb[0].mxu0
        %v1689 = vadd.f32 0.0, %v1688
        %v1690 = vpop.f32.mrb[0].mxu0
        %1691 = vmatprep.mubr.f32.mxu0 0.0
        %1692 = vmatmul.mubr.f32.gmra.mrb[0].mxu0 %v1503
        %v1693 = vpop.f32.mrb[0].mxu0
        %v1694 = vadd.f32 0.0, %v1693
        %v1695 = vpop.f32.mrb[0].mxu0
        %1696 = vmatprep.mubr.f32.mxu0 0.0
        %1697 = vmatmul.mubr.f32.gmra.mrb[0].mxu0 %v1505
        %v1698 = vpop.f32.mrb[0].mxu0
        %v1699 = vadd.f32 0.0, %v1698
        %v1700 = vpop.f32.mrb[0].mxu0
        %1701 = vmatprep.mubr.f32.mxu0 0.0
        %1702 = vmatmul.mubr.f32.gmra.mrb[0].mxu0 %v1507
        %v1703 = vpop.f32.mrb[0].mxu0
        %v1704 = vadd.f32 0.0, %v1703
        %v1705 = vpop.f32.mrb[0].mxu0
        %1706 = vmatprep.mubr.f32.mxu0 0.0
        %1707 = vmatmul.mubr.f32.gmra.mrb[0].mxu0 %v1509
        %v1708 = vpop.f32.mrb[0].mxu0
        %v1709 = vadd.f32 0.0, %v1708
        %v1710 = vpop.f32.mrb[0].mxu0
        %1711 = vmatprep.mubr.f32.mxu0 0.0
        %1712 = vmatmul.mubr.f32.gmra.mrb[0].mxu0 %v1511
        %v1713 = vpop.f32.mrb[0].mxu0
        %v1714 = vadd.f32 0.0, %v1713
        %v1715 = vpop.f32.mrb[0].mxu0
        %1716 = vmatprep.mubr.f32.mxu0 0.0
        %1717 = vmatmul.mubr.f32.gmra.mrb[0].mxu0 %v1513
        %v1718 = vpop.f32.mrb[0].mxu0
        %v1719 = vadd.f32 0.0, %v1718
        %v1720 = vpop.f32.mrb[0].mxu0
        %1721 = vmatprep.mubr.f32.mxu0 0.0
        %1722 = vmatmul.mubr.f32.gmra.mrb[0].mxu0 %v1515
        %v1723 = vpop.f32.mrb[0].mxu0
        %v1724 = vadd.f32 0.0, %v1723
        %v1725 = vpop.f32.mrb[0].mxu0
        %1726 = vmatprep.mubr.f32.mxu0 0.0
        %1727 = vmatmul.mubr.f32.gmra.mrb[0].mxu0 %v1517
        %v1728 = vpop.f32.mrb[0].mxu0
        %v1729 = vadd.f32 0.0, %v1728
        %v1730 = vpop.f32.mrb[0].mxu0
        %1731 = vmatprep.mubr.f32.mxu0 0.0
        %1732 = vmatmul.mubr.f32.gmra.mrb[0].mxu0 %v1519
        %v1733 = vpop.f32.mrb[0].mxu0
        %v1734 = vadd.f32 0.0, %v1733
        %v1735 = vpop.f32.mrb[0].mxu0
        %1736 = vmatprep.mubr.f32.mxu0 0.0
        %1737 = vmatmul.mubr.f32.gmra.mrb[0].mxu0 %v1521
        %v1738 = vpop.f32.mrb[0].mxu0
        %v1739 = vadd.f32 0.0, %v1738
        %v1740 = vpop.f32.mrb[0].mxu0
        %1741 = vmatprep.mubr.f32.mxu0 0.0
        %1742 = vmatmul.mubr.f32.gmra.mrb[0].mxu0 %v1523
        %v1743 = vpop.f32.mrb[0].mxu0
        %v1744 = vadd.f32 0.0, %v1743
        %v1745 = vpop.f32.mrb[0].mxu0
        %1746 = vmatprep.mubr.f32.mxu0 0.0
        %1747 = vmatmul.mubr.f32.gmra.mrb[0].mxu0 %v1525
        %v1748 = vpop.f32.mrb[0].mxu0
        %v1749 = vadd.f32 0.0, %v1748
        %v1750 = vpop.f32.mrb[0].mxu0
        %1751 = vmatprep.mubr.f32.mxu0 0.0
        %1752 = vmatmul.mubr.f32.gmra.mrb[0].mxu0 %v1527
        %v1753 = vpop.f32.mrb[0].mxu0
        %v1754 = vadd.f32 0.0, %v1753
        %v1755 = vpop.f32.mrb[0].mxu0
        %1756 = vdwg.mxu0
        %v1757 = vadd.f32 %v1208, %v1599
        %v1758 = vadd.f32 %v1213, %v1604
        %v1759 = vadd.f32 %v1218, %v1609
        %v1760 = vadd.f32 %v1223, %v1614
        %v1761 = vadd.f32 %v1228, %v1619
        %v1762 = vadd.f32 %v1233, %v1624
        %v1763 = vadd.f32 %v1238, %v1629
        %v1764 = vadd.f32 %v1243, %v1634
        %v1765 = vadd.f32 %v1248, %v1639
        %v1766 = vadd.f32 %v1253, %v1644
        %v1767 = vadd.f32 %v1258, %v1649
        %v1768 = vadd.f32 %v1263, %v1654
        %v1769 = vadd.f32 %v1268, %v1659
        %v1770 = vadd.f32 %v1273, %v1664
        %v1771 = vadd.f32 %v1278, %v1669
        %v1772 = vadd.f32 %v1283, %v1674
        %v1773 = vadd.f32 %v1288, %v1679
        %v1774 = vadd.f32 %v1293, %v1684
        %v1775 = vadd.f32 %v1298, %v1689
        %v1776 = vadd.f32 %v1303, %v1694
        %v1777 = vadd.f32 %v1308, %v1699
        %v1778 = vadd.f32 %v1313, %v1704
        %v1779 = vadd.f32 %v1318, %v1709
        %v1780 = vadd.f32 %v1323, %v1714
        %v1781 = vadd.f32 %v1328, %v1719
        %v1782 = vadd.f32 %v1333, %v1724
        %v1783 = vadd.f32 %v1338, %v1729
        %v1784 = vadd.f32 %v1343, %v1734
        %v1785 = vadd.f32 %v1348, %v1739
        %v1786 = vadd.f32 %v1353, %v1744
        %v1787 = vadd.f32 %v1358, %v1749
        %v1788 = vadd.f32 %v1363, %v1754
        %v1792 = vrot.slane %v641, 7
        %v1793 = vrot.slane %v642, 7
        %v1794 = vsel %vm697, %v1792, %v1793
        %v1795 = vrot.slane %v643, 7
        %v1796 = vsel %vm697, %v1793, %v1795
        %s1797 = scalar_lea.vmem %s1, 12
        %v1798 = vld [vmem:[%s1797] sm:$0xf]
        %v1799 = vsel %vm544, %v1794, 0
        %v1801 = vsel %vm544, %v1796, 0
        %v1804 = vsel %vm845, %v1798, 0
        %1806 = vmatprep.subr.mxu0 0.0
        %1807 = vmatpush1.msra.mxu0 %v1804
        %1808 = vmatprep.subr.mxu0 0.0
        %1809 = vmatpush1.msra.mxu0 0.0
        %1810 = vmatprep.subr.mxu0 0.0
        %1811 = vmatpush1.msra.mxu0 0.0
        %1812 = vmatprep.subr.mxu0 0.0
        %1813 = vmatpush1.msra.mxu0 0.0
        %1814 = vmatprep.subr.mxu0 0.0
        %1815 = vmatpush1.msra.mxu0 0.0
        %1816 = vmatprep.subr.mxu0 0.0
        %1817 = vmatpush1.msra.mxu0 0.0
        %1818 = vmatprep.subr.mxu0 0.0
        %1819 = vmatpush1.msra.mxu0 0.0
        %1820 = vmatprep.subr.mxu0 0.0
        %1821 = vmatpush1.msra.mxu0 0.0
        %1822 = vmatprep.subr.mxu0 0.0
        %1823 = vmatpush1.msra.mxu0 0.0
        %1824 = vmatprep.subr.mxu0 0.0
        %1825 = vmatpush1.msra.mxu0 0.0
        %1826 = vmatprep.subr.mxu0 0.0
        %1827 = vmatpush1.msra.mxu0 0.0
        %1828 = vmatprep.subr.mxu0 0.0
        %1829 = vmatpush1.msra.mxu0 0.0
        %1830 = vmatprep.subr.mxu0 0.0
        %1831 = vmatpush1.msra.mxu0 0.0
        %1832 = vmatprep.subr.mxu0 0.0
        %1833 = vmatpush1.msra.mxu0 0.0
        %1834 = vmatprep.subr.mxu0 0.0
        %1835 = vmatpush1.msra.mxu0 0.0
        %1836 = vmatprep.subr.mxu0 0.0
        %1837 = vmatpush1.msra.mxu0 0.0
        %1838 = vmatprep.subr.mxu0 0.0
        %1839 = vmatpush1.msra.mxu0 0.0
        %1840 = vmatprep.subr.mxu0 0.0
        %1841 = vmatpush1.msra.mxu0 0.0
        %1842 = vmatprep.subr.mxu0 0.0
        %1843 = vmatpush1.msra.mxu0 0.0
        %1844 = vmatprep.subr.mxu0 0.0
        %1845 = vmatpush1.msra.mxu0 0.0
        %1846 = vmatprep.subr.mxu0 0.0
        %1847 = vmatpush1.msra.mxu0 0.0
        %1848 = vmatprep.subr.mxu0 0.0
        %1849 = vmatpush1.msra.mxu0 0.0
        %1850 = vmatprep.subr.mxu0 0.0
        %1851 = vmatpush1.msra.mxu0 0.0
        %1852 = vmatprep.subr.mxu0 0.0
        %1853 = vmatpush1.msra.mxu0 0.0
        %1854 = vmatprep.subr.mxu0 0.0
        %1855 = vmatpush1.msra.mxu0 0.0
        %1856 = vmatprep.subr.mxu0 0.0
        %1857 = vmatpush1.msra.mxu0 0.0
        %1858 = vmatprep.subr.mxu0 0.0
        %1859 = vmatpush1.msra.mxu0 0.0
        %1860 = vmatprep.subr.mxu0 0.0
        %1861 = vmatpush1.msra.mxu0 0.0
        %1862 = vmatprep.subr.mxu0 0.0
        %1863 = vmatpush1.msra.mxu0 0.0
        %1864 = vmatprep.subr.mxu0 0.0
        %1865 = vmatpush1.msra.mxu0 0.0
        %1866 = vmatprep.subr.mxu0 0.0
        %1867 = vmatpush1.msra.mxu0 0.0
        %1868 = vmatprep.subr.mxu0 0.0
        %1869 = vmatpush1.msra.mxu0 0.0
        %1870 = vmatprep.mubr.f32.mxu0 0.0
        %1871 = vmatmul.mubr.f32.gmra.mrb[0].mxu0 %v1078
        %v1872 = vpop.f32.mrb[0].mxu0
        %v1873 = vadd.f32 0.0, %v1872
        %v1874 = vpop.f32.mrb[0].mxu0
        %1875 = vmatprep.mubr.f32.mxu0 0.0
        %1876 = vmatmul.mubr.f32.gmra.mrb[0].mxu0 %v1080
        %v1877 = vpop.f32.mrb[0].mxu0
        %v1878 = vadd.f32 0.0, %v1877
        %v1879 = vpop.f32.mrb[0].mxu0
        %1880 = vmatprep.mubr.f32.mxu0 0.0
        %1881 = vmatmul.mubr.f32.gmra.mrb[0].mxu0 %v1082
        %v1882 = vpop.f32.mrb[0].mxu0
        %v1883 = vadd.f32 0.0, %v1882
        %v1884 = vpop.f32.mrb[0].mxu0
        %1885 = vmatprep.mubr.f32.mxu0 0.0
        %1886 = vmatmul.mubr.f32.gmra.mrb[0].mxu0 %v1084
        %v1887 = vpop.f32.mrb[0].mxu0
        %v1888 = vadd.f32 0.0, %v1887
        %v1889 = vpop.f32.mrb[0].mxu0
        %1890 = vmatprep.mubr.f32.mxu0 0.0
        %1891 = vmatmul.mubr.f32.gmra.mrb[0].mxu0 %v1086
        %v1892 = vpop.f32.mrb[0].mxu0
        %v1893 = vadd.f32 0.0, %v1892
        %v1894 = vpop.f32.mrb[0].mxu0
        %1895 = vmatprep.mubr.f32.mxu0 0.0
        %1896 = vmatmul.mubr.f32.gmra.mrb[0].mxu0 %v1088
        %v1897 = vpop.f32.mrb[0].mxu0
        %v1898 = vadd.f32 0.0, %v1897
        %v1899 = vpop.f32.mrb[0].mxu0
        %1900 = vmatprep.mubr.f32.mxu0 0.0
        %1901 = vmatmul.mubr.f32.gmra.mrb[0].mxu0 %v1090
        %v1902 = vpop.f32.mrb[0].mxu0
        %v1903 = vadd.f32 0.0, %v1902
        %v1904 = vpop.f32.mrb[0].mxu0
        %1905 = vmatprep.mubr.f32.mxu0 0.0
        %1906 = vmatmul.mubr.f32.gmra.mrb[0].mxu0 %v1092
        %v1907 = vpop.f32.mrb[0].mxu0
        %v1908 = vadd.f32 0.0, %v1907
        %v1909 = vpop.f32.mrb[0].mxu0
        %1910 = vmatprep.mubr.f32.mxu0 0.0
        %1911 = vmatmul.mubr.f32.gmra.mrb[0].mxu0 %v1094
        %v1912 = vpop.f32.mrb[0].mxu0
        %v1913 = vadd.f32 0.0, %v1912
        %v1914 = vpop.f32.mrb[0].mxu0
        %1915 = vmatprep.mubr.f32.mxu0 0.0
        %1916 = vmatmul.mubr.f32.gmra.mrb[0].mxu0 %v1096
        %v1917 = vpop.f32.mrb[0].mxu0
        %v1918 = vadd.f32 0.0, %v1917
        %v1919 = vpop.f32.mrb[0].mxu0
        %1920 = vmatprep.mubr.f32.mxu0 0.0
        %1921 = vmatmul.mubr.f32.gmra.mrb[0].mxu0 %v1098
        %v1922 = vpop.f32.mrb[0].mxu0
        %v1923 = vadd.f32 0.0, %v1922
        %v1924 = vpop.f32.mrb[0].mxu0
        %1925 = vmatprep.mubr.f32.mxu0 0.0
        %1926 = vmatmul.mubr.f32.gmra.mrb[0].mxu0 %v1100
        %v1927 = vpop.f32.mrb[0].mxu0
        %v1928 = vadd.f32 0.0, %v1927
        %v1929 = vpop.f32.mrb[0].mxu0
        %1930 = vmatprep.mubr.f32.mxu0 0.0
        %1931 = vmatmul.mubr.f32.gmra.mrb[0].mxu0 %v1102
        %v1932 = vpop.f32.mrb[0].mxu0
        %v1933 = vadd.f32 0.0, %v1932
        %v1934 = vpop.f32.mrb[0].mxu0
        %1935 = vmatprep.mubr.f32.mxu0 0.0
        %1936 = vmatmul.mubr.f32.gmra.mrb[0].mxu0 %v1104
        %v1937 = vpop.f32.mrb[0].mxu0
        %v1938 = vadd.f32 0.0, %v1937
        %v1939 = vpop.f32.mrb[0].mxu0
        %1940 = vmatprep.mubr.f32.mxu0 0.0
        %1941 = vmatmul.mubr.f32.gmra.mrb[0].mxu0 %v1106
        %v1942 = vpop.f32.mrb[0].mxu0
        %v1943 = vadd.f32 0.0, %v1942
        %v1944 = vpop.f32.mrb[0].mxu0
        %1945 = vmatprep.mubr.f32.mxu0 0.0
        %1946 = vmatmul.mubr.f32.gmra.mrb[0].mxu0 %v1108
        %v1947 = vpop.f32.mrb[0].mxu0
        %v1948 = vadd.f32 0.0, %v1947
        %v1949 = vpop.f32.mrb[0].mxu0
        %1950 = vmatprep.mubr.f32.mxu0 0.0
        %1951 = vmatmul.mubr.f32.gmra.mrb[0].mxu0 %v1110
        %v1952 = vpop.f32.mrb[0].mxu0
        %v1953 = vadd.f32 0.0, %v1952
        %v1954 = vpop.f32.mrb[0].mxu0
        %1955 = vmatprep.mubr.f32.mxu0 0.0
        %1956 = vmatmul.mubr.f32.gmra.mrb[0].mxu0 %v1112
        %v1957 = vpop.f32.mrb[0].mxu0
        %v1958 = vadd.f32 0.0, %v1957
        %v1959 = vpop.f32.mrb[0].mxu0
        %1960 = vmatprep.mubr.f32.mxu0 0.0
        %1961 = vmatmul.mubr.f32.gmra.mrb[0].mxu0 %v1114
        %v1962 = vpop.f32.mrb[0].mxu0
        %v1963 = vadd.f32 0.0, %v1962
        %v1964 = vpop.f32.mrb[0].mxu0
        %1965 = vmatprep.mubr.f32.mxu0 0.0
        %1966 = vmatmul.mubr.f32.gmra.mrb[0].mxu0 %v1116
        %v1967 = vpop.f32.mrb[0].mxu0
        %v1968 = vadd.f32 0.0, %v1967
        %v1969 = vpop.f32.mrb[0].mxu0
        %1970 = vmatprep.mubr.f32.mxu0 0.0
        %1971 = vmatmul.mubr.f32.gmra.mrb[0].mxu0 %v1118
        %v1972 = vpop.f32.mrb[0].mxu0
        %v1973 = vadd.f32 0.0, %v1972
        %v1974 = vpop.f32.mrb[0].mxu0
        %1975 = vmatprep.mubr.f32.mxu0 0.0
        %1976 = vmatmul.mubr.f32.gmra.mrb[0].mxu0 %v1120
        %v1977 = vpop.f32.mrb[0].mxu0
        %v1978 = vadd.f32 0.0, %v1977
        %v1979 = vpop.f32.mrb[0].mxu0
        %1980 = vmatprep.mubr.f32.mxu0 0.0
        %1981 = vmatmul.mubr.f32.gmra.mrb[0].mxu0 %v1122
        %v1982 = vpop.f32.mrb[0].mxu0
        %v1983 = vadd.f32 0.0, %v1982
        %v1984 = vpop.f32.mrb[0].mxu0
        %1985 = vmatprep.mubr.f32.mxu0 0.0
        %1986 = vmatmul.mubr.f32.gmra.mrb[0].mxu0 %v1124
        %v1987 = vpop.f32.mrb[0].mxu0
        %v1988 = vadd.f32 0.0, %v1987
        %v1989 = vpop.f32.mrb[0].mxu0
        %1990 = vmatprep.mubr.f32.mxu0 0.0
        %1991 = vmatmul.mubr.f32.gmra.mrb[0].mxu0 %v1126
        %v1992 = vpop.f32.mrb[0].mxu0
        %v1993 = vadd.f32 0.0, %v1992
        %v1994 = vpop.f32.mrb[0].mxu0
        %1995 = vmatprep.mubr.f32.mxu0 0.0
        %1996 = vmatmul.mubr.f32.gmra.mrb[0].mxu0 %v1128
        %v1997 = vpop.f32.mrb[0].mxu0
        %v1998 = vadd.f32 0.0, %v1997
        %v1999 = vpop.f32.mrb[0].mxu0
        %2000 = vmatprep.mubr.f32.mxu0 0.0
        %2001 = vmatmul.mubr.f32.gmra.mrb[0].mxu0 %v1130
        %v2002 = vpop.f32.mrb[0].mxu0
        %v2003 = vadd.f32 0.0, %v2002
        %v2004 = vpop.f32.mrb[0].mxu0
        %2005 = vmatprep.mubr.f32.mxu0 0.0
        %2006 = vmatmul.mubr.f32.gmra.mrb[0].mxu0 %v1132
        %v2007 = vpop.f32.mrb[0].mxu0
        %v2008 = vadd.f32 0.0, %v2007
        %v2009 = vpop.f32.mrb[0].mxu0
        %2010 = vmatprep.mubr.f32.mxu0 0.0
        %2011 = vmatmul.mubr.f32.gmra.mrb[0].mxu0 %v1134
        %v2012 = vpop.f32.mrb[0].mxu0
        %v2013 = vadd.f32 0.0, %v2012
        %v2014 = vpop.f32.mrb[0].mxu0
        %2015 = vmatprep.mubr.f32.mxu0 0.0
        %2016 = vmatmul.mubr.f32.gmra.mrb[0].mxu0 %v1136
        %v2017 = vpop.f32.mrb[0].mxu0
        %v2018 = vadd.f32 0.0, %v2017
        %v2019 = vpop.f32.mrb[0].mxu0
        %2020 = vmatprep.mubr.f32.mxu0 0.0
        %2021 = vmatmul.mubr.f32.gmra.mrb[0].mxu0 %v1799
        %v2022 = vpop.f32.mrb[0].mxu0
        %v2023 = vadd.f32 0.0, %v2022
        %v2024 = vpop.f32.mrb[0].mxu0
        %2025 = vmatprep.mubr.f32.mxu0 0.0
        %2026 = vmatmul.mubr.f32.gmra.mrb[0].mxu0 %v1801
        %v2027 = vpop.f32.mrb[0].mxu0
        %v2028 = vadd.f32 0.0, %v2027
        %v2029 = vpop.f32.mrb[0].mxu0
        %2030 = vdwg.mxu0
        %v2031 = vadd.f32 %v1757, %v1873
        %v2032 = vadd.f32 %v1758, %v1878
        %v2033 = vadd.f32 %v1759, %v1883
        %v2034 = vadd.f32 %v1760, %v1888
        %v2035 = vadd.f32 %v1761, %v1893
        %v2036 = vadd.f32 %v1762, %v1898
        %v2037 = vadd.f32 %v1763, %v1903
        %v2038 = vadd.f32 %v1764, %v1908
        %v2039 = vadd.f32 %v1765, %v1913
        %v2040 = vadd.f32 %v1766, %v1918
        %v2041 = vadd.f32 %v1767, %v1923
        %v2042 = vadd.f32 %v1768, %v1928
        %v2043 = vadd.f32 %v1769, %v1933
        %v2044 = vadd.f32 %v1770, %v1938
        %v2045 = vadd.f32 %v1771, %v1943
        %v2046 = vadd.f32 %v1772, %v1948
        %v2047 = vadd.f32 %v1773, %v1953
        %v2048 = vadd.f32 %v1774, %v1958
        %v2049 = vadd.f32 %v1775, %v1963
        %v2050 = vadd.f32 %v1776, %v1968
        %v2051 = vadd.f32 %v1777, %v1973
        %v2052 = vadd.f32 %v1778, %v1978
        %v2053 = vadd.f32 %v1779, %v1983
        %v2054 = vadd.f32 %v1780, %v1988
        %v2055 = vadd.f32 %v1781, %v1993
        %v2056 = vadd.f32 %v1782, %v1998
        %v2057 = vadd.f32 %v1783, %v2003
        %v2058 = vadd.f32 %v1784, %v2008
        %v2059 = vadd.f32 %v1785, %v2013
        %v2060 = vadd.f32 %v1786, %v2018
        %v2061 = vadd.f32 %v1787, %v2023
        %v2062 = vadd.f32 %v1788, %v2028
        %s2063 = scalar_lea.vmem %s1, 16
        %v2064 = vld [vmem:[%s2063] sm:$0xf]
        %v2065 = vsel %vm544, %v642, 0
        %v2067 = vsel %vm544, %v643, 0
        %v2070 = vsel %vm845, %v2064, 0
        %2072 = vmatprep.subr.mxu0 0.0
        %2073 = vmatpush1.msra.mxu0 %v2070
        %2074 = vmatprep.subr.mxu0 0.0
        %2075 = vmatpush1.msra.mxu0 0.0
        %2076 = vmatprep.subr.mxu0 0.0
        %2077 = vmatpush1.msra.mxu0 0.0
        %2078 = vmatprep.subr.mxu0 0.0
        %2079 = vmatpush1.msra.mxu0 0.0
        %2080 = vmatprep.subr.mxu0 0.0
        %2081 = vmatpush1.msra.mxu0 0.0
        %2082 = vmatprep.subr.mxu0 0.0
        %2083 = vmatpush1.msra.mxu0 0.0
        %2084 = vmatprep.subr.mxu0 0.0
        %2085 = vmatpush1.msra.mxu0 0.0
        %2086 = vmatprep.subr.mxu0 0.0
        %2087 = vmatpush1.msra.mxu0 0.0
        %2088 = vmatprep.subr.mxu0 0.0
        %2089 = vmatpush1.msra.mxu0 0.0
        %2090 = vmatprep.subr.mxu0 0.0
        %2091 = vmatpush1.msra.mxu0 0.0
        %2092 = vmatprep.subr.mxu0 0.0
        %2093 = vmatpush1.msra.mxu0 0.0
        %2094 = vmatprep.subr.mxu0 0.0
        %2095 = vmatpush1.msra.mxu0 0.0
        %2096 = vmatprep.subr.mxu0 0.0
        %2097 = vmatpush1.msra.mxu0 0.0
        %2098 = vmatprep.subr.mxu0 0.0
        %2099 = vmatpush1.msra.mxu0 0.0
        %2100 = vmatprep.subr.mxu0 0.0
        %2101 = vmatpush1.msra.mxu0 0.0
        %2102 = vmatprep.subr.mxu0 0.0
        %2103 = vmatpush1.msra.mxu0 0.0
        %2104 = vmatprep.subr.mxu0 0.0
        %2105 = vmatpush1.msra.mxu0 0.0
        %2106 = vmatprep.subr.mxu0 0.0
        %2107 = vmatpush1.msra.mxu0 0.0
        %2108 = vmatprep.subr.mxu0 0.0
        %2109 = vmatpush1.msra.mxu0 0.0
        %2110 = vmatprep.subr.mxu0 0.0
        %2111 = vmatpush1.msra.mxu0 0.0
        %2112 = vmatprep.subr.mxu0 0.0
        %2113 = vmatpush1.msra.mxu0 0.0
        %2114 = vmatprep.subr.mxu0 0.0
        %2115 = vmatpush1.msra.mxu0 0.0
        %2116 = vmatprep.subr.mxu0 0.0
        %2117 = vmatpush1.msra.mxu0 0.0
        %2118 = vmatprep.subr.mxu0 0.0
        %2119 = vmatpush1.msra.mxu0 0.0
        %2120 = vmatprep.subr.mxu0 0.0
        %2121 = vmatpush1.msra.mxu0 0.0
        %2122 = vmatprep.subr.mxu0 0.0
        %2123 = vmatpush1.msra.mxu0 0.0
        %2124 = vmatprep.subr.mxu0 0.0
        %2125 = vmatpush1.msra.mxu0 0.0
        %2126 = vmatprep.subr.mxu0 0.0
        %2127 = vmatpush1.msra.mxu0 0.0
        %2128 = vmatprep.subr.mxu0 0.0
        %2129 = vmatpush1.msra.mxu0 0.0
        %2130 = vmatprep.subr.mxu0 0.0
        %2131 = vmatpush1.msra.mxu0 0.0
        %2132 = vmatprep.subr.mxu0 0.0
        %2133 = vmatpush1.msra.mxu0 0.0
        %2134 = vmatprep.subr.mxu0 0.0
        %2135 = vmatpush1.msra.mxu0 0.0
        %2136 = vmatprep.mubr.f32.mxu0 0.0
        %2137 = vmatmul.mubr.f32.gmra.mrb[0].mxu0 %v785
        %v2138 = vpop.f32.mrb[0].mxu0
        %v2139 = vadd.f32 0.0, %v2138
        %v2140 = vpop.f32.mrb[0].mxu0
        %2141 = vmatprep.mubr.f32.mxu0 0.0
        %2142 = vmatmul.mubr.f32.gmra.mrb[0].mxu0 %v787
        %v2143 = vpop.f32.mrb[0].mxu0
        %v2144 = vadd.f32 0.0, %v2143
        %v2145 = vpop.f32.mrb[0].mxu0
        %2146 = vmatprep.mubr.f32.mxu0 0.0
        %2147 = vmatmul.mubr.f32.gmra.mrb[0].mxu0 %v789
        %v2148 = vpop.f32.mrb[0].mxu0
        %v2149 = vadd.f32 0.0, %v2148
        %v2150 = vpop.f32.mrb[0].mxu0
        %2151 = vmatprep.mubr.f32.mxu0 0.0
        %2152 = vmatmul.mubr.f32.gmra.mrb[0].mxu0 %v791
        %v2153 = vpop.f32.mrb[0].mxu0
        %v2154 = vadd.f32 0.0, %v2153
        %v2155 = vpop.f32.mrb[0].mxu0
        %2156 = vmatprep.mubr.f32.mxu0 0.0
        %2157 = vmatmul.mubr.f32.gmra.mrb[0].mxu0 %v793
        %v2158 = vpop.f32.mrb[0].mxu0
        %v2159 = vadd.f32 0.0, %v2158
        %v2160 = vpop.f32.mrb[0].mxu0
        %2161 = vmatprep.mubr.f32.mxu0 0.0
        %2162 = vmatmul.mubr.f32.gmra.mrb[0].mxu0 %v795
        %v2163 = vpop.f32.mrb[0].mxu0
        %v2164 = vadd.f32 0.0, %v2163
        %v2165 = vpop.f32.mrb[0].mxu0
        %2166 = vmatprep.mubr.f32.mxu0 0.0
        %2167 = vmatmul.mubr.f32.gmra.mrb[0].mxu0 %v797
        %v2168 = vpop.f32.mrb[0].mxu0
        %v2169 = vadd.f32 0.0, %v2168
        %v2170 = vpop.f32.mrb[0].mxu0
        %2171 = vmatprep.mubr.f32.mxu0 0.0
        %2172 = vmatmul.mubr.f32.gmra.mrb[0].mxu0 %v799
        %v2173 = vpop.f32.mrb[0].mxu0
        %v2174 = vadd.f32 0.0, %v2173
        %v2175 = vpop.f32.mrb[0].mxu0
        %2176 = vmatprep.mubr.f32.mxu0 0.0
        %2177 = vmatmul.mubr.f32.gmra.mrb[0].mxu0 %v801
        %v2178 = vpop.f32.mrb[0].mxu0
        %v2179 = vadd.f32 0.0, %v2178
        %v2180 = vpop.f32.mrb[0].mxu0
        %2181 = vmatprep.mubr.f32.mxu0 0.0
        %2182 = vmatmul.mubr.f32.gmra.mrb[0].mxu0 %v803
        %v2183 = vpop.f32.mrb[0].mxu0
        %v2184 = vadd.f32 0.0, %v2183
        %v2185 = vpop.f32.mrb[0].mxu0
        %2186 = vmatprep.mubr.f32.mxu0 0.0
        %2187 = vmatmul.mubr.f32.gmra.mrb[0].mxu0 %v805
        %v2188 = vpop.f32.mrb[0].mxu0
        %v2189 = vadd.f32 0.0, %v2188
        %v2190 = vpop.f32.mrb[0].mxu0
        %2191 = vmatprep.mubr.f32.mxu0 0.0
        %2192 = vmatmul.mubr.f32.gmra.mrb[0].mxu0 %v807
        %v2193 = vpop.f32.mrb[0].mxu0
        %v2194 = vadd.f32 0.0, %v2193
        %v2195 = vpop.f32.mrb[0].mxu0
        %2196 = vmatprep.mubr.f32.mxu0 0.0
        %2197 = vmatmul.mubr.f32.gmra.mrb[0].mxu0 %v809
        %v2198 = vpop.f32.mrb[0].mxu0
        %v2199 = vadd.f32 0.0, %v2198
        %v2200 = vpop.f32.mrb[0].mxu0
        %2201 = vmatprep.mubr.f32.mxu0 0.0
        %2202 = vmatmul.mubr.f32.gmra.mrb[0].mxu0 %v811
        %v2203 = vpop.f32.mrb[0].mxu0
        %v2204 = vadd.f32 0.0, %v2203
        %v2205 = vpop.f32.mrb[0].mxu0
        %2206 = vmatprep.mubr.f32.mxu0 0.0
        %2207 = vmatmul.mubr.f32.gmra.mrb[0].mxu0 %v813
        %v2208 = vpop.f32.mrb[0].mxu0
        %v2209 = vadd.f32 0.0, %v2208
        %v2210 = vpop.f32.mrb[0].mxu0
        %2211 = vmatprep.mubr.f32.mxu0 0.0
        %2212 = vmatmul.mubr.f32.gmra.mrb[0].mxu0 %v815
        %v2213 = vpop.f32.mrb[0].mxu0
        %v2214 = vadd.f32 0.0, %v2213
        %v2215 = vpop.f32.mrb[0].mxu0
        %2216 = vmatprep.mubr.f32.mxu0 0.0
        %2217 = vmatmul.mubr.f32.gmra.mrb[0].mxu0 %v817
        %v2218 = vpop.f32.mrb[0].mxu0
        %v2219 = vadd.f32 0.0, %v2218
        %v2220 = vpop.f32.mrb[0].mxu0
        %2221 = vmatprep.mubr.f32.mxu0 0.0
        %2222 = vmatmul.mubr.f32.gmra.mrb[0].mxu0 %v819
        %v2223 = vpop.f32.mrb[0].mxu0
        %v2224 = vadd.f32 0.0, %v2223
        %v2225 = vpop.f32.mrb[0].mxu0
        %2226 = vmatprep.mubr.f32.mxu0 0.0
        %2227 = vmatmul.mubr.f32.gmra.mrb[0].mxu0 %v821
        %v2228 = vpop.f32.mrb[0].mxu0
        %v2229 = vadd.f32 0.0, %v2228
        %v2230 = vpop.f32.mrb[0].mxu0
        %2231 = vmatprep.mubr.f32.mxu0 0.0
        %2232 = vmatmul.mubr.f32.gmra.mrb[0].mxu0 %v823
        %v2233 = vpop.f32.mrb[0].mxu0
        %v2234 = vadd.f32 0.0, %v2233
        %v2235 = vpop.f32.mrb[0].mxu0
        %2236 = vmatprep.mubr.f32.mxu0 0.0
        %2237 = vmatmul.mubr.f32.gmra.mrb[0].mxu0 %v825
        %v2238 = vpop.f32.mrb[0].mxu0
        %v2239 = vadd.f32 0.0, %v2238
        %v2240 = vpop.f32.mrb[0].mxu0
        %2241 = vmatprep.mubr.f32.mxu0 0.0
        %2242 = vmatmul.mubr.f32.gmra.mrb[0].mxu0 %v827
        %v2243 = vpop.f32.mrb[0].mxu0
        %v2244 = vadd.f32 0.0, %v2243
        %v2245 = vpop.f32.mrb[0].mxu0
        %2246 = vmatprep.mubr.f32.mxu0 0.0
        %2247 = vmatmul.mubr.f32.gmra.mrb[0].mxu0 %v829
        %v2248 = vpop.f32.mrb[0].mxu0
        %v2249 = vadd.f32 0.0, %v2248
        %v2250 = vpop.f32.mrb[0].mxu0
        %2251 = vmatprep.mubr.f32.mxu0 0.0
        %2252 = vmatmul.mubr.f32.gmra.mrb[0].mxu0 %v831
        %v2253 = vpop.f32.mrb[0].mxu0
        %v2254 = vadd.f32 0.0, %v2253
        %v2255 = vpop.f32.mrb[0].mxu0
        %2256 = vmatprep.mubr.f32.mxu0 0.0
        %2257 = vmatmul.mubr.f32.gmra.mrb[0].mxu0 %v833
        %v2258 = vpop.f32.mrb[0].mxu0
        %v2259 = vadd.f32 0.0, %v2258
        %v2260 = vpop.f32.mrb[0].mxu0
        %2261 = vmatprep.mubr.f32.mxu0 0.0
        %2262 = vmatmul.mubr.f32.gmra.mrb[0].mxu0 %v835
        %v2263 = vpop.f32.mrb[0].mxu0
        %v2264 = vadd.f32 0.0, %v2263
        %v2265 = vpop.f32.mrb[0].mxu0
        %2266 = vmatprep.mubr.f32.mxu0 0.0
        %2267 = vmatmul.mubr.f32.gmra.mrb[0].mxu0 %v837
        %v2268 = vpop.f32.mrb[0].mxu0
        %v2269 = vadd.f32 0.0, %v2268
        %v2270 = vpop.f32.mrb[0].mxu0
        %2271 = vmatprep.mubr.f32.mxu0 0.0
        %2272 = vmatmul.mubr.f32.gmra.mrb[0].mxu0 %v839
        %v2273 = vpop.f32.mrb[0].mxu0
        %v2274 = vadd.f32 0.0, %v2273
        %v2275 = vpop.f32.mrb[0].mxu0
        %2276 = vmatprep.mubr.f32.mxu0 0.0
        %2277 = vmatmul.mubr.f32.gmra.mrb[0].mxu0 %v841
        %v2278 = vpop.f32.mrb[0].mxu0
        %v2279 = vadd.f32 0.0, %v2278
        %v2280 = vpop.f32.mrb[0].mxu0
        %2281 = vmatprep.mubr.f32.mxu0 0.0
        %2282 = vmatmul.mubr.f32.gmra.mrb[0].mxu0 %v843
        %v2283 = vpop.f32.mrb[0].mxu0
        %v2284 = vadd.f32 0.0, %v2283
        %v2285 = vpop.f32.mrb[0].mxu0
        %2286 = vmatprep.mubr.f32.mxu0 0.0
        %2287 = vmatmul.mubr.f32.gmra.mrb[0].mxu0 %v2065
        %v2288 = vpop.f32.mrb[0].mxu0
        %v2289 = vadd.f32 0.0, %v2288
        %v2290 = vpop.f32.mrb[0].mxu0
        %2291 = vmatprep.mubr.f32.mxu0 0.0
        %2292 = vmatmul.mubr.f32.gmra.mrb[0].mxu0 %v2067
        %v2293 = vpop.f32.mrb[0].mxu0
        %v2294 = vadd.f32 0.0, %v2293
        %v2295 = vpop.f32.mrb[0].mxu0
        %2296 = vdwg.mxu0
        %v2297 = vadd.f32 %v2031, %v2139
        %v2298 = vadd.f32 %v2032, %v2144
        %v2299 = vadd.f32 %v2033, %v2149
        %v2300 = vadd.f32 %v2034, %v2154
        %v2301 = vadd.f32 %v2035, %v2159
        %v2302 = vadd.f32 %v2036, %v2164
        %v2303 = vadd.f32 %v2037, %v2169
        %v2304 = vadd.f32 %v2038, %v2174
        %v2305 = vadd.f32 %v2039, %v2179
        %v2306 = vadd.f32 %v2040, %v2184
        %v2307 = vadd.f32 %v2041, %v2189
        %v2308 = vadd.f32 %v2042, %v2194
        %v2309 = vadd.f32 %v2043, %v2199
        %v2310 = vadd.f32 %v2044, %v2204
        %v2311 = vadd.f32 %v2045, %v2209
        %v2312 = vadd.f32 %v2046, %v2214
        %v2313 = vadd.f32 %v2047, %v2219
        %v2314 = vadd.f32 %v2048, %v2224
        %v2315 = vadd.f32 %v2049, %v2229
        %v2316 = vadd.f32 %v2050, %v2234
        %v2317 = vadd.f32 %v2051, %v2239
        %v2318 = vadd.f32 %v2052, %v2244
        %v2319 = vadd.f32 %v2053, %v2249
        %v2320 = vadd.f32 %v2054, %v2254
        %v2321 = vadd.f32 %v2055, %v2259
        %v2322 = vadd.f32 %v2056, %v2264
        %v2323 = vadd.f32 %v2057, %v2269
        %v2324 = vadd.f32 %v2058, %v2274
        %v2325 = vadd.f32 %v2059, %v2279
        %v2326 = vadd.f32 %v2060, %v2284
        %v2327 = vadd.f32 %v2061, %v2289
        %v2328 = vadd.f32 %v2062, %v2294
        %v2330 = vrot.slane %v642, 1
        %v2331 = vrot.slane %v643, 1
        %v2332 = vsel %vm1382, %v2330, %v2331
        %v2333 = vrot.slane %v644, 1
        %v2334 = vsel %vm1382, %v2331, %v2333
        %s2335 = scalar_lea.vmem %s1, 20
        %v2336 = vld [vmem:[%s2335] sm:$0xf]
        %v2337 = vsel %vm544, %v2332, 0
        %v2339 = vsel %vm544, %v2334, 0
        %v2342 = vsel %vm845, %v2336, 0
        %2344 = vmatprep.subr.mxu0 0.0
        %2345 = vmatpush1.msra.mxu0 %v2342
        %2346 = vmatprep.subr.mxu0 0.0
        %2347 = vmatpush1.msra.mxu0 0.0
        %2348 = vmatprep.subr.mxu0 0.0
        %2349 = vmatpush1.msra.mxu0 0.0
        %2350 = vmatprep.subr.mxu0 0.0
        %2351 = vmatpush1.msra.mxu0 0.0
        %2352 = vmatprep.subr.mxu0 0.0
        %2353 = vmatpush1.msra.mxu0 0.0
        %2354 = vmatprep.subr.mxu0 0.0
        %2355 = vmatpush1.msra.mxu0 0.0
        %2356 = vmatprep.subr.mxu0 0.0
        %2357 = vmatpush1.msra.mxu0 0.0
        %2358 = vmatprep.subr.mxu0 0.0
        %2359 = vmatpush1.msra.mxu0 0.0
        %2360 = vmatprep.subr.mxu0 0.0
        %2361 = vmatpush1.msra.mxu0 0.0
        %2362 = vmatprep.subr.mxu0 0.0
        %2363 = vmatpush1.msra.mxu0 0.0
        %2364 = vmatprep.subr.mxu0 0.0
        %2365 = vmatpush1.msra.mxu0 0.0
        %2366 = vmatprep.subr.mxu0 0.0
        %2367 = vmatpush1.msra.mxu0 0.0
        %2368 = vmatprep.subr.mxu0 0.0
        %2369 = vmatpush1.msra.mxu0 0.0
        %2370 = vmatprep.subr.mxu0 0.0
        %2371 = vmatpush1.msra.mxu0 0.0
        %2372 = vmatprep.subr.mxu0 0.0
        %2373 = vmatpush1.msra.mxu0 0.0
        %2374 = vmatprep.subr.mxu0 0.0
        %2375 = vmatpush1.msra.mxu0 0.0
        %2376 = vmatprep.subr.mxu0 0.0
        %2377 = vmatpush1.msra.mxu0 0.0
        %2378 = vmatprep.subr.mxu0 0.0
        %2379 = vmatpush1.msra.mxu0 0.0
        %2380 = vmatprep.subr.mxu0 0.0
        %2381 = vmatpush1.msra.mxu0 0.0
        %2382 = vmatprep.subr.mxu0 0.0
        %2383 = vmatpush1.msra.mxu0 0.0
        %2384 = vmatprep.subr.mxu0 0.0
        %2385 = vmatpush1.msra.mxu0 0.0
        %2386 = vmatprep.subr.mxu0 0.0
        %2387 = vmatpush1.msra.mxu0 0.0
        %2388 = vmatprep.subr.mxu0 0.0
        %2389 = vmatpush1.msra.mxu0 0.0
        %2390 = vmatprep.subr.mxu0 0.0
        %2391 = vmatpush1.msra.mxu0 0.0
        %2392 = vmatprep.subr.mxu0 0.0
        %2393 = vmatpush1.msra.mxu0 0.0
        %2394 = vmatprep.subr.mxu0 0.0
        %2395 = vmatpush1.msra.mxu0 0.0
        %2396 = vmatprep.subr.mxu0 0.0
        %2397 = vmatpush1.msra.mxu0 0.0
        %2398 = vmatprep.subr.mxu0 0.0
        %2399 = vmatpush1.msra.mxu0 0.0
        %2400 = vmatprep.subr.mxu0 0.0
        %2401 = vmatpush1.msra.mxu0 0.0
        %2402 = vmatprep.subr.mxu0 0.0
        %2403 = vmatpush1.msra.mxu0 0.0
        %2404 = vmatprep.subr.mxu0 0.0
        %2405 = vmatpush1.msra.mxu0 0.0
        %2406 = vmatprep.subr.mxu0 0.0
        %2407 = vmatpush1.msra.mxu0 0.0
        %2408 = vmatprep.mubr.f32.mxu0 0.0
        %2409 = vmatmul.mubr.f32.gmra.mrb[0].mxu0 %v1469
        %v2410 = vpop.f32.mrb[0].mxu0
        %v2411 = vadd.f32 0.0, %v2410
        %v2412 = vpop.f32.mrb[0].mxu0
        %2413 = vmatprep.mubr.f32.mxu0 0.0
        %2414 = vmatmul.mubr.f32.gmra.mrb[0].mxu0 %v1471
        %v2415 = vpop.f32.mrb[0].mxu0
        %v2416 = vadd.f32 0.0, %v2415
        %v2417 = vpop.f32.mrb[0].mxu0
        %2418 = vmatprep.mubr.f32.mxu0 0.0
        %2419 = vmatmul.mubr.f32.gmra.mrb[0].mxu0 %v1473
        %v2420 = vpop.f32.mrb[0].mxu0
        %v2421 = vadd.f32 0.0, %v2420
        %v2422 = vpop.f32.mrb[0].mxu0
        %2423 = vmatprep.mubr.f32.mxu0 0.0
        %2424 = vmatmul.mubr.f32.gmra.mrb[0].mxu0 %v1475
        %v2425 = vpop.f32.mrb[0].mxu0
        %v2426 = vadd.f32 0.0, %v2425
        %v2427 = vpop.f32.mrb[0].mxu0
        %2428 = vmatprep.mubr.f32.mxu0 0.0
        %2429 = vmatmul.mubr.f32.gmra.mrb[0].mxu0 %v1477
        %v2430 = vpop.f32.mrb[0].mxu0
        %v2431 = vadd.f32 0.0, %v2430
        %v2432 = vpop.f32.mrb[0].mxu0
        %2433 = vmatprep.mubr.f32.mxu0 0.0
        %2434 = vmatmul.mubr.f32.gmra.mrb[0].mxu0 %v1479
        %v2435 = vpop.f32.mrb[0].mxu0
        %v2436 = vadd.f32 0.0, %v2435
        %v2437 = vpop.f32.mrb[0].mxu0
        %2438 = vmatprep.mubr.f32.mxu0 0.0
        %2439 = vmatmul.mubr.f32.gmra.mrb[0].mxu0 %v1481
        %v2440 = vpop.f32.mrb[0].mxu0
        %v2441 = vadd.f32 0.0, %v2440
        %v2442 = vpop.f32.mrb[0].mxu0
        %2443 = vmatprep.mubr.f32.mxu0 0.0
        %2444 = vmatmul.mubr.f32.gmra.mrb[0].mxu0 %v1483
        %v2445 = vpop.f32.mrb[0].mxu0
        %v2446 = vadd.f32 0.0, %v2445
        %v2447 = vpop.f32.mrb[0].mxu0
        %2448 = vmatprep.mubr.f32.mxu0 0.0
        %2449 = vmatmul.mubr.f32.gmra.mrb[0].mxu0 %v1485
        %v2450 = vpop.f32.mrb[0].mxu0
        %v2451 = vadd.f32 0.0, %v2450
        %v2452 = vpop.f32.mrb[0].mxu0
        %2453 = vmatprep.mubr.f32.mxu0 0.0
        %2454 = vmatmul.mubr.f32.gmra.mrb[0].mxu0 %v1487
        %v2455 = vpop.f32.mrb[0].mxu0
        %v2456 = vadd.f32 0.0, %v2455
        %v2457 = vpop.f32.mrb[0].mxu0
        %2458 = vmatprep.mubr.f32.mxu0 0.0
        %2459 = vmatmul.mubr.f32.gmra.mrb[0].mxu0 %v1489
        %v2460 = vpop.f32.mrb[0].mxu0
        %v2461 = vadd.f32 0.0, %v2460
        %v2462 = vpop.f32.mrb[0].mxu0
        %2463 = vmatprep.mubr.f32.mxu0 0.0
        %2464 = vmatmul.mubr.f32.gmra.mrb[0].mxu0 %v1491
        %v2465 = vpop.f32.mrb[0].mxu0
        %v2466 = vadd.f32 0.0, %v2465
        %v2467 = vpop.f32.mrb[0].mxu0
        %2468 = vmatprep.mubr.f32.mxu0 0.0
        %2469 = vmatmul.mubr.f32.gmra.mrb[0].mxu0 %v1493
        %v2470 = vpop.f32.mrb[0].mxu0
        %v2471 = vadd.f32 0.0, %v2470
        %v2472 = vpop.f32.mrb[0].mxu0
        %2473 = vmatprep.mubr.f32.mxu0 0.0
        %2474 = vmatmul.mubr.f32.gmra.mrb[0].mxu0 %v1495
        %v2475 = vpop.f32.mrb[0].mxu0
        %v2476 = vadd.f32 0.0, %v2475
        %v2477 = vpop.f32.mrb[0].mxu0
        %2478 = vmatprep.mubr.f32.mxu0 0.0
        %2479 = vmatmul.mubr.f32.gmra.mrb[0].mxu0 %v1497
        %v2480 = vpop.f32.mrb[0].mxu0
        %v2481 = vadd.f32 0.0, %v2480
        %v2482 = vpop.f32.mrb[0].mxu0
        %2483 = vmatprep.mubr.f32.mxu0 0.0
        %2484 = vmatmul.mubr.f32.gmra.mrb[0].mxu0 %v1499
        %v2485 = vpop.f32.mrb[0].mxu0
        %v2486 = vadd.f32 0.0, %v2485
        %v2487 = vpop.f32.mrb[0].mxu0
        %2488 = vmatprep.mubr.f32.mxu0 0.0
        %2489 = vmatmul.mubr.f32.gmra.mrb[0].mxu0 %v1501
        %v2490 = vpop.f32.mrb[0].mxu0
        %v2491 = vadd.f32 0.0, %v2490
        %v2492 = vpop.f32.mrb[0].mxu0
        %2493 = vmatprep.mubr.f32.mxu0 0.0
        %2494 = vmatmul.mubr.f32.gmra.mrb[0].mxu0 %v1503
        %v2495 = vpop.f32.mrb[0].mxu0
        %v2496 = vadd.f32 0.0, %v2495
        %v2497 = vpop.f32.mrb[0].mxu0
        %2498 = vmatprep.mubr.f32.mxu0 0.0
        %2499 = vmatmul.mubr.f32.gmra.mrb[0].mxu0 %v1505
        %v2500 = vpop.f32.mrb[0].mxu0
        %v2501 = vadd.f32 0.0, %v2500
        %v2502 = vpop.f32.mrb[0].mxu0
        %2503 = vmatprep.mubr.f32.mxu0 0.0
        %2504 = vmatmul.mubr.f32.gmra.mrb[0].mxu0 %v1507
        %v2505 = vpop.f32.mrb[0].mxu0
        %v2506 = vadd.f32 0.0, %v2505
        %v2507 = vpop.f32.mrb[0].mxu0
        %2508 = vmatprep.mubr.f32.mxu0 0.0
        %2509 = vmatmul.mubr.f32.gmra.mrb[0].mxu0 %v1509
        %v2510 = vpop.f32.mrb[0].mxu0
        %v2511 = vadd.f32 0.0, %v2510
        %v2512 = vpop.f32.mrb[0].mxu0
        %2513 = vmatprep.mubr.f32.mxu0 0.0
        %2514 = vmatmul.mubr.f32.gmra.mrb[0].mxu0 %v1511
        %v2515 = vpop.f32.mrb[0].mxu0
        %v2516 = vadd.f32 0.0, %v2515
        %v2517 = vpop.f32.mrb[0].mxu0
        %2518 = vmatprep.mubr.f32.mxu0 0.0
        %2519 = vmatmul.mubr.f32.gmra.mrb[0].mxu0 %v1513
        %v2520 = vpop.f32.mrb[0].mxu0
        %v2521 = vadd.f32 0.0, %v2520
        %v2522 = vpop.f32.mrb[0].mxu0
        %2523 = vmatprep.mubr.f32.mxu0 0.0
        %2524 = vmatmul.mubr.f32.gmra.mrb[0].mxu0 %v1515
        %v2525 = vpop.f32.mrb[0].mxu0
        %v2526 = vadd.f32 0.0, %v2525
        %v2527 = vpop.f32.mrb[0].mxu0
        %2528 = vmatprep.mubr.f32.mxu0 0.0
        %2529 = vmatmul.mubr.f32.gmra.mrb[0].mxu0 %v1517
        %v2530 = vpop.f32.mrb[0].mxu0
        %v2531 = vadd.f32 0.0, %v2530
        %v2532 = vpop.f32.mrb[0].mxu0
        %2533 = vmatprep.mubr.f32.mxu0 0.0
        %2534 = vmatmul.mubr.f32.gmra.mrb[0].mxu0 %v1519
        %v2535 = vpop.f32.mrb[0].mxu0
        %v2536 = vadd.f32 0.0, %v2535
        %v2537 = vpop.f32.mrb[0].mxu0
        %2538 = vmatprep.mubr.f32.mxu0 0.0
        %2539 = vmatmul.mubr.f32.gmra.mrb[0].mxu0 %v1521
        %v2540 = vpop.f32.mrb[0].mxu0
        %v2541 = vadd.f32 0.0, %v2540
        %v2542 = vpop.f32.mrb[0].mxu0
        %2543 = vmatprep.mubr.f32.mxu0 0.0
        %2544 = vmatmul.mubr.f32.gmra.mrb[0].mxu0 %v1523
        %v2545 = vpop.f32.mrb[0].mxu0
        %v2546 = vadd.f32 0.0, %v2545
        %v2547 = vpop.f32.mrb[0].mxu0
        %2548 = vmatprep.mubr.f32.mxu0 0.0
        %2549 = vmatmul.mubr.f32.gmra.mrb[0].mxu0 %v1525
        %v2550 = vpop.f32.mrb[0].mxu0
        %v2551 = vadd.f32 0.0, %v2550
        %v2552 = vpop.f32.mrb[0].mxu0
        %2553 = vmatprep.mubr.f32.mxu0 0.0
        %2554 = vmatmul.mubr.f32.gmra.mrb[0].mxu0 %v1527
        %v2555 = vpop.f32.mrb[0].mxu0
        %v2556 = vadd.f32 0.0, %v2555
        %v2557 = vpop.f32.mrb[0].mxu0
        %2558 = vmatprep.mubr.f32.mxu0 0.0
        %2559 = vmatmul.mubr.f32.gmra.mrb[0].mxu0 %v2337
        %v2560 = vpop.f32.mrb[0].mxu0
        %v2561 = vadd.f32 0.0, %v2560
        %v2562 = vpop.f32.mrb[0].mxu0
        %2563 = vmatprep.mubr.f32.mxu0 0.0
        %2564 = vmatmul.mubr.f32.gmra.mrb[0].mxu0 %v2339
        %v2565 = vpop.f32.mrb[0].mxu0
        %v2566 = vadd.f32 0.0, %v2565
        %v2567 = vpop.f32.mrb[0].mxu0
        %2568 = vdwg.mxu0
        %v2569 = vadd.f32 %v2297, %v2411
        %v2570 = vadd.f32 %v2298, %v2416
        %v2571 = vadd.f32 %v2299, %v2421
        %v2572 = vadd.f32 %v2300, %v2426
        %v2573 = vadd.f32 %v2301, %v2431
        %v2574 = vadd.f32 %v2302, %v2436
        %v2575 = vadd.f32 %v2303, %v2441
        %v2576 = vadd.f32 %v2304, %v2446
        %v2577 = vadd.f32 %v2305, %v2451
        %v2578 = vadd.f32 %v2306, %v2456
        %v2579 = vadd.f32 %v2307, %v2461
        %v2580 = vadd.f32 %v2308, %v2466
        %v2581 = vadd.f32 %v2309, %v2471
        %v2582 = vadd.f32 %v2310, %v2476
        %v2583 = vadd.f32 %v2311, %v2481
        %v2584 = vadd.f32 %v2312, %v2486
        %v2585 = vadd.f32 %v2313, %v2491
        %v2586 = vadd.f32 %v2314, %v2496
        %v2587 = vadd.f32 %v2315, %v2501
        %v2588 = vadd.f32 %v2316, %v2506
        %v2589 = vadd.f32 %v2317, %v2511
        %v2590 = vadd.f32 %v2318, %v2516
        %v2591 = vadd.f32 %v2319, %v2521
        %v2592 = vadd.f32 %v2320, %v2526
        %v2593 = vadd.f32 %v2321, %v2531
        %v2594 = vadd.f32 %v2322, %v2536
        %v2595 = vadd.f32 %v2323, %v2541
        %v2596 = vadd.f32 %v2324, %v2546
        %v2597 = vadd.f32 %v2325, %v2551
        %v2598 = vadd.f32 %v2326, %v2556
        %v2599 = vadd.f32 %v2327, %v2561
        %v2600 = vadd.f32 %v2328, %v2566
        %v2604 = vrot.slane %v645, 7
        %v2605 = vrot.slane %v646, 7
        %v2606 = vsel %vm697, %v2604, %v2605
        %v2607 = vrot.slane %v647, 7
        %v2608 = vsel %vm697, %v2605, %v2607
        %s2609 = scalar_lea.vmem %s1, 24
        %v2610 = vld [vmem:[%s2609] sm:$0xf]
        %v2611 = vsel %vm544, %v2606, 0
        %v2613 = vsel %vm544, %v2608, 0
        %v2616 = vsel %vm845, %v2610, 0
        %2618 = vmatprep.subr.mxu0 0.0
        %2619 = vmatpush1.msra.mxu0 %v2616
        %2620 = vmatprep.subr.mxu0 0.0
        %2621 = vmatpush1.msra.mxu0 0.0
        %2622 = vmatprep.subr.mxu0 0.0
        %2623 = vmatpush1.msra.mxu0 0.0
        %2624 = vmatprep.subr.mxu0 0.0
        %2625 = vmatpush1.msra.mxu0 0.0
        %2626 = vmatprep.subr.mxu0 0.0
        %2627 = vmatpush1.msra.mxu0 0.0
        %2628 = vmatprep.subr.mxu0 0.0
        %2629 = vmatpush1.msra.mxu0 0.0
        %2630 = vmatprep.subr.mxu0 0.0
        %2631 = vmatpush1.msra.mxu0 0.0
        %2632 = vmatprep.subr.mxu0 0.0
        %2633 = vmatpush1.msra.mxu0 0.0
        %2634 = vmatprep.subr.mxu0 0.0
        %2635 = vmatpush1.msra.mxu0 0.0
        %2636 = vmatprep.subr.mxu0 0.0
        %2637 = vmatpush1.msra.mxu0 0.0
        %2638 = vmatprep.subr.mxu0 0.0
        %2639 = vmatpush1.msra.mxu0 0.0
        %2640 = vmatprep.subr.mxu0 0.0
        %2641 = vmatpush1.msra.mxu0 0.0
        %2642 = vmatprep.subr.mxu0 0.0
        %2643 = vmatpush1.msra.mxu0 0.0
        %2644 = vmatprep.subr.mxu0 0.0
        %2645 = vmatpush1.msra.mxu0 0.0
        %2646 = vmatprep.subr.mxu0 0.0
        %2647 = vmatpush1.msra.mxu0 0.0
        %2648 = vmatprep.subr.mxu0 0.0
        %2649 = vmatpush1.msra.mxu0 0.0
        %2650 = vmatprep.subr.mxu0 0.0
        %2651 = vmatpush1.msra.mxu0 0.0
        %2652 = vmatprep.subr.mxu0 0.0
        %2653 = vmatpush1.msra.mxu0 0.0
        %2654 = vmatprep.subr.mxu0 0.0
        %2655 = vmatpush1.msra.mxu0 0.0
        %2656 = vmatprep.subr.mxu0 0.0
        %2657 = vmatpush1.msra.mxu0 0.0
        %2658 = vmatprep.subr.mxu0 0.0
        %2659 = vmatpush1.msra.mxu0 0.0
        %2660 = vmatprep.subr.mxu0 0.0
        %2661 = vmatpush1.msra.mxu0 0.0
        %2662 = vmatprep.subr.mxu0 0.0
        %2663 = vmatpush1.msra.mxu0 0.0
        %2664 = vmatprep.subr.mxu0 0.0
        %2665 = vmatpush1.msra.mxu0 0.0
        %2666 = vmatprep.subr.mxu0 0.0
        %2667 = vmatpush1.msra.mxu0 0.0
        %2668 = vmatprep.subr.mxu0 0.0
        %2669 = vmatpush1.msra.mxu0 0.0
        %2670 = vmatprep.subr.mxu0 0.0
        %2671 = vmatpush1.msra.mxu0 0.0
        %2672 = vmatprep.subr.mxu0 0.0
        %2673 = vmatpush1.msra.mxu0 0.0
        %2674 = vmatprep.subr.mxu0 0.0
        %2675 = vmatpush1.msra.mxu0 0.0
        %2676 = vmatprep.subr.mxu0 0.0
        %2677 = vmatpush1.msra.mxu0 0.0
        %2678 = vmatprep.subr.mxu0 0.0
        %2679 = vmatpush1.msra.mxu0 0.0
        %2680 = vmatprep.subr.mxu0 0.0
        %2681 = vmatpush1.msra.mxu0 0.0
        %2682 = vmatprep.mubr.f32.mxu0 0.0
        %2683 = vmatmul.mubr.f32.gmra.mrb[0].mxu0 %v1082
        %v2684 = vpop.f32.mrb[0].mxu0
        %v2685 = vadd.f32 0.0, %v2684
        %v2686 = vpop.f32.mrb[0].mxu0
        %2687 = vmatprep.mubr.f32.mxu0 0.0
        %2688 = vmatmul.mubr.f32.gmra.mrb[0].mxu0 %v1084
        %v2689 = vpop.f32.mrb[0].mxu0
        %v2690 = vadd.f32 0.0, %v2689
        %v2691 = vpop.f32.mrb[0].mxu0
        %2692 = vmatprep.mubr.f32.mxu0 0.0
        %2693 = vmatmul.mubr.f32.gmra.mrb[0].mxu0 %v1086
        %v2694 = vpop.f32.mrb[0].mxu0
        %v2695 = vadd.f32 0.0, %v2694
        %v2696 = vpop.f32.mrb[0].mxu0
        %2697 = vmatprep.mubr.f32.mxu0 0.0
        %2698 = vmatmul.mubr.f32.gmra.mrb[0].mxu0 %v1088
        %v2699 = vpop.f32.mrb[0].mxu0
        %v2700 = vadd.f32 0.0, %v2699
        %v2701 = vpop.f32.mrb[0].mxu0
        %2702 = vmatprep.mubr.f32.mxu0 0.0
        %2703 = vmatmul.mubr.f32.gmra.mrb[0].mxu0 %v1090
        %v2704 = vpop.f32.mrb[0].mxu0
        %v2705 = vadd.f32 0.0, %v2704
        %v2706 = vpop.f32.mrb[0].mxu0
        %2707 = vmatprep.mubr.f32.mxu0 0.0
        %2708 = vmatmul.mubr.f32.gmra.mrb[0].mxu0 %v1092
        %v2709 = vpop.f32.mrb[0].mxu0
        %v2710 = vadd.f32 0.0, %v2709
        %v2711 = vpop.f32.mrb[0].mxu0
        %2712 = vmatprep.mubr.f32.mxu0 0.0
        %2713 = vmatmul.mubr.f32.gmra.mrb[0].mxu0 %v1094
        %v2714 = vpop.f32.mrb[0].mxu0
        %v2715 = vadd.f32 0.0, %v2714
        %v2716 = vpop.f32.mrb[0].mxu0
        %2717 = vmatprep.mubr.f32.mxu0 0.0
        %2718 = vmatmul.mubr.f32.gmra.mrb[0].mxu0 %v1096
        %v2719 = vpop.f32.mrb[0].mxu0
        %v2720 = vadd.f32 0.0, %v2719
        %v2721 = vpop.f32.mrb[0].mxu0
        %2722 = vmatprep.mubr.f32.mxu0 0.0
        %2723 = vmatmul.mubr.f32.gmra.mrb[0].mxu0 %v1098
        %v2724 = vpop.f32.mrb[0].mxu0
        %v2725 = vadd.f32 0.0, %v2724
        %v2726 = vpop.f32.mrb[0].mxu0
        %2727 = vmatprep.mubr.f32.mxu0 0.0
        %2728 = vmatmul.mubr.f32.gmra.mrb[0].mxu0 %v1100
        %v2729 = vpop.f32.mrb[0].mxu0
        %v2730 = vadd.f32 0.0, %v2729
        %v2731 = vpop.f32.mrb[0].mxu0
        %2732 = vmatprep.mubr.f32.mxu0 0.0
        %2733 = vmatmul.mubr.f32.gmra.mrb[0].mxu0 %v1102
        %v2734 = vpop.f32.mrb[0].mxu0
        %v2735 = vadd.f32 0.0, %v2734
        %v2736 = vpop.f32.mrb[0].mxu0
        %2737 = vmatprep.mubr.f32.mxu0 0.0
        %2738 = vmatmul.mubr.f32.gmra.mrb[0].mxu0 %v1104
        %v2739 = vpop.f32.mrb[0].mxu0
        %v2740 = vadd.f32 0.0, %v2739
        %v2741 = vpop.f32.mrb[0].mxu0
        %2742 = vmatprep.mubr.f32.mxu0 0.0
        %2743 = vmatmul.mubr.f32.gmra.mrb[0].mxu0 %v1106
        %v2744 = vpop.f32.mrb[0].mxu0
        %v2745 = vadd.f32 0.0, %v2744
        %v2746 = vpop.f32.mrb[0].mxu0
        %2747 = vmatprep.mubr.f32.mxu0 0.0
        %2748 = vmatmul.mubr.f32.gmra.mrb[0].mxu0 %v1108
        %v2749 = vpop.f32.mrb[0].mxu0
        %v2750 = vadd.f32 0.0, %v2749
        %v2751 = vpop.f32.mrb[0].mxu0
        %2752 = vmatprep.mubr.f32.mxu0 0.0
        %2753 = vmatmul.mubr.f32.gmra.mrb[0].mxu0 %v1110
        %v2754 = vpop.f32.mrb[0].mxu0
        %v2755 = vadd.f32 0.0, %v2754
        %v2756 = vpop.f32.mrb[0].mxu0
        %2757 = vmatprep.mubr.f32.mxu0 0.0
        %2758 = vmatmul.mubr.f32.gmra.mrb[0].mxu0 %v1112
        %v2759 = vpop.f32.mrb[0].mxu0
        %v2760 = vadd.f32 0.0, %v2759
        %v2761 = vpop.f32.mrb[0].mxu0
        %2762 = vmatprep.mubr.f32.mxu0 0.0
        %2763 = vmatmul.mubr.f32.gmra.mrb[0].mxu0 %v1114
        %v2764 = vpop.f32.mrb[0].mxu0
        %v2765 = vadd.f32 0.0, %v2764
        %v2766 = vpop.f32.mrb[0].mxu0
        %2767 = vmatprep.mubr.f32.mxu0 0.0
        %2768 = vmatmul.mubr.f32.gmra.mrb[0].mxu0 %v1116
        %v2769 = vpop.f32.mrb[0].mxu0
        %v2770 = vadd.f32 0.0, %v2769
        %v2771 = vpop.f32.mrb[0].mxu0
        %2772 = vmatprep.mubr.f32.mxu0 0.0
        %2773 = vmatmul.mubr.f32.gmra.mrb[0].mxu0 %v1118
        %v2774 = vpop.f32.mrb[0].mxu0
        %v2775 = vadd.f32 0.0, %v2774
        %v2776 = vpop.f32.mrb[0].mxu0
        %2777 = vmatprep.mubr.f32.mxu0 0.0
        %2778 = vmatmul.mubr.f32.gmra.mrb[0].mxu0 %v1120
        %v2779 = vpop.f32.mrb[0].mxu0
        %v2780 = vadd.f32 0.0, %v2779
        %v2781 = vpop.f32.mrb[0].mxu0
        %2782 = vmatprep.mubr.f32.mxu0 0.0
        %2783 = vmatmul.mubr.f32.gmra.mrb[0].mxu0 %v1122
        %v2784 = vpop.f32.mrb[0].mxu0
        %v2785 = vadd.f32 0.0, %v2784
        %v2786 = vpop.f32.mrb[0].mxu0
        %2787 = vmatprep.mubr.f32.mxu0 0.0
        %2788 = vmatmul.mubr.f32.gmra.mrb[0].mxu0 %v1124
        %v2789 = vpop.f32.mrb[0].mxu0
        %v2790 = vadd.f32 0.0, %v2789
        %v2791 = vpop.f32.mrb[0].mxu0
        %2792 = vmatprep.mubr.f32.mxu0 0.0
        %2793 = vmatmul.mubr.f32.gmra.mrb[0].mxu0 %v1126
        %v2794 = vpop.f32.mrb[0].mxu0
        %v2795 = vadd.f32 0.0, %v2794
        %v2796 = vpop.f32.mrb[0].mxu0
        %2797 = vmatprep.mubr.f32.mxu0 0.0
        %2798 = vmatmul.mubr.f32.gmra.mrb[0].mxu0 %v1128
        %v2799 = vpop.f32.mrb[0].mxu0
        %v2800 = vadd.f32 0.0, %v2799
        %v2801 = vpop.f32.mrb[0].mxu0
        %2802 = vmatprep.mubr.f32.mxu0 0.0
        %2803 = vmatmul.mubr.f32.gmra.mrb[0].mxu0 %v1130
        %v2804 = vpop.f32.mrb[0].mxu0
        %v2805 = vadd.f32 0.0, %v2804
        %v2806 = vpop.f32.mrb[0].mxu0
        %2807 = vmatprep.mubr.f32.mxu0 0.0
        %2808 = vmatmul.mubr.f32.gmra.mrb[0].mxu0 %v1132
        %v2809 = vpop.f32.mrb[0].mxu0
        %v2810 = vadd.f32 0.0, %v2809
        %v2811 = vpop.f32.mrb[0].mxu0
        %2812 = vmatprep.mubr.f32.mxu0 0.0
        %2813 = vmatmul.mubr.f32.gmra.mrb[0].mxu0 %v1134
        %v2814 = vpop.f32.mrb[0].mxu0
        %v2815 = vadd.f32 0.0, %v2814
        %v2816 = vpop.f32.mrb[0].mxu0
        %2817 = vmatprep.mubr.f32.mxu0 0.0
        %2818 = vmatmul.mubr.f32.gmra.mrb[0].mxu0 %v1136
        %v2819 = vpop.f32.mrb[0].mxu0
        %v2820 = vadd.f32 0.0, %v2819
        %v2821 = vpop.f32.mrb[0].mxu0
        %2822 = vmatprep.mubr.f32.mxu0 0.0
        %2823 = vmatmul.mubr.f32.gmra.mrb[0].mxu0 %v1799
        %v2824 = vpop.f32.mrb[0].mxu0
        %v2825 = vadd.f32 0.0, %v2824
        %v2826 = vpop.f32.mrb[0].mxu0
        %2827 = vmatprep.mubr.f32.mxu0 0.0
        %2828 = vmatmul.mubr.f32.gmra.mrb[0].mxu0 %v1801
        %v2829 = vpop.f32.mrb[0].mxu0
        %v2830 = vadd.f32 0.0, %v2829
        %v2831 = vpop.f32.mrb[0].mxu0
        %2832 = vmatprep.mubr.f32.mxu0 0.0
        %2833 = vmatmul.mubr.f32.gmra.mrb[0].mxu0 %v2611
        %v2834 = vpop.f32.mrb[0].mxu0
        %v2835 = vadd.f32 0.0, %v2834
        %v2836 = vpop.f32.mrb[0].mxu0
        %2837 = vmatprep.mubr.f32.mxu0 0.0
        %2838 = vmatmul.mubr.f32.gmra.mrb[0].mxu0 %v2613
        %v2839 = vpop.f32.mrb[0].mxu0
        %v2840 = vadd.f32 0.0, %v2839
        %v2841 = vpop.f32.mrb[0].mxu0
        %2842 = vdwg.mxu0
        %v2843 = vadd.f32 %v2569, %v2685
        %v2844 = vadd.f32 %v2570, %v2690
        %v2845 = vadd.f32 %v2571, %v2695
        %v2846 = vadd.f32 %v2572, %v2700
        %v2847 = vadd.f32 %v2573, %v2705
        %v2848 = vadd.f32 %v2574, %v2710
        %v2849 = vadd.f32 %v2575, %v2715
        %v2850 = vadd.f32 %v2576, %v2720
        %v2851 = vadd.f32 %v2577, %v2725
        %v2852 = vadd.f32 %v2578, %v2730
        %v2853 = vadd.f32 %v2579, %v2735
        %v2854 = vadd.f32 %v2580, %v2740
        %v2855 = vadd.f32 %v2581, %v2745
        %v2856 = vadd.f32 %v2582, %v2750
        %v2857 = vadd.f32 %v2583, %v2755
        %v2858 = vadd.f32 %v2584, %v2760
        %v2859 = vadd.f32 %v2585, %v2765
        %v2860 = vadd.f32 %v2586, %v2770
        %v2861 = vadd.f32 %v2587, %v2775
        %v2862 = vadd.f32 %v2588, %v2780
        %v2863 = vadd.f32 %v2589, %v2785
        %v2864 = vadd.f32 %v2590, %v2790
        %v2865 = vadd.f32 %v2591, %v2795
        %v2866 = vadd.f32 %v2592, %v2800
        %v2867 = vadd.f32 %v2593, %v2805
        %v2868 = vadd.f32 %v2594, %v2810
        %v2869 = vadd.f32 %v2595, %v2815
        %v2870 = vadd.f32 %v2596, %v2820
        %v2871 = vadd.f32 %v2597, %v2825
        %v2872 = vadd.f32 %v2598, %v2830
        %v2873 = vadd.f32 %v2599, %v2835
        %v2874 = vadd.f32 %v2600, %v2840
        %s2875 = scalar_lea.vmem %s1, 28
        %v2876 = vld [vmem:[%s2875] sm:$0xf]
        %v2877 = vsel %vm544, %v646, 0
        %v2879 = vsel %vm544, %v647, 0
        %v2882 = vsel %vm845, %v2876, 0
        %2884 = vmatprep.subr.mxu0 0.0
        %2885 = vmatpush1.msra.mxu0 %v2882
        %2886 = vmatprep.subr.mxu0 0.0
        %2887 = vmatpush1.msra.mxu0 0.0
        %2888 = vmatprep.subr.mxu0 0.0
        %2889 = vmatpush1.msra.mxu0 0.0
        %2890 = vmatprep.subr.mxu0 0.0
        %2891 = vmatpush1.msra.mxu0 0.0
        %2892 = vmatprep.subr.mxu0 0.0
        %2893 = vmatpush1.msra.mxu0 0.0
        %2894 = vmatprep.subr.mxu0 0.0
        %2895 = vmatpush1.msra.mxu0 0.0
        %2896 = vmatprep.subr.mxu0 0.0
        %2897 = vmatpush1.msra.mxu0 0.0
        %2898 = vmatprep.subr.mxu0 0.0
        %2899 = vmatpush1.msra.mxu0 0.0
        %2900 = vmatprep.subr.mxu0 0.0
        %2901 = vmatpush1.msra.mxu0 0.0
        %2902 = vmatprep.subr.mxu0 0.0
        %2903 = vmatpush1.msra.mxu0 0.0
        %2904 = vmatprep.subr.mxu0 0.0
        %2905 = vmatpush1.msra.mxu0 0.0
        %2906 = vmatprep.subr.mxu0 0.0
        %2907 = vmatpush1.msra.mxu0 0.0
        %2908 = vmatprep.subr.mxu0 0.0
        %2909 = vmatpush1.msra.mxu0 0.0
        %2910 = vmatprep.subr.mxu0 0.0
        %2911 = vmatpush1.msra.mxu0 0.0
        %2912 = vmatprep.subr.mxu0 0.0
        %2913 = vmatpush1.msra.mxu0 0.0
        %2914 = vmatprep.subr.mxu0 0.0
        %2915 = vmatpush1.msra.mxu0 0.0
        %2916 = vmatprep.subr.mxu0 0.0
        %2917 = vmatpush1.msra.mxu0 0.0
        %2918 = vmatprep.subr.mxu0 0.0
        %2919 = vmatpush1.msra.mxu0 0.0
        %2920 = vmatprep.subr.mxu0 0.0
        %2921 = vmatpush1.msra.mxu0 0.0
        %2922 = vmatprep.subr.mxu0 0.0
        %2923 = vmatpush1.msra.mxu0 0.0
        %2924 = vmatprep.subr.mxu0 0.0
        %2925 = vmatpush1.msra.mxu0 0.0
        %2926 = vmatprep.subr.mxu0 0.0
        %2927 = vmatpush1.msra.mxu0 0.0
        %2928 = vmatprep.subr.mxu0 0.0
        %2929 = vmatpush1.msra.mxu0 0.0
        %2930 = vmatprep.subr.mxu0 0.0
        %2931 = vmatpush1.msra.mxu0 0.0
        %2932 = vmatprep.subr.mxu0 0.0
        %2933 = vmatpush1.msra.mxu0 0.0
        %2934 = vmatprep.subr.mxu0 0.0
        %2935 = vmatpush1.msra.mxu0 0.0
        %2936 = vmatprep.subr.mxu0 0.0
        %2937 = vmatpush1.msra.mxu0 0.0
        %2938 = vmatprep.subr.mxu0 0.0
        %2939 = vmatpush1.msra.mxu0 0.0
        %2940 = vmatprep.subr.mxu0 0.0
        %2941 = vmatpush1.msra.mxu0 0.0
        %2942 = vmatprep.subr.mxu0 0.0
        %2943 = vmatpush1.msra.mxu0 0.0
        %2944 = vmatprep.subr.mxu0 0.0
        %2945 = vmatpush1.msra.mxu0 0.0
        %2946 = vmatprep.subr.mxu0 0.0
        %2947 = vmatpush1.msra.mxu0 0.0
        %2948 = vmatprep.mubr.f32.mxu0 0.0
        %2949 = vmatmul.mubr.f32.gmra.mrb[0].mxu0 %v789
        %v2950 = vpop.f32.mrb[0].mxu0
        %v2951 = vadd.f32 0.0, %v2950
        %v2952 = vpop.f32.mrb[0].mxu0
        %2953 = vmatprep.mubr.f32.mxu0 0.0
        %2954 = vmatmul.mubr.f32.gmra.mrb[0].mxu0 %v791
        %v2955 = vpop.f32.mrb[0].mxu0
        %v2956 = vadd.f32 0.0, %v2955
        %v2957 = vpop.f32.mrb[0].mxu0
        %2958 = vmatprep.mubr.f32.mxu0 0.0
        %2959 = vmatmul.mubr.f32.gmra.mrb[0].mxu0 %v793
        %v2960 = vpop.f32.mrb[0].mxu0
        %v2961 = vadd.f32 0.0, %v2960
        %v2962 = vpop.f32.mrb[0].mxu0
        %2963 = vmatprep.mubr.f32.mxu0 0.0
        %2964 = vmatmul.mubr.f32.gmra.mrb[0].mxu0 %v795
        %v2965 = vpop.f32.mrb[0].mxu0
        %v2966 = vadd.f32 0.0, %v2965
        %v2967 = vpop.f32.mrb[0].mxu0
        %2968 = vmatprep.mubr.f32.mxu0 0.0
        %2969 = vmatmul.mubr.f32.gmra.mrb[0].mxu0 %v797
        %v2970 = vpop.f32.mrb[0].mxu0
        %v2971 = vadd.f32 0.0, %v2970
        %v2972 = vpop.f32.mrb[0].mxu0
        %2973 = vmatprep.mubr.f32.mxu0 0.0
        %2974 = vmatmul.mubr.f32.gmra.mrb[0].mxu0 %v799
        %v2975 = vpop.f32.mrb[0].mxu0
        %v2976 = vadd.f32 0.0, %v2975
        %v2977 = vpop.f32.mrb[0].mxu0
        %2978 = vmatprep.mubr.f32.mxu0 0.0
        %2979 = vmatmul.mubr.f32.gmra.mrb[0].mxu0 %v801
        %v2980 = vpop.f32.mrb[0].mxu0
        %v2981 = vadd.f32 0.0, %v2980
        %v2982 = vpop.f32.mrb[0].mxu0
        %2983 = vmatprep.mubr.f32.mxu0 0.0
        %2984 = vmatmul.mubr.f32.gmra.mrb[0].mxu0 %v803
        %v2985 = vpop.f32.mrb[0].mxu0
        %v2986 = vadd.f32 0.0, %v2985
        %v2987 = vpop.f32.mrb[0].mxu0
        %2988 = vmatprep.mubr.f32.mxu0 0.0
        %2989 = vmatmul.mubr.f32.gmra.mrb[0].mxu0 %v805
        %v2990 = vpop.f32.mrb[0].mxu0
        %v2991 = vadd.f32 0.0, %v2990
        %v2992 = vpop.f32.mrb[0].mxu0
        %2993 = vmatprep.mubr.f32.mxu0 0.0
        %2994 = vmatmul.mubr.f32.gmra.mrb[0].mxu0 %v807
        %v2995 = vpop.f32.mrb[0].mxu0
        %v2996 = vadd.f32 0.0, %v2995
        %v2997 = vpop.f32.mrb[0].mxu0
        %2998 = vmatprep.mubr.f32.mxu0 0.0
        %2999 = vmatmul.mubr.f32.gmra.mrb[0].mxu0 %v809
        %v3000 = vpop.f32.mrb[0].mxu0
        %v3001 = vadd.f32 0.0, %v3000
        %v3002 = vpop.f32.mrb[0].mxu0
        %3003 = vmatprep.mubr.f32.mxu0 0.0
        %3004 = vmatmul.mubr.f32.gmra.mrb[0].mxu0 %v811
        %v3005 = vpop.f32.mrb[0].mxu0
        %v3006 = vadd.f32 0.0, %v3005
        %v3007 = vpop.f32.mrb[0].mxu0
        %3008 = vmatprep.mubr.f32.mxu0 0.0
        %3009 = vmatmul.mubr.f32.gmra.mrb[0].mxu0 %v813
        %v3010 = vpop.f32.mrb[0].mxu0
        %v3011 = vadd.f32 0.0, %v3010
        %v3012 = vpop.f32.mrb[0].mxu0
        %3013 = vmatprep.mubr.f32.mxu0 0.0
        %3014 = vmatmul.mubr.f32.gmra.mrb[0].mxu0 %v815
        %v3015 = vpop.f32.mrb[0].mxu0
        %v3016 = vadd.f32 0.0, %v3015
        %v3017 = vpop.f32.mrb[0].mxu0
        %3018 = vmatprep.mubr.f32.mxu0 0.0
        %3019 = vmatmul.mubr.f32.gmra.mrb[0].mxu0 %v817
        %v3020 = vpop.f32.mrb[0].mxu0
        %v3021 = vadd.f32 0.0, %v3020
        %v3022 = vpop.f32.mrb[0].mxu0
        %3023 = vmatprep.mubr.f32.mxu0 0.0
        %3024 = vmatmul.mubr.f32.gmra.mrb[0].mxu0 %v819
        %v3025 = vpop.f32.mrb[0].mxu0
        %v3026 = vadd.f32 0.0, %v3025
        %v3027 = vpop.f32.mrb[0].mxu0
        %3028 = vmatprep.mubr.f32.mxu0 0.0
        %3029 = vmatmul.mubr.f32.gmra.mrb[0].mxu0 %v821
        %v3030 = vpop.f32.mrb[0].mxu0
        %v3031 = vadd.f32 0.0, %v3030
        %v3032 = vpop.f32.mrb[0].mxu0
        %3033 = vmatprep.mubr.f32.mxu0 0.0
        %3034 = vmatmul.mubr.f32.gmra.mrb[0].mxu0 %v823
        %v3035 = vpop.f32.mrb[0].mxu0
        %v3036 = vadd.f32 0.0, %v3035
        %v3037 = vpop.f32.mrb[0].mxu0
        %3038 = vmatprep.mubr.f32.mxu0 0.0
        %3039 = vmatmul.mubr.f32.gmra.mrb[0].mxu0 %v825
        %v3040 = vpop.f32.mrb[0].mxu0
        %v3041 = vadd.f32 0.0, %v3040
        %v3042 = vpop.f32.mrb[0].mxu0
        %3043 = vmatprep.mubr.f32.mxu0 0.0
        %3044 = vmatmul.mubr.f32.gmra.mrb[0].mxu0 %v827
        %v3045 = vpop.f32.mrb[0].mxu0
        %v3046 = vadd.f32 0.0, %v3045
        %v3047 = vpop.f32.mrb[0].mxu0
        %3048 = vmatprep.mubr.f32.mxu0 0.0
        %3049 = vmatmul.mubr.f32.gmra.mrb[0].mxu0 %v829
        %v3050 = vpop.f32.mrb[0].mxu0
        %v3051 = vadd.f32 0.0, %v3050
        %v3052 = vpop.f32.mrb[0].mxu0
        %3053 = vmatprep.mubr.f32.mxu0 0.0
        %3054 = vmatmul.mubr.f32.gmra.mrb[0].mxu0 %v831
        %v3055 = vpop.f32.mrb[0].mxu0
        %v3056 = vadd.f32 0.0, %v3055
        %v3057 = vpop.f32.mrb[0].mxu0
        %3058 = vmatprep.mubr.f32.mxu0 0.0
        %3059 = vmatmul.mubr.f32.gmra.mrb[0].mxu0 %v833
        %v3060 = vpop.f32.mrb[0].mxu0
        %v3061 = vadd.f32 0.0, %v3060
        %v3062 = vpop.f32.mrb[0].mxu0
        %3063 = vmatprep.mubr.f32.mxu0 0.0
        %3064 = vmatmul.mubr.f32.gmra.mrb[0].mxu0 %v835
        %v3065 = vpop.f32.mrb[0].mxu0
        %v3066 = vadd.f32 0.0, %v3065
        %v3067 = vpop.f32.mrb[0].mxu0
        %3068 = vmatprep.mubr.f32.mxu0 0.0
        %3069 = vmatmul.mubr.f32.gmra.mrb[0].mxu0 %v837
        %v3070 = vpop.f32.mrb[0].mxu0
        %v3071 = vadd.f32 0.0, %v3070
        %v3072 = vpop.f32.mrb[0].mxu0
        %3073 = vmatprep.mubr.f32.mxu0 0.0
        %3074 = vmatmul.mubr.f32.gmra.mrb[0].mxu0 %v839
        %v3075 = vpop.f32.mrb[0].mxu0
        %v3076 = vadd.f32 0.0, %v3075
        %v3077 = vpop.f32.mrb[0].mxu0
        %3078 = vmatprep.mubr.f32.mxu0 0.0
        %3079 = vmatmul.mubr.f32.gmra.mrb[0].mxu0 %v841
        %v3080 = vpop.f32.mrb[0].mxu0
        %v3081 = vadd.f32 0.0, %v3080
        %v3082 = vpop.f32.mrb[0].mxu0
        %3083 = vmatprep.mubr.f32.mxu0 0.0
        %3084 = vmatmul.mubr.f32.gmra.mrb[0].mxu0 %v843
        %v3085 = vpop.f32.mrb[0].mxu0
        %v3086 = vadd.f32 0.0, %v3085
        %v3087 = vpop.f32.mrb[0].mxu0
        %3088 = vmatprep.mubr.f32.mxu0 0.0
        %3089 = vmatmul.mubr.f32.gmra.mrb[0].mxu0 %v2065
        %v3090 = vpop.f32.mrb[0].mxu0
        %v3091 = vadd.f32 0.0, %v3090
        %v3092 = vpop.f32.mrb[0].mxu0
        %3093 = vmatprep.mubr.f32.mxu0 0.0
        %3094 = vmatmul.mubr.f32.gmra.mrb[0].mxu0 %v2067
        %v3095 = vpop.f32.mrb[0].mxu0
        %v3096 = vadd.f32 0.0, %v3095
        %v3097 = vpop.f32.mrb[0].mxu0
        %3098 = vmatprep.mubr.f32.mxu0 0.0
        %3099 = vmatmul.mubr.f32.gmra.mrb[0].mxu0 %v2877
        %v3100 = vpop.f32.mrb[0].mxu0
        %v3101 = vadd.f32 0.0, %v3100
        %v3102 = vpop.f32.mrb[0].mxu0
        %3103 = vmatprep.mubr.f32.mxu0 0.0
        %3104 = vmatmul.mubr.f32.gmra.mrb[0].mxu0 %v2879
        %v3105 = vpop.f32.mrb[0].mxu0
        %v3106 = vadd.f32 0.0, %v3105
        %v3107 = vpop.f32.mrb[0].mxu0
        %3108 = vdwg.mxu0
        %v3109 = vadd.f32 %v2843, %v2951
        %v3110 = vadd.f32 %v2844, %v2956
        %v3111 = vadd.f32 %v2845, %v2961
        %v3112 = vadd.f32 %v2846, %v2966
        %v3113 = vadd.f32 %v2847, %v2971
        %v3114 = vadd.f32 %v2848, %v2976
        %v3115 = vadd.f32 %v2849, %v2981
        %v3116 = vadd.f32 %v2850, %v2986
        %v3117 = vadd.f32 %v2851, %v2991
        %v3118 = vadd.f32 %v2852, %v2996
        %v3119 = vadd.f32 %v2853, %v3001
        %v3120 = vadd.f32 %v2854, %v3006
        %v3121 = vadd.f32 %v2855, %v3011
        %v3122 = vadd.f32 %v2856, %v3016
        %v3123 = vadd.f32 %v2857, %v3021
        %v3124 = vadd.f32 %v2858, %v3026
        %v3125 = vadd.f32 %v2859, %v3031
        %v3126 = vadd.f32 %v2860, %v3036
        %v3127 = vadd.f32 %v2861, %v3041
        %v3128 = vadd.f32 %v2862, %v3046
        %v3129 = vadd.f32 %v2863, %v3051
        %v3130 = vadd.f32 %v2864, %v3056
        %v3131 = vadd.f32 %v2865, %v3061
        %v3132 = vadd.f32 %v2866, %v3066
        %v3133 = vadd.f32 %v2867, %v3071
        %v3134 = vadd.f32 %v2868, %v3076
        %v3135 = vadd.f32 %v2869, %v3081
        %v3136 = vadd.f32 %v2870, %v3086
        %v3137 = vadd.f32 %v2871, %v3091
        %v3138 = vadd.f32 %v2872, %v3096
        %v3139 = vadd.f32 %v2873, %v3101
        %v3140 = vadd.f32 %v2874, %v3106
        %v3142 = vrot.slane %v646, 1
        %v3143 = vrot.slane %v647, 1
        %v3144 = vsel %vm1382, %v3142, %v3143
        %v3145 = vrot.slane %v648, 1
        %v3146 = vsel %vm1382, %v3143, %v3145
        %s3147 = scalar_lea.vmem %s1, 32
        %v3148 = vld [vmem:[%s3147] sm:$0xf]
        %v3149 = vsel %vm544, %v3144, 0
        %v3151 = vsel %vm544, %v3146, 0
        %v3154 = vsel %vm845, %v3148, 0
        %3156 = vmatprep.subr.mxu0 0.0
        %3157 = vmatpush1.msra.mxu0 %v3154
        %3158 = vmatprep.subr.mxu0 0.0
        %3159 = vmatpush1.msra.mxu0 0.0
        %3160 = vmatprep.subr.mxu0 0.0
        %3161 = vmatpush1.msra.mxu0 0.0
        %3162 = vmatprep.subr.mxu0 0.0
        %3163 = vmatpush1.msra.mxu0 0.0
        %3164 = vmatprep.subr.mxu0 0.0
        %3165 = vmatpush1.msra.mxu0 0.0
        %3166 = vmatprep.subr.mxu0 0.0
        %3167 = vmatpush1.msra.mxu0 0.0
        %3168 = vmatprep.subr.mxu0 0.0
        %3169 = vmatpush1.msra.mxu0 0.0
        %3170 = vmatprep.subr.mxu0 0.0
        %3171 = vmatpush1.msra.mxu0 0.0
        %3172 = vmatprep.subr.mxu0 0.0
        %3173 = vmatpush1.msra.mxu0 0.0
        %3174 = vmatprep.subr.mxu0 0.0
        %3175 = vmatpush1.msra.mxu0 0.0
        %3176 = vmatprep.subr.mxu0 0.0
        %3177 = vmatpush1.msra.mxu0 0.0
        %3178 = vmatprep.subr.mxu0 0.0
        %3179 = vmatpush1.msra.mxu0 0.0
        %3180 = vmatprep.subr.mxu0 0.0
        %3181 = vmatpush1.msra.mxu0 0.0
        %3182 = vmatprep.subr.mxu0 0.0
        %3183 = vmatpush1.msra.mxu0 0.0
        %3184 = vmatprep.subr.mxu0 0.0
        %3185 = vmatpush1.msra.mxu0 0.0
        %3186 = vmatprep.subr.mxu0 0.0
        %3187 = vmatpush1.msra.mxu0 0.0
        %3188 = vmatprep.subr.mxu0 0.0
        %3189 = vmatpush1.msra.mxu0 0.0
        %3190 = vmatprep.subr.mxu0 0.0
        %3191 = vmatpush1.msra.mxu0 0.0
        %3192 = vmatprep.subr.mxu0 0.0
        %3193 = vmatpush1.msra.mxu0 0.0
        %3194 = vmatprep.subr.mxu0 0.0
        %3195 = vmatpush1.msra.mxu0 0.0
        %3196 = vmatprep.subr.mxu0 0.0
        %3197 = vmatpush1.msra.mxu0 0.0
        %3198 = vmatprep.subr.mxu0 0.0
        %3199 = vmatpush1.msra.mxu0 0.0
        %3200 = vmatprep.subr.mxu0 0.0
        %3201 = vmatpush1.msra.mxu0 0.0
        %3202 = vmatprep.subr.mxu0 0.0
        %3203 = vmatpush1.msra.mxu0 0.0
        %3204 = vmatprep.subr.mxu0 0.0
        %3205 = vmatpush1.msra.mxu0 0.0
        %3206 = vmatprep.subr.mxu0 0.0
        %3207 = vmatpush1.msra.mxu0 0.0
        %3208 = vmatprep.subr.mxu0 0.0
        %3209 = vmatpush1.msra.mxu0 0.0
        %3210 = vmatprep.subr.mxu0 0.0
        %3211 = vmatpush1.msra.mxu0 0.0
        %3212 = vmatprep.subr.mxu0 0.0
        %3213 = vmatpush1.msra.mxu0 0.0
        %3214 = vmatprep.subr.mxu0 0.0
        %3215 = vmatpush1.msra.mxu0 0.0
        %3216 = vmatprep.subr.mxu0 0.0
        %3217 = vmatpush1.msra.mxu0 0.0
        %3218 = vmatprep.subr.mxu0 0.0
        %3219 = vmatpush1.msra.mxu0 0.0
        %3220 = vmatprep.mubr.f32.mxu0 0.0
        %3221 = vmatmul.mubr.f32.gmra.mrb[0].mxu0 %v1473
        %v3222 = vpop.f32.mrb[0].mxu0
        %v3223 = vadd.f32 0.0, %v3222
        %v3224 = vpop.f32.mrb[0].mxu0
        %3225 = vmatprep.mubr.f32.mxu0 0.0
        %3226 = vmatmul.mubr.f32.gmra.mrb[0].mxu0 %v1475
        %v3227 = vpop.f32.mrb[0].mxu0
        %v3228 = vadd.f32 0.0, %v3227
        %v3229 = vpop.f32.mrb[0].mxu0
        %3230 = vmatprep.mubr.f32.mxu0 0.0
        %3231 = vmatmul.mubr.f32.gmra.mrb[0].mxu0 %v1477
        %v3232 = vpop.f32.mrb[0].mxu0
        %v3233 = vadd.f32 0.0, %v3232
        %v3234 = vpop.f32.mrb[0].mxu0
        %3235 = vmatprep.mubr.f32.mxu0 0.0
        %3236 = vmatmul.mubr.f32.gmra.mrb[0].mxu0 %v1479
        %v3237 = vpop.f32.mrb[0].mxu0
        %v3238 = vadd.f32 0.0, %v3237
        %v3239 = vpop.f32.mrb[0].mxu0
        %3240 = vmatprep.mubr.f32.mxu0 0.0
        %3241 = vmatmul.mubr.f32.gmra.mrb[0].mxu0 %v1481
        %v3242 = vpop.f32.mrb[0].mxu0
        %v3243 = vadd.f32 0.0, %v3242
        %v3244 = vpop.f32.mrb[0].mxu0
        %3245 = vmatprep.mubr.f32.mxu0 0.0
        %3246 = vmatmul.mubr.f32.gmra.mrb[0].mxu0 %v1483
        %v3247 = vpop.f32.mrb[0].mxu0
        %v3248 = vadd.f32 0.0, %v3247
        %v3249 = vpop.f32.mrb[0].mxu0
        %3250 = vmatprep.mubr.f32.mxu0 0.0
        %3251 = vmatmul.mubr.f32.gmra.mrb[0].mxu0 %v1485
        %v3252 = vpop.f32.mrb[0].mxu0
        %v3253 = vadd.f32 0.0, %v3252
        %v3254 = vpop.f32.mrb[0].mxu0
        %3255 = vmatprep.mubr.f32.mxu0 0.0
        %3256 = vmatmul.mubr.f32.gmra.mrb[0].mxu0 %v1487
        %v3257 = vpop.f32.mrb[0].mxu0
        %v3258 = vadd.f32 0.0, %v3257
        %v3259 = vpop.f32.mrb[0].mxu0
        %3260 = vmatprep.mubr.f32.mxu0 0.0
        %3261 = vmatmul.mubr.f32.gmra.mrb[0].mxu0 %v1489
        %v3262 = vpop.f32.mrb[0].mxu0
        %v3263 = vadd.f32 0.0, %v3262
        %v3264 = vpop.f32.mrb[0].mxu0
        %3265 = vmatprep.mubr.f32.mxu0 0.0
        %3266 = vmatmul.mubr.f32.gmra.mrb[0].mxu0 %v1491
        %v3267 = vpop.f32.mrb[0].mxu0
        %v3268 = vadd.f32 0.0, %v3267
        %v3269 = vpop.f32.mrb[0].mxu0
        %3270 = vmatprep.mubr.f32.mxu0 0.0
        %3271 = vmatmul.mubr.f32.gmra.mrb[0].mxu0 %v1493
        %v3272 = vpop.f32.mrb[0].mxu0
        %v3273 = vadd.f32 0.0, %v3272
        %v3274 = vpop.f32.mrb[0].mxu0
        %3275 = vmatprep.mubr.f32.mxu0 0.0
        %3276 = vmatmul.mubr.f32.gmra.mrb[0].mxu0 %v1495
        %v3277 = vpop.f32.mrb[0].mxu0
        %v3278 = vadd.f32 0.0, %v3277
        %v3279 = vpop.f32.mrb[0].mxu0
        %3280 = vmatprep.mubr.f32.mxu0 0.0
        %3281 = vmatmul.mubr.f32.gmra.mrb[0].mxu0 %v1497
        %v3282 = vpop.f32.mrb[0].mxu0
        %v3283 = vadd.f32 0.0, %v3282
        %v3284 = vpop.f32.mrb[0].mxu0
        %3285 = vmatprep.mubr.f32.mxu0 0.0
        %3286 = vmatmul.mubr.f32.gmra.mrb[0].mxu0 %v1499
        %v3287 = vpop.f32.mrb[0].mxu0
        %v3288 = vadd.f32 0.0, %v3287
        %v3289 = vpop.f32.mrb[0].mxu0
        %3290 = vmatprep.mubr.f32.mxu0 0.0
        %3291 = vmatmul.mubr.f32.gmra.mrb[0].mxu0 %v1501
        %v3292 = vpop.f32.mrb[0].mxu0
        %v3293 = vadd.f32 0.0, %v3292
        %v3294 = vpop.f32.mrb[0].mxu0
        %3295 = vmatprep.mubr.f32.mxu0 0.0
        %3296 = vmatmul.mubr.f32.gmra.mrb[0].mxu0 %v1503
        %v3297 = vpop.f32.mrb[0].mxu0
        %v3298 = vadd.f32 0.0, %v3297
        %v3299 = vpop.f32.mrb[0].mxu0
        %3300 = vmatprep.mubr.f32.mxu0 0.0
        %3301 = vmatmul.mubr.f32.gmra.mrb[0].mxu0 %v1505
        %v3302 = vpop.f32.mrb[0].mxu0
        %v3303 = vadd.f32 0.0, %v3302
        %v3304 = vpop.f32.mrb[0].mxu0
        %3305 = vmatprep.mubr.f32.mxu0 0.0
        %3306 = vmatmul.mubr.f32.gmra.mrb[0].mxu0 %v1507
        %v3307 = vpop.f32.mrb[0].mxu0
        %v3308 = vadd.f32 0.0, %v3307
        %v3309 = vpop.f32.mrb[0].mxu0
        %3310 = vmatprep.mubr.f32.mxu0 0.0
        %3311 = vmatmul.mubr.f32.gmra.mrb[0].mxu0 %v1509
        %v3312 = vpop.f32.mrb[0].mxu0
        %v3313 = vadd.f32 0.0, %v3312
        %v3314 = vpop.f32.mrb[0].mxu0
        %3315 = vmatprep.mubr.f32.mxu0 0.0
        %3316 = vmatmul.mubr.f32.gmra.mrb[0].mxu0 %v1511
        %v3317 = vpop.f32.mrb[0].mxu0
        %v3318 = vadd.f32 0.0, %v3317
        %v3319 = vpop.f32.mrb[0].mxu0
        %3320 = vmatprep.mubr.f32.mxu0 0.0
        %3321 = vmatmul.mubr.f32.gmra.mrb[0].mxu0 %v1513
        %v3322 = vpop.f32.mrb[0].mxu0
        %v3323 = vadd.f32 0.0, %v3322
        %v3324 = vpop.f32.mrb[0].mxu0
        %3325 = vmatprep.mubr.f32.mxu0 0.0
        %3326 = vmatmul.mubr.f32.gmra.mrb[0].mxu0 %v1515
        %v3327 = vpop.f32.mrb[0].mxu0
        %v3328 = vadd.f32 0.0, %v3327
        %v3329 = vpop.f32.mrb[0].mxu0
        %3330 = vmatprep.mubr.f32.mxu0 0.0
        %3331 = vmatmul.mubr.f32.gmra.mrb[0].mxu0 %v1517
        %v3332 = vpop.f32.mrb[0].mxu0
        %v3333 = vadd.f32 0.0, %v3332
        %v3334 = vpop.f32.mrb[0].mxu0
        %3335 = vmatprep.mubr.f32.mxu0 0.0
        %3336 = vmatmul.mubr.f32.gmra.mrb[0].mxu0 %v1519
        %v3337 = vpop.f32.mrb[0].mxu0
        %v3338 = vadd.f32 0.0, %v3337
        %v3339 = vpop.f32.mrb[0].mxu0
        %3340 = vmatprep.mubr.f32.mxu0 0.0
        %3341 = vmatmul.mubr.f32.gmra.mrb[0].mxu0 %v1521
        %v3342 = vpop.f32.mrb[0].mxu0
        %v3343 = vadd.f32 0.0, %v3342
        %v3344 = vpop.f32.mrb[0].mxu0
        %3345 = vmatprep.mubr.f32.mxu0 0.0
        %3346 = vmatmul.mubr.f32.gmra.mrb[0].mxu0 %v1523
        %v3347 = vpop.f32.mrb[0].mxu0
        %v3348 = vadd.f32 0.0, %v3347
        %v3349 = vpop.f32.mrb[0].mxu0
        %3350 = vmatprep.mubr.f32.mxu0 0.0
        %3351 = vmatmul.mubr.f32.gmra.mrb[0].mxu0 %v1525
        %v3352 = vpop.f32.mrb[0].mxu0
        %v3353 = vadd.f32 0.0, %v3352
        %v3354 = vpop.f32.mrb[0].mxu0
        %3355 = vmatprep.mubr.f32.mxu0 0.0
        %3356 = vmatmul.mubr.f32.gmra.mrb[0].mxu0 %v1527
        %v3357 = vpop.f32.mrb[0].mxu0
        %v3358 = vadd.f32 0.0, %v3357
        %v3359 = vpop.f32.mrb[0].mxu0
        %3360 = vmatprep.mubr.f32.mxu0 0.0
        %3361 = vmatmul.mubr.f32.gmra.mrb[0].mxu0 %v2337
        %v3362 = vpop.f32.mrb[0].mxu0
        %v3363 = vadd.f32 0.0, %v3362
        %v3364 = vpop.f32.mrb[0].mxu0
        %3365 = vmatprep.mubr.f32.mxu0 0.0
        %3366 = vmatmul.mubr.f32.gmra.mrb[0].mxu0 %v2339
        %v3367 = vpop.f32.mrb[0].mxu0
        %v3368 = vadd.f32 0.0, %v3367
        %v3369 = vpop.f32.mrb[0].mxu0
        %3370 = vmatprep.mubr.f32.mxu0 0.0
        %3371 = vmatmul.mubr.f32.gmra.mrb[0].mxu0 %v3149
        %v3372 = vpop.f32.mrb[0].mxu0
        %v3373 = vadd.f32 0.0, %v3372
        %v3374 = vpop.f32.mrb[0].mxu0
        %3375 = vmatprep.mubr.f32.mxu0 0.0
        %3376 = vmatmul.mubr.f32.gmra.mrb[0].mxu0 %v3151
        %v3377 = vpop.f32.mrb[0].mxu0
        %v3378 = vadd.f32 0.0, %v3377
        %v3379 = vpop.f32.mrb[0].mxu0
        %3380 = vdwg.mxu0
        %v3381 = vadd.f32 %v3109, %v3223
        %v3382 = vadd.f32 %v3110, %v3228
        %v3383 = vadd.f32 %v3111, %v3233
        %v3384 = vadd.f32 %v3112, %v3238
        %v3385 = vadd.f32 %v3113, %v3243
        %v3386 = vadd.f32 %v3114, %v3248
        %v3387 = vadd.f32 %v3115, %v3253
        %v3388 = vadd.f32 %v3116, %v3258
        %v3389 = vadd.f32 %v3117, %v3263
        %v3390 = vadd.f32 %v3118, %v3268
        %v3391 = vadd.f32 %v3119, %v3273
        %v3392 = vadd.f32 %v3120, %v3278
        %v3393 = vadd.f32 %v3121, %v3283
        %v3394 = vadd.f32 %v3122, %v3288
        %v3395 = vadd.f32 %v3123, %v3293
        %v3396 = vadd.f32 %v3124, %v3298
        %v3397 = vadd.f32 %v3125, %v3303
        %v3398 = vadd.f32 %v3126, %v3308
        %v3399 = vadd.f32 %v3127, %v3313
        %v3400 = vadd.f32 %v3128, %v3318
        %v3401 = vadd.f32 %v3129, %v3323
        %v3402 = vadd.f32 %v3130, %v3328
        %v3403 = vadd.f32 %v3131, %v3333
        %v3404 = vadd.f32 %v3132, %v3338
        %v3405 = vadd.f32 %v3133, %v3343
        %v3406 = vadd.f32 %v3134, %v3348
        %v3407 = vadd.f32 %v3135, %v3353
        %v3408 = vadd.f32 %v3136, %v3358
        %v3409 = vadd.f32 %v3137, %v3363
        %v3410 = vadd.f32 %v3138, %v3368
        %v3411 = vadd.f32 %v3139, %v3373
        %v3412 = vadd.f32 %v3140, %v3378
        %v3413 = vld [vmem:[%s2] sm:$0x1]
        %v3415 = vlaneseq
        %v3416 = vshrl.u32 %v3415, 7
        %v3417 = vsub.s32 0, %v3416
        %v3418 = vrot.slane %v3413, %v3417
        %v3420 = vadd.f32 %v3381, %v3418
        %v3421 = vadd.f32 %v3382, %v3418
        %v3422 = vadd.f32 %v3383, %v3418
        %v3423 = vadd.f32 %v3384, %v3418
        %v3424 = vadd.f32 %v3385, %v3418
        %v3425 = vadd.f32 %v3386, %v3418
        %v3426 = vadd.f32 %v3387, %v3418
        %v3427 = vadd.f32 %v3388, %v3418
        %v3428 = vadd.f32 %v3389, %v3418
        %v3429 = vadd.f32 %v3390, %v3418
        %v3430 = vadd.f32 %v3391, %v3418
        %v3431 = vadd.f32 %v3392, %v3418
        %v3432 = vadd.f32 %v3393, %v3418
        %v3433 = vadd.f32 %v3394, %v3418
        %v3434 = vadd.f32 %v3395, %v3418
        %v3435 = vadd.f32 %v3396, %v3418
        %v3436 = vadd.f32 %v3397, %v3418
        %v3437 = vadd.f32 %v3398, %v3418
        %v3438 = vadd.f32 %v3399, %v3418
        %v3439 = vadd.f32 %v3400, %v3418
        %v3440 = vadd.f32 %v3401, %v3418
        %v3441 = vadd.f32 %v3402, %v3418
        %v3442 = vadd.f32 %v3403, %v3418
        %v3443 = vadd.f32 %v3404, %v3418
        %v3444 = vadd.f32 %v3405, %v3418
        %v3445 = vadd.f32 %v3406, %v3418
        %v3446 = vadd.f32 %v3407, %v3418
        %v3447 = vadd.f32 %v3408, %v3418
        %v3448 = vadd.f32 %v3409, %v3418
        %v3449 = vadd.f32 %v3410, %v3418
        %v3450 = vadd.f32 %v3411, %v3418
        %v3451 = vadd.f32 %v3412, %v3418
        %v3452 = vmax.f32 %v3420, 0.0
        %v3453 = vmax.f32 %v3421, 0.0
        %v3454 = vmax.f32 %v3422, 0.0
        %v3455 = vmax.f32 %v3423, 0.0
        %v3456 = vmax.f32 %v3424, 0.0
        %v3457 = vmax.f32 %v3425, 0.0
        %v3458 = vmax.f32 %v3426, 0.0
        %v3459 = vmax.f32 %v3427, 0.0
        %v3460 = vmax.f32 %v3428, 0.0
        %v3461 = vmax.f32 %v3429, 0.0
        %v3462 = vmax.f32 %v3430, 0.0
        %v3463 = vmax.f32 %v3431, 0.0
        %v3464 = vmax.f32 %v3432, 0.0
        %v3465 = vmax.f32 %v3433, 0.0
        %v3466 = vmax.f32 %v3434, 0.0
        %v3467 = vmax.f32 %v3435, 0.0
        %v3468 = vmax.f32 %v3436, 0.0
        %v3469 = vmax.f32 %v3437, 0.0
        %v3470 = vmax.f32 %v3438, 0.0
        %v3471 = vmax.f32 %v3439, 0.0
        %v3472 = vmax.f32 %v3440, 0.0
        %v3473 = vmax.f32 %v3441, 0.0
        %v3474 = vmax.f32 %v3442, 0.0
        %v3475 = vmax.f32 %v3443, 0.0
        %v3476 = vmax.f32 %v3444, 0.0
        %v3477 = vmax.f32 %v3445, 0.0
        %v3478 = vmax.f32 %v3446, 0.0
        %v3479 = vmax.f32 %v3447, 0.0
        %v3480 = vmax.f32 %v3448, 0.0
        %v3481 = vmax.f32 %v3449, 0.0
        %v3482 = vmax.f32 %v3450, 0.0
        %v3483 = vmax.f32 %v3451, 0.0
        %vm3484 = vcmask 64512
        %3485 = vst.msk [vmem:[%s543 + $0x8] sm:$0xff] %vm3484, %v3452
        %3486 = vst.msk [vmem:[%s543 + $0x10] sm:$0xff] %vm3484, %v3453
        %3487 = vst.msk [vmem:[%s543 + $0x28] sm:$0xff] %vm3484, %v3454
        %3488 = vst.msk [vmem:[%s543 + $0x30] sm:$0xff] %vm3484, %v3455
        %3489 = vst.msk [vmem:[%s543 + $0x48] sm:$0xff] %vm3484, %v3456
        %3490 = vst.msk [vmem:[%s543 + $0x50] sm:$0xff] %vm3484, %v3457
        %3491 = vst.msk [vmem:[%s543 + $0x68] sm:$0xff] %vm3484, %v3458
        %3492 = vst.msk [vmem:[%s543 + $0x70] sm:$0xff] %vm3484, %v3459
        %3493 = vst.msk [vmem:[%s543 + $0x88] sm:$0xff] %vm3484, %v3460
        %3494 = vst.msk [vmem:[%s543 + $0x90] sm:$0xff] %vm3484, %v3461
        %3495 = vst.msk [vmem:[%s543 + $0xa8] sm:$0xff] %vm3484, %v3462
        %3496 = vst.msk [vmem:[%s543 + $0xb0] sm:$0xff] %vm3484, %v3463
        %3497 = vst.msk [vmem:[%s543 + $0xc8] sm:$0xff] %vm3484, %v3464
        %3498 = vst.msk [vmem:[%s543 + $0xd0] sm:$0xff] %vm3484, %v3465
        %3499 = vst.msk [vmem:[%s543 + $0xe8] sm:$0xff] %vm3484, %v3466
        %3500 = vst.msk [vmem:[%s543 + $0xf0] sm:$0xff] %vm3484, %v3467
        %3501 = vst.msk [vmem:[%s543 + $0x108] sm:$0xff] %vm3484, %v3468
        %3502 = vst.msk [vmem:[%s543 + $0x110] sm:$0xff] %vm3484, %v3469
        %3503 = vst.msk [vmem:[%s543 + $0x128] sm:$0xff] %vm3484, %v3470
        %3504 = vst.msk [vmem:[%s543 + $0x130] sm:$0xff] %vm3484, %v3471
        %3505 = vst.msk [vmem:[%s543 + $0x148] sm:$0xff] %vm3484, %v3472
        %3506 = vst.msk [vmem:[%s543 + $0x150] sm:$0xff] %vm3484, %v3473
        %3507 = vst.msk [vmem:[%s543 + $0x168] sm:$0xff] %vm3484, %v3474
        %3508 = vst.msk [vmem:[%s543 + $0x170] sm:$0xff] %vm3484, %v3475
        %3509 = vst.msk [vmem:[%s543 + $0x188] sm:$0xff] %vm3484, %v3476
        %3510 = vst.msk [vmem:[%s543 + $0x190] sm:$0xff] %vm3484, %v3477
        %3511 = vst.msk [vmem:[%s543 + $0x1a8] sm:$0xff] %vm3484, %v3478
        %3512 = vst.msk [vmem:[%s543 + $0x1b0] sm:$0xff] %vm3484, %v3479
        %3513 = vst.msk [vmem:[%s543 + $0x1c8] sm:$0xff] %vm3484, %v3480
        %3514 = vst.msk [vmem:[%s543 + $0x1d0] sm:$0xff] %vm3484, %v3481
        %3515 = vst.msk [vmem:[%s543 + $0x1e8] sm:$0xff] %vm3484, %v3482
        %3516 = vst.msk [vmem:[%s543 + $0x1f0] sm:$0xff] %vm3484, %v3483
        %v3517 = vld [vmem:[#allocation2] sm:$0xff]
        %v3518 = vld [vmem:[#allocation2 + $0x8] sm:$0xff]
        %v3519 = vld [vmem:[#allocation2 + $0x10] sm:$0xff]
        %v3520 = vld [vmem:[#allocation2 + $0x18] sm:$0xff]
        %v3521 = vld [vmem:[#allocation2 + $0x20] sm:$0xff]
        %v3522 = vld [vmem:[#allocation2 + $0x28] sm:$0xff]
        %v3523 = vld [vmem:[#allocation2 + $0x30] sm:$0xff]
        %v3524 = vld [vmem:[#allocation2 + $0x38] sm:$0xff]
        %v3525 = vld [vmem:[#allocation2 + $0x40] sm:$0xff]
        %v3526 = vld [vmem:[#allocation2 + $0x48] sm:$0xff]
        %v3527 = vld [vmem:[#allocation2 + $0x50] sm:$0xff]
        %v3528 = vld [vmem:[#allocation2 + $0x58] sm:$0xff]
        %v3529 = vld [vmem:[#allocation2 + $0x60] sm:$0xff]
        %v3530 = vld [vmem:[#allocation2 + $0x68] sm:$0xff]
        %v3531 = vld [vmem:[#allocation2 + $0x70] sm:$0xff]
        %v3532 = vld [vmem:[#allocation2 + $0x78] sm:$0xff]
        %v3533 = vld [vmem:[#allocation2 + $0x80] sm:$0xff]
        %v3534 = vld [vmem:[#allocation2 + $0x88] sm:$0xff]
        %v3535 = vld [vmem:[#allocation2 + $0x90] sm:$0xff]
        %v3536 = vld [vmem:[#allocation2 + $0x98] sm:$0xff]
        %v3537 = vld [vmem:[#allocation2 + $0xa0] sm:$0xff]
        %v3538 = vld [vmem:[#allocation2 + $0xa8] sm:$0xff]
        %v3539 = vld [vmem:[#allocation2 + $0xb0] sm:$0xff]
        %v3540 = vld [vmem:[#allocation2 + $0xb8] sm:$0xff]
        %v3541 = vld [vmem:[#allocation2 + $0xc0] sm:$0xff]
        %v3542 = vld [vmem:[#allocation2 + $0xc8] sm:$0xff]
        %v3543 = vld [vmem:[#allocation2 + $0xd0] sm:$0xff]
        %v3544 = vld [vmem:[#allocation2 + $0xd8] sm:$0xff]
        %v3545 = vld [vmem:[#allocation2 + $0xe0] sm:$0xff]
        %v3546 = vld [vmem:[#allocation2 + $0xe8] sm:$0xff]
        %v3547 = vld [vmem:[#allocation2 + $0xf0] sm:$0xff]
        %v3548 = vld [vmem:[#allocation2 + $0xf8] sm:$0xff]
        %v3549 = vld [vmem:[#allocation2 + $0x100] sm:$0xff]
        %v3550 = vld [vmem:[#allocation2 + $0x108] sm:$0xff]
        %v3551 = vld [vmem:[#allocation2 + $0x110] sm:$0xff]
        %v3552 = vld [vmem:[#allocation2 + $0x118] sm:$0xff]
        %v3553 = vld [vmem:[#allocation2 + $0x120] sm:$0xff]
        %v3554 = vld [vmem:[#allocation2 + $0x128] sm:$0xff]
        %v3555 = vld [vmem:[#allocation2 + $0x130] sm:$0xff]
        %v3556 = vld [vmem:[#allocation2 + $0x138] sm:$0xff]
        %v3557 = vld [vmem:[#allocation2 + $0x140] sm:$0xff]
        %v3558 = vld [vmem:[#allocation2 + $0x148] sm:$0xff]
        %v3559 = vld [vmem:[#allocation2 + $0x150] sm:$0xff]
        %v3560 = vld [vmem:[#allocation2 + $0x158] sm:$0xff]
        %v3561 = vld [vmem:[#allocation2 + $0x160] sm:$0xff]
        %v3562 = vld [vmem:[#allocation2 + $0x168] sm:$0xff]
        %v3563 = vld [vmem:[#allocation2 + $0x170] sm:$0xff]
        %v3564 = vld [vmem:[#allocation2 + $0x178] sm:$0xff]
        %v3565 = vld [vmem:[#allocation2 + $0x180] sm:$0xff]
        %v3566 = vld [vmem:[#allocation2 + $0x188] sm:$0xff]
        %v3567 = vld [vmem:[#allocation2 + $0x190] sm:$0xff]
        %v3568 = vld [vmem:[#allocation2 + $0x198] sm:$0xff]
        %v3569 = vld [vmem:[#allocation2 + $0x1a0] sm:$0xff]
        %v3570 = vld [vmem:[#allocation2 + $0x1a8] sm:$0xff]
        %v3571 = vld [vmem:[#allocation2 + $0x1b0] sm:$0xff]
        %v3572 = vld [vmem:[#allocation2 + $0x1b8] sm:$0xff]
        %v3573 = vld [vmem:[#allocation2 + $0x1c0] sm:$0xff]
        %v3574 = vld [vmem:[#allocation2 + $0x1c8] sm:$0xff]
        %v3575 = vld [vmem:[#allocation2 + $0x1d0] sm:$0xff]
        %v3576 = vld [vmem:[#allocation2 + $0x1d8] sm:$0xff]
        %v3577 = vld [vmem:[#allocation2 + $0x1e0] sm:$0xff]
        %v3578 = vld [vmem:[#allocation2 + $0x1e8] sm:$0xff]
        %v3579 = vld [vmem:[#allocation2 + $0x1f0] sm:$0xff]
        %v3580 = vld [vmem:[#allocation2 + $0x1f8] sm:$0xff]
        %v3581 = vld [vmem:[#allocation2 + $0x200] sm:$0xff]
        %v3582 = vld [vmem:[#allocation2 + $0x208] sm:$0xff]
        %v3583 = vld [vmem:[#allocation2 + $0x210] sm:$0xff]
        %v3584 = vld [vmem:[#allocation2 + $0x218] sm:$0xff]
        %v3585 = vld [vmem:[#allocation2 + $0x220] sm:$0xff]
        %v3586 = vld [vmem:[#allocation2 + $0x228] sm:$0xff]
        %v3587 = vld [vmem:[#allocation2 + $0x230] sm:$0xff]
        %v3588 = vld [vmem:[#allocation2 + $0x238] sm:$0xff]
        %v3637 = vrot.slane %v3517, 7
        %v3638 = vrot.slane %v3518, 7
        %v3639 = vsel %vm697, %v3637, %v3638
        %v3640 = vrot.slane %v3519, 7
        %v3641 = vsel %vm697, %v3638, %v3640
        %v3642 = vrot.slane %v3521, 7
        %v3643 = vrot.slane %v3522, 7
        %v3644 = vsel %vm697, %v3642, %v3643
        %v3645 = vrot.slane %v3523, 7
        %v3646 = vsel %vm697, %v3643, %v3645
        %v3647 = vrot.slane %v3525, 7
        %v3648 = vrot.slane %v3526, 7
        %v3649 = vsel %vm697, %v3647, %v3648
        %v3650 = vrot.slane %v3527, 7
        %v3651 = vsel %vm697, %v3648, %v3650
        %v3652 = vrot.slane %v3529, 7
        %v3653 = vrot.slane %v3530, 7
        %v3654 = vsel %vm697, %v3652, %v3653
        %v3655 = vrot.slane %v3531, 7
        %v3656 = vsel %vm697, %v3653, %v3655
        %v3657 = vrot.slane %v3533, 7
        %v3658 = vrot.slane %v3534, 7
        %v3659 = vsel %vm697, %v3657, %v3658
        %v3660 = vrot.slane %v3535, 7
        %v3661 = vsel %vm697, %v3658, %v3660
        %v3662 = vrot.slane %v3537, 7
        %v3663 = vrot.slane %v3538, 7
        %v3664 = vsel %vm697, %v3662, %v3663
        %v3665 = vrot.slane %v3539, 7
        %v3666 = vsel %vm697, %v3663, %v3665
        %v3667 = vrot.slane %v3541, 7
        %v3668 = vrot.slane %v3542, 7
        %v3669 = vsel %vm697, %v3667, %v3668
        %v3670 = vrot.slane %v3543, 7
        %v3671 = vsel %vm697, %v3668, %v3670
        %v3672 = vrot.slane %v3545, 7
        %v3673 = vrot.slane %v3546, 7
        %v3674 = vsel %vm697, %v3672, %v3673
        %v3675 = vrot.slane %v3547, 7
        %v3676 = vsel %vm697, %v3673, %v3675
        %v3677 = vrot.slane %v3549, 7
        %v3678 = vrot.slane %v3550, 7
        %v3679 = vsel %vm697, %v3677, %v3678
        %v3680 = vrot.slane %v3551, 7
        %v3681 = vsel %vm697, %v3678, %v3680
        %v3682 = vrot.slane %v3553, 7
        %v3683 = vrot.slane %v3554, 7
        %v3684 = vsel %vm697, %v3682, %v3683
        %v3685 = vrot.slane %v3555, 7
        %v3686 = vsel %vm697, %v3683, %v3685
        %v3687 = vrot.slane %v3557, 7
        %v3688 = vrot.slane %v3558, 7
        %v3689 = vsel %vm697, %v3687, %v3688
        %v3690 = vrot.slane %v3559, 7
        %v3691 = vsel %vm697, %v3688, %v3690
        %v3692 = vrot.slane %v3561, 7
        %v3693 = vrot.slane %v3562, 7
        %v3694 = vsel %vm697, %v3692, %v3693
        %v3695 = vrot.slane %v3563, 7
        %v3696 = vsel %vm697, %v3693, %v3695
        %v3697 = vrot.slane %v3565, 7
        %v3698 = vrot.slane %v3566, 7
        %v3699 = vsel %vm697, %v3697, %v3698
        %v3700 = vrot.slane %v3567, 7
        %v3701 = vsel %vm697, %v3698, %v3700
        %v3702 = vrot.slane %v3569, 7
        %v3703 = vrot.slane %v3570, 7
        %v3704 = vsel %vm697, %v3702, %v3703
        %v3705 = vrot.slane %v3571, 7
        %v3706 = vsel %vm697, %v3703, %v3705
        %v3707 = vrot.slane %v3573, 7
        %v3708 = vrot.slane %v3574, 7
        %v3709 = vsel %vm697, %v3707, %v3708
        %v3710 = vrot.slane %v3575, 7
        %v3711 = vsel %vm697, %v3708, %v3710
        %v3712 = vrot.slane %v3577, 7
        %v3713 = vrot.slane %v3578, 7
        %v3714 = vsel %vm697, %v3712, %v3713
        %v3715 = vrot.slane %v3579, 7
        %v3716 = vsel %vm697, %v3713, %v3715
        %v3717 = vld [vmem:[%s3] sm:$0xff]
        %s3718 = scalar_lea.vmem %s3, 8
        %v3719 = vld [vmem:[%s3718] sm:$0xff]
        %v3720 = vsel %vm3484, %v3518, 0
        %v3722 = vsel %vm3484, %v3519, 0
        %v3724 = vsel %vm3484, %v3522, 0
        %v3726 = vsel %vm3484, %v3523, 0
        %v3728 = vsel %vm3484, %v3526, 0
        %v3730 = vsel %vm3484, %v3527, 0
        %v3732 = vsel %vm3484, %v3530, 0
        %v3734 = vsel %vm3484, %v3531, 0
        %v3736 = vsel %vm3484, %v3534, 0
        %v3738 = vsel %vm3484, %v3535, 0
        %v3740 = vsel %vm3484, %v3538, 0
        %v3742 = vsel %vm3484, %v3539, 0
        %v3744 = vsel %vm3484, %v3542, 0
        %v3746 = vsel %vm3484, %v3543, 0
        %v3748 = vsel %vm3484, %v3546, 0
        %v3750 = vsel %vm3484, %v3547, 0
        %v3752 = vsel %vm3484, %v3550, 0
        %v3754 = vsel %vm3484, %v3551, 0
        %v3756 = vsel %vm3484, %v3554, 0
        %v3758 = vsel %vm3484, %v3555, 0
        %v3760 = vsel %vm3484, %v3558, 0
        %v3762 = vsel %vm3484, %v3559, 0
        %v3764 = vsel %vm3484, %v3562, 0
        %v3766 = vsel %vm3484, %v3563, 0
        %v3768 = vsel %vm3484, %v3566, 0
        %v3770 = vsel %vm3484, %v3567, 0
        %v3772 = vsel %vm3484, %v3570, 0
        %v3774 = vsel %vm3484, %v3571, 0
        %v3776 = vsel %vm3484, %v3574, 0
        %v3778 = vsel %vm3484, %v3575, 0
        %v3780 = vsel %vm3484, %v3578, 0
        %v3782 = vsel %vm3484, %v3579, 0
        %3784 = vmatprep.subr.mxu0 0.0
        %3785 = vmatpush1.msra.mxu0 %v3719
        %3786 = vmatprep.subr.mxu0 0.0
        %3787 = vmatpush1.msra.mxu0 0.0
        %3788 = vmatprep.subr.mxu0 0.0
        %3789 = vmatpush1.msra.mxu0 0.0
        %3790 = vmatprep.subr.mxu0 0.0
        %3791 = vmatpush1.msra.mxu0 0.0
        %3792 = vmatprep.subr.mxu0 0.0
        %3793 = vmatpush1.msra.mxu0 0.0
        %3794 = vmatprep.subr.mxu0 0.0
        %3795 = vmatpush1.msra.mxu0 0.0
        %3796 = vmatprep.subr.mxu0 0.0
        %3797 = vmatpush1.msra.mxu0 0.0
        %3798 = vmatprep.subr.mxu0 0.0
        %3799 = vmatpush1.msra.mxu0 0.0
        %3800 = vmatprep.subr.mxu0 0.0
        %3801 = vmatpush1.msra.mxu0 0.0
        %3802 = vmatprep.subr.mxu0 0.0
        %3803 = vmatpush1.msra.mxu0 0.0
        %3804 = vmatprep.subr.mxu0 0.0
        %3805 = vmatpush1.msra.mxu0 0.0
        %3806 = vmatprep.subr.mxu0 0.0
        %3807 = vmatpush1.msra.mxu0 0.0
        %3808 = vmatprep.subr.mxu0 0.0
        %3809 = vmatpush1.msra.mxu0 0.0
        %3810 = vmatprep.subr.mxu0 0.0
        %3811 = vmatpush1.msra.mxu0 0.0
        %3812 = vmatprep.subr.mxu0 0.0
        %3813 = vmatpush1.msra.mxu0 0.0
        %3814 = vmatprep.subr.mxu0 0.0
        %3815 = vmatpush1.msra.mxu0 0.0
        %3816 = vmatprep.subr.mxu0 0.0
        %3817 = vmatpush1.msra.mxu0 0.0
        %3818 = vmatprep.subr.mxu0 0.0
        %3819 = vmatpush1.msra.mxu0 0.0
        %3820 = vmatprep.subr.mxu0 0.0
        %3821 = vmatpush1.msra.mxu0 0.0
        %3822 = vmatprep.subr.mxu0 0.0
        %3823 = vmatpush1.msra.mxu0 0.0
        %3824 = vmatprep.subr.mxu0 0.0
        %3825 = vmatpush1.msra.mxu0 0.0
        %3826 = vmatprep.subr.mxu0 0.0
        %3827 = vmatpush1.msra.mxu0 0.0
        %3828 = vmatprep.subr.mxu0 0.0
        %3829 = vmatpush1.msra.mxu0 0.0
        %3830 = vmatprep.subr.mxu0 0.0
        %3831 = vmatpush1.msra.mxu0 0.0
        %3832 = vmatprep.subr.mxu0 0.0
        %3833 = vmatpush1.msra.mxu0 0.0
        %3834 = vmatprep.subr.mxu0 0.0
        %3835 = vmatpush1.msra.mxu0 0.0
        %3836 = vmatprep.subr.mxu0 0.0
        %3837 = vmatpush1.msra.mxu0 0.0
        %3838 = vmatprep.subr.mxu0 0.0
        %3839 = vmatpush1.msra.mxu0 0.0
        %3840 = vmatprep.subr.mxu0 0.0
        %3841 = vmatpush1.msra.mxu0 0.0
        %3842 = vmatprep.subr.mxu0 0.0
        %3843 = vmatpush1.msra.mxu0 0.0
        %3844 = vmatprep.subr.mxu0 0.0
        %3845 = vmatpush1.msra.mxu0 0.0
        %3846 = vmatprep.subr.mxu0 0.0
        %3847 = vmatpush1.msra.mxu0 0.0
        %3848 = vmatprep.mubr.f32.mxu0 0.0
        %3849 = vmatmul.mubr.f32.gmra.mrb[0].mxu0 %v3720
        %v3850 = vpop.f32.mrb[0].mxu0
        %v3851 = vadd.f32 0.0, %v3850
        %v3852 = vpop.f32.mrb[0].mxu0
        %3853 = vmatprep.mubr.f32.mxu0 0.0
        %3854 = vmatmul.mubr.f32.gmra.mrb[0].mxu0 %v3722
        %v3855 = vpop.f32.mrb[0].mxu0
        %v3856 = vadd.f32 0.0, %v3855
        %v3857 = vpop.f32.mrb[0].mxu0
        %3858 = vmatprep.mubr.f32.mxu0 0.0
        %3859 = vmatmul.mubr.f32.gmra.mrb[0].mxu0 %v3724
        %v3860 = vpop.f32.mrb[0].mxu0
        %v3861 = vadd.f32 0.0, %v3860
        %v3862 = vpop.f32.mrb[0].mxu0
        %3863 = vmatprep.mubr.f32.mxu0 0.0
        %3864 = vmatmul.mubr.f32.gmra.mrb[0].mxu0 %v3726
        %v3865 = vpop.f32.mrb[0].mxu0
        %v3866 = vadd.f32 0.0, %v3865
        %v3867 = vpop.f32.mrb[0].mxu0
        %3868 = vmatprep.mubr.f32.mxu0 0.0
        %3869 = vmatmul.mubr.f32.gmra.mrb[0].mxu0 %v3728
        %v3870 = vpop.f32.mrb[0].mxu0
        %v3871 = vadd.f32 0.0, %v3870
        %v3872 = vpop.f32.mrb[0].mxu0
        %3873 = vmatprep.mubr.f32.mxu0 0.0
        %3874 = vmatmul.mubr.f32.gmra.mrb[0].mxu0 %v3730
        %v3875 = vpop.f32.mrb[0].mxu0
        %v3876 = vadd.f32 0.0, %v3875
        %v3877 = vpop.f32.mrb[0].mxu0
        %3878 = vmatprep.mubr.f32.mxu0 0.0
        %3879 = vmatmul.mubr.f32.gmra.mrb[0].mxu0 %v3732
        %v3880 = vpop.f32.mrb[0].mxu0
        %v3881 = vadd.f32 0.0, %v3880
        %v3882 = vpop.f32.mrb[0].mxu0
        %3883 = vmatprep.mubr.f32.mxu0 0.0
        %3884 = vmatmul.mubr.f32.gmra.mrb[0].mxu0 %v3734
        %v3885 = vpop.f32.mrb[0].mxu0
        %v3886 = vadd.f32 0.0, %v3885
        %v3887 = vpop.f32.mrb[0].mxu0
        %3888 = vmatprep.mubr.f32.mxu0 0.0
        %3889 = vmatmul.mubr.f32.gmra.mrb[0].mxu0 %v3736
        %v3890 = vpop.f32.mrb[0].mxu0
        %v3891 = vadd.f32 0.0, %v3890
        %v3892 = vpop.f32.mrb[0].mxu0
        %3893 = vmatprep.mubr.f32.mxu0 0.0
        %3894 = vmatmul.mubr.f32.gmra.mrb[0].mxu0 %v3738
        %v3895 = vpop.f32.mrb[0].mxu0
        %v3896 = vadd.f32 0.0, %v3895
        %v3897 = vpop.f32.mrb[0].mxu0
        %3898 = vmatprep.mubr.f32.mxu0 0.0
        %3899 = vmatmul.mubr.f32.gmra.mrb[0].mxu0 %v3740
        %v3900 = vpop.f32.mrb[0].mxu0
        %v3901 = vadd.f32 0.0, %v3900
        %v3902 = vpop.f32.mrb[0].mxu0
        %3903 = vmatprep.mubr.f32.mxu0 0.0
        %3904 = vmatmul.mubr.f32.gmra.mrb[0].mxu0 %v3742
        %v3905 = vpop.f32.mrb[0].mxu0
        %v3906 = vadd.f32 0.0, %v3905
        %v3907 = vpop.f32.mrb[0].mxu0
        %3908 = vmatprep.mubr.f32.mxu0 0.0
        %3909 = vmatmul.mubr.f32.gmra.mrb[0].mxu0 %v3744
        %v3910 = vpop.f32.mrb[0].mxu0
        %v3911 = vadd.f32 0.0, %v3910
        %v3912 = vpop.f32.mrb[0].mxu0
        %3913 = vmatprep.mubr.f32.mxu0 0.0
        %3914 = vmatmul.mubr.f32.gmra.mrb[0].mxu0 %v3746
        %v3915 = vpop.f32.mrb[0].mxu0
        %v3916 = vadd.f32 0.0, %v3915
        %v3917 = vpop.f32.mrb[0].mxu0
        %3918 = vmatprep.mubr.f32.mxu0 0.0
        %3919 = vmatmul.mubr.f32.gmra.mrb[0].mxu0 %v3748
        %v3920 = vpop.f32.mrb[0].mxu0
        %v3921 = vadd.f32 0.0, %v3920
        %v3922 = vpop.f32.mrb[0].mxu0
        %3923 = vmatprep.mubr.f32.mxu0 0.0
        %3924 = vmatmul.mubr.f32.gmra.mrb[0].mxu0 %v3750
        %v3925 = vpop.f32.mrb[0].mxu0
        %v3926 = vadd.f32 0.0, %v3925
        %v3927 = vpop.f32.mrb[0].mxu0
        %3928 = vmatprep.mubr.f32.mxu0 0.0
        %3929 = vmatmul.mubr.f32.gmra.mrb[0].mxu0 %v3752
        %v3930 = vpop.f32.mrb[0].mxu0
        %v3931 = vadd.f32 0.0, %v3930
        %v3932 = vpop.f32.mrb[0].mxu0
        %3933 = vmatprep.mubr.f32.mxu0 0.0
        %3934 = vmatmul.mubr.f32.gmra.mrb[0].mxu0 %v3754
        %v3935 = vpop.f32.mrb[0].mxu0
        %v3936 = vadd.f32 0.0, %v3935
        %v3937 = vpop.f32.mrb[0].mxu0
        %3938 = vmatprep.mubr.f32.mxu0 0.0
        %3939 = vmatmul.mubr.f32.gmra.mrb[0].mxu0 %v3756
        %v3940 = vpop.f32.mrb[0].mxu0
        %v3941 = vadd.f32 0.0, %v3940
        %v3942 = vpop.f32.mrb[0].mxu0
        %3943 = vmatprep.mubr.f32.mxu0 0.0
        %3944 = vmatmul.mubr.f32.gmra.mrb[0].mxu0 %v3758
        %v3945 = vpop.f32.mrb[0].mxu0
        %v3946 = vadd.f32 0.0, %v3945
        %v3947 = vpop.f32.mrb[0].mxu0
        %3948 = vmatprep.mubr.f32.mxu0 0.0
        %3949 = vmatmul.mubr.f32.gmra.mrb[0].mxu0 %v3760
        %v3950 = vpop.f32.mrb[0].mxu0
        %v3951 = vadd.f32 0.0, %v3950
        %v3952 = vpop.f32.mrb[0].mxu0
        %3953 = vmatprep.mubr.f32.mxu0 0.0
        %3954 = vmatmul.mubr.f32.gmra.mrb[0].mxu0 %v3762
        %v3955 = vpop.f32.mrb[0].mxu0
        %v3956 = vadd.f32 0.0, %v3955
        %v3957 = vpop.f32.mrb[0].mxu0
        %3958 = vmatprep.mubr.f32.mxu0 0.0
        %3959 = vmatmul.mubr.f32.gmra.mrb[0].mxu0 %v3764
        %v3960 = vpop.f32.mrb[0].mxu0
        %v3961 = vadd.f32 0.0, %v3960
        %v3962 = vpop.f32.mrb[0].mxu0
        %3963 = vmatprep.mubr.f32.mxu0 0.0
        %3964 = vmatmul.mubr.f32.gmra.mrb[0].mxu0 %v3766
        %v3965 = vpop.f32.mrb[0].mxu0
        %v3966 = vadd.f32 0.0, %v3965
        %v3967 = vpop.f32.mrb[0].mxu0
        %3968 = vmatprep.mubr.f32.mxu0 0.0
        %3969 = vmatmul.mubr.f32.gmra.mrb[0].mxu0 %v3768
        %v3970 = vpop.f32.mrb[0].mxu0
        %v3971 = vadd.f32 0.0, %v3970
        %v3972 = vpop.f32.mrb[0].mxu0
        %3973 = vmatprep.mubr.f32.mxu0 0.0
        %3974 = vmatmul.mubr.f32.gmra.mrb[0].mxu0 %v3770
        %v3975 = vpop.f32.mrb[0].mxu0
        %v3976 = vadd.f32 0.0, %v3975
        %v3977 = vpop.f32.mrb[0].mxu0
        %3978 = vmatprep.mubr.f32.mxu0 0.0
        %3979 = vmatmul.mubr.f32.gmra.mrb[0].mxu0 %v3772
        %v3980 = vpop.f32.mrb[0].mxu0
        %v3981 = vadd.f32 0.0, %v3980
        %v3982 = vpop.f32.mrb[0].mxu0
        %3983 = vmatprep.mubr.f32.mxu0 0.0
        %3984 = vmatmul.mubr.f32.gmra.mrb[0].mxu0 %v3774
        %v3985 = vpop.f32.mrb[0].mxu0
        %v3986 = vadd.f32 0.0, %v3985
        %v3987 = vpop.f32.mrb[0].mxu0
        %3988 = vmatprep.mubr.f32.mxu0 0.0
        %3989 = vmatmul.mubr.f32.gmra.mrb[0].mxu0 %v3776
        %v3990 = vpop.f32.mrb[0].mxu0
        %v3991 = vadd.f32 0.0, %v3990
        %v3992 = vpop.f32.mrb[0].mxu0
        %3993 = vmatprep.mubr.f32.mxu0 0.0
        %3994 = vmatmul.mubr.f32.gmra.mrb[0].mxu0 %v3778
        %v3995 = vpop.f32.mrb[0].mxu0
        %v3996 = vadd.f32 0.0, %v3995
        %v3997 = vpop.f32.mrb[0].mxu0
        %3998 = vmatprep.mubr.f32.mxu0 0.0
        %3999 = vmatmul.mubr.f32.gmra.mrb[0].mxu0 %v3780
        %v4000 = vpop.f32.mrb[0].mxu0
        %v4001 = vadd.f32 0.0, %v4000
        %v4002 = vpop.f32.mrb[0].mxu0
        %4003 = vmatprep.mubr.f32.mxu0 0.0
        %4004 = vmatmul.mubr.f32.gmra.mrb[0].mxu0 %v3782
        %v4005 = vpop.f32.mrb[0].mxu0
        %v4006 = vadd.f32 0.0, %v4005
        %v4007 = vpop.f32.mrb[0].mxu0
        %4008 = vdwg.mxu0
        %v4009 = vsel %vm3484, %v3639, 0
        %v4011 = vsel %vm3484, %v3641, 0
        %v4013 = vsel %vm3484, %v3644, 0
        %v4015 = vsel %vm3484, %v3646, 0
        %v4017 = vsel %vm3484, %v3649, 0
        %v4019 = vsel %vm3484, %v3651, 0
        %v4021 = vsel %vm3484, %v3654, 0
        %v4023 = vsel %vm3484, %v3656, 0
        %v4025 = vsel %vm3484, %v3659, 0
        %v4027 = vsel %vm3484, %v3661, 0
        %v4029 = vsel %vm3484, %v3664, 0
        %v4031 = vsel %vm3484, %v3666, 0
        %v4033 = vsel %vm3484, %v3669, 0
        %v4035 = vsel %vm3484, %v3671, 0
        %v4037 = vsel %vm3484, %v3674, 0
        %v4039 = vsel %vm3484, %v3676, 0
        %v4041 = vsel %vm3484, %v3679, 0
        %v4043 = vsel %vm3484, %v3681, 0
        %v4045 = vsel %vm3484, %v3684, 0
        %v4047 = vsel %vm3484, %v3686, 0
        %v4049 = vsel %vm3484, %v3689, 0
        %v4051 = vsel %vm3484, %v3691, 0
        %v4053 = vsel %vm3484, %v3694, 0
        %v4055 = vsel %vm3484, %v3696, 0
        %v4057 = vsel %vm3484, %v3699, 0
        %v4059 = vsel %vm3484, %v3701, 0
        %v4061 = vsel %vm3484, %v3704, 0
        %v4063 = vsel %vm3484, %v3706, 0
        %v4065 = vsel %vm3484, %v3709, 0
        %v4067 = vsel %vm3484, %v3711, 0
        %v4069 = vsel %vm3484, %v3714, 0
        %v4071 = vsel %vm3484, %v3716, 0
        %4073 = vmatprep.subr.mxu0 0.0
        %4074 = vmatpush1.msra.mxu0 %v3717
        %4075 = vmatprep.subr.mxu0 0.0
        %4076 = vmatpush1.msra.mxu0 0.0
        %4077 = vmatprep.subr.mxu0 0.0
        %4078 = vmatpush1.msra.mxu0 0.0
        %4079 = vmatprep.subr.mxu0 0.0
        %4080 = vmatpush1.msra.mxu0 0.0
        %4081 = vmatprep.subr.mxu0 0.0
        %4082 = vmatpush1.msra.mxu0 0.0
        %4083 = vmatprep.subr.mxu0 0.0
        %4084 = vmatpush1.msra.mxu0 0.0
        %4085 = vmatprep.subr.mxu0 0.0
        %4086 = vmatpush1.msra.mxu0 0.0
        %4087 = vmatprep.subr.mxu0 0.0
        %4088 = vmatpush1.msra.mxu0 0.0
        %4089 = vmatprep.subr.mxu0 0.0
        %4090 = vmatpush1.msra.mxu0 0.0
        %4091 = vmatprep.subr.mxu0 0.0
        %4092 = vmatpush1.msra.mxu0 0.0
        %4093 = vmatprep.subr.mxu0 0.0
        %4094 = vmatpush1.msra.mxu0 0.0
        %4095 = vmatprep.subr.mxu0 0.0
        %4096 = vmatpush1.msra.mxu0 0.0
        %4097 = vmatprep.subr.mxu0 0.0
        %4098 = vmatpush1.msra.mxu0 0.0
        %4099 = vmatprep.subr.mxu0 0.0
        %4100 = vmatpush1.msra.mxu0 0.0
        %4101 = vmatprep.subr.mxu0 0.0
        %4102 = vmatpush1.msra.mxu0 0.0
        %4103 = vmatprep.subr.mxu0 0.0
        %4104 = vmatpush1.msra.mxu0 0.0
        %4105 = vmatprep.subr.mxu0 0.0
        %4106 = vmatpush1.msra.mxu0 0.0
        %4107 = vmatprep.subr.mxu0 0.0
        %4108 = vmatpush1.msra.mxu0 0.0
        %4109 = vmatprep.subr.mxu0 0.0
        %4110 = vmatpush1.msra.mxu0 0.0
        %4111 = vmatprep.subr.mxu0 0.0
        %4112 = vmatpush1.msra.mxu0 0.0
        %4113 = vmatprep.subr.mxu0 0.0
        %4114 = vmatpush1.msra.mxu0 0.0
        %4115 = vmatprep.subr.mxu0 0.0
        %4116 = vmatpush1.msra.mxu0 0.0
        %4117 = vmatprep.subr.mxu0 0.0
        %4118 = vmatpush1.msra.mxu0 0.0
        %4119 = vmatprep.subr.mxu0 0.0
        %4120 = vmatpush1.msra.mxu0 0.0
        %4121 = vmatprep.subr.mxu0 0.0
        %4122 = vmatpush1.msra.mxu0 0.0
        %4123 = vmatprep.subr.mxu0 0.0
        %4124 = vmatpush1.msra.mxu0 0.0
        %4125 = vmatprep.subr.mxu0 0.0
        %4126 = vmatpush1.msra.mxu0 0.0
        %4127 = vmatprep.subr.mxu0 0.0
        %4128 = vmatpush1.msra.mxu0 0.0
        %4129 = vmatprep.subr.mxu0 0.0
        %4130 = vmatpush1.msra.mxu0 0.0
        %4131 = vmatprep.subr.mxu0 0.0
        %4132 = vmatpush1.msra.mxu0 0.0
        %4133 = vmatprep.subr.mxu0 0.0
        %4134 = vmatpush1.msra.mxu0 0.0
        %4135 = vmatprep.subr.mxu0 0.0
        %4136 = vmatpush1.msra.mxu0 0.0
        %4137 = vmatprep.mubr.f32.mxu0 0.0
        %4138 = vmatmul.mubr.f32.gmra.mrb[0].mxu0 %v4009
        %v4139 = vpop.f32.mrb[0].mxu0
        %v4140 = vadd.f32 %v3851, %v4139
        %v4141 = vpop.f32.mrb[0].mxu0
        %4142 = vmatprep.mubr.f32.mxu0 0.0
        %4143 = vmatmul.mubr.f32.gmra.mrb[0].mxu0 %v4011
        %v4144 = vpop.f32.mrb[0].mxu0
        %v4145 = vadd.f32 %v3856, %v4144
        %v4146 = vpop.f32.mrb[0].mxu0
        %4147 = vmatprep.mubr.f32.mxu0 0.0
        %4148 = vmatmul.mubr.f32.gmra.mrb[0].mxu0 %v4013
        %v4149 = vpop.f32.mrb[0].mxu0
        %v4150 = vadd.f32 %v3861, %v4149
        %v4151 = vpop.f32.mrb[0].mxu0
        %4152 = vmatprep.mubr.f32.mxu0 0.0
        %4153 = vmatmul.mubr.f32.gmra.mrb[0].mxu0 %v4015
        %v4154 = vpop.f32.mrb[0].mxu0
        %v4155 = vadd.f32 %v3866, %v4154
        %v4156 = vpop.f32.mrb[0].mxu0
        %4157 = vmatprep.mubr.f32.mxu0 0.0
        %4158 = vmatmul.mubr.f32.gmra.mrb[0].mxu0 %v4017
        %v4159 = vpop.f32.mrb[0].mxu0
        %v4160 = vadd.f32 %v3871, %v4159
        %v4161 = vpop.f32.mrb[0].mxu0
        %4162 = vmatprep.mubr.f32.mxu0 0.0
        %4163 = vmatmul.mubr.f32.gmra.mrb[0].mxu0 %v4019
        %v4164 = vpop.f32.mrb[0].mxu0
        %v4165 = vadd.f32 %v3876, %v4164
        %v4166 = vpop.f32.mrb[0].mxu0
        %4167 = vmatprep.mubr.f32.mxu0 0.0
        %4168 = vmatmul.mubr.f32.gmra.mrb[0].mxu0 %v4021
        %v4169 = vpop.f32.mrb[0].mxu0
        %v4170 = vadd.f32 %v3881, %v4169
        %v4171 = vpop.f32.mrb[0].mxu0
        %4172 = vmatprep.mubr.f32.mxu0 0.0
        %4173 = vmatmul.mubr.f32.gmra.mrb[0].mxu0 %v4023
        %v4174 = vpop.f32.mrb[0].mxu0
        %v4175 = vadd.f32 %v3886, %v4174
        %v4176 = vpop.f32.mrb[0].mxu0
        %4177 = vmatprep.mubr.f32.mxu0 0.0
        %4178 = vmatmul.mubr.f32.gmra.mrb[0].mxu0 %v4025
        %v4179 = vpop.f32.mrb[0].mxu0
        %v4180 = vadd.f32 %v3891, %v4179
        %v4181 = vpop.f32.mrb[0].mxu0
        %4182 = vmatprep.mubr.f32.mxu0 0.0
        %4183 = vmatmul.mubr.f32.gmra.mrb[0].mxu0 %v4027
        %v4184 = vpop.f32.mrb[0].mxu0
        %v4185 = vadd.f32 %v3896, %v4184
        %v4186 = vpop.f32.mrb[0].mxu0
        %4187 = vmatprep.mubr.f32.mxu0 0.0
        %4188 = vmatmul.mubr.f32.gmra.mrb[0].mxu0 %v4029
        %v4189 = vpop.f32.mrb[0].mxu0
        %v4190 = vadd.f32 %v3901, %v4189
        %v4191 = vpop.f32.mrb[0].mxu0
        %4192 = vmatprep.mubr.f32.mxu0 0.0
        %4193 = vmatmul.mubr.f32.gmra.mrb[0].mxu0 %v4031
        %v4194 = vpop.f32.mrb[0].mxu0
        %v4195 = vadd.f32 %v3906, %v4194
        %v4196 = vpop.f32.mrb[0].mxu0
        %4197 = vmatprep.mubr.f32.mxu0 0.0
        %4198 = vmatmul.mubr.f32.gmra.mrb[0].mxu0 %v4033
        %v4199 = vpop.f32.mrb[0].mxu0
        %v4200 = vadd.f32 %v3911, %v4199
        %v4201 = vpop.f32.mrb[0].mxu0
        %4202 = vmatprep.mubr.f32.mxu0 0.0
        %4203 = vmatmul.mubr.f32.gmra.mrb[0].mxu0 %v4035
        %v4204 = vpop.f32.mrb[0].mxu0
        %v4205 = vadd.f32 %v3916, %v4204
        %v4206 = vpop.f32.mrb[0].mxu0
        %4207 = vmatprep.mubr.f32.mxu0 0.0
        %4208 = vmatmul.mubr.f32.gmra.mrb[0].mxu0 %v4037
        %v4209 = vpop.f32.mrb[0].mxu0
        %v4210 = vadd.f32 %v3921, %v4209
        %v4211 = vpop.f32.mrb[0].mxu0
        %4212 = vmatprep.mubr.f32.mxu0 0.0
        %4213 = vmatmul.mubr.f32.gmra.mrb[0].mxu0 %v4039
        %v4214 = vpop.f32.mrb[0].mxu0
        %v4215 = vadd.f32 %v3926, %v4214
        %v4216 = vpop.f32.mrb[0].mxu0
        %4217 = vmatprep.mubr.f32.mxu0 0.0
        %4218 = vmatmul.mubr.f32.gmra.mrb[0].mxu0 %v4041
        %v4219 = vpop.f32.mrb[0].mxu0
        %v4220 = vadd.f32 %v3931, %v4219
        %v4221 = vpop.f32.mrb[0].mxu0
        %4222 = vmatprep.mubr.f32.mxu0 0.0
        %4223 = vmatmul.mubr.f32.gmra.mrb[0].mxu0 %v4043
        %v4224 = vpop.f32.mrb[0].mxu0
        %v4225 = vadd.f32 %v3936, %v4224
        %v4226 = vpop.f32.mrb[0].mxu0
        %4227 = vmatprep.mubr.f32.mxu0 0.0
        %4228 = vmatmul.mubr.f32.gmra.mrb[0].mxu0 %v4045
        %v4229 = vpop.f32.mrb[0].mxu0
        %v4230 = vadd.f32 %v3941, %v4229
        %v4231 = vpop.f32.mrb[0].mxu0
        %4232 = vmatprep.mubr.f32.mxu0 0.0
        %4233 = vmatmul.mubr.f32.gmra.mrb[0].mxu0 %v4047
        %v4234 = vpop.f32.mrb[0].mxu0
        %v4235 = vadd.f32 %v3946, %v4234
        %v4236 = vpop.f32.mrb[0].mxu0
        %4237 = vmatprep.mubr.f32.mxu0 0.0
        %4238 = vmatmul.mubr.f32.gmra.mrb[0].mxu0 %v4049
        %v4239 = vpop.f32.mrb[0].mxu0
        %v4240 = vadd.f32 %v3951, %v4239
        %v4241 = vpop.f32.mrb[0].mxu0
        %4242 = vmatprep.mubr.f32.mxu0 0.0
        %4243 = vmatmul.mubr.f32.gmra.mrb[0].mxu0 %v4051
        %v4244 = vpop.f32.mrb[0].mxu0
        %v4245 = vadd.f32 %v3956, %v4244
        %v4246 = vpop.f32.mrb[0].mxu0
        %4247 = vmatprep.mubr.f32.mxu0 0.0
        %4248 = vmatmul.mubr.f32.gmra.mrb[0].mxu0 %v4053
        %v4249 = vpop.f32.mrb[0].mxu0
        %v4250 = vadd.f32 %v3961, %v4249
        %v4251 = vpop.f32.mrb[0].mxu0
        %4252 = vmatprep.mubr.f32.mxu0 0.0
        %4253 = vmatmul.mubr.f32.gmra.mrb[0].mxu0 %v4055
        %v4254 = vpop.f32.mrb[0].mxu0
        %v4255 = vadd.f32 %v3966, %v4254
        %v4256 = vpop.f32.mrb[0].mxu0
        %4257 = vmatprep.mubr.f32.mxu0 0.0
        %4258 = vmatmul.mubr.f32.gmra.mrb[0].mxu0 %v4057
        %v4259 = vpop.f32.mrb[0].mxu0
        %v4260 = vadd.f32 %v3971, %v4259
        %v4261 = vpop.f32.mrb[0].mxu0
        %4262 = vmatprep.mubr.f32.mxu0 0.0
        %4263 = vmatmul.mubr.f32.gmra.mrb[0].mxu0 %v4059
        %v4264 = vpop.f32.mrb[0].mxu0
        %v4265 = vadd.f32 %v3976, %v4264
        %v4266 = vpop.f32.mrb[0].mxu0
        %4267 = vmatprep.mubr.f32.mxu0 0.0
        %4268 = vmatmul.mubr.f32.gmra.mrb[0].mxu0 %v4061
        %v4269 = vpop.f32.mrb[0].mxu0
        %v4270 = vadd.f32 %v3981, %v4269
        %v4271 = vpop.f32.mrb[0].mxu0
        %4272 = vmatprep.mubr.f32.mxu0 0.0
        %4273 = vmatmul.mubr.f32.gmra.mrb[0].mxu0 %v4063
        %v4274 = vpop.f32.mrb[0].mxu0
        %v4275 = vadd.f32 %v3986, %v4274
        %v4276 = vpop.f32.mrb[0].mxu0
        %4277 = vmatprep.mubr.f32.mxu0 0.0
        %4278 = vmatmul.mubr.f32.gmra.mrb[0].mxu0 %v4065
        %v4279 = vpop.f32.mrb[0].mxu0
        %v4280 = vadd.f32 %v3991, %v4279
        %v4281 = vpop.f32.mrb[0].mxu0
        %4282 = vmatprep.mubr.f32.mxu0 0.0
        %4283 = vmatmul.mubr.f32.gmra.mrb[0].mxu0 %v4067
        %v4284 = vpop.f32.mrb[0].mxu0
        %v4285 = vadd.f32 %v3996, %v4284
        %v4286 = vpop.f32.mrb[0].mxu0
        %4287 = vmatprep.mubr.f32.mxu0 0.0
        %4288 = vmatmul.mubr.f32.gmra.mrb[0].mxu0 %v4069
        %v4289 = vpop.f32.mrb[0].mxu0
        %v4290 = vadd.f32 %v4001, %v4289
        %v4291 = vpop.f32.mrb[0].mxu0
        %4292 = vmatprep.mubr.f32.mxu0 0.0
        %4293 = vmatmul.mubr.f32.gmra.mrb[0].mxu0 %v4071
        %v4294 = vpop.f32.mrb[0].mxu0
        %v4295 = vadd.f32 %v4006, %v4294
        %v4296 = vpop.f32.mrb[0].mxu0
        %4297 = vdwg.mxu0
        %v4314 = vrot.slane %v3518, 1
        %v4315 = vrot.slane %v3519, 1
        %v4316 = vsel %vm1382, %v4314, %v4315
        %v4317 = vrot.slane %v3520, 1
        %v4318 = vsel %vm1382, %v4315, %v4317
        %v4319 = vrot.slane %v3522, 1
        %v4320 = vrot.slane %v3523, 1
        %v4321 = vsel %vm1382, %v4319, %v4320
        %v4322 = vrot.slane %v3524, 1
        %v4323 = vsel %vm1382, %v4320, %v4322
        %v4324 = vrot.slane %v3526, 1
        %v4325 = vrot.slane %v3527, 1
        %v4326 = vsel %vm1382, %v4324, %v4325
        %v4327 = vrot.slane %v3528, 1
        %v4328 = vsel %vm1382, %v4325, %v4327
        %v4329 = vrot.slane %v3530, 1
        %v4330 = vrot.slane %v3531, 1
        %v4331 = vsel %vm1382, %v4329, %v4330
        %v4332 = vrot.slane %v3532, 1
        %v4333 = vsel %vm1382, %v4330, %v4332
        %v4334 = vrot.slane %v3534, 1
        %v4335 = vrot.slane %v3535, 1
        %v4336 = vsel %vm1382, %v4334, %v4335
        %v4337 = vrot.slane %v3536, 1
        %v4338 = vsel %vm1382, %v4335, %v4337
        %v4339 = vrot.slane %v3538, 1
        %v4340 = vrot.slane %v3539, 1
        %v4341 = vsel %vm1382, %v4339, %v4340
        %v4342 = vrot.slane %v3540, 1
        %v4343 = vsel %vm1382, %v4340, %v4342
        %v4344 = vrot.slane %v3542, 1
        %v4345 = vrot.slane %v3543, 1
        %v4346 = vsel %vm1382, %v4344, %v4345
        %v4347 = vrot.slane %v3544, 1
        %v4348 = vsel %vm1382, %v4345, %v4347
        %v4349 = vrot.slane %v3546, 1
        %v4350 = vrot.slane %v3547, 1
        %v4351 = vsel %vm1382, %v4349, %v4350
        %v4352 = vrot.slane %v3548, 1
        %v4353 = vsel %vm1382, %v4350, %v4352
        %v4354 = vrot.slane %v3550, 1
        %v4355 = vrot.slane %v3551, 1
        %v4356 = vsel %vm1382, %v4354, %v4355
        %v4357 = vrot.slane %v3552, 1
        %v4358 = vsel %vm1382, %v4355, %v4357
        %v4359 = vrot.slane %v3554, 1
        %v4360 = vrot.slane %v3555, 1
        %v4361 = vsel %vm1382, %v4359, %v4360
        %v4362 = vrot.slane %v3556, 1
        %v4363 = vsel %vm1382, %v4360, %v4362
        %v4364 = vrot.slane %v3558, 1
        %v4365 = vrot.slane %v3559, 1
        %v4366 = vsel %vm1382, %v4364, %v4365
        %v4367 = vrot.slane %v3560, 1
        %v4368 = vsel %vm1382, %v4365, %v4367
        %v4369 = vrot.slane %v3562, 1
        %v4370 = vrot.slane %v3563, 1
        %v4371 = vsel %vm1382, %v4369, %v4370
        %v4372 = vrot.slane %v3564, 1
        %v4373 = vsel %vm1382, %v4370, %v4372
        %v4374 = vrot.slane %v3566, 1
        %v4375 = vrot.slane %v3567, 1
        %v4376 = vsel %vm1382, %v4374, %v4375
        %v4377 = vrot.slane %v3568, 1
        %v4378 = vsel %vm1382, %v4375, %v4377
        %v4379 = vrot.slane %v3570, 1
        %v4380 = vrot.slane %v3571, 1
        %v4381 = vsel %vm1382, %v4379, %v4380
        %v4382 = vrot.slane %v3572, 1
        %v4383 = vsel %vm1382, %v4380, %v4382
        %v4384 = vrot.slane %v3574, 1
        %v4385 = vrot.slane %v3575, 1
        %v4386 = vsel %vm1382, %v4384, %v4385
        %v4387 = vrot.slane %v3576, 1
        %v4388 = vsel %vm1382, %v4385, %v4387
        %v4389 = vrot.slane %v3578, 1
        %v4390 = vrot.slane %v3579, 1
        %v4391 = vsel %vm1382, %v4389, %v4390
        %v4392 = vrot.slane %v3580, 1
        %v4393 = vsel %vm1382, %v4390, %v4392
        %s4394 = scalar_lea.vmem %s3, 16
        %v4395 = vld [vmem:[%s4394] sm:$0xff]
        %v4396 = vsel %vm3484, %v4316, 0
        %v4398 = vsel %vm3484, %v4318, 0
        %v4400 = vsel %vm3484, %v4321, 0
        %v4402 = vsel %vm3484, %v4323, 0
        %v4404 = vsel %vm3484, %v4326, 0
        %v4406 = vsel %vm3484, %v4328, 0
        %v4408 = vsel %vm3484, %v4331, 0
        %v4410 = vsel %vm3484, %v4333, 0
        %v4412 = vsel %vm3484, %v4336, 0
        %v4414 = vsel %vm3484, %v4338, 0
        %v4416 = vsel %vm3484, %v4341, 0
        %v4418 = vsel %vm3484, %v4343, 0
        %v4420 = vsel %vm3484, %v4346, 0
        %v4422 = vsel %vm3484, %v4348, 0
        %v4424 = vsel %vm3484, %v4351, 0
        %v4426 = vsel %vm3484, %v4353, 0
        %v4428 = vsel %vm3484, %v4356, 0
        %v4430 = vsel %vm3484, %v4358, 0
        %v4432 = vsel %vm3484, %v4361, 0
        %v4434 = vsel %vm3484, %v4363, 0
        %v4436 = vsel %vm3484, %v4366, 0
        %v4438 = vsel %vm3484, %v4368, 0
        %v4440 = vsel %vm3484, %v4371, 0
        %v4442 = vsel %vm3484, %v4373, 0
        %v4444 = vsel %vm3484, %v4376, 0
        %v4446 = vsel %vm3484, %v4378, 0
        %v4448 = vsel %vm3484, %v4381, 0
        %v4450 = vsel %vm3484, %v4383, 0
        %v4452 = vsel %vm3484, %v4386, 0
        %v4454 = vsel %vm3484, %v4388, 0
        %v4456 = vsel %vm3484, %v4391, 0
        %v4458 = vsel %vm3484, %v4393, 0
        %4460 = vmatprep.subr.mxu0 0.0
        %4461 = vmatpush1.msra.mxu0 %v4395
        %4462 = vmatprep.subr.mxu0 0.0
        %4463 = vmatpush1.msra.mxu0 0.0
        %4464 = vmatprep.subr.mxu0 0.0
        %4465 = vmatpush1.msra.mxu0 0.0
        %4466 = vmatprep.subr.mxu0 0.0
        %4467 = vmatpush1.msra.mxu0 0.0
        %4468 = vmatprep.subr.mxu0 0.0
        %4469 = vmatpush1.msra.mxu0 0.0
        %4470 = vmatprep.subr.mxu0 0.0
        %4471 = vmatpush1.msra.mxu0 0.0
        %4472 = vmatprep.subr.mxu0 0.0
        %4473 = vmatpush1.msra.mxu0 0.0
        %4474 = vmatprep.subr.mxu0 0.0
        %4475 = vmatpush1.msra.mxu0 0.0
        %4476 = vmatprep.subr.mxu0 0.0
        %4477 = vmatpush1.msra.mxu0 0.0
        %4478 = vmatprep.subr.mxu0 0.0
        %4479 = vmatpush1.msra.mxu0 0.0
        %4480 = vmatprep.subr.mxu0 0.0
        %4481 = vmatpush1.msra.mxu0 0.0
        %4482 = vmatprep.subr.mxu0 0.0
        %4483 = vmatpush1.msra.mxu0 0.0
        %4484 = vmatprep.subr.mxu0 0.0
        %4485 = vmatpush1.msra.mxu0 0.0
        %4486 = vmatprep.subr.mxu0 0.0
        %4487 = vmatpush1.msra.mxu0 0.0
        %4488 = vmatprep.subr.mxu0 0.0
        %4489 = vmatpush1.msra.mxu0 0.0
        %4490 = vmatprep.subr.mxu0 0.0
        %4491 = vmatpush1.msra.mxu0 0.0
        %4492 = vmatprep.subr.mxu0 0.0
        %4493 = vmatpush1.msra.mxu0 0.0
        %4494 = vmatprep.subr.mxu0 0.0
        %4495 = vmatpush1.msra.mxu0 0.0
        %4496 = vmatprep.subr.mxu0 0.0
        %4497 = vmatpush1.msra.mxu0 0.0
        %4498 = vmatprep.subr.mxu0 0.0
        %4499 = vmatpush1.msra.mxu0 0.0
        %4500 = vmatprep.subr.mxu0 0.0
        %4501 = vmatpush1.msra.mxu0 0.0
        %4502 = vmatprep.subr.mxu0 0.0
        %4503 = vmatpush1.msra.mxu0 0.0
        %4504 = vmatprep.subr.mxu0 0.0
        %4505 = vmatpush1.msra.mxu0 0.0
        %4506 = vmatprep.subr.mxu0 0.0
        %4507 = vmatpush1.msra.mxu0 0.0
        %4508 = vmatprep.subr.mxu0 0.0
        %4509 = vmatpush1.msra.mxu0 0.0
        %4510 = vmatprep.subr.mxu0 0.0
        %4511 = vmatpush1.msra.mxu0 0.0
        %4512 = vmatprep.subr.mxu0 0.0
        %4513 = vmatpush1.msra.mxu0 0.0
        %4514 = vmatprep.subr.mxu0 0.0
        %4515 = vmatpush1.msra.mxu0 0.0
        %4516 = vmatprep.subr.mxu0 0.0
        %4517 = vmatpush1.msra.mxu0 0.0
        %4518 = vmatprep.subr.mxu0 0.0
        %4519 = vmatpush1.msra.mxu0 0.0
        %4520 = vmatprep.subr.mxu0 0.0
        %4521 = vmatpush1.msra.mxu0 0.0
        %4522 = vmatprep.subr.mxu0 0.0
        %4523 = vmatpush1.msra.mxu0 0.0
        %4524 = vmatprep.mubr.f32.mxu0 0.0
        %4525 = vmatmul.mubr.f32.gmra.mrb[0].mxu0 %v4396
        %v4526 = vpop.f32.mrb[0].mxu0
        %v4527 = vadd.f32 0.0, %v4526
        %v4528 = vpop.f32.mrb[0].mxu0
        %4529 = vmatprep.mubr.f32.mxu0 0.0
        %4530 = vmatmul.mubr.f32.gmra.mrb[0].mxu0 %v4398
        %v4531 = vpop.f32.mrb[0].mxu0
        %v4532 = vadd.f32 0.0, %v4531
        %v4533 = vpop.f32.mrb[0].mxu0
        %4534 = vmatprep.mubr.f32.mxu0 0.0
        %4535 = vmatmul.mubr.f32.gmra.mrb[0].mxu0 %v4400
        %v4536 = vpop.f32.mrb[0].mxu0
        %v4537 = vadd.f32 0.0, %v4536
        %v4538 = vpop.f32.mrb[0].mxu0
        %4539 = vmatprep.mubr.f32.mxu0 0.0
        %4540 = vmatmul.mubr.f32.gmra.mrb[0].mxu0 %v4402
        %v4541 = vpop.f32.mrb[0].mxu0
        %v4542 = vadd.f32 0.0, %v4541
        %v4543 = vpop.f32.mrb[0].mxu0
        %4544 = vmatprep.mubr.f32.mxu0 0.0
        %4545 = vmatmul.mubr.f32.gmra.mrb[0].mxu0 %v4404
        %v4546 = vpop.f32.mrb[0].mxu0
        %v4547 = vadd.f32 0.0, %v4546
        %v4548 = vpop.f32.mrb[0].mxu0
        %4549 = vmatprep.mubr.f32.mxu0 0.0
        %4550 = vmatmul.mubr.f32.gmra.mrb[0].mxu0 %v4406
        %v4551 = vpop.f32.mrb[0].mxu0
        %v4552 = vadd.f32 0.0, %v4551
        %v4553 = vpop.f32.mrb[0].mxu0
        %4554 = vmatprep.mubr.f32.mxu0 0.0
        %4555 = vmatmul.mubr.f32.gmra.mrb[0].mxu0 %v4408
        %v4556 = vpop.f32.mrb[0].mxu0
        %v4557 = vadd.f32 0.0, %v4556
        %v4558 = vpop.f32.mrb[0].mxu0
        %4559 = vmatprep.mubr.f32.mxu0 0.0
        %4560 = vmatmul.mubr.f32.gmra.mrb[0].mxu0 %v4410
        %v4561 = vpop.f32.mrb[0].mxu0
        %v4562 = vadd.f32 0.0, %v4561
        %v4563 = vpop.f32.mrb[0].mxu0
        %4564 = vmatprep.mubr.f32.mxu0 0.0
        %4565 = vmatmul.mubr.f32.gmra.mrb[0].mxu0 %v4412
        %v4566 = vpop.f32.mrb[0].mxu0
        %v4567 = vadd.f32 0.0, %v4566
        %v4568 = vpop.f32.mrb[0].mxu0
        %4569 = vmatprep.mubr.f32.mxu0 0.0
        %4570 = vmatmul.mubr.f32.gmra.mrb[0].mxu0 %v4414
        %v4571 = vpop.f32.mrb[0].mxu0
        %v4572 = vadd.f32 0.0, %v4571
        %v4573 = vpop.f32.mrb[0].mxu0
        %4574 = vmatprep.mubr.f32.mxu0 0.0
        %4575 = vmatmul.mubr.f32.gmra.mrb[0].mxu0 %v4416
        %v4576 = vpop.f32.mrb[0].mxu0
        %v4577 = vadd.f32 0.0, %v4576
        %v4578 = vpop.f32.mrb[0].mxu0
        %4579 = vmatprep.mubr.f32.mxu0 0.0
        %4580 = vmatmul.mubr.f32.gmra.mrb[0].mxu0 %v4418
        %v4581 = vpop.f32.mrb[0].mxu0
        %v4582 = vadd.f32 0.0, %v4581
        %v4583 = vpop.f32.mrb[0].mxu0
        %4584 = vmatprep.mubr.f32.mxu0 0.0
        %4585 = vmatmul.mubr.f32.gmra.mrb[0].mxu0 %v4420
        %v4586 = vpop.f32.mrb[0].mxu0
        %v4587 = vadd.f32 0.0, %v4586
        %v4588 = vpop.f32.mrb[0].mxu0
        %4589 = vmatprep.mubr.f32.mxu0 0.0
        %4590 = vmatmul.mubr.f32.gmra.mrb[0].mxu0 %v4422
        %v4591 = vpop.f32.mrb[0].mxu0
        %v4592 = vadd.f32 0.0, %v4591
        %v4593 = vpop.f32.mrb[0].mxu0
        %4594 = vmatprep.mubr.f32.mxu0 0.0
        %4595 = vmatmul.mubr.f32.gmra.mrb[0].mxu0 %v4424
        %v4596 = vpop.f32.mrb[0].mxu0
        %v4597 = vadd.f32 0.0, %v4596
        %v4598 = vpop.f32.mrb[0].mxu0
        %4599 = vmatprep.mubr.f32.mxu0 0.0
        %4600 = vmatmul.mubr.f32.gmra.mrb[0].mxu0 %v4426
        %v4601 = vpop.f32.mrb[0].mxu0
        %v4602 = vadd.f32 0.0, %v4601
        %v4603 = vpop.f32.mrb[0].mxu0
        %4604 = vmatprep.mubr.f32.mxu0 0.0
        %4605 = vmatmul.mubr.f32.gmra.mrb[0].mxu0 %v4428
        %v4606 = vpop.f32.mrb[0].mxu0
        %v4607 = vadd.f32 0.0, %v4606
        %v4608 = vpop.f32.mrb[0].mxu0
        %4609 = vmatprep.mubr.f32.mxu0 0.0
        %4610 = vmatmul.mubr.f32.gmra.mrb[0].mxu0 %v4430
        %v4611 = vpop.f32.mrb[0].mxu0
        %v4612 = vadd.f32 0.0, %v4611
        %v4613 = vpop.f32.mrb[0].mxu0
        %4614 = vmatprep.mubr.f32.mxu0 0.0
        %4615 = vmatmul.mubr.f32.gmra.mrb[0].mxu0 %v4432
        %v4616 = vpop.f32.mrb[0].mxu0
        %v4617 = vadd.f32 0.0, %v4616
        %v4618 = vpop.f32.mrb[0].mxu0
        %4619 = vmatprep.mubr.f32.mxu0 0.0
        %4620 = vmatmul.mubr.f32.gmra.mrb[0].mxu0 %v4434
        %v4621 = vpop.f32.mrb[0].mxu0
        %v4622 = vadd.f32 0.0, %v4621
        %v4623 = vpop.f32.mrb[0].mxu0
        %4624 = vmatprep.mubr.f32.mxu0 0.0
        %4625 = vmatmul.mubr.f32.gmra.mrb[0].mxu0 %v4436
        %v4626 = vpop.f32.mrb[0].mxu0
        %v4627 = vadd.f32 0.0, %v4626
        %v4628 = vpop.f32.mrb[0].mxu0
        %4629 = vmatprep.mubr.f32.mxu0 0.0
        %4630 = vmatmul.mubr.f32.gmra.mrb[0].mxu0 %v4438
        %v4631 = vpop.f32.mrb[0].mxu0
        %v4632 = vadd.f32 0.0, %v4631
        %v4633 = vpop.f32.mrb[0].mxu0
        %4634 = vmatprep.mubr.f32.mxu0 0.0
        %4635 = vmatmul.mubr.f32.gmra.mrb[0].mxu0 %v4440
        %v4636 = vpop.f32.mrb[0].mxu0
        %v4637 = vadd.f32 0.0, %v4636
        %v4638 = vpop.f32.mrb[0].mxu0
        %4639 = vmatprep.mubr.f32.mxu0 0.0
        %4640 = vmatmul.mubr.f32.gmra.mrb[0].mxu0 %v4442
        %v4641 = vpop.f32.mrb[0].mxu0
        %v4642 = vadd.f32 0.0, %v4641
        %v4643 = vpop.f32.mrb[0].mxu0
        %4644 = vmatprep.mubr.f32.mxu0 0.0
        %4645 = vmatmul.mubr.f32.gmra.mrb[0].mxu0 %v4444
        %v4646 = vpop.f32.mrb[0].mxu0
        %v4647 = vadd.f32 0.0, %v4646
        %v4648 = vpop.f32.mrb[0].mxu0
        %4649 = vmatprep.mubr.f32.mxu0 0.0
        %4650 = vmatmul.mubr.f32.gmra.mrb[0].mxu0 %v4446
        %v4651 = vpop.f32.mrb[0].mxu0
        %v4652 = vadd.f32 0.0, %v4651
        %v4653 = vpop.f32.mrb[0].mxu0
        %4654 = vmatprep.mubr.f32.mxu0 0.0
        %4655 = vmatmul.mubr.f32.gmra.mrb[0].mxu0 %v4448
        %v4656 = vpop.f32.mrb[0].mxu0
        %v4657 = vadd.f32 0.0, %v4656
        %v4658 = vpop.f32.mrb[0].mxu0
        %4659 = vmatprep.mubr.f32.mxu0 0.0
        %4660 = vmatmul.mubr.f32.gmra.mrb[0].mxu0 %v4450
        %v4661 = vpop.f32.mrb[0].mxu0
        %v4662 = vadd.f32 0.0, %v4661
        %v4663 = vpop.f32.mrb[0].mxu0
        %4664 = vmatprep.mubr.f32.mxu0 0.0
        %4665 = vmatmul.mubr.f32.gmra.mrb[0].mxu0 %v4452
        %v4666 = vpop.f32.mrb[0].mxu0
        %v4667 = vadd.f32 0.0, %v4666
        %v4668 = vpop.f32.mrb[0].mxu0
        %4669 = vmatprep.mubr.f32.mxu0 0.0
        %4670 = vmatmul.mubr.f32.gmra.mrb[0].mxu0 %v4454
        %v4671 = vpop.f32.mrb[0].mxu0
        %v4672 = vadd.f32 0.0, %v4671
        %v4673 = vpop.f32.mrb[0].mxu0
        %4674 = vmatprep.mubr.f32.mxu0 0.0
        %4675 = vmatmul.mubr.f32.gmra.mrb[0].mxu0 %v4456
        %v4676 = vpop.f32.mrb[0].mxu0
        %v4677 = vadd.f32 0.0, %v4676
        %v4678 = vpop.f32.mrb[0].mxu0
        %4679 = vmatprep.mubr.f32.mxu0 0.0
        %4680 = vmatmul.mubr.f32.gmra.mrb[0].mxu0 %v4458
        %v4681 = vpop.f32.mrb[0].mxu0
        %v4682 = vadd.f32 0.0, %v4681
        %v4683 = vpop.f32.mrb[0].mxu0
        %4684 = vdwg.mxu0
        %v4685 = vadd.f32 %v4140, %v4527
        %v4686 = vadd.f32 %v4145, %v4532
        %v4687 = vadd.f32 %v4150, %v4537
        %v4688 = vadd.f32 %v4155, %v4542
        %v4689 = vadd.f32 %v4160, %v4547
        %v4690 = vadd.f32 %v4165, %v4552
        %v4691 = vadd.f32 %v4170, %v4557
        %v4692 = vadd.f32 %v4175, %v4562
        %v4693 = vadd.f32 %v4180, %v4567
        %v4694 = vadd.f32 %v4185, %v4572
        %v4695 = vadd.f32 %v4190, %v4577
        %v4696 = vadd.f32 %v4195, %v4582
        %v4697 = vadd.f32 %v4200, %v4587
        %v4698 = vadd.f32 %v4205, %v4592
        %v4699 = vadd.f32 %v4210, %v4597
        %v4700 = vadd.f32 %v4215, %v4602
        %v4701 = vadd.f32 %v4220, %v4607
        %v4702 = vadd.f32 %v4225, %v4612
        %v4703 = vadd.f32 %v4230, %v4617
        %v4704 = vadd.f32 %v4235, %v4622
        %v4705 = vadd.f32 %v4240, %v4627
        %v4706 = vadd.f32 %v4245, %v4632
        %v4707 = vadd.f32 %v4250, %v4637
        %v4708 = vadd.f32 %v4255, %v4642
        %v4709 = vadd.f32 %v4260, %v4647
        %v4710 = vadd.f32 %v4265, %v4652
        %v4711 = vadd.f32 %v4270, %v4657
        %v4712 = vadd.f32 %v4275, %v4662
        %v4713 = vadd.f32 %v4280, %v4667
        %v4714 = vadd.f32 %v4285, %v4672
        %v4715 = vadd.f32 %v4290, %v4677
        %v4716 = vadd.f32 %v4295, %v4682
        %v4720 = vrot.slane %v3581, 7
        %v4721 = vrot.slane %v3582, 7
        %v4722 = vsel %vm697, %v4720, %v4721
        %v4723 = vrot.slane %v3583, 7
        %v4724 = vsel %vm697, %v4721, %v4723
        %s4725 = scalar_lea.vmem %s3, 24
        %v4726 = vld [vmem:[%s4725] sm:$0xff]
        %v4727 = vsel %vm3484, %v4722, 0
        %v4729 = vsel %vm3484, %v4724, 0
        %4731 = vmatprep.subr.mxu0 0.0
        %4732 = vmatpush1.msra.mxu0 %v4726
        %4733 = vmatprep.subr.mxu0 0.0
        %4734 = vmatpush1.msra.mxu0 0.0
        %4735 = vmatprep.subr.mxu0 0.0
        %4736 = vmatpush1.msra.mxu0 0.0
        %4737 = vmatprep.subr.mxu0 0.0
        %4738 = vmatpush1.msra.mxu0 0.0
        %4739 = vmatprep.subr.mxu0 0.0
        %4740 = vmatpush1.msra.mxu0 0.0
        %4741 = vmatprep.subr.mxu0 0.0
        %4742 = vmatpush1.msra.mxu0 0.0
        %4743 = vmatprep.subr.mxu0 0.0
        %4744 = vmatpush1.msra.mxu0 0.0
        %4745 = vmatprep.subr.mxu0 0.0
        %4746 = vmatpush1.msra.mxu0 0.0
        %4747 = vmatprep.subr.mxu0 0.0
        %4748 = vmatpush1.msra.mxu0 0.0
        %4749 = vmatprep.subr.mxu0 0.0
        %4750 = vmatpush1.msra.mxu0 0.0
        %4751 = vmatprep.subr.mxu0 0.0
        %4752 = vmatpush1.msra.mxu0 0.0
        %4753 = vmatprep.subr.mxu0 0.0
        %4754 = vmatpush1.msra.mxu0 0.0
        %4755 = vmatprep.subr.mxu0 0.0
        %4756 = vmatpush1.msra.mxu0 0.0
        %4757 = vmatprep.subr.mxu0 0.0
        %4758 = vmatpush1.msra.mxu0 0.0
        %4759 = vmatprep.subr.mxu0 0.0
        %4760 = vmatpush1.msra.mxu0 0.0
        %4761 = vmatprep.subr.mxu0 0.0
        %4762 = vmatpush1.msra.mxu0 0.0
        %4763 = vmatprep.subr.mxu0 0.0
        %4764 = vmatpush1.msra.mxu0 0.0
        %4765 = vmatprep.subr.mxu0 0.0
        %4766 = vmatpush1.msra.mxu0 0.0
        %4767 = vmatprep.subr.mxu0 0.0
        %4768 = vmatpush1.msra.mxu0 0.0
        %4769 = vmatprep.subr.mxu0 0.0
        %4770 = vmatpush1.msra.mxu0 0.0
        %4771 = vmatprep.subr.mxu0 0.0
        %4772 = vmatpush1.msra.mxu0 0.0
        %4773 = vmatprep.subr.mxu0 0.0
        %4774 = vmatpush1.msra.mxu0 0.0
        %4775 = vmatprep.subr.mxu0 0.0
        %4776 = vmatpush1.msra.mxu0 0.0
        %4777 = vmatprep.subr.mxu0 0.0
        %4778 = vmatpush1.msra.mxu0 0.0
        %4779 = vmatprep.subr.mxu0 0.0
        %4780 = vmatpush1.msra.mxu0 0.0
        %4781 = vmatprep.subr.mxu0 0.0
        %4782 = vmatpush1.msra.mxu0 0.0
        %4783 = vmatprep.subr.mxu0 0.0
        %4784 = vmatpush1.msra.mxu0 0.0
        %4785 = vmatprep.subr.mxu0 0.0
        %4786 = vmatpush1.msra.mxu0 0.0
        %4787 = vmatprep.subr.mxu0 0.0
        %4788 = vmatpush1.msra.mxu0 0.0
        %4789 = vmatprep.subr.mxu0 0.0
        %4790 = vmatpush1.msra.mxu0 0.0
        %4791 = vmatprep.subr.mxu0 0.0
        %4792 = vmatpush1.msra.mxu0 0.0
        %4793 = vmatprep.subr.mxu0 0.0
        %4794 = vmatpush1.msra.mxu0 0.0
        %4795 = vmatprep.mubr.f32.mxu0 0.0
        %4796 = vmatmul.mubr.f32.gmra.mrb[0].mxu0 %v4013
        %v4797 = vpop.f32.mrb[0].mxu0
        %v4798 = vadd.f32 0.0, %v4797
        %v4799 = vpop.f32.mrb[0].mxu0
        %4800 = vmatprep.mubr.f32.mxu0 0.0
        %4801 = vmatmul.mubr.f32.gmra.mrb[0].mxu0 %v4015
        %v4802 = vpop.f32.mrb[0].mxu0
        %v4803 = vadd.f32 0.0, %v4802
        %v4804 = vpop.f32.mrb[0].mxu0
        %4805 = vmatprep.mubr.f32.mxu0 0.0
        %4806 = vmatmul.mubr.f32.gmra.mrb[0].mxu0 %v4017
        %v4807 = vpop.f32.mrb[0].mxu0
        %v4808 = vadd.f32 0.0, %v4807
        %v4809 = vpop.f32.mrb[0].mxu0
        %4810 = vmatprep.mubr.f32.mxu0 0.0
        %4811 = vmatmul.mubr.f32.gmra.mrb[0].mxu0 %v4019
        %v4812 = vpop.f32.mrb[0].mxu0
        %v4813 = vadd.f32 0.0, %v4812
        %v4814 = vpop.f32.mrb[0].mxu0
        %4815 = vmatprep.mubr.f32.mxu0 0.0
        %4816 = vmatmul.mubr.f32.gmra.mrb[0].mxu0 %v4021
        %v4817 = vpop.f32.mrb[0].mxu0
        %v4818 = vadd.f32 0.0, %v4817
        %v4819 = vpop.f32.mrb[0].mxu0
        %4820 = vmatprep.mubr.f32.mxu0 0.0
        %4821 = vmatmul.mubr.f32.gmra.mrb[0].mxu0 %v4023
        %v4822 = vpop.f32.mrb[0].mxu0
        %v4823 = vadd.f32 0.0, %v4822
        %v4824 = vpop.f32.mrb[0].mxu0
        %4825 = vmatprep.mubr.f32.mxu0 0.0
        %4826 = vmatmul.mubr.f32.gmra.mrb[0].mxu0 %v4025
        %v4827 = vpop.f32.mrb[0].mxu0
        %v4828 = vadd.f32 0.0, %v4827
        %v4829 = vpop.f32.mrb[0].mxu0
        %4830 = vmatprep.mubr.f32.mxu0 0.0
        %4831 = vmatmul.mubr.f32.gmra.mrb[0].mxu0 %v4027
        %v4832 = vpop.f32.mrb[0].mxu0
        %v4833 = vadd.f32 0.0, %v4832
        %v4834 = vpop.f32.mrb[0].mxu0
        %4835 = vmatprep.mubr.f32.mxu0 0.0
        %4836 = vmatmul.mubr.f32.gmra.mrb[0].mxu0 %v4029
        %v4837 = vpop.f32.mrb[0].mxu0
        %v4838 = vadd.f32 0.0, %v4837
        %v4839 = vpop.f32.mrb[0].mxu0
        %4840 = vmatprep.mubr.f32.mxu0 0.0
        %4841 = vmatmul.mubr.f32.gmra.mrb[0].mxu0 %v4031
        %v4842 = vpop.f32.mrb[0].mxu0
        %v4843 = vadd.f32 0.0, %v4842
        %v4844 = vpop.f32.mrb[0].mxu0
        %4845 = vmatprep.mubr.f32.mxu0 0.0
        %4846 = vmatmul.mubr.f32.gmra.mrb[0].mxu0 %v4033
        %v4847 = vpop.f32.mrb[0].mxu0
        %v4848 = vadd.f32 0.0, %v4847
        %v4849 = vpop.f32.mrb[0].mxu0
        %4850 = vmatprep.mubr.f32.mxu0 0.0
        %4851 = vmatmul.mubr.f32.gmra.mrb[0].mxu0 %v4035
        %v4852 = vpop.f32.mrb[0].mxu0
        %v4853 = vadd.f32 0.0, %v4852
        %v4854 = vpop.f32.mrb[0].mxu0
        %4855 = vmatprep.mubr.f32.mxu0 0.0
        %4856 = vmatmul.mubr.f32.gmra.mrb[0].mxu0 %v4037
        %v4857 = vpop.f32.mrb[0].mxu0
        %v4858 = vadd.f32 0.0, %v4857
        %v4859 = vpop.f32.mrb[0].mxu0
        %4860 = vmatprep.mubr.f32.mxu0 0.0
        %4861 = vmatmul.mubr.f32.gmra.mrb[0].mxu0 %v4039
        %v4862 = vpop.f32.mrb[0].mxu0
        %v4863 = vadd.f32 0.0, %v4862
        %v4864 = vpop.f32.mrb[0].mxu0
        %4865 = vmatprep.mubr.f32.mxu0 0.0
        %4866 = vmatmul.mubr.f32.gmra.mrb[0].mxu0 %v4041
        %v4867 = vpop.f32.mrb[0].mxu0
        %v4868 = vadd.f32 0.0, %v4867
        %v4869 = vpop.f32.mrb[0].mxu0
        %4870 = vmatprep.mubr.f32.mxu0 0.0
        %4871 = vmatmul.mubr.f32.gmra.mrb[0].mxu0 %v4043
        %v4872 = vpop.f32.mrb[0].mxu0
        %v4873 = vadd.f32 0.0, %v4872
        %v4874 = vpop.f32.mrb[0].mxu0
        %4875 = vmatprep.mubr.f32.mxu0 0.0
        %4876 = vmatmul.mubr.f32.gmra.mrb[0].mxu0 %v4045
        %v4877 = vpop.f32.mrb[0].mxu0
        %v4878 = vadd.f32 0.0, %v4877
        %v4879 = vpop.f32.mrb[0].mxu0
        %4880 = vmatprep.mubr.f32.mxu0 0.0
        %4881 = vmatmul.mubr.f32.gmra.mrb[0].mxu0 %v4047
        %v4882 = vpop.f32.mrb[0].mxu0
        %v4883 = vadd.f32 0.0, %v4882
        %v4884 = vpop.f32.mrb[0].mxu0
        %4885 = vmatprep.mubr.f32.mxu0 0.0
        %4886 = vmatmul.mubr.f32.gmra.mrb[0].mxu0 %v4049
        %v4887 = vpop.f32.mrb[0].mxu0
        %v4888 = vadd.f32 0.0, %v4887
        %v4889 = vpop.f32.mrb[0].mxu0
        %4890 = vmatprep.mubr.f32.mxu0 0.0
        %4891 = vmatmul.mubr.f32.gmra.mrb[0].mxu0 %v4051
        %v4892 = vpop.f32.mrb[0].mxu0
        %v4893 = vadd.f32 0.0, %v4892
        %v4894 = vpop.f32.mrb[0].mxu0
        %4895 = vmatprep.mubr.f32.mxu0 0.0
        %4896 = vmatmul.mubr.f32.gmra.mrb[0].mxu0 %v4053
        %v4897 = vpop.f32.mrb[0].mxu0
        %v4898 = vadd.f32 0.0, %v4897
        %v4899 = vpop.f32.mrb[0].mxu0
        %4900 = vmatprep.mubr.f32.mxu0 0.0
        %4901 = vmatmul.mubr.f32.gmra.mrb[0].mxu0 %v4055
        %v4902 = vpop.f32.mrb[0].mxu0
        %v4903 = vadd.f32 0.0, %v4902
        %v4904 = vpop.f32.mrb[0].mxu0
        %4905 = vmatprep.mubr.f32.mxu0 0.0
        %4906 = vmatmul.mubr.f32.gmra.mrb[0].mxu0 %v4057
        %v4907 = vpop.f32.mrb[0].mxu0
        %v4908 = vadd.f32 0.0, %v4907
        %v4909 = vpop.f32.mrb[0].mxu0
        %4910 = vmatprep.mubr.f32.mxu0 0.0
        %4911 = vmatmul.mubr.f32.gmra.mrb[0].mxu0 %v4059
        %v4912 = vpop.f32.mrb[0].mxu0
        %v4913 = vadd.f32 0.0, %v4912
        %v4914 = vpop.f32.mrb[0].mxu0
        %4915 = vmatprep.mubr.f32.mxu0 0.0
        %4916 = vmatmul.mubr.f32.gmra.mrb[0].mxu0 %v4061
        %v4917 = vpop.f32.mrb[0].mxu0
        %v4918 = vadd.f32 0.0, %v4917
        %v4919 = vpop.f32.mrb[0].mxu0
        %4920 = vmatprep.mubr.f32.mxu0 0.0
        %4921 = vmatmul.mubr.f32.gmra.mrb[0].mxu0 %v4063
        %v4922 = vpop.f32.mrb[0].mxu0
        %v4923 = vadd.f32 0.0, %v4922
        %v4924 = vpop.f32.mrb[0].mxu0
        %4925 = vmatprep.mubr.f32.mxu0 0.0
        %4926 = vmatmul.mubr.f32.gmra.mrb[0].mxu0 %v4065
        %v4927 = vpop.f32.mrb[0].mxu0
        %v4928 = vadd.f32 0.0, %v4927
        %v4929 = vpop.f32.mrb[0].mxu0
        %4930 = vmatprep.mubr.f32.mxu0 0.0
        %4931 = vmatmul.mubr.f32.gmra.mrb[0].mxu0 %v4067
        %v4932 = vpop.f32.mrb[0].mxu0
        %v4933 = vadd.f32 0.0, %v4932
        %v4934 = vpop.f32.mrb[0].mxu0
        %4935 = vmatprep.mubr.f32.mxu0 0.0
        %4936 = vmatmul.mubr.f32.gmra.mrb[0].mxu0 %v4069
        %v4937 = vpop.f32.mrb[0].mxu0
        %v4938 = vadd.f32 0.0, %v4937
        %v4939 = vpop.f32.mrb[0].mxu0
        %4940 = vmatprep.mubr.f32.mxu0 0.0
        %4941 = vmatmul.mubr.f32.gmra.mrb[0].mxu0 %v4071
        %v4942 = vpop.f32.mrb[0].mxu0
        %v4943 = vadd.f32 0.0, %v4942
        %v4944 = vpop.f32.mrb[0].mxu0
        %4945 = vmatprep.mubr.f32.mxu0 0.0
        %4946 = vmatmul.mubr.f32.gmra.mrb[0].mxu0 %v4727
        %v4947 = vpop.f32.mrb[0].mxu0
        %v4948 = vadd.f32 0.0, %v4947
        %v4949 = vpop.f32.mrb[0].mxu0
        %4950 = vmatprep.mubr.f32.mxu0 0.0
        %4951 = vmatmul.mubr.f32.gmra.mrb[0].mxu0 %v4729
        %v4952 = vpop.f32.mrb[0].mxu0
        %v4953 = vadd.f32 0.0, %v4952
        %v4954 = vpop.f32.mrb[0].mxu0
        %4955 = vdwg.mxu0
        %v4956 = vadd.f32 %v4685, %v4798
        %v4957 = vadd.f32 %v4686, %v4803
        %v4958 = vadd.f32 %v4687, %v4808
        %v4959 = vadd.f32 %v4688, %v4813
        %v4960 = vadd.f32 %v4689, %v4818
        %v4961 = vadd.f32 %v4690, %v4823
        %v4962 = vadd.f32 %v4691, %v4828
        %v4963 = vadd.f32 %v4692, %v4833
        %v4964 = vadd.f32 %v4693, %v4838
        %v4965 = vadd.f32 %v4694, %v4843
        %v4966 = vadd.f32 %v4695, %v4848
        %v4967 = vadd.f32 %v4696, %v4853
        %v4968 = vadd.f32 %v4697, %v4858
        %v4969 = vadd.f32 %v4698, %v4863
        %v4970 = vadd.f32 %v4699, %v4868
        %v4971 = vadd.f32 %v4700, %v4873
        %v4972 = vadd.f32 %v4701, %v4878
        %v4973 = vadd.f32 %v4702, %v4883
        %v4974 = vadd.f32 %v4703, %v4888
        %v4975 = vadd.f32 %v4704, %v4893
        %v4976 = vadd.f32 %v4705, %v4898
        %v4977 = vadd.f32 %v4706, %v4903
        %v4978 = vadd.f32 %v4707, %v4908
        %v4979 = vadd.f32 %v4708, %v4913
        %v4980 = vadd.f32 %v4709, %v4918
        %v4981 = vadd.f32 %v4710, %v4923
        %v4982 = vadd.f32 %v4711, %v4928
        %v4983 = vadd.f32 %v4712, %v4933
        %v4984 = vadd.f32 %v4713, %v4938
        %v4985 = vadd.f32 %v4714, %v4943
        %v4986 = vadd.f32 %v4715, %v4948
        %v4987 = vadd.f32 %v4716, %v4953
        %s4988 = scalar_lea.vmem %s3, 32
        %v4989 = vld [vmem:[%s4988] sm:$0xff]
        %v4990 = vsel %vm3484, %v3582, 0
        %v4992 = vsel %vm3484, %v3583, 0
        %4994 = vmatprep.subr.mxu0 0.0
        %4995 = vmatpush1.msra.mxu0 %v4989
        %4996 = vmatprep.subr.mxu0 0.0
        %4997 = vmatpush1.msra.mxu0 0.0
        %4998 = vmatprep.subr.mxu0 0.0
        %4999 = vmatpush1.msra.mxu0 0.0
        %5000 = vmatprep.subr.mxu0 0.0
        %5001 = vmatpush1.msra.mxu0 0.0
        %5002 = vmatprep.subr.mxu0 0.0
        %5003 = vmatpush1.msra.mxu0 0.0
        %5004 = vmatprep.subr.mxu0 0.0
        %5005 = vmatpush1.msra.mxu0 0.0
        %5006 = vmatprep.subr.mxu0 0.0
        %5007 = vmatpush1.msra.mxu0 0.0
        %5008 = vmatprep.subr.mxu0 0.0
        %5009 = vmatpush1.msra.mxu0 0.0
        %5010 = vmatprep.subr.mxu0 0.0
        %5011 = vmatpush1.msra.mxu0 0.0
        %5012 = vmatprep.subr.mxu0 0.0
        %5013 = vmatpush1.msra.mxu0 0.0
        %5014 = vmatprep.subr.mxu0 0.0
        %5015 = vmatpush1.msra.mxu0 0.0
        %5016 = vmatprep.subr.mxu0 0.0
        %5017 = vmatpush1.msra.mxu0 0.0
        %5018 = vmatprep.subr.mxu0 0.0
        %5019 = vmatpush1.msra.mxu0 0.0
        %5020 = vmatprep.subr.mxu0 0.0
        %5021 = vmatpush1.msra.mxu0 0.0
        %5022 = vmatprep.subr.mxu0 0.0
        %5023 = vmatpush1.msra.mxu0 0.0
        %5024 = vmatprep.subr.mxu0 0.0
        %5025 = vmatpush1.msra.mxu0 0.0
        %5026 = vmatprep.subr.mxu0 0.0
        %5027 = vmatpush1.msra.mxu0 0.0
        %5028 = vmatprep.subr.mxu0 0.0
        %5029 = vmatpush1.msra.mxu0 0.0
        %5030 = vmatprep.subr.mxu0 0.0
        %5031 = vmatpush1.msra.mxu0 0.0
        %5032 = vmatprep.subr.mxu0 0.0
        %5033 = vmatpush1.msra.mxu0 0.0
        %5034 = vmatprep.subr.mxu0 0.0
        %5035 = vmatpush1.msra.mxu0 0.0
        %5036 = vmatprep.subr.mxu0 0.0
        %5037 = vmatpush1.msra.mxu0 0.0
        %5038 = vmatprep.subr.mxu0 0.0
        %5039 = vmatpush1.msra.mxu0 0.0
        %5040 = vmatprep.subr.mxu0 0.0
        %5041 = vmatpush1.msra.mxu0 0.0
        %5042 = vmatprep.subr.mxu0 0.0
        %5043 = vmatpush1.msra.mxu0 0.0
        %5044 = vmatprep.subr.mxu0 0.0
        %5045 = vmatpush1.msra.mxu0 0.0
        %5046 = vmatprep.subr.mxu0 0.0
        %5047 = vmatpush1.msra.mxu0 0.0
        %5048 = vmatprep.subr.mxu0 0.0
        %5049 = vmatpush1.msra.mxu0 0.0
        %5050 = vmatprep.subr.mxu0 0.0
        %5051 = vmatpush1.msra.mxu0 0.0
        %5052 = vmatprep.subr.mxu0 0.0
        %5053 = vmatpush1.msra.mxu0 0.0
        %5054 = vmatprep.subr.mxu0 0.0
        %5055 = vmatpush1.msra.mxu0 0.0
        %5056 = vmatprep.subr.mxu0 0.0
        %5057 = vmatpush1.msra.mxu0 0.0
        %5058 = vmatprep.mubr.f32.mxu0 0.0
        %5059 = vmatmul.mubr.f32.gmra.mrb[0].mxu0 %v3724
        %v5060 = vpop.f32.mrb[0].mxu0
        %v5061 = vadd.f32 0.0, %v5060
        %v5062 = vpop.f32.mrb[0].mxu0
        %5063 = vmatprep.mubr.f32.mxu0 0.0
        %5064 = vmatmul.mubr.f32.gmra.mrb[0].mxu0 %v3726
        %v5065 = vpop.f32.mrb[0].mxu0
        %v5066 = vadd.f32 0.0, %v5065
        %v5067 = vpop.f32.mrb[0].mxu0
        %5068 = vmatprep.mubr.f32.mxu0 0.0
        %5069 = vmatmul.mubr.f32.gmra.mrb[0].mxu0 %v3728
        %v5070 = vpop.f32.mrb[0].mxu0
        %v5071 = vadd.f32 0.0, %v5070
        %v5072 = vpop.f32.mrb[0].mxu0
        %5073 = vmatprep.mubr.f32.mxu0 0.0
        %5074 = vmatmul.mubr.f32.gmra.mrb[0].mxu0 %v3730
        %v5075 = vpop.f32.mrb[0].mxu0
        %v5076 = vadd.f32 0.0, %v5075
        %v5077 = vpop.f32.mrb[0].mxu0
        %5078 = vmatprep.mubr.f32.mxu0 0.0
        %5079 = vmatmul.mubr.f32.gmra.mrb[0].mxu0 %v3732
        %v5080 = vpop.f32.mrb[0].mxu0
        %v5081 = vadd.f32 0.0, %v5080
        %v5082 = vpop.f32.mrb[0].mxu0
        %5083 = vmatprep.mubr.f32.mxu0 0.0
        %5084 = vmatmul.mubr.f32.gmra.mrb[0].mxu0 %v3734
        %v5085 = vpop.f32.mrb[0].mxu0
        %v5086 = vadd.f32 0.0, %v5085
        %v5087 = vpop.f32.mrb[0].mxu0
        %5088 = vmatprep.mubr.f32.mxu0 0.0
        %5089 = vmatmul.mubr.f32.gmra.mrb[0].mxu0 %v3736
        %v5090 = vpop.f32.mrb[0].mxu0
        %v5091 = vadd.f32 0.0, %v5090
        %v5092 = vpop.f32.mrb[0].mxu0
        %5093 = vmatprep.mubr.f32.mxu0 0.0
        %5094 = vmatmul.mubr.f32.gmra.mrb[0].mxu0 %v3738
        %v5095 = vpop.f32.mrb[0].mxu0
        %v5096 = vadd.f32 0.0, %v5095
        %v5097 = vpop.f32.mrb[0].mxu0
        %5098 = vmatprep.mubr.f32.mxu0 0.0
        %5099 = vmatmul.mubr.f32.gmra.mrb[0].mxu0 %v3740
        %v5100 = vpop.f32.mrb[0].mxu0
        %v5101 = vadd.f32 0.0, %v5100
        %v5102 = vpop.f32.mrb[0].mxu0
        %5103 = vmatprep.mubr.f32.mxu0 0.0
        %5104 = vmatmul.mubr.f32.gmra.mrb[0].mxu0 %v3742
        %v5105 = vpop.f32.mrb[0].mxu0
        %v5106 = vadd.f32 0.0, %v5105
        %v5107 = vpop.f32.mrb[0].mxu0
        %5108 = vmatprep.mubr.f32.mxu0 0.0
        %5109 = vmatmul.mubr.f32.gmra.mrb[0].mxu0 %v3744
        %v5110 = vpop.f32.mrb[0].mxu0
        %v5111 = vadd.f32 0.0, %v5110
        %v5112 = vpop.f32.mrb[0].mxu0
        %5113 = vmatprep.mubr.f32.mxu0 0.0
        %5114 = vmatmul.mubr.f32.gmra.mrb[0].mxu0 %v3746
        %v5115 = vpop.f32.mrb[0].mxu0
        %v5116 = vadd.f32 0.0, %v5115
        %v5117 = vpop.f32.mrb[0].mxu0
        %5118 = vmatprep.mubr.f32.mxu0 0.0
        %5119 = vmatmul.mubr.f32.gmra.mrb[0].mxu0 %v3748
        %v5120 = vpop.f32.mrb[0].mxu0
        %v5121 = vadd.f32 0.0, %v5120
        %v5122 = vpop.f32.mrb[0].mxu0
        %5123 = vmatprep.mubr.f32.mxu0 0.0
        %5124 = vmatmul.mubr.f32.gmra.mrb[0].mxu0 %v3750
        %v5125 = vpop.f32.mrb[0].mxu0
        %v5126 = vadd.f32 0.0, %v5125
        %v5127 = vpop.f32.mrb[0].mxu0
        %5128 = vmatprep.mubr.f32.mxu0 0.0
        %5129 = vmatmul.mubr.f32.gmra.mrb[0].mxu0 %v3752
        %v5130 = vpop.f32.mrb[0].mxu0
        %v5131 = vadd.f32 0.0, %v5130
        %v5132 = vpop.f32.mrb[0].mxu0
        %5133 = vmatprep.mubr.f32.mxu0 0.0
        %5134 = vmatmul.mubr.f32.gmra.mrb[0].mxu0 %v3754
        %v5135 = vpop.f32.mrb[0].mxu0
        %v5136 = vadd.f32 0.0, %v5135
        %v5137 = vpop.f32.mrb[0].mxu0
        %5138 = vmatprep.mubr.f32.mxu0 0.0
        %5139 = vmatmul.mubr.f32.gmra.mrb[0].mxu0 %v3756
        %v5140 = vpop.f32.mrb[0].mxu0
        %v5141 = vadd.f32 0.0, %v5140
        %v5142 = vpop.f32.mrb[0].mxu0
        %5143 = vmatprep.mubr.f32.mxu0 0.0
        %5144 = vmatmul.mubr.f32.gmra.mrb[0].mxu0 %v3758
        %v5145 = vpop.f32.mrb[0].mxu0
        %v5146 = vadd.f32 0.0, %v5145
        %v5147 = vpop.f32.mrb[0].mxu0
        %5148 = vmatprep.mubr.f32.mxu0 0.0
        %5149 = vmatmul.mubr.f32.gmra.mrb[0].mxu0 %v3760
        %v5150 = vpop.f32.mrb[0].mxu0
        %v5151 = vadd.f32 0.0, %v5150
        %v5152 = vpop.f32.mrb[0].mxu0
        %5153 = vmatprep.mubr.f32.mxu0 0.0
        %5154 = vmatmul.mubr.f32.gmra.mrb[0].mxu0 %v3762
        %v5155 = vpop.f32.mrb[0].mxu0
        %v5156 = vadd.f32 0.0, %v5155
        %v5157 = vpop.f32.mrb[0].mxu0
        %5158 = vmatprep.mubr.f32.mxu0 0.0
        %5159 = vmatmul.mubr.f32.gmra.mrb[0].mxu0 %v3764
        %v5160 = vpop.f32.mrb[0].mxu0
        %v5161 = vadd.f32 0.0, %v5160
        %v5162 = vpop.f32.mrb[0].mxu0
        %5163 = vmatprep.mubr.f32.mxu0 0.0
        %5164 = vmatmul.mubr.f32.gmra.mrb[0].mxu0 %v3766
        %v5165 = vpop.f32.mrb[0].mxu0
        %v5166 = vadd.f32 0.0, %v5165
        %v5167 = vpop.f32.mrb[0].mxu0
        %5168 = vmatprep.mubr.f32.mxu0 0.0
        %5169 = vmatmul.mubr.f32.gmra.mrb[0].mxu0 %v3768
        %v5170 = vpop.f32.mrb[0].mxu0
        %v5171 = vadd.f32 0.0, %v5170
        %v5172 = vpop.f32.mrb[0].mxu0
        %5173 = vmatprep.mubr.f32.mxu0 0.0
        %5174 = vmatmul.mubr.f32.gmra.mrb[0].mxu0 %v3770
        %v5175 = vpop.f32.mrb[0].mxu0
        %v5176 = vadd.f32 0.0, %v5175
        %v5177 = vpop.f32.mrb[0].mxu0
        %5178 = vmatprep.mubr.f32.mxu0 0.0
        %5179 = vmatmul.mubr.f32.gmra.mrb[0].mxu0 %v3772
        %v5180 = vpop.f32.mrb[0].mxu0
        %v5181 = vadd.f32 0.0, %v5180
        %v5182 = vpop.f32.mrb[0].mxu0
        %5183 = vmatprep.mubr.f32.mxu0 0.0
        %5184 = vmatmul.mubr.f32.gmra.mrb[0].mxu0 %v3774
        %v5185 = vpop.f32.mrb[0].mxu0
        %v5186 = vadd.f32 0.0, %v5185
        %v5187 = vpop.f32.mrb[0].mxu0
        %5188 = vmatprep.mubr.f32.mxu0 0.0
        %5189 = vmatmul.mubr.f32.gmra.mrb[0].mxu0 %v3776
        %v5190 = vpop.f32.mrb[0].mxu0
        %v5191 = vadd.f32 0.0, %v5190
        %v5192 = vpop.f32.mrb[0].mxu0
        %5193 = vmatprep.mubr.f32.mxu0 0.0
        %5194 = vmatmul.mubr.f32.gmra.mrb[0].mxu0 %v3778
        %v5195 = vpop.f32.mrb[0].mxu0
        %v5196 = vadd.f32 0.0, %v5195
        %v5197 = vpop.f32.mrb[0].mxu0
        %5198 = vmatprep.mubr.f32.mxu0 0.0
        %5199 = vmatmul.mubr.f32.gmra.mrb[0].mxu0 %v3780
        %v5200 = vpop.f32.mrb[0].mxu0
        %v5201 = vadd.f32 0.0, %v5200
        %v5202 = vpop.f32.mrb[0].mxu0
        %5203 = vmatprep.mubr.f32.mxu0 0.0
        %5204 = vmatmul.mubr.f32.gmra.mrb[0].mxu0 %v3782
        %v5205 = vpop.f32.mrb[0].mxu0
        %v5206 = vadd.f32 0.0, %v5205
        %v5207 = vpop.f32.mrb[0].mxu0
        %5208 = vmatprep.mubr.f32.mxu0 0.0
        %5209 = vmatmul.mubr.f32.gmra.mrb[0].mxu0 %v4990
        %v5210 = vpop.f32.mrb[0].mxu0
        %v5211 = vadd.f32 0.0, %v5210
        %v5212 = vpop.f32.mrb[0].mxu0
        %5213 = vmatprep.mubr.f32.mxu0 0.0
        %5214 = vmatmul.mubr.f32.gmra.mrb[0].mxu0 %v4992
        %v5215 = vpop.f32.mrb[0].mxu0
        %v5216 = vadd.f32 0.0, %v5215
        %v5217 = vpop.f32.mrb[0].mxu0
        %5218 = vdwg.mxu0
        %v5219 = vadd.f32 %v4956, %v5061
        %v5220 = vadd.f32 %v4957, %v5066
        %v5221 = vadd.f32 %v4958, %v5071
        %v5222 = vadd.f32 %v4959, %v5076
        %v5223 = vadd.f32 %v4960, %v5081
        %v5224 = vadd.f32 %v4961, %v5086
        %v5225 = vadd.f32 %v4962, %v5091
        %v5226 = vadd.f32 %v4963, %v5096
        %v5227 = vadd.f32 %v4964, %v5101
        %v5228 = vadd.f32 %v4965, %v5106
        %v5229 = vadd.f32 %v4966, %v5111
        %v5230 = vadd.f32 %v4967, %v5116
        %v5231 = vadd.f32 %v4968, %v5121
        %v5232 = vadd.f32 %v4969, %v5126
        %v5233 = vadd.f32 %v4970, %v5131
        %v5234 = vadd.f32 %v4971, %v5136
        %v5235 = vadd.f32 %v4972, %v5141
        %v5236 = vadd.f32 %v4973, %v5146
        %v5237 = vadd.f32 %v4974, %v5151
        %v5238 = vadd.f32 %v4975, %v5156
        %v5239 = vadd.f32 %v4976, %v5161
        %v5240 = vadd.f32 %v4977, %v5166
        %v5241 = vadd.f32 %v4978, %v5171
        %v5242 = vadd.f32 %v4979, %v5176
        %v5243 = vadd.f32 %v4980, %v5181
        %v5244 = vadd.f32 %v4981, %v5186
        %v5245 = vadd.f32 %v4982, %v5191
        %v5246 = vadd.f32 %v4983, %v5196
        %v5247 = vadd.f32 %v4984, %v5201
        %v5248 = vadd.f32 %v4985, %v5206
        %v5249 = vadd.f32 %v4986, %v5211
        %v5250 = vadd.f32 %v4987, %v5216
        %v5252 = vrot.slane %v3582, 1
        %v5253 = vrot.slane %v3583, 1
        %v5254 = vsel %vm1382, %v5252, %v5253
        %v5255 = vrot.slane %v3584, 1
        %v5256 = vsel %vm1382, %v5253, %v5255
        %s5257 = scalar_lea.vmem %s3, 40
        %v5258 = vld [vmem:[%s5257] sm:$0xff]
        %v5259 = vsel %vm3484, %v5254, 0
        %v5261 = vsel %vm3484, %v5256, 0
        %5263 = vmatprep.subr.mxu0 0.0
        %5264 = vmatpush1.msra.mxu0 %v5258
        %5265 = vmatprep.subr.mxu0 0.0
        %5266 = vmatpush1.msra.mxu0 0.0
        %5267 = vmatprep.subr.mxu0 0.0
        %5268 = vmatpush1.msra.mxu0 0.0
        %5269 = vmatprep.subr.mxu0 0.0
        %5270 = vmatpush1.msra.mxu0 0.0
        %5271 = vmatprep.subr.mxu0 0.0
        %5272 = vmatpush1.msra.mxu0 0.0
        %5273 = vmatprep.subr.mxu0 0.0
        %5274 = vmatpush1.msra.mxu0 0.0
        %5275 = vmatprep.subr.mxu0 0.0
        %5276 = vmatpush1.msra.mxu0 0.0
        %5277 = vmatprep.subr.mxu0 0.0
        %5278 = vmatpush1.msra.mxu0 0.0
        %5279 = vmatprep.subr.mxu0 0.0
        %5280 = vmatpush1.msra.mxu0 0.0
        %5281 = vmatprep.subr.mxu0 0.0
        %5282 = vmatpush1.msra.mxu0 0.0
        %5283 = vmatprep.subr.mxu0 0.0
        %5284 = vmatpush1.msra.mxu0 0.0
        %5285 = vmatprep.subr.mxu0 0.0
        %5286 = vmatpush1.msra.mxu0 0.0
        %5287 = vmatprep.subr.mxu0 0.0
        %5288 = vmatpush1.msra.mxu0 0.0
        %5289 = vmatprep.subr.mxu0 0.0
        %5290 = vmatpush1.msra.mxu0 0.0
        %5291 = vmatprep.subr.mxu0 0.0
        %5292 = vmatpush1.msra.mxu0 0.0
        %5293 = vmatprep.subr.mxu0 0.0
        %5294 = vmatpush1.msra.mxu0 0.0
        %5295 = vmatprep.subr.mxu0 0.0
        %5296 = vmatpush1.msra.mxu0 0.0
        %5297 = vmatprep.subr.mxu0 0.0
        %5298 = vmatpush1.msra.mxu0 0.0
        %5299 = vmatprep.subr.mxu0 0.0
        %5300 = vmatpush1.msra.mxu0 0.0
        %5301 = vmatprep.subr.mxu0 0.0
        %5302 = vmatpush1.msra.mxu0 0.0
        %5303 = vmatprep.subr.mxu0 0.0
        %5304 = vmatpush1.msra.mxu0 0.0
        %5305 = vmatprep.subr.mxu0 0.0
        %5306 = vmatpush1.msra.mxu0 0.0
        %5307 = vmatprep.subr.mxu0 0.0
        %5308 = vmatpush1.msra.mxu0 0.0
        %5309 = vmatprep.subr.mxu0 0.0
        %5310 = vmatpush1.msra.mxu0 0.0
        %5311 = vmatprep.subr.mxu0 0.0
        %5312 = vmatpush1.msra.mxu0 0.0
        %5313 = vmatprep.subr.mxu0 0.0
        %5314 = vmatpush1.msra.mxu0 0.0
        %5315 = vmatprep.subr.mxu0 0.0
        %5316 = vmatpush1.msra.mxu0 0.0
        %5317 = vmatprep.subr.mxu0 0.0
        %5318 = vmatpush1.msra.mxu0 0.0
        %5319 = vmatprep.subr.mxu0 0.0
        %5320 = vmatpush1.msra.mxu0 0.0
        %5321 = vmatprep.subr.mxu0 0.0
        %5322 = vmatpush1.msra.mxu0 0.0
        %5323 = vmatprep.subr.mxu0 0.0
        %5324 = vmatpush1.msra.mxu0 0.0
        %5325 = vmatprep.subr.mxu0 0.0
        %5326 = vmatpush1.msra.mxu0 0.0
        %5327 = vmatprep.mubr.f32.mxu0 0.0
        %5328 = vmatmul.mubr.f32.gmra.mrb[0].mxu0 %v4400
        %v5329 = vpop.f32.mrb[0].mxu0
        %v5330 = vadd.f32 0.0, %v5329
        %v5331 = vpop.f32.mrb[0].mxu0
        %5332 = vmatprep.mubr.f32.mxu0 0.0
        %5333 = vmatmul.mubr.f32.gmra.mrb[0].mxu0 %v4402
        %v5334 = vpop.f32.mrb[0].mxu0
        %v5335 = vadd.f32 0.0, %v5334
        %v5336 = vpop.f32.mrb[0].mxu0
        %5337 = vmatprep.mubr.f32.mxu0 0.0
        %5338 = vmatmul.mubr.f32.gmra.mrb[0].mxu0 %v4404
        %v5339 = vpop.f32.mrb[0].mxu0
        %v5340 = vadd.f32 0.0, %v5339
        %v5341 = vpop.f32.mrb[0].mxu0
        %5342 = vmatprep.mubr.f32.mxu0 0.0
        %5343 = vmatmul.mubr.f32.gmra.mrb[0].mxu0 %v4406
        %v5344 = vpop.f32.mrb[0].mxu0
        %v5345 = vadd.f32 0.0, %v5344
        %v5346 = vpop.f32.mrb[0].mxu0
        %5347 = vmatprep.mubr.f32.mxu0 0.0
        %5348 = vmatmul.mubr.f32.gmra.mrb[0].mxu0 %v4408
        %v5349 = vpop.f32.mrb[0].mxu0
        %v5350 = vadd.f32 0.0, %v5349
        %v5351 = vpop.f32.mrb[0].mxu0
        %5352 = vmatprep.mubr.f32.mxu0 0.0
        %5353 = vmatmul.mubr.f32.gmra.mrb[0].mxu0 %v4410
        %v5354 = vpop.f32.mrb[0].mxu0
        %v5355 = vadd.f32 0.0, %v5354
        %v5356 = vpop.f32.mrb[0].mxu0
        %5357 = vmatprep.mubr.f32.mxu0 0.0
        %5358 = vmatmul.mubr.f32.gmra.mrb[0].mxu0 %v4412
        %v5359 = vpop.f32.mrb[0].mxu0
        %v5360 = vadd.f32 0.0, %v5359
        %v5361 = vpop.f32.mrb[0].mxu0
        %5362 = vmatprep.mubr.f32.mxu0 0.0
        %5363 = vmatmul.mubr.f32.gmra.mrb[0].mxu0 %v4414
        %v5364 = vpop.f32.mrb[0].mxu0
        %v5365 = vadd.f32 0.0, %v5364
        %v5366 = vpop.f32.mrb[0].mxu0
        %5367 = vmatprep.mubr.f32.mxu0 0.0
        %5368 = vmatmul.mubr.f32.gmra.mrb[0].mxu0 %v4416
        %v5369 = vpop.f32.mrb[0].mxu0
        %v5370 = vadd.f32 0.0, %v5369
        %v5371 = vpop.f32.mrb[0].mxu0
        %5372 = vmatprep.mubr.f32.mxu0 0.0
        %5373 = vmatmul.mubr.f32.gmra.mrb[0].mxu0 %v4418
        %v5374 = vpop.f32.mrb[0].mxu0
        %v5375 = vadd.f32 0.0, %v5374
        %v5376 = vpop.f32.mrb[0].mxu0
        %5377 = vmatprep.mubr.f32.mxu0 0.0
        %5378 = vmatmul.mubr.f32.gmra.mrb[0].mxu0 %v4420
        %v5379 = vpop.f32.mrb[0].mxu0
        %v5380 = vadd.f32 0.0, %v5379
        %v5381 = vpop.f32.mrb[0].mxu0
        %5382 = vmatprep.mubr.f32.mxu0 0.0
        %5383 = vmatmul.mubr.f32.gmra.mrb[0].mxu0 %v4422
        %v5384 = vpop.f32.mrb[0].mxu0
        %v5385 = vadd.f32 0.0, %v5384
        %v5386 = vpop.f32.mrb[0].mxu0
        %5387 = vmatprep.mubr.f32.mxu0 0.0
        %5388 = vmatmul.mubr.f32.gmra.mrb[0].mxu0 %v4424
        %v5389 = vpop.f32.mrb[0].mxu0
        %v5390 = vadd.f32 0.0, %v5389
        %v5391 = vpop.f32.mrb[0].mxu0
        %5392 = vmatprep.mubr.f32.mxu0 0.0
        %5393 = vmatmul.mubr.f32.gmra.mrb[0].mxu0 %v4426
        %v5394 = vpop.f32.mrb[0].mxu0
        %v5395 = vadd.f32 0.0, %v5394
        %v5396 = vpop.f32.mrb[0].mxu0
        %5397 = vmatprep.mubr.f32.mxu0 0.0
        %5398 = vmatmul.mubr.f32.gmra.mrb[0].mxu0 %v4428
        %v5399 = vpop.f32.mrb[0].mxu0
        %v5400 = vadd.f32 0.0, %v5399
        %v5401 = vpop.f32.mrb[0].mxu0
        %5402 = vmatprep.mubr.f32.mxu0 0.0
        %5403 = vmatmul.mubr.f32.gmra.mrb[0].mxu0 %v4430
        %v5404 = vpop.f32.mrb[0].mxu0
        %v5405 = vadd.f32 0.0, %v5404
        %v5406 = vpop.f32.mrb[0].mxu0
        %5407 = vmatprep.mubr.f32.mxu0 0.0
        %5408 = vmatmul.mubr.f32.gmra.mrb[0].mxu0 %v4432
        %v5409 = vpop.f32.mrb[0].mxu0
        %v5410 = vadd.f32 0.0, %v5409
        %v5411 = vpop.f32.mrb[0].mxu0
        %5412 = vmatprep.mubr.f32.mxu0 0.0
        %5413 = vmatmul.mubr.f32.gmra.mrb[0].mxu0 %v4434
        %v5414 = vpop.f32.mrb[0].mxu0
        %v5415 = vadd.f32 0.0, %v5414
        %v5416 = vpop.f32.mrb[0].mxu0
        %5417 = vmatprep.mubr.f32.mxu0 0.0
        %5418 = vmatmul.mubr.f32.gmra.mrb[0].mxu0 %v4436
        %v5419 = vpop.f32.mrb[0].mxu0
        %v5420 = vadd.f32 0.0, %v5419
        %v5421 = vpop.f32.mrb[0].mxu0
        %5422 = vmatprep.mubr.f32.mxu0 0.0
        %5423 = vmatmul.mubr.f32.gmra.mrb[0].mxu0 %v4438
        %v5424 = vpop.f32.mrb[0].mxu0
        %v5425 = vadd.f32 0.0, %v5424
        %v5426 = vpop.f32.mrb[0].mxu0
        %5427 = vmatprep.mubr.f32.mxu0 0.0
        %5428 = vmatmul.mubr.f32.gmra.mrb[0].mxu0 %v4440
        %v5429 = vpop.f32.mrb[0].mxu0
        %v5430 = vadd.f32 0.0, %v5429
        %v5431 = vpop.f32.mrb[0].mxu0
        %5432 = vmatprep.mubr.f32.mxu0 0.0
        %5433 = vmatmul.mubr.f32.gmra.mrb[0].mxu0 %v4442
        %v5434 = vpop.f32.mrb[0].mxu0
        %v5435 = vadd.f32 0.0, %v5434
        %v5436 = vpop.f32.mrb[0].mxu0
        %5437 = vmatprep.mubr.f32.mxu0 0.0
        %5438 = vmatmul.mubr.f32.gmra.mrb[0].mxu0 %v4444
        %v5439 = vpop.f32.mrb[0].mxu0
        %v5440 = vadd.f32 0.0, %v5439
        %v5441 = vpop.f32.mrb[0].mxu0
        %5442 = vmatprep.mubr.f32.mxu0 0.0
        %5443 = vmatmul.mubr.f32.gmra.mrb[0].mxu0 %v4446
        %v5444 = vpop.f32.mrb[0].mxu0
        %v5445 = vadd.f32 0.0, %v5444
        %v5446 = vpop.f32.mrb[0].mxu0
        %5447 = vmatprep.mubr.f32.mxu0 0.0
        %5448 = vmatmul.mubr.f32.gmra.mrb[0].mxu0 %v4448
        %v5449 = vpop.f32.mrb[0].mxu0
        %v5450 = vadd.f32 0.0, %v5449
        %v5451 = vpop.f32.mrb[0].mxu0
        %5452 = vmatprep.mubr.f32.mxu0 0.0
        %5453 = vmatmul.mubr.f32.gmra.mrb[0].mxu0 %v4450
        %v5454 = vpop.f32.mrb[0].mxu0
        %v5455 = vadd.f32 0.0, %v5454
        %v5456 = vpop.f32.mrb[0].mxu0
        %5457 = vmatprep.mubr.f32.mxu0 0.0
        %5458 = vmatmul.mubr.f32.gmra.mrb[0].mxu0 %v4452
        %v5459 = vpop.f32.mrb[0].mxu0
        %v5460 = vadd.f32 0.0, %v5459
        %v5461 = vpop.f32.mrb[0].mxu0
        %5462 = vmatprep.mubr.f32.mxu0 0.0
        %5463 = vmatmul.mubr.f32.gmra.mrb[0].mxu0 %v4454
        %v5464 = vpop.f32.mrb[0].mxu0
        %v5465 = vadd.f32 0.0, %v5464
        %v5466 = vpop.f32.mrb[0].mxu0
        %5467 = vmatprep.mubr.f32.mxu0 0.0
        %5468 = vmatmul.mubr.f32.gmra.mrb[0].mxu0 %v4456
        %v5469 = vpop.f32.mrb[0].mxu0
        %v5470 = vadd.f32 0.0, %v5469
        %v5471 = vpop.f32.mrb[0].mxu0
        %5472 = vmatprep.mubr.f32.mxu0 0.0
        %5473 = vmatmul.mubr.f32.gmra.mrb[0].mxu0 %v4458
        %v5474 = vpop.f32.mrb[0].mxu0
        %v5475 = vadd.f32 0.0, %v5474
        %v5476 = vpop.f32.mrb[0].mxu0
        %5477 = vmatprep.mubr.f32.mxu0 0.0
        %5478 = vmatmul.mubr.f32.gmra.mrb[0].mxu0 %v5259
        %v5479 = vpop.f32.mrb[0].mxu0
        %v5480 = vadd.f32 0.0, %v5479
        %v5481 = vpop.f32.mrb[0].mxu0
        %5482 = vmatprep.mubr.f32.mxu0 0.0
        %5483 = vmatmul.mubr.f32.gmra.mrb[0].mxu0 %v5261
        %v5484 = vpop.f32.mrb[0].mxu0
        %v5485 = vadd.f32 0.0, %v5484
        %v5486 = vpop.f32.mrb[0].mxu0
        %5487 = vdwg.mxu0
        %v5488 = vadd.f32 %v5219, %v5330
        %v5489 = vadd.f32 %v5220, %v5335
        %v5490 = vadd.f32 %v5221, %v5340
        %v5491 = vadd.f32 %v5222, %v5345
        %v5492 = vadd.f32 %v5223, %v5350
        %v5493 = vadd.f32 %v5224, %v5355
        %v5494 = vadd.f32 %v5225, %v5360
        %v5495 = vadd.f32 %v5226, %v5365
        %v5496 = vadd.f32 %v5227, %v5370
        %v5497 = vadd.f32 %v5228, %v5375
        %v5498 = vadd.f32 %v5229, %v5380
        %v5499 = vadd.f32 %v5230, %v5385
        %v5500 = vadd.f32 %v5231, %v5390
        %v5501 = vadd.f32 %v5232, %v5395
        %v5502 = vadd.f32 %v5233, %v5400
        %v5503 = vadd.f32 %v5234, %v5405
        %v5504 = vadd.f32 %v5235, %v5410
        %v5505 = vadd.f32 %v5236, %v5415
        %v5506 = vadd.f32 %v5237, %v5420
        %v5507 = vadd.f32 %v5238, %v5425
        %v5508 = vadd.f32 %v5239, %v5430
        %v5509 = vadd.f32 %v5240, %v5435
        %v5510 = vadd.f32 %v5241, %v5440
        %v5511 = vadd.f32 %v5242, %v5445
        %v5512 = vadd.f32 %v5243, %v5450
        %v5513 = vadd.f32 %v5244, %v5455
        %v5514 = vadd.f32 %v5245, %v5460
        %v5515 = vadd.f32 %v5246, %v5465
        %v5516 = vadd.f32 %v5247, %v5470
        %v5517 = vadd.f32 %v5248, %v5475
        %v5518 = vadd.f32 %v5249, %v5480
        %v5519 = vadd.f32 %v5250, %v5485
        %v5523 = vrot.slane %v3585, 7
        %v5524 = vrot.slane %v3586, 7
        %v5525 = vsel %vm697, %v5523, %v5524
        %v5526 = vrot.slane %v3587, 7
        %v5527 = vsel %vm697, %v5524, %v5526
        %s5528 = scalar_lea.vmem %s3, 48
        %v5529 = vld [vmem:[%s5528] sm:$0xff]
        %v5530 = vsel %vm3484, %v5525, 0
        %v5532 = vsel %vm3484, %v5527, 0
        %5534 = vmatprep.subr.mxu0 0.0
        %5535 = vmatpush1.msra.mxu0 %v5529
        %5536 = vmatprep.subr.mxu0 0.0
        %5537 = vmatpush1.msra.mxu0 0.0
        %5538 = vmatprep.subr.mxu0 0.0
        %5539 = vmatpush1.msra.mxu0 0.0
        %5540 = vmatprep.subr.mxu0 0.0
        %5541 = vmatpush1.msra.mxu0 0.0
        %5542 = vmatprep.subr.mxu0 0.0
        %5543 = vmatpush1.msra.mxu0 0.0
        %5544 = vmatprep.subr.mxu0 0.0
        %5545 = vmatpush1.msra.mxu0 0.0
        %5546 = vmatprep.subr.mxu0 0.0
        %5547 = vmatpush1.msra.mxu0 0.0
        %5548 = vmatprep.subr.mxu0 0.0
        %5549 = vmatpush1.msra.mxu0 0.0
        %5550 = vmatprep.subr.mxu0 0.0
        %5551 = vmatpush1.msra.mxu0 0.0
        %5552 = vmatprep.subr.mxu0 0.0
        %5553 = vmatpush1.msra.mxu0 0.0
        %5554 = vmatprep.subr.mxu0 0.0
        %5555 = vmatpush1.msra.mxu0 0.0
        %5556 = vmatprep.subr.mxu0 0.0
        %5557 = vmatpush1.msra.mxu0 0.0
        %5558 = vmatprep.subr.mxu0 0.0
        %5559 = vmatpush1.msra.mxu0 0.0
        %5560 = vmatprep.subr.mxu0 0.0
        %5561 = vmatpush1.msra.mxu0 0.0
        %5562 = vmatprep.subr.mxu0 0.0
        %5563 = vmatpush1.msra.mxu0 0.0
        %5564 = vmatprep.subr.mxu0 0.0
        %5565 = vmatpush1.msra.mxu0 0.0
        %5566 = vmatprep.subr.mxu0 0.0
        %5567 = vmatpush1.msra.mxu0 0.0
        %5568 = vmatprep.subr.mxu0 0.0
        %5569 = vmatpush1.msra.mxu0 0.0
        %5570 = vmatprep.subr.mxu0 0.0
        %5571 = vmatpush1.msra.mxu0 0.0
        %5572 = vmatprep.subr.mxu0 0.0
        %5573 = vmatpush1.msra.mxu0 0.0
        %5574 = vmatprep.subr.mxu0 0.0
        %5575 = vmatpush1.msra.mxu0 0.0
        %5576 = vmatprep.subr.mxu0 0.0
        %5577 = vmatpush1.msra.mxu0 0.0
        %5578 = vmatprep.subr.mxu0 0.0
        %5579 = vmatpush1.msra.mxu0 0.0
        %5580 = vmatprep.subr.mxu0 0.0
        %5581 = vmatpush1.msra.mxu0 0.0
        %5582 = vmatprep.subr.mxu0 0.0
        %5583 = vmatpush1.msra.mxu0 0.0
        %5584 = vmatprep.subr.mxu0 0.0
        %5585 = vmatpush1.msra.mxu0 0.0
        %5586 = vmatprep.subr.mxu0 0.0
        %5587 = vmatpush1.msra.mxu0 0.0
        %5588 = vmatprep.subr.mxu0 0.0
        %5589 = vmatpush1.msra.mxu0 0.0
        %5590 = vmatprep.subr.mxu0 0.0
        %5591 = vmatpush1.msra.mxu0 0.0
        %5592 = vmatprep.subr.mxu0 0.0
        %5593 = vmatpush1.msra.mxu0 0.0
        %5594 = vmatprep.subr.mxu0 0.0
        %5595 = vmatpush1.msra.mxu0 0.0
        %5596 = vmatprep.subr.mxu0 0.0
        %5597 = vmatpush1.msra.mxu0 0.0
        %5598 = vmatprep.mubr.f32.mxu0 0.0
        %5599 = vmatmul.mubr.f32.gmra.mrb[0].mxu0 %v4017
        %v5600 = vpop.f32.mrb[0].mxu0
        %v5601 = vadd.f32 0.0, %v5600
        %v5602 = vpop.f32.mrb[0].mxu0
        %5603 = vmatprep.mubr.f32.mxu0 0.0
        %5604 = vmatmul.mubr.f32.gmra.mrb[0].mxu0 %v4019
        %v5605 = vpop.f32.mrb[0].mxu0
        %v5606 = vadd.f32 0.0, %v5605
        %v5607 = vpop.f32.mrb[0].mxu0
        %5608 = vmatprep.mubr.f32.mxu0 0.0
        %5609 = vmatmul.mubr.f32.gmra.mrb[0].mxu0 %v4021
        %v5610 = vpop.f32.mrb[0].mxu0
        %v5611 = vadd.f32 0.0, %v5610
        %v5612 = vpop.f32.mrb[0].mxu0
        %5613 = vmatprep.mubr.f32.mxu0 0.0
        %5614 = vmatmul.mubr.f32.gmra.mrb[0].mxu0 %v4023
        %v5615 = vpop.f32.mrb[0].mxu0
        %v5616 = vadd.f32 0.0, %v5615
        %v5617 = vpop.f32.mrb[0].mxu0
        %5618 = vmatprep.mubr.f32.mxu0 0.0
        %5619 = vmatmul.mubr.f32.gmra.mrb[0].mxu0 %v4025
        %v5620 = vpop.f32.mrb[0].mxu0
        %v5621 = vadd.f32 0.0, %v5620
        %v5622 = vpop.f32.mrb[0].mxu0
        %5623 = vmatprep.mubr.f32.mxu0 0.0
        %5624 = vmatmul.mubr.f32.gmra.mrb[0].mxu0 %v4027
        %v5625 = vpop.f32.mrb[0].mxu0
        %v5626 = vadd.f32 0.0, %v5625
        %v5627 = vpop.f32.mrb[0].mxu0
        %5628 = vmatprep.mubr.f32.mxu0 0.0
        %5629 = vmatmul.mubr.f32.gmra.mrb[0].mxu0 %v4029
        %v5630 = vpop.f32.mrb[0].mxu0
        %v5631 = vadd.f32 0.0, %v5630
        %v5632 = vpop.f32.mrb[0].mxu0
        %5633 = vmatprep.mubr.f32.mxu0 0.0
        %5634 = vmatmul.mubr.f32.gmra.mrb[0].mxu0 %v4031
        %v5635 = vpop.f32.mrb[0].mxu0
        %v5636 = vadd.f32 0.0, %v5635
        %v5637 = vpop.f32.mrb[0].mxu0
        %5638 = vmatprep.mubr.f32.mxu0 0.0
        %5639 = vmatmul.mubr.f32.gmra.mrb[0].mxu0 %v4033
        %v5640 = vpop.f32.mrb[0].mxu0
        %v5641 = vadd.f32 0.0, %v5640
        %v5642 = vpop.f32.mrb[0].mxu0
        %5643 = vmatprep.mubr.f32.mxu0 0.0
        %5644 = vmatmul.mubr.f32.gmra.mrb[0].mxu0 %v4035
        %v5645 = vpop.f32.mrb[0].mxu0
        %v5646 = vadd.f32 0.0, %v5645
        %v5647 = vpop.f32.mrb[0].mxu0
        %5648 = vmatprep.mubr.f32.mxu0 0.0
        %5649 = vmatmul.mubr.f32.gmra.mrb[0].mxu0 %v4037
        %v5650 = vpop.f32.mrb[0].mxu0
        %v5651 = vadd.f32 0.0, %v5650
        %v5652 = vpop.f32.mrb[0].mxu0
        %5653 = vmatprep.mubr.f32.mxu0 0.0
        %5654 = vmatmul.mubr.f32.gmra.mrb[0].mxu0 %v4039
        %v5655 = vpop.f32.mrb[0].mxu0
        %v5656 = vadd.f32 0.0, %v5655
        %v5657 = vpop.f32.mrb[0].mxu0
        %5658 = vmatprep.mubr.f32.mxu0 0.0
        %5659 = vmatmul.mubr.f32.gmra.mrb[0].mxu0 %v4041
        %v5660 = vpop.f32.mrb[0].mxu0
        %v5661 = vadd.f32 0.0, %v5660
        %v5662 = vpop.f32.mrb[0].mxu0
        %5663 = vmatprep.mubr.f32.mxu0 0.0
        %5664 = vmatmul.mubr.f32.gmra.mrb[0].mxu0 %v4043
        %v5665 = vpop.f32.mrb[0].mxu0
        %v5666 = vadd.f32 0.0, %v5665
        %v5667 = vpop.f32.mrb[0].mxu0
        %5668 = vmatprep.mubr.f32.mxu0 0.0
        %5669 = vmatmul.mubr.f32.gmra.mrb[0].mxu0 %v4045
        %v5670 = vpop.f32.mrb[0].mxu0
        %v5671 = vadd.f32 0.0, %v5670
        %v5672 = vpop.f32.mrb[0].mxu0
        %5673 = vmatprep.mubr.f32.mxu0 0.0
        %5674 = vmatmul.mubr.f32.gmra.mrb[0].mxu0 %v4047
        %v5675 = vpop.f32.mrb[0].mxu0
        %v5676 = vadd.f32 0.0, %v5675
        %v5677 = vpop.f32.mrb[0].mxu0
        %5678 = vmatprep.mubr.f32.mxu0 0.0
        %5679 = vmatmul.mubr.f32.gmra.mrb[0].mxu0 %v4049
        %v5680 = vpop.f32.mrb[0].mxu0
        %v5681 = vadd.f32 0.0, %v5680
        %v5682 = vpop.f32.mrb[0].mxu0
        %5683 = vmatprep.mubr.f32.mxu0 0.0
        %5684 = vmatmul.mubr.f32.gmra.mrb[0].mxu0 %v4051
        %v5685 = vpop.f32.mrb[0].mxu0
        %v5686 = vadd.f32 0.0, %v5685
        %v5687 = vpop.f32.mrb[0].mxu0
        %5688 = vmatprep.mubr.f32.mxu0 0.0
        %5689 = vmatmul.mubr.f32.gmra.mrb[0].mxu0 %v4053
        %v5690 = vpop.f32.mrb[0].mxu0
        %v5691 = vadd.f32 0.0, %v5690
        %v5692 = vpop.f32.mrb[0].mxu0
        %5693 = vmatprep.mubr.f32.mxu0 0.0
        %5694 = vmatmul.mubr.f32.gmra.mrb[0].mxu0 %v4055
        %v5695 = vpop.f32.mrb[0].mxu0
        %v5696 = vadd.f32 0.0, %v5695
        %v5697 = vpop.f32.mrb[0].mxu0
        %5698 = vmatprep.mubr.f32.mxu0 0.0
        %5699 = vmatmul.mubr.f32.gmra.mrb[0].mxu0 %v4057
        %v5700 = vpop.f32.mrb[0].mxu0
        %v5701 = vadd.f32 0.0, %v5700
        %v5702 = vpop.f32.mrb[0].mxu0
        %5703 = vmatprep.mubr.f32.mxu0 0.0
        %5704 = vmatmul.mubr.f32.gmra.mrb[0].mxu0 %v4059
        %v5705 = vpop.f32.mrb[0].mxu0
        %v5706 = vadd.f32 0.0, %v5705
        %v5707 = vpop.f32.mrb[0].mxu0
        %5708 = vmatprep.mubr.f32.mxu0 0.0
        %5709 = vmatmul.mubr.f32.gmra.mrb[0].mxu0 %v4061
        %v5710 = vpop.f32.mrb[0].mxu0
        %v5711 = vadd.f32 0.0, %v5710
        %v5712 = vpop.f32.mrb[0].mxu0
        %5713 = vmatprep.mubr.f32.mxu0 0.0
        %5714 = vmatmul.mubr.f32.gmra.mrb[0].mxu0 %v4063
        %v5715 = vpop.f32.mrb[0].mxu0
        %v5716 = vadd.f32 0.0, %v5715
        %v5717 = vpop.f32.mrb[0].mxu0
        %5718 = vmatprep.mubr.f32.mxu0 0.0
        %5719 = vmatmul.mubr.f32.gmra.mrb[0].mxu0 %v4065
        %v5720 = vpop.f32.mrb[0].mxu0
        %v5721 = vadd.f32 0.0, %v5720
        %v5722 = vpop.f32.mrb[0].mxu0
        %5723 = vmatprep.mubr.f32.mxu0 0.0
        %5724 = vmatmul.mubr.f32.gmra.mrb[0].mxu0 %v4067
        %v5725 = vpop.f32.mrb[0].mxu0
        %v5726 = vadd.f32 0.0, %v5725
        %v5727 = vpop.f32.mrb[0].mxu0
        %5728 = vmatprep.mubr.f32.mxu0 0.0
        %5729 = vmatmul.mubr.f32.gmra.mrb[0].mxu0 %v4069
        %v5730 = vpop.f32.mrb[0].mxu0
        %v5731 = vadd.f32 0.0, %v5730
        %v5732 = vpop.f32.mrb[0].mxu0
        %5733 = vmatprep.mubr.f32.mxu0 0.0
        %5734 = vmatmul.mubr.f32.gmra.mrb[0].mxu0 %v4071
        %v5735 = vpop.f32.mrb[0].mxu0
        %v5736 = vadd.f32 0.0, %v5735
        %v5737 = vpop.f32.mrb[0].mxu0
        %5738 = vmatprep.mubr.f32.mxu0 0.0
        %5739 = vmatmul.mubr.f32.gmra.mrb[0].mxu0 %v4727
        %v5740 = vpop.f32.mrb[0].mxu0
        %v5741 = vadd.f32 0.0, %v5740
        %v5742 = vpop.f32.mrb[0].mxu0
        %5743 = vmatprep.mubr.f32.mxu0 0.0
        %5744 = vmatmul.mubr.f32.gmra.mrb[0].mxu0 %v4729
        %v5745 = vpop.f32.mrb[0].mxu0
        %v5746 = vadd.f32 0.0, %v5745
        %v5747 = vpop.f32.mrb[0].mxu0
        %5748 = vmatprep.mubr.f32.mxu0 0.0
        %5749 = vmatmul.mubr.f32.gmra.mrb[0].mxu0 %v5530
        %v5750 = vpop.f32.mrb[0].mxu0
        %v5751 = vadd.f32 0.0, %v5750
        %v5752 = vpop.f32.mrb[0].mxu0
        %5753 = vmatprep.mubr.f32.mxu0 0.0
        %5754 = vmatmul.mubr.f32.gmra.mrb[0].mxu0 %v5532
        %v5755 = vpop.f32.mrb[0].mxu0
        %v5756 = vadd.f32 0.0, %v5755
        %v5757 = vpop.f32.mrb[0].mxu0
        %5758 = vdwg.mxu0
        %v5759 = vadd.f32 %v5488, %v5601
        %v5760 = vadd.f32 %v5489, %v5606
        %v5761 = vadd.f32 %v5490, %v5611
        %v5762 = vadd.f32 %v5491, %v5616
        %v5763 = vadd.f32 %v5492, %v5621
        %v5764 = vadd.f32 %v5493, %v5626
        %v5765 = vadd.f32 %v5494, %v5631
        %v5766 = vadd.f32 %v5495, %v5636
        %v5767 = vadd.f32 %v5496, %v5641
        %v5768 = vadd.f32 %v5497, %v5646
        %v5769 = vadd.f32 %v5498, %v5651
        %v5770 = vadd.f32 %v5499, %v5656
        %v5771 = vadd.f32 %v5500, %v5661
        %v5772 = vadd.f32 %v5501, %v5666
        %v5773 = vadd.f32 %v5502, %v5671
        %v5774 = vadd.f32 %v5503, %v5676
        %v5775 = vadd.f32 %v5504, %v5681
        %v5776 = vadd.f32 %v5505, %v5686
        %v5777 = vadd.f32 %v5506, %v5691
        %v5778 = vadd.f32 %v5507, %v5696
        %v5779 = vadd.f32 %v5508, %v5701
        %v5780 = vadd.f32 %v5509, %v5706
        %v5781 = vadd.f32 %v5510, %v5711
        %v5782 = vadd.f32 %v5511, %v5716
        %v5783 = vadd.f32 %v5512, %v5721
        %v5784 = vadd.f32 %v5513, %v5726
        %v5785 = vadd.f32 %v5514, %v5731
        %v5786 = vadd.f32 %v5515, %v5736
        %v5787 = vadd.f32 %v5516, %v5741
        %v5788 = vadd.f32 %v5517, %v5746
        %v5789 = vadd.f32 %v5518, %v5751
        %v5790 = vadd.f32 %v5519, %v5756
        %s5791 = scalar_lea.vmem %s3, 56
        %v5792 = vld [vmem:[%s5791] sm:$0xff]
        %v5793 = vsel %vm3484, %v3586, 0
        %v5795 = vsel %vm3484, %v3587, 0
        %5797 = vmatprep.subr.mxu0 0.0
        %5798 = vmatpush1.msra.mxu0 %v5792
        %5799 = vmatprep.subr.mxu0 0.0
        %5800 = vmatpush1.msra.mxu0 0.0
        %5801 = vmatprep.subr.mxu0 0.0
        %5802 = vmatpush1.msra.mxu0 0.0
        %5803 = vmatprep.subr.mxu0 0.0
        %5804 = vmatpush1.msra.mxu0 0.0
        %5805 = vmatprep.subr.mxu0 0.0
        %5806 = vmatpush1.msra.mxu0 0.0
        %5807 = vmatprep.subr.mxu0 0.0
        %5808 = vmatpush1.msra.mxu0 0.0
        %5809 = vmatprep.subr.mxu0 0.0
        %5810 = vmatpush1.msra.mxu0 0.0
        %5811 = vmatprep.subr.mxu0 0.0
        %5812 = vmatpush1.msra.mxu0 0.0
        %5813 = vmatprep.subr.mxu0 0.0
        %5814 = vmatpush1.msra.mxu0 0.0
        %5815 = vmatprep.subr.mxu0 0.0
        %5816 = vmatpush1.msra.mxu0 0.0
        %5817 = vmatprep.subr.mxu0 0.0
        %5818 = vmatpush1.msra.mxu0 0.0
        %5819 = vmatprep.subr.mxu0 0.0
        %5820 = vmatpush1.msra.mxu0 0.0
        %5821 = vmatprep.subr.mxu0 0.0
        %5822 = vmatpush1.msra.mxu0 0.0
        %5823 = vmatprep.subr.mxu0 0.0
        %5824 = vmatpush1.msra.mxu0 0.0
        %5825 = vmatprep.subr.mxu0 0.0
        %5826 = vmatpush1.msra.mxu0 0.0
        %5827 = vmatprep.subr.mxu0 0.0
        %5828 = vmatpush1.msra.mxu0 0.0
        %5829 = vmatprep.subr.mxu0 0.0
        %5830 = vmatpush1.msra.mxu0 0.0
        %5831 = vmatprep.subr.mxu0 0.0
        %5832 = vmatpush1.msra.mxu0 0.0
        %5833 = vmatprep.subr.mxu0 0.0
        %5834 = vmatpush1.msra.mxu0 0.0
        %5835 = vmatprep.subr.mxu0 0.0
        %5836 = vmatpush1.msra.mxu0 0.0
        %5837 = vmatprep.subr.mxu0 0.0
        %5838 = vmatpush1.msra.mxu0 0.0
        %5839 = vmatprep.subr.mxu0 0.0
        %5840 = vmatpush1.msra.mxu0 0.0
        %5841 = vmatprep.subr.mxu0 0.0
        %5842 = vmatpush1.msra.mxu0 0.0
        %5843 = vmatprep.subr.mxu0 0.0
        %5844 = vmatpush1.msra.mxu0 0.0
        %5845 = vmatprep.subr.mxu0 0.0
        %5846 = vmatpush1.msra.mxu0 0.0
        %5847 = vmatprep.subr.mxu0 0.0
        %5848 = vmatpush1.msra.mxu0 0.0
        %5849 = vmatprep.subr.mxu0 0.0
        %5850 = vmatpush1.msra.mxu0 0.0
        %5851 = vmatprep.subr.mxu0 0.0
        %5852 = vmatpush1.msra.mxu0 0.0
        %5853 = vmatprep.subr.mxu0 0.0
        %5854 = vmatpush1.msra.mxu0 0.0
        %5855 = vmatprep.subr.mxu0 0.0
        %5856 = vmatpush1.msra.mxu0 0.0
        %5857 = vmatprep.subr.mxu0 0.0
        %5858 = vmatpush1.msra.mxu0 0.0
        %5859 = vmatprep.subr.mxu0 0.0
        %5860 = vmatpush1.msra.mxu0 0.0
        %5861 = vmatprep.mubr.f32.mxu0 0.0
        %5862 = vmatmul.mubr.f32.gmra.mrb[0].mxu0 %v3728
        %v5863 = vpop.f32.mrb[0].mxu0
        %v5864 = vadd.f32 0.0, %v5863
        %v5865 = vpop.f32.mrb[0].mxu0
        %5866 = vmatprep.mubr.f32.mxu0 0.0
        %5867 = vmatmul.mubr.f32.gmra.mrb[0].mxu0 %v3730
        %v5868 = vpop.f32.mrb[0].mxu0
        %v5869 = vadd.f32 0.0, %v5868
        %v5870 = vpop.f32.mrb[0].mxu0
        %5871 = vmatprep.mubr.f32.mxu0 0.0
        %5872 = vmatmul.mubr.f32.gmra.mrb[0].mxu0 %v3732
        %v5873 = vpop.f32.mrb[0].mxu0
        %v5874 = vadd.f32 0.0, %v5873
        %v5875 = vpop.f32.mrb[0].mxu0
        %5876 = vmatprep.mubr.f32.mxu0 0.0
        %5877 = vmatmul.mubr.f32.gmra.mrb[0].mxu0 %v3734
        %v5878 = vpop.f32.mrb[0].mxu0
        %v5879 = vadd.f32 0.0, %v5878
        %v5880 = vpop.f32.mrb[0].mxu0
        %5881 = vmatprep.mubr.f32.mxu0 0.0
        %5882 = vmatmul.mubr.f32.gmra.mrb[0].mxu0 %v3736
        %v5883 = vpop.f32.mrb[0].mxu0
        %v5884 = vadd.f32 0.0, %v5883
        %v5885 = vpop.f32.mrb[0].mxu0
        %5886 = vmatprep.mubr.f32.mxu0 0.0
        %5887 = vmatmul.mubr.f32.gmra.mrb[0].mxu0 %v3738
        %v5888 = vpop.f32.mrb[0].mxu0
        %v5889 = vadd.f32 0.0, %v5888
        %v5890 = vpop.f32.mrb[0].mxu0
        %5891 = vmatprep.mubr.f32.mxu0 0.0
        %5892 = vmatmul.mubr.f32.gmra.mrb[0].mxu0 %v3740
        %v5893 = vpop.f32.mrb[0].mxu0
        %v5894 = vadd.f32 0.0, %v5893
        %v5895 = vpop.f32.mrb[0].mxu0
        %5896 = vmatprep.mubr.f32.mxu0 0.0
        %5897 = vmatmul.mubr.f32.gmra.mrb[0].mxu0 %v3742
        %v5898 = vpop.f32.mrb[0].mxu0
        %v5899 = vadd.f32 0.0, %v5898
        %v5900 = vpop.f32.mrb[0].mxu0
        %5901 = vmatprep.mubr.f32.mxu0 0.0
        %5902 = vmatmul.mubr.f32.gmra.mrb[0].mxu0 %v3744
        %v5903 = vpop.f32.mrb[0].mxu0
        %v5904 = vadd.f32 0.0, %v5903
        %v5905 = vpop.f32.mrb[0].mxu0
        %5906 = vmatprep.mubr.f32.mxu0 0.0
        %5907 = vmatmul.mubr.f32.gmra.mrb[0].mxu0 %v3746
        %v5908 = vpop.f32.mrb[0].mxu0
        %v5909 = vadd.f32 0.0, %v5908
        %v5910 = vpop.f32.mrb[0].mxu0
        %5911 = vmatprep.mubr.f32.mxu0 0.0
        %5912 = vmatmul.mubr.f32.gmra.mrb[0].mxu0 %v3748
        %v5913 = vpop.f32.mrb[0].mxu0
        %v5914 = vadd.f32 0.0, %v5913
        %v5915 = vpop.f32.mrb[0].mxu0
        %5916 = vmatprep.mubr.f32.mxu0 0.0
        %5917 = vmatmul.mubr.f32.gmra.mrb[0].mxu0 %v3750
        %v5918 = vpop.f32.mrb[0].mxu0
        %v5919 = vadd.f32 0.0, %v5918
        %v5920 = vpop.f32.mrb[0].mxu0
        %5921 = vmatprep.mubr.f32.mxu0 0.0
        %5922 = vmatmul.mubr.f32.gmra.mrb[0].mxu0 %v3752
        %v5923 = vpop.f32.mrb[0].mxu0
        %v5924 = vadd.f32 0.0, %v5923
        %v5925 = vpop.f32.mrb[0].mxu0
        %5926 = vmatprep.mubr.f32.mxu0 0.0
        %5927 = vmatmul.mubr.f32.gmra.mrb[0].mxu0 %v3754
        %v5928 = vpop.f32.mrb[0].mxu0
        %v5929 = vadd.f32 0.0, %v5928
        %v5930 = vpop.f32.mrb[0].mxu0
        %5931 = vmatprep.mubr.f32.mxu0 0.0
        %5932 = vmatmul.mubr.f32.gmra.mrb[0].mxu0 %v3756
        %v5933 = vpop.f32.mrb[0].mxu0
        %v5934 = vadd.f32 0.0, %v5933
        %v5935 = vpop.f32.mrb[0].mxu0
        %5936 = vmatprep.mubr.f32.mxu0 0.0
        %5937 = vmatmul.mubr.f32.gmra.mrb[0].mxu0 %v3758
        %v5938 = vpop.f32.mrb[0].mxu0
        %v5939 = vadd.f32 0.0, %v5938
        %v5940 = vpop.f32.mrb[0].mxu0
        %5941 = vmatprep.mubr.f32.mxu0 0.0
        %5942 = vmatmul.mubr.f32.gmra.mrb[0].mxu0 %v3760
        %v5943 = vpop.f32.mrb[0].mxu0
        %v5944 = vadd.f32 0.0, %v5943
        %v5945 = vpop.f32.mrb[0].mxu0
        %5946 = vmatprep.mubr.f32.mxu0 0.0
        %5947 = vmatmul.mubr.f32.gmra.mrb[0].mxu0 %v3762
        %v5948 = vpop.f32.mrb[0].mxu0
        %v5949 = vadd.f32 0.0, %v5948
        %v5950 = vpop.f32.mrb[0].mxu0
        %5951 = vmatprep.mubr.f32.mxu0 0.0
        %5952 = vmatmul.mubr.f32.gmra.mrb[0].mxu0 %v3764
        %v5953 = vpop.f32.mrb[0].mxu0
        %v5954 = vadd.f32 0.0, %v5953
        %v5955 = vpop.f32.mrb[0].mxu0
        %5956 = vmatprep.mubr.f32.mxu0 0.0
        %5957 = vmatmul.mubr.f32.gmra.mrb[0].mxu0 %v3766
        %v5958 = vpop.f32.mrb[0].mxu0
        %v5959 = vadd.f32 0.0, %v5958
        %v5960 = vpop.f32.mrb[0].mxu0
        %5961 = vmatprep.mubr.f32.mxu0 0.0
        %5962 = vmatmul.mubr.f32.gmra.mrb[0].mxu0 %v3768
        %v5963 = vpop.f32.mrb[0].mxu0
        %v5964 = vadd.f32 0.0, %v5963
        %v5965 = vpop.f32.mrb[0].mxu0
        %5966 = vmatprep.mubr.f32.mxu0 0.0
        %5967 = vmatmul.mubr.f32.gmra.mrb[0].mxu0 %v3770
        %v5968 = vpop.f32.mrb[0].mxu0
        %v5969 = vadd.f32 0.0, %v5968
        %v5970 = vpop.f32.mrb[0].mxu0
        %5971 = vmatprep.mubr.f32.mxu0 0.0
        %5972 = vmatmul.mubr.f32.gmra.mrb[0].mxu0 %v3772
        %v5973 = vpop.f32.mrb[0].mxu0
        %v5974 = vadd.f32 0.0, %v5973
        %v5975 = vpop.f32.mrb[0].mxu0
        %5976 = vmatprep.mubr.f32.mxu0 0.0
        %5977 = vmatmul.mubr.f32.gmra.mrb[0].mxu0 %v3774
        %v5978 = vpop.f32.mrb[0].mxu0
        %v5979 = vadd.f32 0.0, %v5978
        %v5980 = vpop.f32.mrb[0].mxu0
        %5981 = vmatprep.mubr.f32.mxu0 0.0
        %5982 = vmatmul.mubr.f32.gmra.mrb[0].mxu0 %v3776
        %v5983 = vpop.f32.mrb[0].mxu0
        %v5984 = vadd.f32 0.0, %v5983
        %v5985 = vpop.f32.mrb[0].mxu0
        %5986 = vmatprep.mubr.f32.mxu0 0.0
        %5987 = vmatmul.mubr.f32.gmra.mrb[0].mxu0 %v3778
        %v5988 = vpop.f32.mrb[0].mxu0
        %v5989 = vadd.f32 0.0, %v5988
        %v5990 = vpop.f32.mrb[0].mxu0
        %5991 = vmatprep.mubr.f32.mxu0 0.0
        %5992 = vmatmul.mubr.f32.gmra.mrb[0].mxu0 %v3780
        %v5993 = vpop.f32.mrb[0].mxu0
        %v5994 = vadd.f32 0.0, %v5993
        %v5995 = vpop.f32.mrb[0].mxu0
        %5996 = vmatprep.mubr.f32.mxu0 0.0
        %5997 = vmatmul.mubr.f32.gmra.mrb[0].mxu0 %v3782
        %v5998 = vpop.f32.mrb[0].mxu0
        %v5999 = vadd.f32 0.0, %v5998
        %v6000 = vpop.f32.mrb[0].mxu0
        %6001 = vmatprep.mubr.f32.mxu0 0.0
        %6002 = vmatmul.mubr.f32.gmra.mrb[0].mxu0 %v4990
        %v6003 = vpop.f32.mrb[0].mxu0
        %v6004 = vadd.f32 0.0, %v6003
        %v6005 = vpop.f32.mrb[0].mxu0
        %6006 = vmatprep.mubr.f32.mxu0 0.0
        %6007 = vmatmul.mubr.f32.gmra.mrb[0].mxu0 %v4992
        %v6008 = vpop.f32.mrb[0].mxu0
        %v6009 = vadd.f32 0.0, %v6008
        %v6010 = vpop.f32.mrb[0].mxu0
        %6011 = vmatprep.mubr.f32.mxu0 0.0
        %6012 = vmatmul.mubr.f32.gmra.mrb[0].mxu0 %v5793
        %v6013 = vpop.f32.mrb[0].mxu0
        %v6014 = vadd.f32 0.0, %v6013
        %v6015 = vpop.f32.mrb[0].mxu0
        %6016 = vmatprep.mubr.f32.mxu0 0.0
        %6017 = vmatmul.mubr.f32.gmra.mrb[0].mxu0 %v5795
        %v6018 = vpop.f32.mrb[0].mxu0
        %v6019 = vadd.f32 0.0, %v6018
        %v6020 = vpop.f32.mrb[0].mxu0
        %6021 = vdwg.mxu0
        %v6022 = vadd.f32 %v5759, %v5864
        %v6023 = vadd.f32 %v5760, %v5869
        %v6024 = vadd.f32 %v5761, %v5874
        %v6025 = vadd.f32 %v5762, %v5879
        %v6026 = vadd.f32 %v5763, %v5884
        %v6027 = vadd.f32 %v5764, %v5889
        %v6028 = vadd.f32 %v5765, %v5894
        %v6029 = vadd.f32 %v5766, %v5899
        %v6030 = vadd.f32 %v5767, %v5904
        %v6031 = vadd.f32 %v5768, %v5909
        %v6032 = vadd.f32 %v5769, %v5914
        %v6033 = vadd.f32 %v5770, %v5919
        %v6034 = vadd.f32 %v5771, %v5924
        %v6035 = vadd.f32 %v5772, %v5929
        %v6036 = vadd.f32 %v5773, %v5934
        %v6037 = vadd.f32 %v5774, %v5939
        %v6038 = vadd.f32 %v5775, %v5944
        %v6039 = vadd.f32 %v5776, %v5949
        %v6040 = vadd.f32 %v5777, %v5954
        %v6041 = vadd.f32 %v5778, %v5959
        %v6042 = vadd.f32 %v5779, %v5964
        %v6043 = vadd.f32 %v5780, %v5969
        %v6044 = vadd.f32 %v5781, %v5974
        %v6045 = vadd.f32 %v5782, %v5979
        %v6046 = vadd.f32 %v5783, %v5984
        %v6047 = vadd.f32 %v5784, %v5989
        %v6048 = vadd.f32 %v5785, %v5994
        %v6049 = vadd.f32 %v5786, %v5999
        %v6050 = vadd.f32 %v5787, %v6004
        %v6051 = vadd.f32 %v5788, %v6009
        %v6052 = vadd.f32 %v5789, %v6014
        %v6053 = vadd.f32 %v5790, %v6019
        %v6055 = vrot.slane %v3586, 1
        %v6056 = vrot.slane %v3587, 1
        %v6057 = vsel %vm1382, %v6055, %v6056
        %v6058 = vrot.slane %v3588, 1
        %v6059 = vsel %vm1382, %v6056, %v6058
        %s6060 = scalar_lea.vmem %s3, 64
        %v6061 = vld [vmem:[%s6060] sm:$0xff]
        %v6062 = vsel %vm3484, %v6057, 0
        %v6064 = vsel %vm3484, %v6059, 0
        %6066 = vmatprep.subr.mxu0 0.0
        %6067 = vmatpush1.msra.mxu0 %v6061
        %6068 = vmatprep.subr.mxu0 0.0
        %6069 = vmatpush1.msra.mxu0 0.0
        %6070 = vmatprep.subr.mxu0 0.0
        %6071 = vmatpush1.msra.mxu0 0.0
        %6072 = vmatprep.subr.mxu0 0.0
        %6073 = vmatpush1.msra.mxu0 0.0
        %6074 = vmatprep.subr.mxu0 0.0
        %6075 = vmatpush1.msra.mxu0 0.0
        %6076 = vmatprep.subr.mxu0 0.0
        %6077 = vmatpush1.msra.mxu0 0.0
        %6078 = vmatprep.subr.mxu0 0.0
        %6079 = vmatpush1.msra.mxu0 0.0
        %6080 = vmatprep.subr.mxu0 0.0
        %6081 = vmatpush1.msra.mxu0 0.0
        %6082 = vmatprep.subr.mxu0 0.0
        %6083 = vmatpush1.msra.mxu0 0.0
        %6084 = vmatprep.subr.mxu0 0.0
        %6085 = vmatpush1.msra.mxu0 0.0
        %6086 = vmatprep.subr.mxu0 0.0
        %6087 = vmatpush1.msra.mxu0 0.0
        %6088 = vmatprep.subr.mxu0 0.0
        %6089 = vmatpush1.msra.mxu0 0.0
        %6090 = vmatprep.subr.mxu0 0.0
        %6091 = vmatpush1.msra.mxu0 0.0
        %6092 = vmatprep.subr.mxu0 0.0
        %6093 = vmatpush1.msra.mxu0 0.0
        %6094 = vmatprep.subr.mxu0 0.0
        %6095 = vmatpush1.msra.mxu0 0.0
        %6096 = vmatprep.subr.mxu0 0.0
        %6097 = vmatpush1.msra.mxu0 0.0
        %6098 = vmatprep.subr.mxu0 0.0
        %6099 = vmatpush1.msra.mxu0 0.0
        %6100 = vmatprep.subr.mxu0 0.0
        %6101 = vmatpush1.msra.mxu0 0.0
        %6102 = vmatprep.subr.mxu0 0.0
        %6103 = vmatpush1.msra.mxu0 0.0
        %6104 = vmatprep.subr.mxu0 0.0
        %6105 = vmatpush1.msra.mxu0 0.0
        %6106 = vmatprep.subr.mxu0 0.0
        %6107 = vmatpush1.msra.mxu0 0.0
        %6108 = vmatprep.subr.mxu0 0.0
        %6109 = vmatpush1.msra.mxu0 0.0
        %6110 = vmatprep.subr.mxu0 0.0
        %6111 = vmatpush1.msra.mxu0 0.0
        %6112 = vmatprep.subr.mxu0 0.0
        %6113 = vmatpush1.msra.mxu0 0.0
        %6114 = vmatprep.subr.mxu0 0.0
        %6115 = vmatpush1.msra.mxu0 0.0
        %6116 = vmatprep.subr.mxu0 0.0
        %6117 = vmatpush1.msra.mxu0 0.0
        %6118 = vmatprep.subr.mxu0 0.0
        %6119 = vmatpush1.msra.mxu0 0.0
        %6120 = vmatprep.subr.mxu0 0.0
        %6121 = vmatpush1.msra.mxu0 0.0
        %6122 = vmatprep.subr.mxu0 0.0
        %6123 = vmatpush1.msra.mxu0 0.0
        %6124 = vmatprep.subr.mxu0 0.0
        %6125 = vmatpush1.msra.mxu0 0.0
        %6126 = vmatprep.subr.mxu0 0.0
        %6127 = vmatpush1.msra.mxu0 0.0
        %6128 = vmatprep.subr.mxu0 0.0
        %6129 = vmatpush1.msra.mxu0 0.0
        %6130 = vmatprep.mubr.f32.mxu0 0.0
        %6131 = vmatmul.mubr.f32.gmra.mrb[0].mxu0 %v4404
        %v6132 = vpop.f32.mrb[0].mxu0
        %v6133 = vadd.f32 0.0, %v6132
        %v6134 = vpop.f32.mrb[0].mxu0
        %6135 = vmatprep.mubr.f32.mxu0 0.0
        %6136 = vmatmul.mubr.f32.gmra.mrb[0].mxu0 %v4406
        %v6137 = vpop.f32.mrb[0].mxu0
        %v6138 = vadd.f32 0.0, %v6137
        %v6139 = vpop.f32.mrb[0].mxu0
        %6140 = vmatprep.mubr.f32.mxu0 0.0
        %6141 = vmatmul.mubr.f32.gmra.mrb[0].mxu0 %v4408
        %v6142 = vpop.f32.mrb[0].mxu0
        %v6143 = vadd.f32 0.0, %v6142
        %v6144 = vpop.f32.mrb[0].mxu0
        %6145 = vmatprep.mubr.f32.mxu0 0.0
        %6146 = vmatmul.mubr.f32.gmra.mrb[0].mxu0 %v4410
        %v6147 = vpop.f32.mrb[0].mxu0
        %v6148 = vadd.f32 0.0, %v6147
        %v6149 = vpop.f32.mrb[0].mxu0
        %6150 = vmatprep.mubr.f32.mxu0 0.0
        %6151 = vmatmul.mubr.f32.gmra.mrb[0].mxu0 %v4412
        %v6152 = vpop.f32.mrb[0].mxu0
        %v6153 = vadd.f32 0.0, %v6152
        %v6154 = vpop.f32.mrb[0].mxu0
        %6155 = vmatprep.mubr.f32.mxu0 0.0
        %6156 = vmatmul.mubr.f32.gmra.mrb[0].mxu0 %v4414
        %v6157 = vpop.f32.mrb[0].mxu0
        %v6158 = vadd.f32 0.0, %v6157
        %v6159 = vpop.f32.mrb[0].mxu0
        %6160 = vmatprep.mubr.f32.mxu0 0.0
        %6161 = vmatmul.mubr.f32.gmra.mrb[0].mxu0 %v4416
        %v6162 = vpop.f32.mrb[0].mxu0
        %v6163 = vadd.f32 0.0, %v6162
        %v6164 = vpop.f32.mrb[0].mxu0
        %6165 = vmatprep.mubr.f32.mxu0 0.0
        %6166 = vmatmul.mubr.f32.gmra.mrb[0].mxu0 %v4418
        %v6167 = vpop.f32.mrb[0].mxu0
        %v6168 = vadd.f32 0.0, %v6167
        %v6169 = vpop.f32.mrb[0].mxu0
        %6170 = vmatprep.mubr.f32.mxu0 0.0
        %6171 = vmatmul.mubr.f32.gmra.mrb[0].mxu0 %v4420
        %v6172 = vpop.f32.mrb[0].mxu0
        %v6173 = vadd.f32 0.0, %v6172
        %v6174 = vpop.f32.mrb[0].mxu0
        %6175 = vmatprep.mubr.f32.mxu0 0.0
        %6176 = vmatmul.mubr.f32.gmra.mrb[0].mxu0 %v4422
        %v6177 = vpop.f32.mrb[0].mxu0
        %v6178 = vadd.f32 0.0, %v6177
        %v6179 = vpop.f32.mrb[0].mxu0
        %6180 = vmatprep.mubr.f32.mxu0 0.0
        %6181 = vmatmul.mubr.f32.gmra.mrb[0].mxu0 %v4424
        %v6182 = vpop.f32.mrb[0].mxu0
        %v6183 = vadd.f32 0.0, %v6182
        %v6184 = vpop.f32.mrb[0].mxu0
        %6185 = vmatprep.mubr.f32.mxu0 0.0
        %6186 = vmatmul.mubr.f32.gmra.mrb[0].mxu0 %v4426
        %v6187 = vpop.f32.mrb[0].mxu0
        %v6188 = vadd.f32 0.0, %v6187
        %v6189 = vpop.f32.mrb[0].mxu0
        %6190 = vmatprep.mubr.f32.mxu0 0.0
        %6191 = vmatmul.mubr.f32.gmra.mrb[0].mxu0 %v4428
        %v6192 = vpop.f32.mrb[0].mxu0
        %v6193 = vadd.f32 0.0, %v6192
        %v6194 = vpop.f32.mrb[0].mxu0
        %6195 = vmatprep.mubr.f32.mxu0 0.0
        %6196 = vmatmul.mubr.f32.gmra.mrb[0].mxu0 %v4430
        %v6197 = vpop.f32.mrb[0].mxu0
        %v6198 = vadd.f32 0.0, %v6197
        %v6199 = vpop.f32.mrb[0].mxu0
        %6200 = vmatprep.mubr.f32.mxu0 0.0
        %6201 = vmatmul.mubr.f32.gmra.mrb[0].mxu0 %v4432
        %v6202 = vpop.f32.mrb[0].mxu0
        %v6203 = vadd.f32 0.0, %v6202
        %v6204 = vpop.f32.mrb[0].mxu0
        %6205 = vmatprep.mubr.f32.mxu0 0.0
        %6206 = vmatmul.mubr.f32.gmra.mrb[0].mxu0 %v4434
        %v6207 = vpop.f32.mrb[0].mxu0
        %v6208 = vadd.f32 0.0, %v6207
        %v6209 = vpop.f32.mrb[0].mxu0
        %6210 = vmatprep.mubr.f32.mxu0 0.0
        %6211 = vmatmul.mubr.f32.gmra.mrb[0].mxu0 %v4436
        %v6212 = vpop.f32.mrb[0].mxu0
        %v6213 = vadd.f32 0.0, %v6212
        %v6214 = vpop.f32.mrb[0].mxu0
        %6215 = vmatprep.mubr.f32.mxu0 0.0
        %6216 = vmatmul.mubr.f32.gmra.mrb[0].mxu0 %v4438
        %v6217 = vpop.f32.mrb[0].mxu0
        %v6218 = vadd.f32 0.0, %v6217
        %v6219 = vpop.f32.mrb[0].mxu0
        %6220 = vmatprep.mubr.f32.mxu0 0.0
        %6221 = vmatmul.mubr.f32.gmra.mrb[0].mxu0 %v4440
        %v6222 = vpop.f32.mrb[0].mxu0
        %v6223 = vadd.f32 0.0, %v6222
        %v6224 = vpop.f32.mrb[0].mxu0
        %6225 = vmatprep.mubr.f32.mxu0 0.0
        %6226 = vmatmul.mubr.f32.gmra.mrb[0].mxu0 %v4442
        %v6227 = vpop.f32.mrb[0].mxu0
        %v6228 = vadd.f32 0.0, %v6227
        %v6229 = vpop.f32.mrb[0].mxu0
        %6230 = vmatprep.mubr.f32.mxu0 0.0
        %6231 = vmatmul.mubr.f32.gmra.mrb[0].mxu0 %v4444
        %v6232 = vpop.f32.mrb[0].mxu0
        %v6233 = vadd.f32 0.0, %v6232
        %v6234 = vpop.f32.mrb[0].mxu0
        %6235 = vmatprep.mubr.f32.mxu0 0.0
        %6236 = vmatmul.mubr.f32.gmra.mrb[0].mxu0 %v4446
        %v6237 = vpop.f32.mrb[0].mxu0
        %v6238 = vadd.f32 0.0, %v6237
        %v6239 = vpop.f32.mrb[0].mxu0
        %6240 = vmatprep.mubr.f32.mxu0 0.0
        %6241 = vmatmul.mubr.f32.gmra.mrb[0].mxu0 %v4448
        %v6242 = vpop.f32.mrb[0].mxu0
        %v6243 = vadd.f32 0.0, %v6242
        %v6244 = vpop.f32.mrb[0].mxu0
        %6245 = vmatprep.mubr.f32.mxu0 0.0
        %6246 = vmatmul.mubr.f32.gmra.mrb[0].mxu0 %v4450
        %v6247 = vpop.f32.mrb[0].mxu0
        %v6248 = vadd.f32 0.0, %v6247
        %v6249 = vpop.f32.mrb[0].mxu0
        %6250 = vmatprep.mubr.f32.mxu0 0.0
        %6251 = vmatmul.mubr.f32.gmra.mrb[0].mxu0 %v4452
        %v6252 = vpop.f32.mrb[0].mxu0
        %v6253 = vadd.f32 0.0, %v6252
        %v6254 = vpop.f32.mrb[0].mxu0
        %6255 = vmatprep.mubr.f32.mxu0 0.0
        %6256 = vmatmul.mubr.f32.gmra.mrb[0].mxu0 %v4454
        %v6257 = vpop.f32.mrb[0].mxu0
        %v6258 = vadd.f32 0.0, %v6257
        %v6259 = vpop.f32.mrb[0].mxu0
        %6260 = vmatprep.mubr.f32.mxu0 0.0
        %6261 = vmatmul.mubr.f32.gmra.mrb[0].mxu0 %v4456
        %v6262 = vpop.f32.mrb[0].mxu0
        %v6263 = vadd.f32 0.0, %v6262
        %v6264 = vpop.f32.mrb[0].mxu0
        %6265 = vmatprep.mubr.f32.mxu0 0.0
        %6266 = vmatmul.mubr.f32.gmra.mrb[0].mxu0 %v4458
        %v6267 = vpop.f32.mrb[0].mxu0
        %v6268 = vadd.f32 0.0, %v6267
        %v6269 = vpop.f32.mrb[0].mxu0
        %6270 = vmatprep.mubr.f32.mxu0 0.0
        %6271 = vmatmul.mubr.f32.gmra.mrb[0].mxu0 %v5259
        %v6272 = vpop.f32.mrb[0].mxu0
        %v6273 = vadd.f32 0.0, %v6272
        %v6274 = vpop.f32.mrb[0].mxu0
        %6275 = vmatprep.mubr.f32.mxu0 0.0
        %6276 = vmatmul.mubr.f32.gmra.mrb[0].mxu0 %v5261
        %v6277 = vpop.f32.mrb[0].mxu0
        %v6278 = vadd.f32 0.0, %v6277
        %v6279 = vpop.f32.mrb[0].mxu0
        %6280 = vmatprep.mubr.f32.mxu0 0.0
        %6281 = vmatmul.mubr.f32.gmra.mrb[0].mxu0 %v6062
        %v6282 = vpop.f32.mrb[0].mxu0
        %v6283 = vadd.f32 0.0, %v6282
        %v6284 = vpop.f32.mrb[0].mxu0
        %6285 = vmatprep.mubr.f32.mxu0 0.0
        %6286 = vmatmul.mubr.f32.gmra.mrb[0].mxu0 %v6064
        %v6287 = vpop.f32.mrb[0].mxu0
        %v6288 = vadd.f32 0.0, %v6287
        %v6289 = vpop.f32.mrb[0].mxu0
        %6290 = vdwg.mxu0
        %v6291 = vadd.f32 %v6022, %v6133
        %v6292 = vadd.f32 %v6023, %v6138
        %v6293 = vadd.f32 %v6024, %v6143
        %v6294 = vadd.f32 %v6025, %v6148
        %v6295 = vadd.f32 %v6026, %v6153
        %v6296 = vadd.f32 %v6027, %v6158
        %v6297 = vadd.f32 %v6028, %v6163
        %v6298 = vadd.f32 %v6029, %v6168
        %v6299 = vadd.f32 %v6030, %v6173
        %v6300 = vadd.f32 %v6031, %v6178
        %v6301 = vadd.f32 %v6032, %v6183
        %v6302 = vadd.f32 %v6033, %v6188
        %v6303 = vadd.f32 %v6034, %v6193
        %v6304 = vadd.f32 %v6035, %v6198
        %v6305 = vadd.f32 %v6036, %v6203
        %v6306 = vadd.f32 %v6037, %v6208
        %v6307 = vadd.f32 %v6038, %v6213
        %v6308 = vadd.f32 %v6039, %v6218
        %v6309 = vadd.f32 %v6040, %v6223
        %v6310 = vadd.f32 %v6041, %v6228
        %v6311 = vadd.f32 %v6042, %v6233
        %v6312 = vadd.f32 %v6043, %v6238
        %v6313 = vadd.f32 %v6044, %v6243
        %v6314 = vadd.f32 %v6045, %v6248
        %v6315 = vadd.f32 %v6046, %v6253
        %v6316 = vadd.f32 %v6047, %v6258
        %v6317 = vadd.f32 %v6048, %v6263
        %v6318 = vadd.f32 %v6049, %v6268
        %v6319 = vadd.f32 %v6050, %v6273
        %v6320 = vadd.f32 %v6051, %v6278
        %v6321 = vadd.f32 %v6052, %v6283
        %v6322 = vadd.f32 %v6053, %v6288
        %v6323 = vld [vmem:[%s4] sm:$0x1]
        %v6325 = vlaneseq
        %v6326 = vshrl.u32 %v6325, 7
        %v6327 = vsub.s32 0, %v6326
        %v6328 = vrot.slane %v6323, %v6327
        %v6330 = vadd.f32 %v6291, %v6328
        %v6331 = vadd.f32 %v6292, %v6328
        %v6332 = vadd.f32 %v6293, %v6328
        %v6333 = vadd.f32 %v6294, %v6328
        %v6334 = vadd.f32 %v6295, %v6328
        %v6335 = vadd.f32 %v6296, %v6328
        %v6336 = vadd.f32 %v6297, %v6328
        %v6337 = vadd.f32 %v6298, %v6328
        %v6338 = vadd.f32 %v6299, %v6328
        %v6339 = vadd.f32 %v6300, %v6328
        %v6340 = vadd.f32 %v6301, %v6328
        %v6341 = vadd.f32 %v6302, %v6328
        %v6342 = vadd.f32 %v6303, %v6328
        %v6343 = vadd.f32 %v6304, %v6328
        %v6344 = vadd.f32 %v6305, %v6328
        %v6345 = vadd.f32 %v6306, %v6328
        %v6346 = vadd.f32 %v6307, %v6328
        %v6347 = vadd.f32 %v6308, %v6328
        %v6348 = vadd.f32 %v6309, %v6328
        %v6349 = vadd.f32 %v6310, %v6328
        %v6350 = vadd.f32 %v6311, %v6328
        %v6351 = vadd.f32 %v6312, %v6328
        %v6352 = vadd.f32 %v6313, %v6328
        %v6353 = vadd.f32 %v6314, %v6328
        %v6354 = vadd.f32 %v6315, %v6328
        %v6355 = vadd.f32 %v6316, %v6328
        %v6356 = vadd.f32 %v6317, %v6328
        %v6357 = vadd.f32 %v6318, %v6328
        %v6358 = vadd.f32 %v6319, %v6328
        %v6359 = vadd.f32 %v6320, %v6328
        %v6360 = vadd.f32 %v6321, %v6328
        %v6361 = vadd.f32 %v6322, %v6328
        %v6362 = vmax.f32 %v6330, 0.0
        %v6363 = vmax.f32 %v6331, 0.0
        %v6364 = vmax.f32 %v6332, 0.0
        %v6365 = vmax.f32 %v6333, 0.0
        %v6366 = vmax.f32 %v6334, 0.0
        %v6367 = vmax.f32 %v6335, 0.0
        %v6368 = vmax.f32 %v6336, 0.0
        %v6369 = vmax.f32 %v6337, 0.0
        %v6370 = vmax.f32 %v6338, 0.0
        %v6371 = vmax.f32 %v6339, 0.0
        %v6372 = vmax.f32 %v6340, 0.0
        %v6373 = vmax.f32 %v6341, 0.0
        %v6374 = vmax.f32 %v6342, 0.0
        %v6375 = vmax.f32 %v6343, 0.0
        %v6376 = vmax.f32 %v6344, 0.0
        %v6377 = vmax.f32 %v6345, 0.0
        %v6378 = vmax.f32 %v6346, 0.0
        %v6379 = vmax.f32 %v6347, 0.0
        %v6380 = vmax.f32 %v6348, 0.0
        %v6381 = vmax.f32 %v6349, 0.0
        %v6382 = vmax.f32 %v6350, 0.0
        %v6383 = vmax.f32 %v6351, 0.0
        %v6384 = vmax.f32 %v6352, 0.0
        %v6385 = vmax.f32 %v6353, 0.0
        %v6386 = vmax.f32 %v6354, 0.0
        %v6387 = vmax.f32 %v6355, 0.0
        %v6388 = vmax.f32 %v6356, 0.0
        %v6389 = vmax.f32 %v6357, 0.0
        %v6390 = vmax.f32 %v6358, 0.0
        %v6391 = vmax.f32 %v6359, 0.0
        %v6392 = vmax.f32 %v6360, 0.0
        %v6393 = vmax.f32 %v6361, 0.0
        %vm6394 = vcmask 130048
        %6395 = vst.msk [vmem:[%s543 + $0x8] sm:$0xff] %vm6394, %v6362
        %6396 = vst.msk [vmem:[%s543 + $0x10] sm:$0xff] %vm6394, %v6363
        %6397 = vst.msk [vmem:[%s543 + $0x28] sm:$0xff] %vm6394, %v6364
        %6398 = vst.msk [vmem:[%s543 + $0x30] sm:$0xff] %vm6394, %v6365
        %6399 = vst.msk [vmem:[%s543 + $0x48] sm:$0xff] %vm6394, %v6366
        %6400 = vst.msk [vmem:[%s543 + $0x50] sm:$0xff] %vm6394, %v6367
        %6401 = vst.msk [vmem:[%s543 + $0x68] sm:$0xff] %vm6394, %v6368
        %6402 = vst.msk [vmem:[%s543 + $0x70] sm:$0xff] %vm6394, %v6369
        %6403 = vst.msk [vmem:[%s543 + $0x88] sm:$0xff] %vm6394, %v6370
        %6404 = vst.msk [vmem:[%s543 + $0x90] sm:$0xff] %vm6394, %v6371
        %6405 = vst.msk [vmem:[%s543 + $0xa8] sm:$0xff] %vm6394, %v6372
        %6406 = vst.msk [vmem:[%s543 + $0xb0] sm:$0xff] %vm6394, %v6373
        %6407 = vst.msk [vmem:[%s543 + $0xc8] sm:$0xff] %vm6394, %v6374
        %6408 = vst.msk [vmem:[%s543 + $0xd0] sm:$0xff] %vm6394, %v6375
        %6409 = vst.msk [vmem:[%s543 + $0xe8] sm:$0xff] %vm6394, %v6376
        %6410 = vst.msk [vmem:[%s543 + $0xf0] sm:$0xff] %vm6394, %v6377
        %6411 = vst.msk [vmem:[%s543 + $0x108] sm:$0xff] %vm6394, %v6378
        %6412 = vst.msk [vmem:[%s543 + $0x110] sm:$0xff] %vm6394, %v6379
        %6413 = vst.msk [vmem:[%s543 + $0x128] sm:$0xff] %vm6394, %v6380
        %6414 = vst.msk [vmem:[%s543 + $0x130] sm:$0xff] %vm6394, %v6381
        %6415 = vst.msk [vmem:[%s543 + $0x148] sm:$0xff] %vm6394, %v6382
        %6416 = vst.msk [vmem:[%s543 + $0x150] sm:$0xff] %vm6394, %v6383
        %6417 = vst.msk [vmem:[%s543 + $0x168] sm:$0xff] %vm6394, %v6384
        %6418 = vst.msk [vmem:[%s543 + $0x170] sm:$0xff] %vm6394, %v6385
        %6419 = vst.msk [vmem:[%s543 + $0x188] sm:$0xff] %vm6394, %v6386
        %6420 = vst.msk [vmem:[%s543 + $0x190] sm:$0xff] %vm6394, %v6387
        %6421 = vst.msk [vmem:[%s543 + $0x1a8] sm:$0xff] %vm6394, %v6388
        %6422 = vst.msk [vmem:[%s543 + $0x1b0] sm:$0xff] %vm6394, %v6389
        %6423 = vst.msk [vmem:[%s543 + $0x1c8] sm:$0xff] %vm6394, %v6390
        %6424 = vst.msk [vmem:[%s543 + $0x1d0] sm:$0xff] %vm6394, %v6391
        %6425 = vst.msk [vmem:[%s543 + $0x1e8] sm:$0xff] %vm6394, %v6392
        %6426 = vst.msk [vmem:[%s543 + $0x1f0] sm:$0xff] %vm6394, %v6393
        %v6427 = vld [vmem:[#allocation2] sm:$0xff]
        %v6428 = vld [vmem:[#allocation2 + $0x8] sm:$0xff]
        %v6429 = vld [vmem:[#allocation2 + $0x10] sm:$0xff]
        %v6430 = vld [vmem:[#allocation2 + $0x18] sm:$0xff]
        %v6431 = vld [vmem:[#allocation2 + $0x20] sm:$0xff]
        %v6432 = vld [vmem:[#allocation2 + $0x28] sm:$0xff]
        %v6433 = vld [vmem:[#allocation2 + $0x30] sm:$0xff]
        %v6434 = vld [vmem:[#allocation2 + $0x38] sm:$0xff]
        %v6435 = vld [vmem:[#allocation2 + $0x40] sm:$0xff]
        %v6436 = vld [vmem:[#allocation2 + $0x48] sm:$0xff]
        %v6437 = vld [vmem:[#allocation2 + $0x50] sm:$0xff]
        %v6438 = vld [vmem:[#allocation2 + $0x58] sm:$0xff]
        %v6439 = vld [vmem:[#allocation2 + $0x60] sm:$0xff]
        %v6440 = vld [vmem:[#allocation2 + $0x68] sm:$0xff]
        %v6441 = vld [vmem:[#allocation2 + $0x70] sm:$0xff]
        %v6442 = vld [vmem:[#allocation2 + $0x78] sm:$0xff]
        %v6443 = vld [vmem:[#allocation2 + $0x80] sm:$0xff]
        %v6444 = vld [vmem:[#allocation2 + $0x88] sm:$0xff]
        %v6445 = vld [vmem:[#allocation2 + $0x90] sm:$0xff]
        %v6446 = vld [vmem:[#allocation2 + $0x98] sm:$0xff]
        %v6447 = vld [vmem:[#allocation2 + $0xa0] sm:$0xff]
        %v6448 = vld [vmem:[#allocation2 + $0xa8] sm:$0xff]
        %v6449 = vld [vmem:[#allocation2 + $0xb0] sm:$0xff]
        %v6450 = vld [vmem:[#allocation2 + $0xb8] sm:$0xff]
        %v6451 = vld [vmem:[#allocation2 + $0xc0] sm:$0xff]
        %v6452 = vld [vmem:[#allocation2 + $0xc8] sm:$0xff]
        %v6453 = vld [vmem:[#allocation2 + $0xd0] sm:$0xff]
        %v6454 = vld [vmem:[#allocation2 + $0xd8] sm:$0xff]
        %v6455 = vld [vmem:[#allocation2 + $0xe0] sm:$0xff]
        %v6456 = vld [vmem:[#allocation2 + $0xe8] sm:$0xff]
        %v6457 = vld [vmem:[#allocation2 + $0xf0] sm:$0xff]
        %v6458 = vld [vmem:[#allocation2 + $0xf8] sm:$0xff]
        %v6459 = vld [vmem:[#allocation2 + $0x100] sm:$0xff]
        %v6460 = vld [vmem:[#allocation2 + $0x108] sm:$0xff]
        %v6461 = vld [vmem:[#allocation2 + $0x110] sm:$0xff]
        %v6462 = vld [vmem:[#allocation2 + $0x118] sm:$0xff]
        %v6463 = vld [vmem:[#allocation2 + $0x120] sm:$0xff]
        %v6464 = vld [vmem:[#allocation2 + $0x128] sm:$0xff]
        %v6465 = vld [vmem:[#allocation2 + $0x130] sm:$0xff]
        %v6466 = vld [vmem:[#allocation2 + $0x138] sm:$0xff]
        %v6467 = vld [vmem:[#allocation2 + $0x140] sm:$0xff]
        %v6468 = vld [vmem:[#allocation2 + $0x148] sm:$0xff]
        %v6469 = vld [vmem:[#allocation2 + $0x150] sm:$0xff]
        %v6470 = vld [vmem:[#allocation2 + $0x158] sm:$0xff]
        %v6471 = vld [vmem:[#allocation2 + $0x160] sm:$0xff]
        %v6472 = vld [vmem:[#allocation2 + $0x168] sm:$0xff]
        %v6473 = vld [vmem:[#allocation2 + $0x170] sm:$0xff]
        %v6474 = vld [vmem:[#allocation2 + $0x178] sm:$0xff]
        %v6475 = vld [vmem:[#allocation2 + $0x180] sm:$0xff]
        %v6476 = vld [vmem:[#allocation2 + $0x188] sm:$0xff]
        %v6477 = vld [vmem:[#allocation2 + $0x190] sm:$0xff]
        %v6478 = vld [vmem:[#allocation2 + $0x198] sm:$0xff]
        %v6479 = vld [vmem:[#allocation2 + $0x1a0] sm:$0xff]
        %v6480 = vld [vmem:[#allocation2 + $0x1a8] sm:$0xff]
        %v6481 = vld [vmem:[#allocation2 + $0x1b0] sm:$0xff]
        %v6482 = vld [vmem:[#allocation2 + $0x1b8] sm:$0xff]
        %v6483 = vld [vmem:[#allocation2 + $0x1c0] sm:$0xff]
        %v6484 = vld [vmem:[#allocation2 + $0x1c8] sm:$0xff]
        %v6485 = vld [vmem:[#allocation2 + $0x1d0] sm:$0xff]
        %v6486 = vld [vmem:[#allocation2 + $0x1d8] sm:$0xff]
        %v6487 = vld [vmem:[#allocation2 + $0x1e0] sm:$0xff]
        %v6488 = vld [vmem:[#allocation2 + $0x1e8] sm:$0xff]
        %v6489 = vld [vmem:[#allocation2 + $0x1f0] sm:$0xff]
        %v6490 = vld [vmem:[#allocation2 + $0x1f8] sm:$0xff]
        %v6491 = vld [vmem:[#allocation2 + $0x200] sm:$0xff]
        %v6492 = vld [vmem:[#allocation2 + $0x208] sm:$0xff]
        %v6493 = vld [vmem:[#allocation2 + $0x210] sm:$0xff]
        %v6494 = vld [vmem:[#allocation2 + $0x218] sm:$0xff]
        %v6495 = vld [vmem:[#allocation2 + $0x220] sm:$0xff]
        %v6496 = vld [vmem:[#allocation2 + $0x228] sm:$0xff]
        %v6497 = vld [vmem:[#allocation2 + $0x230] sm:$0xff]
        %v6498 = vld [vmem:[#allocation2 + $0x238] sm:$0xff]
        %v6547 = vrot.slane %v6427, 7
        %v6548 = vrot.slane %v6428, 7
        %v6549 = vsel %vm697, %v6547, %v6548
        %v6550 = vrot.slane %v6429, 7
        %v6551 = vsel %vm697, %v6548, %v6550
        %v6552 = vrot.slane %v6431, 7
        %v6553 = vrot.slane %v6432, 7
        %v6554 = vsel %vm697, %v6552, %v6553
        %v6555 = vrot.slane %v6433, 7
        %v6556 = vsel %vm697, %v6553, %v6555
        %v6557 = vrot.slane %v6435, 7
        %v6558 = vrot.slane %v6436, 7
        %v6559 = vsel %vm697, %v6557, %v6558
        %v6560 = vrot.slane %v6437, 7
        %v6561 = vsel %vm697, %v6558, %v6560
        %v6562 = vrot.slane %v6439, 7
        %v6563 = vrot.slane %v6440, 7
        %v6564 = vsel %vm697, %v6562, %v6563
        %v6565 = vrot.slane %v6441, 7
        %v6566 = vsel %vm697, %v6563, %v6565
        %v6567 = vrot.slane %v6443, 7
        %v6568 = vrot.slane %v6444, 7
        %v6569 = vsel %vm697, %v6567, %v6568
        %v6570 = vrot.slane %v6445, 7
        %v6571 = vsel %vm697, %v6568, %v6570
        %v6572 = vrot.slane %v6447, 7
        %v6573 = vrot.slane %v6448, 7
        %v6574 = vsel %vm697, %v6572, %v6573
        %v6575 = vrot.slane %v6449, 7
        %v6576 = vsel %vm697, %v6573, %v6575
        %v6577 = vrot.slane %v6451, 7
        %v6578 = vrot.slane %v6452, 7
        %v6579 = vsel %vm697, %v6577, %v6578
        %v6580 = vrot.slane %v6453, 7
        %v6581 = vsel %vm697, %v6578, %v6580
        %v6582 = vrot.slane %v6455, 7
        %v6583 = vrot.slane %v6456, 7
        %v6584 = vsel %vm697, %v6582, %v6583
        %v6585 = vrot.slane %v6457, 7
        %v6586 = vsel %vm697, %v6583, %v6585
        %v6587 = vrot.slane %v6459, 7
        %v6588 = vrot.slane %v6460, 7
        %v6589 = vsel %vm697, %v6587, %v6588
        %v6590 = vrot.slane %v6461, 7
        %v6591 = vsel %vm697, %v6588, %v6590
        %v6592 = vrot.slane %v6463, 7
        %v6593 = vrot.slane %v6464, 7
        %v6594 = vsel %vm697, %v6592, %v6593
        %v6595 = vrot.slane %v6465, 7
        %v6596 = vsel %vm697, %v6593, %v6595
        %v6597 = vrot.slane %v6467, 7
        %v6598 = vrot.slane %v6468, 7
        %v6599 = vsel %vm697, %v6597, %v6598
        %v6600 = vrot.slane %v6469, 7
        %v6601 = vsel %vm697, %v6598, %v6600
        %v6602 = vrot.slane %v6471, 7
        %v6603 = vrot.slane %v6472, 7
        %v6604 = vsel %vm697, %v6602, %v6603
        %v6605 = vrot.slane %v6473, 7
        %v6606 = vsel %vm697, %v6603, %v6605
        %v6607 = vrot.slane %v6475, 7
        %v6608 = vrot.slane %v6476, 7
        %v6609 = vsel %vm697, %v6607, %v6608
        %v6610 = vrot.slane %v6477, 7
        %v6611 = vsel %vm697, %v6608, %v6610
        %v6612 = vrot.slane %v6479, 7
        %v6613 = vrot.slane %v6480, 7
        %v6614 = vsel %vm697, %v6612, %v6613
        %v6615 = vrot.slane %v6481, 7
        %v6616 = vsel %vm697, %v6613, %v6615
        %v6617 = vrot.slane %v6483, 7
        %v6618 = vrot.slane %v6484, 7
        %v6619 = vsel %vm697, %v6617, %v6618
        %v6620 = vrot.slane %v6485, 7
        %v6621 = vsel %vm697, %v6618, %v6620
        %v6622 = vrot.slane %v6487, 7
        %v6623 = vrot.slane %v6488, 7
        %v6624 = vsel %vm697, %v6622, %v6623
        %v6625 = vrot.slane %v6489, 7
        %v6626 = vsel %vm697, %v6623, %v6625
        %v6627 = vld [vmem:[%s5] sm:$0xff]
        %v6628 = vld [vmem:[%s5 + $0x8] sm:$0xff]
        %s6629 = scalar_lea.vmem %s5, 16
        %v6630 = vld [vmem:[%s6629] sm:$0xff]
        %v6631 = vld [vmem:[%s6629 + $0x8] sm:$0xff]
        %v6632 = vsel %vm6394, %v6428, 0
        %v6634 = vsel %vm6394, %v6429, 0
        %v6636 = vsel %vm6394, %v6432, 0
        %v6638 = vsel %vm6394, %v6433, 0
        %v6640 = vsel %vm6394, %v6436, 0
        %v6642 = vsel %vm6394, %v6437, 0
        %v6644 = vsel %vm6394, %v6440, 0
        %v6646 = vsel %vm6394, %v6441, 0
        %v6648 = vsel %vm6394, %v6444, 0
        %v6650 = vsel %vm6394, %v6445, 0
        %v6652 = vsel %vm6394, %v6448, 0
        %v6654 = vsel %vm6394, %v6449, 0
        %v6656 = vsel %vm6394, %v6452, 0
        %v6658 = vsel %vm6394, %v6453, 0
        %v6660 = vsel %vm6394, %v6456, 0
        %v6662 = vsel %vm6394, %v6457, 0
        %v6664 = vsel %vm6394, %v6460, 0
        %v6666 = vsel %vm6394, %v6461, 0
        %v6668 = vsel %vm6394, %v6464, 0
        %v6670 = vsel %vm6394, %v6465, 0
        %v6672 = vsel %vm6394, %v6468, 0
        %v6674 = vsel %vm6394, %v6469, 0
        %v6676 = vsel %vm6394, %v6472, 0
        %v6678 = vsel %vm6394, %v6473, 0
        %v6680 = vsel %vm6394, %v6476, 0
        %v6682 = vsel %vm6394, %v6477, 0
        %v6684 = vsel %vm6394, %v6480, 0
        %v6686 = vsel %vm6394, %v6481, 0
        %v6688 = vsel %vm6394, %v6484, 0
        %v6690 = vsel %vm6394, %v6485, 0
        %v6692 = vsel %vm6394, %v6488, 0
        %v6694 = vsel %vm6394, %v6489, 0
        %6696 = vmatprep.subr.mxu0 0.0
        %6697 = vmatpush1.msra.mxu0 %v6630
        %6698 = vmatprep.subr.mxu0 0.0
        %6699 = vmatpush1.msra.mxu0 %v6631
        %6700 = vmatprep.subr.mxu0 0.0
        %6701 = vmatpush1.msra.mxu0 0.0
        %6702 = vmatprep.subr.mxu0 0.0
        %6703 = vmatpush1.msra.mxu0 0.0
        %6704 = vmatprep.subr.mxu0 0.0
        %6705 = vmatpush1.msra.mxu0 0.0
        %6706 = vmatprep.subr.mxu0 0.0
        %6707 = vmatpush1.msra.mxu0 0.0
        %6708 = vmatprep.subr.mxu0 0.0
        %6709 = vmatpush1.msra.mxu0 0.0
        %6710 = vmatprep.subr.mxu0 0.0
        %6711 = vmatpush1.msra.mxu0 0.0
        %6712 = vmatprep.subr.mxu0 0.0
        %6713 = vmatpush1.msra.mxu0 0.0
        %6714 = vmatprep.subr.mxu0 0.0
        %6715 = vmatpush1.msra.mxu0 0.0
        %6716 = vmatprep.subr.mxu0 0.0
        %6717 = vmatpush1.msra.mxu0 0.0
        %6718 = vmatprep.subr.mxu0 0.0
        %6719 = vmatpush1.msra.mxu0 0.0
        %6720 = vmatprep.subr.mxu0 0.0
        %6721 = vmatpush1.msra.mxu0 0.0
        %6722 = vmatprep.subr.mxu0 0.0
        %6723 = vmatpush1.msra.mxu0 0.0
        %6724 = vmatprep.subr.mxu0 0.0
        %6725 = vmatpush1.msra.mxu0 0.0
        %6726 = vmatprep.subr.mxu0 0.0
        %6727 = vmatpush1.msra.mxu0 0.0
        %6728 = vmatprep.subr.mxu0 0.0
        %6729 = vmatpush1.msra.mxu0 0.0
        %6730 = vmatprep.subr.mxu0 0.0
        %6731 = vmatpush1.msra.mxu0 0.0
        %6732 = vmatprep.subr.mxu0 0.0
        %6733 = vmatpush1.msra.mxu0 0.0
        %6734 = vmatprep.subr.mxu0 0.0
        %6735 = vmatpush1.msra.mxu0 0.0
        %6736 = vmatprep.subr.mxu0 0.0
        %6737 = vmatpush1.msra.mxu0 0.0
        %6738 = vmatprep.subr.mxu0 0.0
        %6739 = vmatpush1.msra.mxu0 0.0
        %6740 = vmatprep.subr.mxu0 0.0
        %6741 = vmatpush1.msra.mxu0 0.0
        %6742 = vmatprep.subr.mxu0 0.0
        %6743 = vmatpush1.msra.mxu0 0.0
        %6744 = vmatprep.subr.mxu0 0.0
        %6745 = vmatpush1.msra.mxu0 0.0
        %6746 = vmatprep.subr.mxu0 0.0
        %6747 = vmatpush1.msra.mxu0 0.0
        %6748 = vmatprep.subr.mxu0 0.0
        %6749 = vmatpush1.msra.mxu0 0.0
        %6750 = vmatprep.subr.mxu0 0.0
        %6751 = vmatpush1.msra.mxu0 0.0
        %6752 = vmatprep.subr.mxu0 0.0
        %6753 = vmatpush1.msra.mxu0 0.0
        %6754 = vmatprep.subr.mxu0 0.0
        %6755 = vmatpush1.msra.mxu0 0.0
        %6756 = vmatprep.subr.mxu0 0.0
        %6757 = vmatpush1.msra.mxu0 0.0
        %6758 = vmatprep.subr.mxu0 0.0
        %6759 = vmatpush1.msra.mxu0 0.0
        %6760 = vmatprep.mubr.f32.mxu0 0.0
        %6761 = vmatmul.mubr.f32.gmra.mrb[0].mxu0 %v6632
        %v6762 = vpop.f32.mrb[0].mxu0
        %v6763 = vadd.f32 0.0, %v6762
        %v6764 = vpop.f32.mrb[0].mxu0
        %6765 = vmatprep.mubr.f32.mxu0 0.0
        %6766 = vmatmul.mubr.f32.gmra.mrb[0].mxu0 %v6634
        %v6767 = vpop.f32.mrb[0].mxu0
        %v6768 = vadd.f32 0.0, %v6767
        %v6769 = vpop.f32.mrb[0].mxu0
        %6770 = vmatprep.mubr.f32.mxu0 0.0
        %6771 = vmatmul.mubr.f32.gmra.mrb[0].mxu0 %v6636
        %v6772 = vpop.f32.mrb[0].mxu0
        %v6773 = vadd.f32 0.0, %v6772
        %v6774 = vpop.f32.mrb[0].mxu0
        %6775 = vmatprep.mubr.f32.mxu0 0.0
        %6776 = vmatmul.mubr.f32.gmra.mrb[0].mxu0 %v6638
        %v6777 = vpop.f32.mrb[0].mxu0
        %v6778 = vadd.f32 0.0, %v6777
        %v6779 = vpop.f32.mrb[0].mxu0
        %6780 = vmatprep.mubr.f32.mxu0 0.0
        %6781 = vmatmul.mubr.f32.gmra.mrb[0].mxu0 %v6640
        %v6782 = vpop.f32.mrb[0].mxu0
        %v6783 = vadd.f32 0.0, %v6782
        %v6784 = vpop.f32.mrb[0].mxu0
        %6785 = vmatprep.mubr.f32.mxu0 0.0
        %6786 = vmatmul.mubr.f32.gmra.mrb[0].mxu0 %v6642
        %v6787 = vpop.f32.mrb[0].mxu0
        %v6788 = vadd.f32 0.0, %v6787
        %v6789 = vpop.f32.mrb[0].mxu0
        %6790 = vmatprep.mubr.f32.mxu0 0.0
        %6791 = vmatmul.mubr.f32.gmra.mrb[0].mxu0 %v6644
        %v6792 = vpop.f32.mrb[0].mxu0
        %v6793 = vadd.f32 0.0, %v6792
        %v6794 = vpop.f32.mrb[0].mxu0
        %6795 = vmatprep.mubr.f32.mxu0 0.0
        %6796 = vmatmul.mubr.f32.gmra.mrb[0].mxu0 %v6646
        %v6797 = vpop.f32.mrb[0].mxu0
        %v6798 = vadd.f32 0.0, %v6797
        %v6799 = vpop.f32.mrb[0].mxu0
        %6800 = vmatprep.mubr.f32.mxu0 0.0
        %6801 = vmatmul.mubr.f32.gmra.mrb[0].mxu0 %v6648
        %v6802 = vpop.f32.mrb[0].mxu0
        %v6803 = vadd.f32 0.0, %v6802
        %v6804 = vpop.f32.mrb[0].mxu0
        %6805 = vmatprep.mubr.f32.mxu0 0.0
        %6806 = vmatmul.mubr.f32.gmra.mrb[0].mxu0 %v6650
        %v6807 = vpop.f32.mrb[0].mxu0
        %v6808 = vadd.f32 0.0, %v6807
        %v6809 = vpop.f32.mrb[0].mxu0
        %6810 = vmatprep.mubr.f32.mxu0 0.0
        %6811 = vmatmul.mubr.f32.gmra.mrb[0].mxu0 %v6652
        %v6812 = vpop.f32.mrb[0].mxu0
        %v6813 = vadd.f32 0.0, %v6812
        %v6814 = vpop.f32.mrb[0].mxu0
        %6815 = vmatprep.mubr.f32.mxu0 0.0
        %6816 = vmatmul.mubr.f32.gmra.mrb[0].mxu0 %v6654
        %v6817 = vpop.f32.mrb[0].mxu0
        %v6818 = vadd.f32 0.0, %v6817
        %v6819 = vpop.f32.mrb[0].mxu0
        %6820 = vmatprep.mubr.f32.mxu0 0.0
        %6821 = vmatmul.mubr.f32.gmra.mrb[0].mxu0 %v6656
        %v6822 = vpop.f32.mrb[0].mxu0
        %v6823 = vadd.f32 0.0, %v6822
        %v6824 = vpop.f32.mrb[0].mxu0
        %6825 = vmatprep.mubr.f32.mxu0 0.0
        %6826 = vmatmul.mubr.f32.gmra.mrb[0].mxu0 %v6658
        %v6827 = vpop.f32.mrb[0].mxu0
        %v6828 = vadd.f32 0.0, %v6827
        %v6829 = vpop.f32.mrb[0].mxu0
        %6830 = vmatprep.mubr.f32.mxu0 0.0
        %6831 = vmatmul.mubr.f32.gmra.mrb[0].mxu0 %v6660
        %v6832 = vpop.f32.mrb[0].mxu0
        %v6833 = vadd.f32 0.0, %v6832
        %v6834 = vpop.f32.mrb[0].mxu0
        %6835 = vmatprep.mubr.f32.mxu0 0.0
        %6836 = vmatmul.mubr.f32.gmra.mrb[0].mxu0 %v6662
        %v6837 = vpop.f32.mrb[0].mxu0
        %v6838 = vadd.f32 0.0, %v6837
        %v6839 = vpop.f32.mrb[0].mxu0
        %6840 = vmatprep.mubr.f32.mxu0 0.0
        %6841 = vmatmul.mubr.f32.gmra.mrb[0].mxu0 %v6664
        %v6842 = vpop.f32.mrb[0].mxu0
        %v6843 = vadd.f32 0.0, %v6842
        %v6844 = vpop.f32.mrb[0].mxu0
        %6845 = vmatprep.mubr.f32.mxu0 0.0
        %6846 = vmatmul.mubr.f32.gmra.mrb[0].mxu0 %v6666
        %v6847 = vpop.f32.mrb[0].mxu0
        %v6848 = vadd.f32 0.0, %v6847
        %v6849 = vpop.f32.mrb[0].mxu0
        %6850 = vmatprep.mubr.f32.mxu0 0.0
        %6851 = vmatmul.mubr.f32.gmra.mrb[0].mxu0 %v6668
        %v6852 = vpop.f32.mrb[0].mxu0
        %v6853 = vadd.f32 0.0, %v6852
        %v6854 = vpop.f32.mrb[0].mxu0
        %6855 = vmatprep.mubr.f32.mxu0 0.0
        %6856 = vmatmul.mubr.f32.gmra.mrb[0].mxu0 %v6670
        %v6857 = vpop.f32.mrb[0].mxu0
        %v6858 = vadd.f32 0.0, %v6857
        %v6859 = vpop.f32.mrb[0].mxu0
        %6860 = vmatprep.mubr.f32.mxu0 0.0
        %6861 = vmatmul.mubr.f32.gmra.mrb[0].mxu0 %v6672
        %v6862 = vpop.f32.mrb[0].mxu0
        %v6863 = vadd.f32 0.0, %v6862
        %v6864 = vpop.f32.mrb[0].mxu0
        %6865 = vmatprep.mubr.f32.mxu0 0.0
        %6866 = vmatmul.mubr.f32.gmra.mrb[0].mxu0 %v6674
        %v6867 = vpop.f32.mrb[0].mxu0
        %v6868 = vadd.f32 0.0, %v6867
        %v6869 = vpop.f32.mrb[0].mxu0
        %6870 = vmatprep.mubr.f32.mxu0 0.0
        %6871 = vmatmul.mubr.f32.gmra.mrb[0].mxu0 %v6676
        %v6872 = vpop.f32.mrb[0].mxu0
        %v6873 = vadd.f32 0.0, %v6872
        %v6874 = vpop.f32.mrb[0].mxu0
        %6875 = vmatprep.mubr.f32.mxu0 0.0
        %6876 = vmatmul.mubr.f32.gmra.mrb[0].mxu0 %v6678
        %v6877 = vpop.f32.mrb[0].mxu0
        %v6878 = vadd.f32 0.0, %v6877
        %v6879 = vpop.f32.mrb[0].mxu0
        %6880 = vmatprep.mubr.f32.mxu0 0.0
        %6881 = vmatmul.mubr.f32.gmra.mrb[0].mxu0 %v6680
        %v6882 = vpop.f32.mrb[0].mxu0
        %v6883 = vadd.f32 0.0, %v6882
        %v6884 = vpop.f32.mrb[0].mxu0
        %6885 = vmatprep.mubr.f32.mxu0 0.0
        %6886 = vmatmul.mubr.f32.gmra.mrb[0].mxu0 %v6682
        %v6887 = vpop.f32.mrb[0].mxu0
        %v6888 = vadd.f32 0.0, %v6887
        %v6889 = vpop.f32.mrb[0].mxu0
        %6890 = vmatprep.mubr.f32.mxu0 0.0
        %6891 = vmatmul.mubr.f32.gmra.mrb[0].mxu0 %v6684
        %v6892 = vpop.f32.mrb[0].mxu0
        %v6893 = vadd.f32 0.0, %v6892
        %v6894 = vpop.f32.mrb[0].mxu0
        %6895 = vmatprep.mubr.f32.mxu0 0.0
        %6896 = vmatmul.mubr.f32.gmra.mrb[0].mxu0 %v6686
        %v6897 = vpop.f32.mrb[0].mxu0
        %v6898 = vadd.f32 0.0, %v6897
        %v6899 = vpop.f32.mrb[0].mxu0
        %6900 = vmatprep.mubr.f32.mxu0 0.0
        %6901 = vmatmul.mubr.f32.gmra.mrb[0].mxu0 %v6688
        %v6902 = vpop.f32.mrb[0].mxu0
        %v6903 = vadd.f32 0.0, %v6902
        %v6904 = vpop.f32.mrb[0].mxu0
        %6905 = vmatprep.mubr.f32.mxu0 0.0
        %6906 = vmatmul.mubr.f32.gmra.mrb[0].mxu0 %v6690
        %v6907 = vpop.f32.mrb[0].mxu0
        %v6908 = vadd.f32 0.0, %v6907
        %v6909 = vpop.f32.mrb[0].mxu0
        %6910 = vmatprep.mubr.f32.mxu0 0.0
        %6911 = vmatmul.mubr.f32.gmra.mrb[0].mxu0 %v6692
        %v6912 = vpop.f32.mrb[0].mxu0
        %v6913 = vadd.f32 0.0, %v6912
        %v6914 = vpop.f32.mrb[0].mxu0
        %6915 = vmatprep.mubr.f32.mxu0 0.0
        %6916 = vmatmul.mubr.f32.gmra.mrb[0].mxu0 %v6694
        %v6917 = vpop.f32.mrb[0].mxu0
        %v6918 = vadd.f32 0.0, %v6917
        %v6919 = vpop.f32.mrb[0].mxu0
        %6920 = vdwg.mxu0
        %v6921 = vsel %vm6394, %v6549, 0
        %v6923 = vsel %vm6394, %v6551, 0
        %v6925 = vsel %vm6394, %v6554, 0
        %v6927 = vsel %vm6394, %v6556, 0
        %v6929 = vsel %vm6394, %v6559, 0
        %v6931 = vsel %vm6394, %v6561, 0
        %v6933 = vsel %vm6394, %v6564, 0
        %v6935 = vsel %vm6394, %v6566, 0
        %v6937 = vsel %vm6394, %v6569, 0
        %v6939 = vsel %vm6394, %v6571, 0
        %v6941 = vsel %vm6394, %v6574, 0
        %v6943 = vsel %vm6394, %v6576, 0
        %v6945 = vsel %vm6394, %v6579, 0
        %v6947 = vsel %vm6394, %v6581, 0
        %v6949 = vsel %vm6394, %v6584, 0
        %v6951 = vsel %vm6394, %v6586, 0
        %v6953 = vsel %vm6394, %v6589, 0
        %v6955 = vsel %vm6394, %v6591, 0
        %v6957 = vsel %vm6394, %v6594, 0
        %v6959 = vsel %vm6394, %v6596, 0
        %v6961 = vsel %vm6394, %v6599, 0
        %v6963 = vsel %vm6394, %v6601, 0
        %v6965 = vsel %vm6394, %v6604, 0
        %v6967 = vsel %vm6394, %v6606, 0
        %v6969 = vsel %vm6394, %v6609, 0
        %v6971 = vsel %vm6394, %v6611, 0
        %v6973 = vsel %vm6394, %v6614, 0
        %v6975 = vsel %vm6394, %v6616, 0
        %v6977 = vsel %vm6394, %v6619, 0
        %v6979 = vsel %vm6394, %v6621, 0
        %v6981 = vsel %vm6394, %v6624, 0
        %v6983 = vsel %vm6394, %v6626, 0
        %6985 = vmatprep.subr.mxu0 0.0
        %6986 = vmatpush1.msra.mxu0 %v6627
        %6987 = vmatprep.subr.mxu0 0.0
        %6988 = vmatpush1.msra.mxu0 %v6628
        %6989 = vmatprep.subr.mxu0 0.0
        %6990 = vmatpush1.msra.mxu0 0.0
        %6991 = vmatprep.subr.mxu0 0.0
        %6992 = vmatpush1.msra.mxu0 0.0
        %6993 = vmatprep.subr.mxu0 0.0
        %6994 = vmatpush1.msra.mxu0 0.0
        %6995 = vmatprep.subr.mxu0 0.0
        %6996 = vmatpush1.msra.mxu0 0.0
        %6997 = vmatprep.subr.mxu0 0.0
        %6998 = vmatpush1.msra.mxu0 0.0
        %6999 = vmatprep.subr.mxu0 0.0
        %7000 = vmatpush1.msra.mxu0 0.0
        %7001 = vmatprep.subr.mxu0 0.0
        %7002 = vmatpush1.msra.mxu0 0.0
        %7003 = vmatprep.subr.mxu0 0.0
        %7004 = vmatpush1.msra.mxu0 0.0
        %7005 = vmatprep.subr.mxu0 0.0
        %7006 = vmatpush1.msra.mxu0 0.0
        %7007 = vmatprep.subr.mxu0 0.0
        %7008 = vmatpush1.msra.mxu0 0.0
        %7009 = vmatprep.subr.mxu0 0.0
        %7010 = vmatpush1.msra.mxu0 0.0
        %7011 = vmatprep.subr.mxu0 0.0
        %7012 = vmatpush1.msra.mxu0 0.0
        %7013 = vmatprep.subr.mxu0 0.0
        %7014 = vmatpush1.msra.mxu0 0.0
        %7015 = vmatprep.subr.mxu0 0.0
        %7016 = vmatpush1.msra.mxu0 0.0
        %7017 = vmatprep.subr.mxu0 0.0
        %7018 = vmatpush1.msra.mxu0 0.0
        %7019 = vmatprep.subr.mxu0 0.0
        %7020 = vmatpush1.msra.mxu0 0.0
        %7021 = vmatprep.subr.mxu0 0.0
        %7022 = vmatpush1.msra.mxu0 0.0
        %7023 = vmatprep.subr.mxu0 0.0
        %7024 = vmatpush1.msra.mxu0 0.0
        %7025 = vmatprep.subr.mxu0 0.0
        %7026 = vmatpush1.msra.mxu0 0.0
        %7027 = vmatprep.subr.mxu0 0.0
        %7028 = vmatpush1.msra.mxu0 0.0
        %7029 = vmatprep.subr.mxu0 0.0
        %7030 = vmatpush1.msra.mxu0 0.0
        %7031 = vmatprep.subr.mxu0 0.0
        %7032 = vmatpush1.msra.mxu0 0.0
        %7033 = vmatprep.subr.mxu0 0.0
        %7034 = vmatpush1.msra.mxu0 0.0
        %7035 = vmatprep.subr.mxu0 0.0
        %7036 = vmatpush1.msra.mxu0 0.0
        %7037 = vmatprep.subr.mxu0 0.0
        %7038 = vmatpush1.msra.mxu0 0.0
        %7039 = vmatprep.subr.mxu0 0.0
        %7040 = vmatpush1.msra.mxu0 0.0
        %7041 = vmatprep.subr.mxu0 0.0
        %7042 = vmatpush1.msra.mxu0 0.0
        %7043 = vmatprep.subr.mxu0 0.0
        %7044 = vmatpush1.msra.mxu0 0.0
        %7045 = vmatprep.subr.mxu0 0.0
        %7046 = vmatpush1.msra.mxu0 0.0
        %7047 = vmatprep.subr.mxu0 0.0
        %7048 = vmatpush1.msra.mxu0 0.0
        %7049 = vmatprep.mubr.f32.mxu0 0.0
        %7050 = vmatmul.mubr.f32.gmra.mrb[0].mxu0 %v6921
        %v7051 = vpop.f32.mrb[0].mxu0
        %v7052 = vadd.f32 %v6763, %v7051
        %v7053 = vpop.f32.mrb[0].mxu0
        %7054 = vmatprep.mubr.f32.mxu0 0.0
        %7055 = vmatmul.mubr.f32.gmra.mrb[0].mxu0 %v6923
        %v7056 = vpop.f32.mrb[0].mxu0
        %v7057 = vadd.f32 %v6768, %v7056
        %v7058 = vpop.f32.mrb[0].mxu0
        %7059 = vmatprep.mubr.f32.mxu0 0.0
        %7060 = vmatmul.mubr.f32.gmra.mrb[0].mxu0 %v6925
        %v7061 = vpop.f32.mrb[0].mxu0
        %v7062 = vadd.f32 %v6773, %v7061
        %v7063 = vpop.f32.mrb[0].mxu0
        %7064 = vmatprep.mubr.f32.mxu0 0.0
        %7065 = vmatmul.mubr.f32.gmra.mrb[0].mxu0 %v6927
        %v7066 = vpop.f32.mrb[0].mxu0
        %v7067 = vadd.f32 %v6778, %v7066
        %v7068 = vpop.f32.mrb[0].mxu0
        %7069 = vmatprep.mubr.f32.mxu0 0.0
        %7070 = vmatmul.mubr.f32.gmra.mrb[0].mxu0 %v6929
        %v7071 = vpop.f32.mrb[0].mxu0
        %v7072 = vadd.f32 %v6783, %v7071
        %v7073 = vpop.f32.mrb[0].mxu0
        %7074 = vmatprep.mubr.f32.mxu0 0.0
        %7075 = vmatmul.mubr.f32.gmra.mrb[0].mxu0 %v6931
        %v7076 = vpop.f32.mrb[0].mxu0
        %v7077 = vadd.f32 %v6788, %v7076
        %v7078 = vpop.f32.mrb[0].mxu0
        %7079 = vmatprep.mubr.f32.mxu0 0.0
        %7080 = vmatmul.mubr.f32.gmra.mrb[0].mxu0 %v6933
        %v7081 = vpop.f32.mrb[0].mxu0
        %v7082 = vadd.f32 %v6793, %v7081
        %v7083 = vpop.f32.mrb[0].mxu0
        %7084 = vmatprep.mubr.f32.mxu0 0.0
        %7085 = vmatmul.mubr.f32.gmra.mrb[0].mxu0 %v6935
        %v7086 = vpop.f32.mrb[0].mxu0
        %v7087 = vadd.f32 %v6798, %v7086
        %v7088 = vpop.f32.mrb[0].mxu0
        %7089 = vmatprep.mubr.f32.mxu0 0.0
        %7090 = vmatmul.mubr.f32.gmra.mrb[0].mxu0 %v6937
        %v7091 = vpop.f32.mrb[0].mxu0
        %v7092 = vadd.f32 %v6803, %v7091
        %v7093 = vpop.f32.mrb[0].mxu0
        %7094 = vmatprep.mubr.f32.mxu0 0.0
        %7095 = vmatmul.mubr.f32.gmra.mrb[0].mxu0 %v6939
        %v7096 = vpop.f32.mrb[0].mxu0
        %v7097 = vadd.f32 %v6808, %v7096
        %v7098 = vpop.f32.mrb[0].mxu0
        %7099 = vmatprep.mubr.f32.mxu0 0.0
        %7100 = vmatmul.mubr.f32.gmra.mrb[0].mxu0 %v6941
        %v7101 = vpop.f32.mrb[0].mxu0
        %v7102 = vadd.f32 %v6813, %v7101
        %v7103 = vpop.f32.mrb[0].mxu0
        %7104 = vmatprep.mubr.f32.mxu0 0.0
        %7105 = vmatmul.mubr.f32.gmra.mrb[0].mxu0 %v6943
        %v7106 = vpop.f32.mrb[0].mxu0
        %v7107 = vadd.f32 %v6818, %v7106
        %v7108 = vpop.f32.mrb[0].mxu0
        %7109 = vmatprep.mubr.f32.mxu0 0.0
        %7110 = vmatmul.mubr.f32.gmra.mrb[0].mxu0 %v6945
        %v7111 = vpop.f32.mrb[0].mxu0
        %v7112 = vadd.f32 %v6823, %v7111
        %v7113 = vpop.f32.mrb[0].mxu0
        %7114 = vmatprep.mubr.f32.mxu0 0.0
        %7115 = vmatmul.mubr.f32.gmra.mrb[0].mxu0 %v6947
        %v7116 = vpop.f32.mrb[0].mxu0
        %v7117 = vadd.f32 %v6828, %v7116
        %v7118 = vpop.f32.mrb[0].mxu0
        %7119 = vmatprep.mubr.f32.mxu0 0.0
        %7120 = vmatmul.mubr.f32.gmra.mrb[0].mxu0 %v6949
        %v7121 = vpop.f32.mrb[0].mxu0
        %v7122 = vadd.f32 %v6833, %v7121
        %v7123 = vpop.f32.mrb[0].mxu0
        %7124 = vmatprep.mubr.f32.mxu0 0.0
        %7125 = vmatmul.mubr.f32.gmra.mrb[0].mxu0 %v6951
        %v7126 = vpop.f32.mrb[0].mxu0
        %v7127 = vadd.f32 %v6838, %v7126
        %v7128 = vpop.f32.mrb[0].mxu0
        %7129 = vmatprep.mubr.f32.mxu0 0.0
        %7130 = vmatmul.mubr.f32.gmra.mrb[0].mxu0 %v6953
        %v7131 = vpop.f32.mrb[0].mxu0
        %v7132 = vadd.f32 %v6843, %v7131
        %v7133 = vpop.f32.mrb[0].mxu0
        %7134 = vmatprep.mubr.f32.mxu0 0.0
        %7135 = vmatmul.mubr.f32.gmra.mrb[0].mxu0 %v6955
        %v7136 = vpop.f32.mrb[0].mxu0
        %v7137 = vadd.f32 %v6848, %v7136
        %v7138 = vpop.f32.mrb[0].mxu0
        %7139 = vmatprep.mubr.f32.mxu0 0.0
        %7140 = vmatmul.mubr.f32.gmra.mrb[0].mxu0 %v6957
        %v7141 = vpop.f32.mrb[0].mxu0
        %v7142 = vadd.f32 %v6853, %v7141
        %v7143 = vpop.f32.mrb[0].mxu0
        %7144 = vmatprep.mubr.f32.mxu0 0.0
        %7145 = vmatmul.mubr.f32.gmra.mrb[0].mxu0 %v6959
        %v7146 = vpop.f32.mrb[0].mxu0
        %v7147 = vadd.f32 %v6858, %v7146
        %v7148 = vpop.f32.mrb[0].mxu0
        %7149 = vmatprep.mubr.f32.mxu0 0.0
        %7150 = vmatmul.mubr.f32.gmra.mrb[0].mxu0 %v6961
        %v7151 = vpop.f32.mrb[0].mxu0
        %v7152 = vadd.f32 %v6863, %v7151
        %v7153 = vpop.f32.mrb[0].mxu0
        %7154 = vmatprep.mubr.f32.mxu0 0.0
        %7155 = vmatmul.mubr.f32.gmra.mrb[0].mxu0 %v6963
        %v7156 = vpop.f32.mrb[0].mxu0
        %v7157 = vadd.f32 %v6868, %v7156
        %v7158 = vpop.f32.mrb[0].mxu0
        %7159 = vmatprep.mubr.f32.mxu0 0.0
        %7160 = vmatmul.mubr.f32.gmra.mrb[0].mxu0 %v6965
        %v7161 = vpop.f32.mrb[0].mxu0
        %v7162 = vadd.f32 %v6873, %v7161
        %v7163 = vpop.f32.mrb[0].mxu0
        %7164 = vmatprep.mubr.f32.mxu0 0.0
        %7165 = vmatmul.mubr.f32.gmra.mrb[0].mxu0 %v6967
        %v7166 = vpop.f32.mrb[0].mxu0
        %v7167 = vadd.f32 %v6878, %v7166
        %v7168 = vpop.f32.mrb[0].mxu0
        %7169 = vmatprep.mubr.f32.mxu0 0.0
        %7170 = vmatmul.mubr.f32.gmra.mrb[0].mxu0 %v6969
        %v7171 = vpop.f32.mrb[0].mxu0
        %v7172 = vadd.f32 %v6883, %v7171
        %v7173 = vpop.f32.mrb[0].mxu0
        %7174 = vmatprep.mubr.f32.mxu0 0.0
        %7175 = vmatmul.mubr.f32.gmra.mrb[0].mxu0 %v6971
        %v7176 = vpop.f32.mrb[0].mxu0
        %v7177 = vadd.f32 %v6888, %v7176
        %v7178 = vpop.f32.mrb[0].mxu0
        %7179 = vmatprep.mubr.f32.mxu0 0.0
        %7180 = vmatmul.mubr.f32.gmra.mrb[0].mxu0 %v6973
        %v7181 = vpop.f32.mrb[0].mxu0
        %v7182 = vadd.f32 %v6893, %v7181
        %v7183 = vpop.f32.mrb[0].mxu0
        %7184 = vmatprep.mubr.f32.mxu0 0.0
        %7185 = vmatmul.mubr.f32.gmra.mrb[0].mxu0 %v6975
        %v7186 = vpop.f32.mrb[0].mxu0
        %v7187 = vadd.f32 %v6898, %v7186
        %v7188 = vpop.f32.mrb[0].mxu0
        %7189 = vmatprep.mubr.f32.mxu0 0.0
        %7190 = vmatmul.mubr.f32.gmra.mrb[0].mxu0 %v6977
        %v7191 = vpop.f32.mrb[0].mxu0
        %v7192 = vadd.f32 %v6903, %v7191
        %v7193 = vpop.f32.mrb[0].mxu0
        %7194 = vmatprep.mubr.f32.mxu0 0.0
        %7195 = vmatmul.mubr.f32.gmra.mrb[0].mxu0 %v6979
        %v7196 = vpop.f32.mrb[0].mxu0
        %v7197 = vadd.f32 %v6908, %v7196
        %v7198 = vpop.f32.mrb[0].mxu0
        %7199 = vmatprep.mubr.f32.mxu0 0.0
        %7200 = vmatmul.mubr.f32.gmra.mrb[0].mxu0 %v6981
        %v7201 = vpop.f32.mrb[0].mxu0
        %v7202 = vadd.f32 %v6913, %v7201
        %v7203 = vpop.f32.mrb[0].mxu0
        %7204 = vmatprep.mubr.f32.mxu0 0.0
        %7205 = vmatmul.mubr.f32.gmra.mrb[0].mxu0 %v6983
        %v7206 = vpop.f32.mrb[0].mxu0
        %v7207 = vadd.f32 %v6918, %v7206
        %v7208 = vpop.f32.mrb[0].mxu0
        %7209 = vdwg.mxu0
        %v7226 = vrot.slane %v6428, 1
        %v7227 = vrot.slane %v6429, 1
        %v7228 = vsel %vm1382, %v7226, %v7227
        %v7229 = vrot.slane %v6430, 1
        %v7230 = vsel %vm1382, %v7227, %v7229
        %v7231 = vrot.slane %v6432, 1
        %v7232 = vrot.slane %v6433, 1
        %v7233 = vsel %vm1382, %v7231, %v7232
        %v7234 = vrot.slane %v6434, 1
        %v7235 = vsel %vm1382, %v7232, %v7234
        %v7236 = vrot.slane %v6436, 1
        %v7237 = vrot.slane %v6437, 1
        %v7238 = vsel %vm1382, %v7236, %v7237
        %v7239 = vrot.slane %v6438, 1
        %v7240 = vsel %vm1382, %v7237, %v7239
        %v7241 = vrot.slane %v6440, 1
        %v7242 = vrot.slane %v6441, 1
        %v7243 = vsel %vm1382, %v7241, %v7242
        %v7244 = vrot.slane %v6442, 1
        %v7245 = vsel %vm1382, %v7242, %v7244
        %v7246 = vrot.slane %v6444, 1
        %v7247 = vrot.slane %v6445, 1
        %v7248 = vsel %vm1382, %v7246, %v7247
        %v7249 = vrot.slane %v6446, 1
        %v7250 = vsel %vm1382, %v7247, %v7249
        %v7251 = vrot.slane %v6448, 1
        %v7252 = vrot.slane %v6449, 1
        %v7253 = vsel %vm1382, %v7251, %v7252
        %v7254 = vrot.slane %v6450, 1
        %v7255 = vsel %vm1382, %v7252, %v7254
        %v7256 = vrot.slane %v6452, 1
        %v7257 = vrot.slane %v6453, 1
        %v7258 = vsel %vm1382, %v7256, %v7257
        %v7259 = vrot.slane %v6454, 1
        %v7260 = vsel %vm1382, %v7257, %v7259
        %v7261 = vrot.slane %v6456, 1
        %v7262 = vrot.slane %v6457, 1
        %v7263 = vsel %vm1382, %v7261, %v7262
        %v7264 = vrot.slane %v6458, 1
        %v7265 = vsel %vm1382, %v7262, %v7264
        %v7266 = vrot.slane %v6460, 1
        %v7267 = vrot.slane %v6461, 1
        %v7268 = vsel %vm1382, %v7266, %v7267
        %v7269 = vrot.slane %v6462, 1
        %v7270 = vsel %vm1382, %v7267, %v7269
        %v7271 = vrot.slane %v6464, 1
        %v7272 = vrot.slane %v6465, 1
        %v7273 = vsel %vm1382, %v7271, %v7272
        %v7274 = vrot.slane %v6466, 1
        %v7275 = vsel %vm1382, %v7272, %v7274
        %v7276 = vrot.slane %v6468, 1
        %v7277 = vrot.slane %v6469, 1
        %v7278 = vsel %vm1382, %v7276, %v7277
        %v7279 = vrot.slane %v6470, 1
        %v7280 = vsel %vm1382, %v7277, %v7279
        %v7281 = vrot.slane %v6472, 1
        %v7282 = vrot.slane %v6473, 1
        %v7283 = vsel %vm1382, %v7281, %v7282
        %v7284 = vrot.slane %v6474, 1
        %v7285 = vsel %vm1382, %v7282, %v7284
        %v7286 = vrot.slane %v6476, 1
        %v7287 = vrot.slane %v6477, 1
        %v7288 = vsel %vm1382, %v7286, %v7287
        %v7289 = vrot.slane %v6478, 1
        %v7290 = vsel %vm1382, %v7287, %v7289
        %v7291 = vrot.slane %v6480, 1
        %v7292 = vrot.slane %v6481, 1
        %v7293 = vsel %vm1382, %v7291, %v7292
        %v7294 = vrot.slane %v6482, 1
        %v7295 = vsel %vm1382, %v7292, %v7294
        %v7296 = vrot.slane %v6484, 1
        %v7297 = vrot.slane %v6485, 1
        %v7298 = vsel %vm1382, %v7296, %v7297
        %v7299 = vrot.slane %v6486, 1
        %v7300 = vsel %vm1382, %v7297, %v7299
        %v7301 = vrot.slane %v6488, 1
        %v7302 = vrot.slane %v6489, 1
        %v7303 = vsel %vm1382, %v7301, %v7302
        %v7304 = vrot.slane %v6490, 1
        %v7305 = vsel %vm1382, %v7302, %v7304
        %s7306 = scalar_lea.vmem %s5, 32
        %v7307 = vld [vmem:[%s7306] sm:$0xff]
        %v7308 = vld [vmem:[%s7306 + $0x8] sm:$0xff]
        %v7309 = vsel %vm6394, %v7228, 0
        %v7311 = vsel %vm6394, %v7230, 0
        %v7313 = vsel %vm6394, %v7233, 0
        %v7315 = vsel %vm6394, %v7235, 0
        %v7317 = vsel %vm6394, %v7238, 0
        %v7319 = vsel %vm6394, %v7240, 0
        %v7321 = vsel %vm6394, %v7243, 0
        %v7323 = vsel %vm6394, %v7245, 0
        %v7325 = vsel %vm6394, %v7248, 0
        %v7327 = vsel %vm6394, %v7250, 0
        %v7329 = vsel %vm6394, %v7253, 0
        %v7331 = vsel %vm6394, %v7255, 0
        %v7333 = vsel %vm6394, %v7258, 0
        %v7335 = vsel %vm6394, %v7260, 0
        %v7337 = vsel %vm6394, %v7263, 0
        %v7339 = vsel %vm6394, %v7265, 0
        %v7341 = vsel %vm6394, %v7268, 0
        %v7343 = vsel %vm6394, %v7270, 0
        %v7345 = vsel %vm6394, %v7273, 0
        %v7347 = vsel %vm6394, %v7275, 0
        %v7349 = vsel %vm6394, %v7278, 0
        %v7351 = vsel %vm6394, %v7280, 0
        %v7353 = vsel %vm6394, %v7283, 0
        %v7355 = vsel %vm6394, %v7285, 0
        %v7357 = vsel %vm6394, %v7288, 0
        %v7359 = vsel %vm6394, %v7290, 0
        %v7361 = vsel %vm6394, %v7293, 0
        %v7363 = vsel %vm6394, %v7295, 0
        %v7365 = vsel %vm6394, %v7298, 0
        %v7367 = vsel %vm6394, %v7300, 0
        %v7369 = vsel %vm6394, %v7303, 0
        %v7371 = vsel %vm6394, %v7305, 0
        %7373 = vmatprep.subr.mxu0 0.0
        %7374 = vmatpush1.msra.mxu0 %v7307
        %7375 = vmatprep.subr.mxu0 0.0
        %7376 = vmatpush1.msra.mxu0 %v7308
        %7377 = vmatprep.subr.mxu0 0.0
        %7378 = vmatpush1.msra.mxu0 0.0
        %7379 = vmatprep.subr.mxu0 0.0
        %7380 = vmatpush1.msra.mxu0 0.0
        %7381 = vmatprep.subr.mxu0 0.0
        %7382 = vmatpush1.msra.mxu0 0.0
        %7383 = vmatprep.subr.mxu0 0.0
        %7384 = vmatpush1.msra.mxu0 0.0
        %7385 = vmatprep.subr.mxu0 0.0
        %7386 = vmatpush1.msra.mxu0 0.0
        %7387 = vmatprep.subr.mxu0 0.0
        %7388 = vmatpush1.msra.mxu0 0.0
        %7389 = vmatprep.subr.mxu0 0.0
        %7390 = vmatpush1.msra.mxu0 0.0
        %7391 = vmatprep.subr.mxu0 0.0
        %7392 = vmatpush1.msra.mxu0 0.0
        %7393 = vmatprep.subr.mxu0 0.0
        %7394 = vmatpush1.msra.mxu0 0.0
        %7395 = vmatprep.subr.mxu0 0.0
        %7396 = vmatpush1.msra.mxu0 0.0
        %7397 = vmatprep.subr.mxu0 0.0
        %7398 = vmatpush1.msra.mxu0 0.0
        %7399 = vmatprep.subr.mxu0 0.0
        %7400 = vmatpush1.msra.mxu0 0.0
        %7401 = vmatprep.subr.mxu0 0.0
        %7402 = vmatpush1.msra.mxu0 0.0
        %7403 = vmatprep.subr.mxu0 0.0
        %7404 = vmatpush1.msra.mxu0 0.0
        %7405 = vmatprep.subr.mxu0 0.0
        %7406 = vmatpush1.msra.mxu0 0.0
        %7407 = vmatprep.subr.mxu0 0.0
        %7408 = vmatpush1.msra.mxu0 0.0
        %7409 = vmatprep.subr.mxu0 0.0
        %7410 = vmatpush1.msra.mxu0 0.0
        %7411 = vmatprep.subr.mxu0 0.0
        %7412 = vmatpush1.msra.mxu0 0.0
        %7413 = vmatprep.subr.mxu0 0.0
        %7414 = vmatpush1.msra.mxu0 0.0
        %7415 = vmatprep.subr.mxu0 0.0
        %7416 = vmatpush1.msra.mxu0 0.0
        %7417 = vmatprep.subr.mxu0 0.0
        %7418 = vmatpush1.msra.mxu0 0.0
        %7419 = vmatprep.subr.mxu0 0.0
        %7420 = vmatpush1.msra.mxu0 0.0
        %7421 = vmatprep.subr.mxu0 0.0
        %7422 = vmatpush1.msra.mxu0 0.0
        %7423 = vmatprep.subr.mxu0 0.0
        %7424 = vmatpush1.msra.mxu0 0.0
        %7425 = vmatprep.subr.mxu0 0.0
        %7426 = vmatpush1.msra.mxu0 0.0
        %7427 = vmatprep.subr.mxu0 0.0
        %7428 = vmatpush1.msra.mxu0 0.0
        %7429 = vmatprep.subr.mxu0 0.0
        %7430 = vmatpush1.msra.mxu0 0.0
        %7431 = vmatprep.subr.mxu0 0.0
        %7432 = vmatpush1.msra.mxu0 0.0
        %7433 = vmatprep.subr.mxu0 0.0
        %7434 = vmatpush1.msra.mxu0 0.0
        %7435 = vmatprep.subr.mxu0 0.0
        %7436 = vmatpush1.msra.mxu0 0.0
        %7437 = vmatprep.mubr.f32.mxu0 0.0
        %7438 = vmatmul.mubr.f32.gmra.mrb[0].mxu0 %v7309
        %v7439 = vpop.f32.mrb[0].mxu0
        %v7440 = vadd.f32 0.0, %v7439
        %v7441 = vpop.f32.mrb[0].mxu0
        %7442 = vmatprep.mubr.f32.mxu0 0.0
        %7443 = vmatmul.mubr.f32.gmra.mrb[0].mxu0 %v7311
        %v7444 = vpop.f32.mrb[0].mxu0
        %v7445 = vadd.f32 0.0, %v7444
        %v7446 = vpop.f32.mrb[0].mxu0
        %7447 = vmatprep.mubr.f32.mxu0 0.0
        %7448 = vmatmul.mubr.f32.gmra.mrb[0].mxu0 %v7313
        %v7449 = vpop.f32.mrb[0].mxu0
        %v7450 = vadd.f32 0.0, %v7449
        %v7451 = vpop.f32.mrb[0].mxu0
        %7452 = vmatprep.mubr.f32.mxu0 0.0
        %7453 = vmatmul.mubr.f32.gmra.mrb[0].mxu0 %v7315
        %v7454 = vpop.f32.mrb[0].mxu0
        %v7455 = vadd.f32 0.0, %v7454
        %v7456 = vpop.f32.mrb[0].mxu0
        %7457 = vmatprep.mubr.f32.mxu0 0.0
        %7458 = vmatmul.mubr.f32.gmra.mrb[0].mxu0 %v7317
        %v7459 = vpop.f32.mrb[0].mxu0
        %v7460 = vadd.f32 0.0, %v7459
        %v7461 = vpop.f32.mrb[0].mxu0
        %7462 = vmatprep.mubr.f32.mxu0 0.0
        %7463 = vmatmul.mubr.f32.gmra.mrb[0].mxu0 %v7319
        %v7464 = vpop.f32.mrb[0].mxu0
        %v7465 = vadd.f32 0.0, %v7464
        %v7466 = vpop.f32.mrb[0].mxu0
        %7467 = vmatprep.mubr.f32.mxu0 0.0
        %7468 = vmatmul.mubr.f32.gmra.mrb[0].mxu0 %v7321
        %v7469 = vpop.f32.mrb[0].mxu0
        %v7470 = vadd.f32 0.0, %v7469
        %v7471 = vpop.f32.mrb[0].mxu0
        %7472 = vmatprep.mubr.f32.mxu0 0.0
        %7473 = vmatmul.mubr.f32.gmra.mrb[0].mxu0 %v7323
        %v7474 = vpop.f32.mrb[0].mxu0
        %v7475 = vadd.f32 0.0, %v7474
        %v7476 = vpop.f32.mrb[0].mxu0
        %7477 = vmatprep.mubr.f32.mxu0 0.0
        %7478 = vmatmul.mubr.f32.gmra.mrb[0].mxu0 %v7325
        %v7479 = vpop.f32.mrb[0].mxu0
        %v7480 = vadd.f32 0.0, %v7479
        %v7481 = vpop.f32.mrb[0].mxu0
        %7482 = vmatprep.mubr.f32.mxu0 0.0
        %7483 = vmatmul.mubr.f32.gmra.mrb[0].mxu0 %v7327
        %v7484 = vpop.f32.mrb[0].mxu0
        %v7485 = vadd.f32 0.0, %v7484
        %v7486 = vpop.f32.mrb[0].mxu0
        %7487 = vmatprep.mubr.f32.mxu0 0.0
        %7488 = vmatmul.mubr.f32.gmra.mrb[0].mxu0 %v7329
        %v7489 = vpop.f32.mrb[0].mxu0
        %v7490 = vadd.f32 0.0, %v7489
        %v7491 = vpop.f32.mrb[0].mxu0
        %7492 = vmatprep.mubr.f32.mxu0 0.0
        %7493 = vmatmul.mubr.f32.gmra.mrb[0].mxu0 %v7331
        %v7494 = vpop.f32.mrb[0].mxu0
        %v7495 = vadd.f32 0.0, %v7494
        %v7496 = vpop.f32.mrb[0].mxu0
        %7497 = vmatprep.mubr.f32.mxu0 0.0
        %7498 = vmatmul.mubr.f32.gmra.mrb[0].mxu0 %v7333
        %v7499 = vpop.f32.mrb[0].mxu0
        %v7500 = vadd.f32 0.0, %v7499
        %v7501 = vpop.f32.mrb[0].mxu0
        %7502 = vmatprep.mubr.f32.mxu0 0.0
        %7503 = vmatmul.mubr.f32.gmra.mrb[0].mxu0 %v7335
        %v7504 = vpop.f32.mrb[0].mxu0
        %v7505 = vadd.f32 0.0, %v7504
        %v7506 = vpop.f32.mrb[0].mxu0
        %7507 = vmatprep.mubr.f32.mxu0 0.0
        %7508 = vmatmul.mubr.f32.gmra.mrb[0].mxu0 %v7337
        %v7509 = vpop.f32.mrb[0].mxu0
        %v7510 = vadd.f32 0.0, %v7509
        %v7511 = vpop.f32.mrb[0].mxu0
        %7512 = vmatprep.mubr.f32.mxu0 0.0
        %7513 = vmatmul.mubr.f32.gmra.mrb[0].mxu0 %v7339
        %v7514 = vpop.f32.mrb[0].mxu0
        %v7515 = vadd.f32 0.0, %v7514
        %v7516 = vpop.f32.mrb[0].mxu0
        %7517 = vmatprep.mubr.f32.mxu0 0.0
        %7518 = vmatmul.mubr.f32.gmra.mrb[0].mxu0 %v7341
        %v7519 = vpop.f32.mrb[0].mxu0
        %v7520 = vadd.f32 0.0, %v7519
        %v7521 = vpop.f32.mrb[0].mxu0
        %7522 = vmatprep.mubr.f32.mxu0 0.0
        %7523 = vmatmul.mubr.f32.gmra.mrb[0].mxu0 %v7343
        %v7524 = vpop.f32.mrb[0].mxu0
        %v7525 = vadd.f32 0.0, %v7524
        %v7526 = vpop.f32.mrb[0].mxu0
        %7527 = vmatprep.mubr.f32.mxu0 0.0
        %7528 = vmatmul.mubr.f32.gmra.mrb[0].mxu0 %v7345
        %v7529 = vpop.f32.mrb[0].mxu0
        %v7530 = vadd.f32 0.0, %v7529
        %v7531 = vpop.f32.mrb[0].mxu0
        %7532 = vmatprep.mubr.f32.mxu0 0.0
        %7533 = vmatmul.mubr.f32.gmra.mrb[0].mxu0 %v7347
        %v7534 = vpop.f32.mrb[0].mxu0
        %v7535 = vadd.f32 0.0, %v7534
        %v7536 = vpop.f32.mrb[0].mxu0
        %7537 = vmatprep.mubr.f32.mxu0 0.0
        %7538 = vmatmul.mubr.f32.gmra.mrb[0].mxu0 %v7349
        %v7539 = vpop.f32.mrb[0].mxu0
        %v7540 = vadd.f32 0.0, %v7539
        %v7541 = vpop.f32.mrb[0].mxu0
        %7542 = vmatprep.mubr.f32.mxu0 0.0
        %7543 = vmatmul.mubr.f32.gmra.mrb[0].mxu0 %v7351
        %v7544 = vpop.f32.mrb[0].mxu0
        %v7545 = vadd.f32 0.0, %v7544
        %v7546 = vpop.f32.mrb[0].mxu0
        %7547 = vmatprep.mubr.f32.mxu0 0.0
        %7548 = vmatmul.mubr.f32.gmra.mrb[0].mxu0 %v7353
        %v7549 = vpop.f32.mrb[0].mxu0
        %v7550 = vadd.f32 0.0, %v7549
        %v7551 = vpop.f32.mrb[0].mxu0
        %7552 = vmatprep.mubr.f32.mxu0 0.0
        %7553 = vmatmul.mubr.f32.gmra.mrb[0].mxu0 %v7355
        %v7554 = vpop.f32.mrb[0].mxu0
        %v7555 = vadd.f32 0.0, %v7554
        %v7556 = vpop.f32.mrb[0].mxu0
        %7557 = vmatprep.mubr.f32.mxu0 0.0
        %7558 = vmatmul.mubr.f32.gmra.mrb[0].mxu0 %v7357
        %v7559 = vpop.f32.mrb[0].mxu0
        %v7560 = vadd.f32 0.0, %v7559
        %v7561 = vpop.f32.mrb[0].mxu0
        %7562 = vmatprep.mubr.f32.mxu0 0.0
        %7563 = vmatmul.mubr.f32.gmra.mrb[0].mxu0 %v7359
        %v7564 = vpop.f32.mrb[0].mxu0
        %v7565 = vadd.f32 0.0, %v7564
        %v7566 = vpop.f32.mrb[0].mxu0
        %7567 = vmatprep.mubr.f32.mxu0 0.0
        %7568 = vmatmul.mubr.f32.gmra.mrb[0].mxu0 %v7361
        %v7569 = vpop.f32.mrb[0].mxu0
        %v7570 = vadd.f32 0.0, %v7569
        %v7571 = vpop.f32.mrb[0].mxu0
        %7572 = vmatprep.mubr.f32.mxu0 0.0
        %7573 = vmatmul.mubr.f32.gmra.mrb[0].mxu0 %v7363
        %v7574 = vpop.f32.mrb[0].mxu0
        %v7575 = vadd.f32 0.0, %v7574
        %v7576 = vpop.f32.mrb[0].mxu0
        %7577 = vmatprep.mubr.f32.mxu0 0.0
        %7578 = vmatmul.mubr.f32.gmra.mrb[0].mxu0 %v7365
        %v7579 = vpop.f32.mrb[0].mxu0
        %v7580 = vadd.f32 0.0, %v7579
        %v7581 = vpop.f32.mrb[0].mxu0
        %7582 = vmatprep.mubr.f32.mxu0 0.0
        %7583 = vmatmul.mubr.f32.gmra.mrb[0].mxu0 %v7367
        %v7584 = vpop.f32.mrb[0].mxu0
        %v7585 = vadd.f32 0.0, %v7584
        %v7586 = vpop.f32.mrb[0].mxu0
        %7587 = vmatprep.mubr.f32.mxu0 0.0
        %7588 = vmatmul.mubr.f32.gmra.mrb[0].mxu0 %v7369
        %v7589 = vpop.f32.mrb[0].mxu0
        %v7590 = vadd.f32 0.0, %v7589
        %v7591 = vpop.f32.mrb[0].mxu0
        %7592 = vmatprep.mubr.f32.mxu0 0.0
        %7593 = vmatmul.mubr.f32.gmra.mrb[0].mxu0 %v7371
        %v7594 = vpop.f32.mrb[0].mxu0
        %v7595 = vadd.f32 0.0, %v7594
        %v7596 = vpop.f32.mrb[0].mxu0
        %7597 = vdwg.mxu0
        %v7598 = vadd.f32 %v7052, %v7440
        %v7599 = vadd.f32 %v7057, %v7445
        %v7600 = vadd.f32 %v7062, %v7450
        %v7601 = vadd.f32 %v7067, %v7455
        %v7602 = vadd.f32 %v7072, %v7460
        %v7603 = vadd.f32 %v7077, %v7465
        %v7604 = vadd.f32 %v7082, %v7470
        %v7605 = vadd.f32 %v7087, %v7475
        %v7606 = vadd.f32 %v7092, %v7480
        %v7607 = vadd.f32 %v7097, %v7485
        %v7608 = vadd.f32 %v7102, %v7490
        %v7609 = vadd.f32 %v7107, %v7495
        %v7610 = vadd.f32 %v7112, %v7500
        %v7611 = vadd.f32 %v7117, %v7505
        %v7612 = vadd.f32 %v7122, %v7510
        %v7613 = vadd.f32 %v7127, %v7515
        %v7614 = vadd.f32 %v7132, %v7520
        %v7615 = vadd.f32 %v7137, %v7525
        %v7616 = vadd.f32 %v7142, %v7530
        %v7617 = vadd.f32 %v7147, %v7535
        %v7618 = vadd.f32 %v7152, %v7540
        %v7619 = vadd.f32 %v7157, %v7545
        %v7620 = vadd.f32 %v7162, %v7550
        %v7621 = vadd.f32 %v7167, %v7555
        %v7622 = vadd.f32 %v7172, %v7560
        %v7623 = vadd.f32 %v7177, %v7565
        %v7624 = vadd.f32 %v7182, %v7570
        %v7625 = vadd.f32 %v7187, %v7575
        %v7626 = vadd.f32 %v7192, %v7580
        %v7627 = vadd.f32 %v7197, %v7585
        %v7628 = vadd.f32 %v7202, %v7590
        %v7629 = vadd.f32 %v7207, %v7595
        %v7633 = vrot.slane %v6491, 7
        %v7634 = vrot.slane %v6492, 7
        %v7635 = vsel %vm697, %v7633, %v7634
        %v7636 = vrot.slane %v6493, 7
        %v7637 = vsel %vm697, %v7634, %v7636
        %s7638 = scalar_lea.vmem %s5, 48
        %v7639 = vld [vmem:[%s7638] sm:$0xff]
        %v7640 = vld [vmem:[%s7638 + $0x8] sm:$0xff]
        %v7641 = vsel %vm6394, %v7635, 0
        %v7643 = vsel %vm6394, %v7637, 0
        %7645 = vmatprep.subr.mxu0 0.0
        %7646 = vmatpush1.msra.mxu0 %v7639
        %7647 = vmatprep.subr.mxu0 0.0
        %7648 = vmatpush1.msra.mxu0 %v7640
        %7649 = vmatprep.subr.mxu0 0.0
        %7650 = vmatpush1.msra.mxu0 0.0
        %7651 = vmatprep.subr.mxu0 0.0
        %7652 = vmatpush1.msra.mxu0 0.0
        %7653 = vmatprep.subr.mxu0 0.0
        %7654 = vmatpush1.msra.mxu0 0.0
        %7655 = vmatprep.subr.mxu0 0.0
        %7656 = vmatpush1.msra.mxu0 0.0
        %7657 = vmatprep.subr.mxu0 0.0
        %7658 = vmatpush1.msra.mxu0 0.0
        %7659 = vmatprep.subr.mxu0 0.0
        %7660 = vmatpush1.msra.mxu0 0.0
        %7661 = vmatprep.subr.mxu0 0.0
        %7662 = vmatpush1.msra.mxu0 0.0
        %7663 = vmatprep.subr.mxu0 0.0
        %7664 = vmatpush1.msra.mxu0 0.0
        %7665 = vmatprep.subr.mxu0 0.0
        %7666 = vmatpush1.msra.mxu0 0.0
        %7667 = vmatprep.subr.mxu0 0.0
        %7668 = vmatpush1.msra.mxu0 0.0
        %7669 = vmatprep.subr.mxu0 0.0
        %7670 = vmatpush1.msra.mxu0 0.0
        %7671 = vmatprep.subr.mxu0 0.0
        %7672 = vmatpush1.msra.mxu0 0.0
        %7673 = vmatprep.subr.mxu0 0.0
        %7674 = vmatpush1.msra.mxu0 0.0
        %7675 = vmatprep.subr.mxu0 0.0
        %7676 = vmatpush1.msra.mxu0 0.0
        %7677 = vmatprep.subr.mxu0 0.0
        %7678 = vmatpush1.msra.mxu0 0.0
        %7679 = vmatprep.subr.mxu0 0.0
        %7680 = vmatpush1.msra.mxu0 0.0
        %7681 = vmatprep.subr.mxu0 0.0
        %7682 = vmatpush1.msra.mxu0 0.0
        %7683 = vmatprep.subr.mxu0 0.0
        %7684 = vmatpush1.msra.mxu0 0.0
        %7685 = vmatprep.subr.mxu0 0.0
        %7686 = vmatpush1.msra.mxu0 0.0
        %7687 = vmatprep.subr.mxu0 0.0
        %7688 = vmatpush1.msra.mxu0 0.0
        %7689 = vmatprep.subr.mxu0 0.0
        %7690 = vmatpush1.msra.mxu0 0.0
        %7691 = vmatprep.subr.mxu0 0.0
        %7692 = vmatpush1.msra.mxu0 0.0
        %7693 = vmatprep.subr.mxu0 0.0
        %7694 = vmatpush1.msra.mxu0 0.0
        %7695 = vmatprep.subr.mxu0 0.0
        %7696 = vmatpush1.msra.mxu0 0.0
        %7697 = vmatprep.subr.mxu0 0.0
        %7698 = vmatpush1.msra.mxu0 0.0
        %7699 = vmatprep.subr.mxu0 0.0
        %7700 = vmatpush1.msra.mxu0 0.0
        %7701 = vmatprep.subr.mxu0 0.0
        %7702 = vmatpush1.msra.mxu0 0.0
        %7703 = vmatprep.subr.mxu0 0.0
        %7704 = vmatpush1.msra.mxu0 0.0
        %7705 = vmatprep.subr.mxu0 0.0
        %7706 = vmatpush1.msra.mxu0 0.0
        %7707 = vmatprep.subr.mxu0 0.0
        %7708 = vmatpush1.msra.mxu0 0.0
        %7709 = vmatprep.mubr.f32.mxu0 0.0
        %7710 = vmatmul.mubr.f32.gmra.mrb[0].mxu0 %v6925
        %v7711 = vpop.f32.mrb[0].mxu0
        %v7712 = vadd.f32 0.0, %v7711
        %v7713 = vpop.f32.mrb[0].mxu0
        %7714 = vmatprep.mubr.f32.mxu0 0.0
        %7715 = vmatmul.mubr.f32.gmra.mrb[0].mxu0 %v6927
        %v7716 = vpop.f32.mrb[0].mxu0
        %v7717 = vadd.f32 0.0, %v7716
        %v7718 = vpop.f32.mrb[0].mxu0
        %7719 = vmatprep.mubr.f32.mxu0 0.0
        %7720 = vmatmul.mubr.f32.gmra.mrb[0].mxu0 %v6929
        %v7721 = vpop.f32.mrb[0].mxu0
        %v7722 = vadd.f32 0.0, %v7721
        %v7723 = vpop.f32.mrb[0].mxu0
        %7724 = vmatprep.mubr.f32.mxu0 0.0
        %7725 = vmatmul.mubr.f32.gmra.mrb[0].mxu0 %v6931
        %v7726 = vpop.f32.mrb[0].mxu0
        %v7727 = vadd.f32 0.0, %v7726
        %v7728 = vpop.f32.mrb[0].mxu0
        %7729 = vmatprep.mubr.f32.mxu0 0.0
        %7730 = vmatmul.mubr.f32.gmra.mrb[0].mxu0 %v6933
        %v7731 = vpop.f32.mrb[0].mxu0
        %v7732 = vadd.f32 0.0, %v7731
        %v7733 = vpop.f32.mrb[0].mxu0
        %7734 = vmatprep.mubr.f32.mxu0 0.0
        %7735 = vmatmul.mubr.f32.gmra.mrb[0].mxu0 %v6935
        %v7736 = vpop.f32.mrb[0].mxu0
        %v7737 = vadd.f32 0.0, %v7736
        %v7738 = vpop.f32.mrb[0].mxu0
        %7739 = vmatprep.mubr.f32.mxu0 0.0
        %7740 = vmatmul.mubr.f32.gmra.mrb[0].mxu0 %v6937
        %v7741 = vpop.f32.mrb[0].mxu0
        %v7742 = vadd.f32 0.0, %v7741
        %v7743 = vpop.f32.mrb[0].mxu0
        %7744 = vmatprep.mubr.f32.mxu0 0.0
        %7745 = vmatmul.mubr.f32.gmra.mrb[0].mxu0 %v6939
        %v7746 = vpop.f32.mrb[0].mxu0
        %v7747 = vadd.f32 0.0, %v7746
        %v7748 = vpop.f32.mrb[0].mxu0
        %7749 = vmatprep.mubr.f32.mxu0 0.0
        %7750 = vmatmul.mubr.f32.gmra.mrb[0].mxu0 %v6941
        %v7751 = vpop.f32.mrb[0].mxu0
        %v7752 = vadd.f32 0.0, %v7751
        %v7753 = vpop.f32.mrb[0].mxu0
        %7754 = vmatprep.mubr.f32.mxu0 0.0
        %7755 = vmatmul.mubr.f32.gmra.mrb[0].mxu0 %v6943
        %v7756 = vpop.f32.mrb[0].mxu0
        %v7757 = vadd.f32 0.0, %v7756
        %v7758 = vpop.f32.mrb[0].mxu0
        %7759 = vmatprep.mubr.f32.mxu0 0.0
        %7760 = vmatmul.mubr.f32.gmra.mrb[0].mxu0 %v6945
        %v7761 = vpop.f32.mrb[0].mxu0
        %v7762 = vadd.f32 0.0, %v7761
        %v7763 = vpop.f32.mrb[0].mxu0
        %7764 = vmatprep.mubr.f32.mxu0 0.0
        %7765 = vmatmul.mubr.f32.gmra.mrb[0].mxu0 %v6947
        %v7766 = vpop.f32.mrb[0].mxu0
        %v7767 = vadd.f32 0.0, %v7766
        %v7768 = vpop.f32.mrb[0].mxu0
        %7769 = vmatprep.mubr.f32.mxu0 0.0
        %7770 = vmatmul.mubr.f32.gmra.mrb[0].mxu0 %v6949
        %v7771 = vpop.f32.mrb[0].mxu0
        %v7772 = vadd.f32 0.0, %v7771
        %v7773 = vpop.f32.mrb[0].mxu0
        %7774 = vmatprep.mubr.f32.mxu0 0.0
        %7775 = vmatmul.mubr.f32.gmra.mrb[0].mxu0 %v6951
        %v7776 = vpop.f32.mrb[0].mxu0
        %v7777 = vadd.f32 0.0, %v7776
        %v7778 = vpop.f32.mrb[0].mxu0
        %7779 = vmatprep.mubr.f32.mxu0 0.0
        %7780 = vmatmul.mubr.f32.gmra.mrb[0].mxu0 %v6953
        %v7781 = vpop.f32.mrb[0].mxu0
        %v7782 = vadd.f32 0.0, %v7781
        %v7783 = vpop.f32.mrb[0].mxu0
        %7784 = vmatprep.mubr.f32.mxu0 0.0
        %7785 = vmatmul.mubr.f32.gmra.mrb[0].mxu0 %v6955
        %v7786 = vpop.f32.mrb[0].mxu0
        %v7787 = vadd.f32 0.0, %v7786
        %v7788 = vpop.f32.mrb[0].mxu0
        %7789 = vmatprep.mubr.f32.mxu0 0.0
        %7790 = vmatmul.mubr.f32.gmra.mrb[0].mxu0 %v6957
        %v7791 = vpop.f32.mrb[0].mxu0
        %v7792 = vadd.f32 0.0, %v7791
        %v7793 = vpop.f32.mrb[0].mxu0
        %7794 = vmatprep.mubr.f32.mxu0 0.0
        %7795 = vmatmul.mubr.f32.gmra.mrb[0].mxu0 %v6959
        %v7796 = vpop.f32.mrb[0].mxu0
        %v7797 = vadd.f32 0.0, %v7796
        %v7798 = vpop.f32.mrb[0].mxu0
        %7799 = vmatprep.mubr.f32.mxu0 0.0
        %7800 = vmatmul.mubr.f32.gmra.mrb[0].mxu0 %v6961
        %v7801 = vpop.f32.mrb[0].mxu0
        %v7802 = vadd.f32 0.0, %v7801
        %v7803 = vpop.f32.mrb[0].mxu0
        %7804 = vmatprep.mubr.f32.mxu0 0.0
        %7805 = vmatmul.mubr.f32.gmra.mrb[0].mxu0 %v6963
        %v7806 = vpop.f32.mrb[0].mxu0
        %v7807 = vadd.f32 0.0, %v7806
        %v7808 = vpop.f32.mrb[0].mxu0
        %7809 = vmatprep.mubr.f32.mxu0 0.0
        %7810 = vmatmul.mubr.f32.gmra.mrb[0].mxu0 %v6965
        %v7811 = vpop.f32.mrb[0].mxu0
        %v7812 = vadd.f32 0.0, %v7811
        %v7813 = vpop.f32.mrb[0].mxu0
        %7814 = vmatprep.mubr.f32.mxu0 0.0
        %7815 = vmatmul.mubr.f32.gmra.mrb[0].mxu0 %v6967
        %v7816 = vpop.f32.mrb[0].mxu0
        %v7817 = vadd.f32 0.0, %v7816
        %v7818 = vpop.f32.mrb[0].mxu0
        %7819 = vmatprep.mubr.f32.mxu0 0.0
        %7820 = vmatmul.mubr.f32.gmra.mrb[0].mxu0 %v6969
        %v7821 = vpop.f32.mrb[0].mxu0
        %v7822 = vadd.f32 0.0, %v7821
        %v7823 = vpop.f32.mrb[0].mxu0
        %7824 = vmatprep.mubr.f32.mxu0 0.0
        %7825 = vmatmul.mubr.f32.gmra.mrb[0].mxu0 %v6971
        %v7826 = vpop.f32.mrb[0].mxu0
        %v7827 = vadd.f32 0.0, %v7826
        %v7828 = vpop.f32.mrb[0].mxu0
        %7829 = vmatprep.mubr.f32.mxu0 0.0
        %7830 = vmatmul.mubr.f32.gmra.mrb[0].mxu0 %v6973
        %v7831 = vpop.f32.mrb[0].mxu0
        %v7832 = vadd.f32 0.0, %v7831
        %v7833 = vpop.f32.mrb[0].mxu0
        %7834 = vmatprep.mubr.f32.mxu0 0.0
        %7835 = vmatmul.mubr.f32.gmra.mrb[0].mxu0 %v6975
        %v7836 = vpop.f32.mrb[0].mxu0
        %v7837 = vadd.f32 0.0, %v7836
        %v7838 = vpop.f32.mrb[0].mxu0
        %7839 = vmatprep.mubr.f32.mxu0 0.0
        %7840 = vmatmul.mubr.f32.gmra.mrb[0].mxu0 %v6977
        %v7841 = vpop.f32.mrb[0].mxu0
        %v7842 = vadd.f32 0.0, %v7841
        %v7843 = vpop.f32.mrb[0].mxu0
        %7844 = vmatprep.mubr.f32.mxu0 0.0
        %7845 = vmatmul.mubr.f32.gmra.mrb[0].mxu0 %v6979
        %v7846 = vpop.f32.mrb[0].mxu0
        %v7847 = vadd.f32 0.0, %v7846
        %v7848 = vpop.f32.mrb[0].mxu0
        %7849 = vmatprep.mubr.f32.mxu0 0.0
        %7850 = vmatmul.mubr.f32.gmra.mrb[0].mxu0 %v6981
        %v7851 = vpop.f32.mrb[0].mxu0
        %v7852 = vadd.f32 0.0, %v7851
        %v7853 = vpop.f32.mrb[0].mxu0
        %7854 = vmatprep.mubr.f32.mxu0 0.0
        %7855 = vmatmul.mubr.f32.gmra.mrb[0].mxu0 %v6983
        %v7856 = vpop.f32.mrb[0].mxu0
        %v7857 = vadd.f32 0.0, %v7856
        %v7858 = vpop.f32.mrb[0].mxu0
        %7859 = vmatprep.mubr.f32.mxu0 0.0
        %7860 = vmatmul.mubr.f32.gmra.mrb[0].mxu0 %v7641
        %v7861 = vpop.f32.mrb[0].mxu0
        %v7862 = vadd.f32 0.0, %v7861
        %v7863 = vpop.f32.mrb[0].mxu0
        %7864 = vmatprep.mubr.f32.mxu0 0.0
        %7865 = vmatmul.mubr.f32.gmra.mrb[0].mxu0 %v7643
        %v7866 = vpop.f32.mrb[0].mxu0
        %v7867 = vadd.f32 0.0, %v7866
        %v7868 = vpop.f32.mrb[0].mxu0
        %7869 = vdwg.mxu0
        %v7870 = vadd.f32 %v7598, %v7712
        %v7871 = vadd.f32 %v7599, %v7717
        %v7872 = vadd.f32 %v7600, %v7722
        %v7873 = vadd.f32 %v7601, %v7727
        %v7874 = vadd.f32 %v7602, %v7732
        %v7875 = vadd.f32 %v7603, %v7737
        %v7876 = vadd.f32 %v7604, %v7742
        %v7877 = vadd.f32 %v7605, %v7747
        %v7878 = vadd.f32 %v7606, %v7752
        %v7879 = vadd.f32 %v7607, %v7757
        %v7880 = vadd.f32 %v7608, %v7762
        %v7881 = vadd.f32 %v7609, %v7767
        %v7882 = vadd.f32 %v7610, %v7772
        %v7883 = vadd.f32 %v7611, %v7777
        %v7884 = vadd.f32 %v7612, %v7782
        %v7885 = vadd.f32 %v7613, %v7787
        %v7886 = vadd.f32 %v7614, %v7792
        %v7887 = vadd.f32 %v7615, %v7797
        %v7888 = vadd.f32 %v7616, %v7802
        %v7889 = vadd.f32 %v7617, %v7807
        %v7890 = vadd.f32 %v7618, %v7812
        %v7891 = vadd.f32 %v7619, %v7817
        %v7892 = vadd.f32 %v7620, %v7822
        %v7893 = vadd.f32 %v7621, %v7827
        %v7894 = vadd.f32 %v7622, %v7832
        %v7895 = vadd.f32 %v7623, %v7837
        %v7896 = vadd.f32 %v7624, %v7842
        %v7897 = vadd.f32 %v7625, %v7847
        %v7898 = vadd.f32 %v7626, %v7852
        %v7899 = vadd.f32 %v7627, %v7857
        %v7900 = vadd.f32 %v7628, %v7862
        %v7901 = vadd.f32 %v7629, %v7867
        %s7902 = scalar_lea.vmem %s5, 64
        %v7903 = vld [vmem:[%s7902] sm:$0xff]
        %v7904 = vld [vmem:[%s7902 + $0x8] sm:$0xff]
        %v7905 = vsel %vm6394, %v6492, 0
        %v7907 = vsel %vm6394, %v6493, 0
        %7909 = vmatprep.subr.mxu0 0.0
        %7910 = vmatpush1.msra.mxu0 %v7903
        %7911 = vmatprep.subr.mxu0 0.0
        %7912 = vmatpush1.msra.mxu0 %v7904
        %7913 = vmatprep.subr.mxu0 0.0
        %7914 = vmatpush1.msra.mxu0 0.0
        %7915 = vmatprep.subr.mxu0 0.0
        %7916 = vmatpush1.msra.mxu0 0.0
        %7917 = vmatprep.subr.mxu0 0.0
        %7918 = vmatpush1.msra.mxu0 0.0
        %7919 = vmatprep.subr.mxu0 0.0
        %7920 = vmatpush1.msra.mxu0 0.0
        %7921 = vmatprep.subr.mxu0 0.0
        %7922 = vmatpush1.msra.mxu0 0.0
        %7923 = vmatprep.subr.mxu0 0.0
        %7924 = vmatpush1.msra.mxu0 0.0
        %7925 = vmatprep.subr.mxu0 0.0
        %7926 = vmatpush1.msra.mxu0 0.0
        %7927 = vmatprep.subr.mxu0 0.0
        %7928 = vmatpush1.msra.mxu0 0.0
        %7929 = vmatprep.subr.mxu0 0.0
        %7930 = vmatpush1.msra.mxu0 0.0
        %7931 = vmatprep.subr.mxu0 0.0
        %7932 = vmatpush1.msra.mxu0 0.0
        %7933 = vmatprep.subr.mxu0 0.0
        %7934 = vmatpush1.msra.mxu0 0.0
        %7935 = vmatprep.subr.mxu0 0.0
        %7936 = vmatpush1.msra.mxu0 0.0
        %7937 = vmatprep.subr.mxu0 0.0
        %7938 = vmatpush1.msra.mxu0 0.0
        %7939 = vmatprep.subr.mxu0 0.0
        %7940 = vmatpush1.msra.mxu0 0.0
        %7941 = vmatprep.subr.mxu0 0.0
        %7942 = vmatpush1.msra.mxu0 0.0
        %7943 = vmatprep.subr.mxu0 0.0
        %7944 = vmatpush1.msra.mxu0 0.0
        %7945 = vmatprep.subr.mxu0 0.0
        %7946 = vmatpush1.msra.mxu0 0.0
        %7947 = vmatprep.subr.mxu0 0.0
        %7948 = vmatpush1.msra.mxu0 0.0
        %7949 = vmatprep.subr.mxu0 0.0
        %7950 = vmatpush1.msra.mxu0 0.0
        %7951 = vmatprep.subr.mxu0 0.0
        %7952 = vmatpush1.msra.mxu0 0.0
        %7953 = vmatprep.subr.mxu0 0.0
        %7954 = vmatpush1.msra.mxu0 0.0
        %7955 = vmatprep.subr.mxu0 0.0
        %7956 = vmatpush1.msra.mxu0 0.0
        %7957 = vmatprep.subr.mxu0 0.0
        %7958 = vmatpush1.msra.mxu0 0.0
        %7959 = vmatprep.subr.mxu0 0.0
        %7960 = vmatpush1.msra.mxu0 0.0
        %7961 = vmatprep.subr.mxu0 0.0
        %7962 = vmatpush1.msra.mxu0 0.0
        %7963 = vmatprep.subr.mxu0 0.0
        %7964 = vmatpush1.msra.mxu0 0.0
        %7965 = vmatprep.subr.mxu0 0.0
        %7966 = vmatpush1.msra.mxu0 0.0
        %7967 = vmatprep.subr.mxu0 0.0
        %7968 = vmatpush1.msra.mxu0 0.0
        %7969 = vmatprep.subr.mxu0 0.0
        %7970 = vmatpush1.msra.mxu0 0.0
        %7971 = vmatprep.subr.mxu0 0.0
        %7972 = vmatpush1.msra.mxu0 0.0
        %7973 = vmatprep.mubr.f32.mxu0 0.0
        %7974 = vmatmul.mubr.f32.gmra.mrb[0].mxu0 %v6636
        %v7975 = vpop.f32.mrb[0].mxu0
        %v7976 = vadd.f32 0.0, %v7975
        %v7977 = vpop.f32.mrb[0].mxu0
        %7978 = vmatprep.mubr.f32.mxu0 0.0
        %7979 = vmatmul.mubr.f32.gmra.mrb[0].mxu0 %v6638
        %v7980 = vpop.f32.mrb[0].mxu0
        %v7981 = vadd.f32 0.0, %v7980
        %v7982 = vpop.f32.mrb[0].mxu0
        %7983 = vmatprep.mubr.f32.mxu0 0.0
        %7984 = vmatmul.mubr.f32.gmra.mrb[0].mxu0 %v6640
        %v7985 = vpop.f32.mrb[0].mxu0
        %v7986 = vadd.f32 0.0, %v7985
        %v7987 = vpop.f32.mrb[0].mxu0
        %7988 = vmatprep.mubr.f32.mxu0 0.0
        %7989 = vmatmul.mubr.f32.gmra.mrb[0].mxu0 %v6642
        %v7990 = vpop.f32.mrb[0].mxu0
        %v7991 = vadd.f32 0.0, %v7990
        %v7992 = vpop.f32.mrb[0].mxu0
        %7993 = vmatprep.mubr.f32.mxu0 0.0
        %7994 = vmatmul.mubr.f32.gmra.mrb[0].mxu0 %v6644
        %v7995 = vpop.f32.mrb[0].mxu0
        %v7996 = vadd.f32 0.0, %v7995
        %v7997 = vpop.f32.mrb[0].mxu0
        %7998 = vmatprep.mubr.f32.mxu0 0.0
        %7999 = vmatmul.mubr.f32.gmra.mrb[0].mxu0 %v6646
        %v8000 = vpop.f32.mrb[0].mxu0
        %v8001 = vadd.f32 0.0, %v8000
        %v8002 = vpop.f32.mrb[0].mxu0
        %8003 = vmatprep.mubr.f32.mxu0 0.0
        %8004 = vmatmul.mubr.f32.gmra.mrb[0].mxu0 %v6648
        %v8005 = vpop.f32.mrb[0].mxu0
        %v8006 = vadd.f32 0.0, %v8005
        %v8007 = vpop.f32.mrb[0].mxu0
        %8008 = vmatprep.mubr.f32.mxu0 0.0
        %8009 = vmatmul.mubr.f32.gmra.mrb[0].mxu0 %v6650
        %v8010 = vpop.f32.mrb[0].mxu0
        %v8011 = vadd.f32 0.0, %v8010
        %v8012 = vpop.f32.mrb[0].mxu0
        %8013 = vmatprep.mubr.f32.mxu0 0.0
        %8014 = vmatmul.mubr.f32.gmra.mrb[0].mxu0 %v6652
        %v8015 = vpop.f32.mrb[0].mxu0
        %v8016 = vadd.f32 0.0, %v8015
        %v8017 = vpop.f32.mrb[0].mxu0
        %8018 = vmatprep.mubr.f32.mxu0 0.0
        %8019 = vmatmul.mubr.f32.gmra.mrb[0].mxu0 %v6654
        %v8020 = vpop.f32.mrb[0].mxu0
        %v8021 = vadd.f32 0.0, %v8020
        %v8022 = vpop.f32.mrb[0].mxu0
        %8023 = vmatprep.mubr.f32.mxu0 0.0
        %8024 = vmatmul.mubr.f32.gmra.mrb[0].mxu0 %v6656
        %v8025 = vpop.f32.mrb[0].mxu0
        %v8026 = vadd.f32 0.0, %v8025
        %v8027 = vpop.f32.mrb[0].mxu0
        %8028 = vmatprep.mubr.f32.mxu0 0.0
        %8029 = vmatmul.mubr.f32.gmra.mrb[0].mxu0 %v6658
        %v8030 = vpop.f32.mrb[0].mxu0
        %v8031 = vadd.f32 0.0, %v8030
        %v8032 = vpop.f32.mrb[0].mxu0
        %8033 = vmatprep.mubr.f32.mxu0 0.0
        %8034 = vmatmul.mubr.f32.gmra.mrb[0].mxu0 %v6660
        %v8035 = vpop.f32.mrb[0].mxu0
        %v8036 = vadd.f32 0.0, %v8035
        %v8037 = vpop.f32.mrb[0].mxu0
        %8038 = vmatprep.mubr.f32.mxu0 0.0
        %8039 = vmatmul.mubr.f32.gmra.mrb[0].mxu0 %v6662
        %v8040 = vpop.f32.mrb[0].mxu0
        %v8041 = vadd.f32 0.0, %v8040
        %v8042 = vpop.f32.mrb[0].mxu0
        %8043 = vmatprep.mubr.f32.mxu0 0.0
        %8044 = vmatmul.mubr.f32.gmra.mrb[0].mxu0 %v6664
        %v8045 = vpop.f32.mrb[0].mxu0
        %v8046 = vadd.f32 0.0, %v8045
        %v8047 = vpop.f32.mrb[0].mxu0
        %8048 = vmatprep.mubr.f32.mxu0 0.0
        %8049 = vmatmul.mubr.f32.gmra.mrb[0].mxu0 %v6666
        %v8050 = vpop.f32.mrb[0].mxu0
        %v8051 = vadd.f32 0.0, %v8050
        %v8052 = vpop.f32.mrb[0].mxu0
        %8053 = vmatprep.mubr.f32.mxu0 0.0
        %8054 = vmatmul.mubr.f32.gmra.mrb[0].mxu0 %v6668
        %v8055 = vpop.f32.mrb[0].mxu0
        %v8056 = vadd.f32 0.0, %v8055
        %v8057 = vpop.f32.mrb[0].mxu0
        %8058 = vmatprep.mubr.f32.mxu0 0.0
        %8059 = vmatmul.mubr.f32.gmra.mrb[0].mxu0 %v6670
        %v8060 = vpop.f32.mrb[0].mxu0
        %v8061 = vadd.f32 0.0, %v8060
        %v8062 = vpop.f32.mrb[0].mxu0
        %8063 = vmatprep.mubr.f32.mxu0 0.0
        %8064 = vmatmul.mubr.f32.gmra.mrb[0].mxu0 %v6672
        %v8065 = vpop.f32.mrb[0].mxu0
        %v8066 = vadd.f32 0.0, %v8065
        %v8067 = vpop.f32.mrb[0].mxu0
        %8068 = vmatprep.mubr.f32.mxu0 0.0
        %8069 = vmatmul.mubr.f32.gmra.mrb[0].mxu0 %v6674
        %v8070 = vpop.f32.mrb[0].mxu0
        %v8071 = vadd.f32 0.0, %v8070
        %v8072 = vpop.f32.mrb[0].mxu0
        %8073 = vmatprep.mubr.f32.mxu0 0.0
        %8074 = vmatmul.mubr.f32.gmra.mrb[0].mxu0 %v6676
        %v8075 = vpop.f32.mrb[0].mxu0
        %v8076 = vadd.f32 0.0, %v8075
        %v8077 = vpop.f32.mrb[0].mxu0
        %8078 = vmatprep.mubr.f32.mxu0 0.0
        %8079 = vmatmul.mubr.f32.gmra.mrb[0].mxu0 %v6678
        %v8080 = vpop.f32.mrb[0].mxu0
        %v8081 = vadd.f32 0.0, %v8080
        %v8082 = vpop.f32.mrb[0].mxu0
        %8083 = vmatprep.mubr.f32.mxu0 0.0
        %8084 = vmatmul.mubr.f32.gmra.mrb[0].mxu0 %v6680
        %v8085 = vpop.f32.mrb[0].mxu0
        %v8086 = vadd.f32 0.0, %v8085
        %v8087 = vpop.f32.mrb[0].mxu0
        %8088 = vmatprep.mubr.f32.mxu0 0.0
        %8089 = vmatmul.mubr.f32.gmra.mrb[0].mxu0 %v6682
        %v8090 = vpop.f32.mrb[0].mxu0
        %v8091 = vadd.f32 0.0, %v8090
        %v8092 = vpop.f32.mrb[0].mxu0
        %8093 = vmatprep.mubr.f32.mxu0 0.0
        %8094 = vmatmul.mubr.f32.gmra.mrb[0].mxu0 %v6684
        %v8095 = vpop.f32.mrb[0].mxu0
        %v8096 = vadd.f32 0.0, %v8095
        %v8097 = vpop.f32.mrb[0].mxu0
        %8098 = vmatprep.mubr.f32.mxu0 0.0
        %8099 = vmatmul.mubr.f32.gmra.mrb[0].mxu0 %v6686
        %v8100 = vpop.f32.mrb[0].mxu0
        %v8101 = vadd.f32 0.0, %v8100
        %v8102 = vpop.f32.mrb[0].mxu0
        %8103 = vmatprep.mubr.f32.mxu0 0.0
        %8104 = vmatmul.mubr.f32.gmra.mrb[0].mxu0 %v6688
        %v8105 = vpop.f32.mrb[0].mxu0
        %v8106 = vadd.f32 0.0, %v8105
        %v8107 = vpop.f32.mrb[0].mxu0
        %8108 = vmatprep.mubr.f32.mxu0 0.0
        %8109 = vmatmul.mubr.f32.gmra.mrb[0].mxu0 %v6690
        %v8110 = vpop.f32.mrb[0].mxu0
        %v8111 = vadd.f32 0.0, %v8110
        %v8112 = vpop.f32.mrb[0].mxu0
        %8113 = vmatprep.mubr.f32.mxu0 0.0
        %8114 = vmatmul.mubr.f32.gmra.mrb[0].mxu0 %v6692
        %v8115 = vpop.f32.mrb[0].mxu0
        %v8116 = vadd.f32 0.0, %v8115
        %v8117 = vpop.f32.mrb[0].mxu0
        %8118 = vmatprep.mubr.f32.mxu0 0.0
        %8119 = vmatmul.mubr.f32.gmra.mrb[0].mxu0 %v6694
        %v8120 = vpop.f32.mrb[0].mxu0
        %v8121 = vadd.f32 0.0, %v8120
        %v8122 = vpop.f32.mrb[0].mxu0
        %8123 = vmatprep.mubr.f32.mxu0 0.0
        %8124 = vmatmul.mubr.f32.gmra.mrb[0].mxu0 %v7905
        %v8125 = vpop.f32.mrb[0].mxu0
        %v8126 = vadd.f32 0.0, %v8125
        %v8127 = vpop.f32.mrb[0].mxu0
        %8128 = vmatprep.mubr.f32.mxu0 0.0
        %8129 = vmatmul.mubr.f32.gmra.mrb[0].mxu0 %v7907
        %v8130 = vpop.f32.mrb[0].mxu0
        %v8131 = vadd.f32 0.0, %v8130
        %v8132 = vpop.f32.mrb[0].mxu0
        %8133 = vdwg.mxu0
        %v8134 = vadd.f32 %v7870, %v7976
        %v8135 = vadd.f32 %v7871, %v7981
        %v8136 = vadd.f32 %v7872, %v7986
        %v8137 = vadd.f32 %v7873, %v7991
        %v8138 = vadd.f32 %v7874, %v7996
        %v8139 = vadd.f32 %v7875, %v8001
        %v8140 = vadd.f32 %v7876, %v8006
        %v8141 = vadd.f32 %v7877, %v8011
        %v8142 = vadd.f32 %v7878, %v8016
        %v8143 = vadd.f32 %v7879, %v8021
        %v8144 = vadd.f32 %v7880, %v8026
        %v8145 = vadd.f32 %v7881, %v8031
        %v8146 = vadd.f32 %v7882, %v8036
        %v8147 = vadd.f32 %v7883, %v8041
        %v8148 = vadd.f32 %v7884, %v8046
        %v8149 = vadd.f32 %v7885, %v8051
        %v8150 = vadd.f32 %v7886, %v8056
        %v8151 = vadd.f32 %v7887, %v8061
        %v8152 = vadd.f32 %v7888, %v8066
        %v8153 = vadd.f32 %v7889, %v8071
        %v8154 = vadd.f32 %v7890, %v8076
        %v8155 = vadd.f32 %v7891, %v8081
        %v8156 = vadd.f32 %v7892, %v8086
        %v8157 = vadd.f32 %v7893, %v8091
        %v8158 = vadd.f32 %v7894, %v8096
        %v8159 = vadd.f32 %v7895, %v8101
        %v8160 = vadd.f32 %v7896, %v8106
        %v8161 = vadd.f32 %v7897, %v8111
        %v8162 = vadd.f32 %v7898, %v8116
        %v8163 = vadd.f32 %v7899, %v8121
        %v8164 = vadd.f32 %v7900, %v8126
        %v8165 = vadd.f32 %v7901, %v8131
        %v8167 = vrot.slane %v6492, 1
        %v8168 = vrot.slane %v6493, 1
        %v8169 = vsel %vm1382, %v8167, %v8168
        %v8170 = vrot.slane %v6494, 1
        %v8171 = vsel %vm1382, %v8168, %v8170
        %s8172 = scalar_lea.vmem %s5, 80
        %v8173 = vld [vmem:[%s8172] sm:$0xff]
        %v8174 = vld [vmem:[%s8172 + $0x8] sm:$0xff]
        %v8175 = vsel %vm6394, %v8169, 0
        %v8177 = vsel %vm6394, %v8171, 0
        %8179 = vmatprep.subr.mxu0 0.0
        %8180 = vmatpush1.msra.mxu0 %v8173
        %8181 = vmatprep.subr.mxu0 0.0
        %8182 = vmatpush1.msra.mxu0 %v8174
        %8183 = vmatprep.subr.mxu0 0.0
        %8184 = vmatpush1.msra.mxu0 0.0
        %8185 = vmatprep.subr.mxu0 0.0
        %8186 = vmatpush1.msra.mxu0 0.0
        %8187 = vmatprep.subr.mxu0 0.0
        %8188 = vmatpush1.msra.mxu0 0.0
        %8189 = vmatprep.subr.mxu0 0.0
        %8190 = vmatpush1.msra.mxu0 0.0
        %8191 = vmatprep.subr.mxu0 0.0
        %8192 = vmatpush1.msra.mxu0 0.0
        %8193 = vmatprep.subr.mxu0 0.0
        %8194 = vmatpush1.msra.mxu0 0.0
        %8195 = vmatprep.subr.mxu0 0.0
        %8196 = vmatpush1.msra.mxu0 0.0
        %8197 = vmatprep.subr.mxu0 0.0
        %8198 = vmatpush1.msra.mxu0 0.0
        %8199 = vmatprep.subr.mxu0 0.0
        %8200 = vmatpush1.msra.mxu0 0.0
        %8201 = vmatprep.subr.mxu0 0.0
        %8202 = vmatpush1.msra.mxu0 0.0
        %8203 = vmatprep.subr.mxu0 0.0
        %8204 = vmatpush1.msra.mxu0 0.0
        %8205 = vmatprep.subr.mxu0 0.0
        %8206 = vmatpush1.msra.mxu0 0.0
        %8207 = vmatprep.subr.mxu0 0.0
        %8208 = vmatpush1.msra.mxu0 0.0
        %8209 = vmatprep.subr.mxu0 0.0
        %8210 = vmatpush1.msra.mxu0 0.0
        %8211 = vmatprep.subr.mxu0 0.0
        %8212 = vmatpush1.msra.mxu0 0.0
        %8213 = vmatprep.subr.mxu0 0.0
        %8214 = vmatpush1.msra.mxu0 0.0
        %8215 = vmatprep.subr.mxu0 0.0
        %8216 = vmatpush1.msra.mxu0 0.0
        %8217 = vmatprep.subr.mxu0 0.0
        %8218 = vmatpush1.msra.mxu0 0.0
        %8219 = vmatprep.subr.mxu0 0.0
        %8220 = vmatpush1.msra.mxu0 0.0
        %8221 = vmatprep.subr.mxu0 0.0
        %8222 = vmatpush1.msra.mxu0 0.0
        %8223 = vmatprep.subr.mxu0 0.0
        %8224 = vmatpush1.msra.mxu0 0.0
        %8225 = vmatprep.subr.mxu0 0.0
        %8226 = vmatpush1.msra.mxu0 0.0
        %8227 = vmatprep.subr.mxu0 0.0
        %8228 = vmatpush1.msra.mxu0 0.0
        %8229 = vmatprep.subr.mxu0 0.0
        %8230 = vmatpush1.msra.mxu0 0.0
        %8231 = vmatprep.subr.mxu0 0.0
        %8232 = vmatpush1.msra.mxu0 0.0
        %8233 = vmatprep.subr.mxu0 0.0
        %8234 = vmatpush1.msra.mxu0 0.0
        %8235 = vmatprep.subr.mxu0 0.0
        %8236 = vmatpush1.msra.mxu0 0.0
        %8237 = vmatprep.subr.mxu0 0.0
        %8238 = vmatpush1.msra.mxu0 0.0
        %8239 = vmatprep.subr.mxu0 0.0
        %8240 = vmatpush1.msra.mxu0 0.0
        %8241 = vmatprep.subr.mxu0 0.0
        %8242 = vmatpush1.msra.mxu0 0.0
        %8243 = vmatprep.mubr.f32.mxu0 0.0
        %8244 = vmatmul.mubr.f32.gmra.mrb[0].mxu0 %v7313
        %v8245 = vpop.f32.mrb[0].mxu0
        %v8246 = vadd.f32 0.0, %v8245
        %v8247 = vpop.f32.mrb[0].mxu0
        %8248 = vmatprep.mubr.f32.mxu0 0.0
        %8249 = vmatmul.mubr.f32.gmra.mrb[0].mxu0 %v7315
        %v8250 = vpop.f32.mrb[0].mxu0
        %v8251 = vadd.f32 0.0, %v8250
        %v8252 = vpop.f32.mrb[0].mxu0
        %8253 = vmatprep.mubr.f32.mxu0 0.0
        %8254 = vmatmul.mubr.f32.gmra.mrb[0].mxu0 %v7317
        %v8255 = vpop.f32.mrb[0].mxu0
        %v8256 = vadd.f32 0.0, %v8255
        %v8257 = vpop.f32.mrb[0].mxu0
        %8258 = vmatprep.mubr.f32.mxu0 0.0
        %8259 = vmatmul.mubr.f32.gmra.mrb[0].mxu0 %v7319
        %v8260 = vpop.f32.mrb[0].mxu0
        %v8261 = vadd.f32 0.0, %v8260
        %v8262 = vpop.f32.mrb[0].mxu0
        %8263 = vmatprep.mubr.f32.mxu0 0.0
        %8264 = vmatmul.mubr.f32.gmra.mrb[0].mxu0 %v7321
        %v8265 = vpop.f32.mrb[0].mxu0
        %v8266 = vadd.f32 0.0, %v8265
        %v8267 = vpop.f32.mrb[0].mxu0
        %8268 = vmatprep.mubr.f32.mxu0 0.0
        %8269 = vmatmul.mubr.f32.gmra.mrb[0].mxu0 %v7323
        %v8270 = vpop.f32.mrb[0].mxu0
        %v8271 = vadd.f32 0.0, %v8270
        %v8272 = vpop.f32.mrb[0].mxu0
        %8273 = vmatprep.mubr.f32.mxu0 0.0
        %8274 = vmatmul.mubr.f32.gmra.mrb[0].mxu0 %v7325
        %v8275 = vpop.f32.mrb[0].mxu0
        %v8276 = vadd.f32 0.0, %v8275
        %v8277 = vpop.f32.mrb[0].mxu0
        %8278 = vmatprep.mubr.f32.mxu0 0.0
        %8279 = vmatmul.mubr.f32.gmra.mrb[0].mxu0 %v7327
        %v8280 = vpop.f32.mrb[0].mxu0
        %v8281 = vadd.f32 0.0, %v8280
        %v8282 = vpop.f32.mrb[0].mxu0
        %8283 = vmatprep.mubr.f32.mxu0 0.0
        %8284 = vmatmul.mubr.f32.gmra.mrb[0].mxu0 %v7329
        %v8285 = vpop.f32.mrb[0].mxu0
        %v8286 = vadd.f32 0.0, %v8285
        %v8287 = vpop.f32.mrb[0].mxu0
        %8288 = vmatprep.mubr.f32.mxu0 0.0
        %8289 = vmatmul.mubr.f32.gmra.mrb[0].mxu0 %v7331
        %v8290 = vpop.f32.mrb[0].mxu0
        %v8291 = vadd.f32 0.0, %v8290
        %v8292 = vpop.f32.mrb[0].mxu0
        %8293 = vmatprep.mubr.f32.mxu0 0.0
        %8294 = vmatmul.mubr.f32.gmra.mrb[0].mxu0 %v7333
        %v8295 = vpop.f32.mrb[0].mxu0
        %v8296 = vadd.f32 0.0, %v8295
        %v8297 = vpop.f32.mrb[0].mxu0
        %8298 = vmatprep.mubr.f32.mxu0 0.0
        %8299 = vmatmul.mubr.f32.gmra.mrb[0].mxu0 %v7335
        %v8300 = vpop.f32.mrb[0].mxu0
        %v8301 = vadd.f32 0.0, %v8300
        %v8302 = vpop.f32.mrb[0].mxu0
        %8303 = vmatprep.mubr.f32.mxu0 0.0
        %8304 = vmatmul.mubr.f32.gmra.mrb[0].mxu0 %v7337
        %v8305 = vpop.f32.mrb[0].mxu0
        %v8306 = vadd.f32 0.0, %v8305
        %v8307 = vpop.f32.mrb[0].mxu0
        %8308 = vmatprep.mubr.f32.mxu0 0.0
        %8309 = vmatmul.mubr.f32.gmra.mrb[0].mxu0 %v7339
        %v8310 = vpop.f32.mrb[0].mxu0
        %v8311 = vadd.f32 0.0, %v8310
        %v8312 = vpop.f32.mrb[0].mxu0
        %8313 = vmatprep.mubr.f32.mxu0 0.0
        %8314 = vmatmul.mubr.f32.gmra.mrb[0].mxu0 %v7341
        %v8315 = vpop.f32.mrb[0].mxu0
        %v8316 = vadd.f32 0.0, %v8315
        %v8317 = vpop.f32.mrb[0].mxu0
        %8318 = vmatprep.mubr.f32.mxu0 0.0
        %8319 = vmatmul.mubr.f32.gmra.mrb[0].mxu0 %v7343
        %v8320 = vpop.f32.mrb[0].mxu0
        %v8321 = vadd.f32 0.0, %v8320
        %v8322 = vpop.f32.mrb[0].mxu0
        %8323 = vmatprep.mubr.f32.mxu0 0.0
        %8324 = vmatmul.mubr.f32.gmra.mrb[0].mxu0 %v7345
        %v8325 = vpop.f32.mrb[0].mxu0
        %v8326 = vadd.f32 0.0, %v8325
        %v8327 = vpop.f32.mrb[0].mxu0
        %8328 = vmatprep.mubr.f32.mxu0 0.0
        %8329 = vmatmul.mubr.f32.gmra.mrb[0].mxu0 %v7347
        %v8330 = vpop.f32.mrb[0].mxu0
        %v8331 = vadd.f32 0.0, %v8330
        %v8332 = vpop.f32.mrb[0].mxu0
        %8333 = vmatprep.mubr.f32.mxu0 0.0
        %8334 = vmatmul.mubr.f32.gmra.mrb[0].mxu0 %v7349
        %v8335 = vpop.f32.mrb[0].mxu0
        %v8336 = vadd.f32 0.0, %v8335
        %v8337 = vpop.f32.mrb[0].mxu0
        %8338 = vmatprep.mubr.f32.mxu0 0.0
        %8339 = vmatmul.mubr.f32.gmra.mrb[0].mxu0 %v7351
        %v8340 = vpop.f32.mrb[0].mxu0
        %v8341 = vadd.f32 0.0, %v8340
        %v8342 = vpop.f32.mrb[0].mxu0
        %8343 = vmatprep.mubr.f32.mxu0 0.0
        %8344 = vmatmul.mubr.f32.gmra.mrb[0].mxu0 %v7353
        %v8345 = vpop.f32.mrb[0].mxu0
        %v8346 = vadd.f32 0.0, %v8345
        %v8347 = vpop.f32.mrb[0].mxu0
        %8348 = vmatprep.mubr.f32.mxu0 0.0
        %8349 = vmatmul.mubr.f32.gmra.mrb[0].mxu0 %v7355
        %v8350 = vpop.f32.mrb[0].mxu0
        %v8351 = vadd.f32 0.0, %v8350
        %v8352 = vpop.f32.mrb[0].mxu0
        %8353 = vmatprep.mubr.f32.mxu0 0.0
        %8354 = vmatmul.mubr.f32.gmra.mrb[0].mxu0 %v7357
        %v8355 = vpop.f32.mrb[0].mxu0
        %v8356 = vadd.f32 0.0, %v8355
        %v8357 = vpop.f32.mrb[0].mxu0
        %8358 = vmatprep.mubr.f32.mxu0 0.0
        %8359 = vmatmul.mubr.f32.gmra.mrb[0].mxu0 %v7359
        %v8360 = vpop.f32.mrb[0].mxu0
        %v8361 = vadd.f32 0.0, %v8360
        %v8362 = vpop.f32.mrb[0].mxu0
        %8363 = vmatprep.mubr.f32.mxu0 0.0
        %8364 = vmatmul.mubr.f32.gmra.mrb[0].mxu0 %v7361
        %v8365 = vpop.f32.mrb[0].mxu0
        %v8366 = vadd.f32 0.0, %v8365
        %v8367 = vpop.f32.mrb[0].mxu0
        %8368 = vmatprep.mubr.f32.mxu0 0.0
        %8369 = vmatmul.mubr.f32.gmra.mrb[0].mxu0 %v7363
        %v8370 = vpop.f32.mrb[0].mxu0
        %v8371 = vadd.f32 0.0, %v8370
        %v8372 = vpop.f32.mrb[0].mxu0
        %8373 = vmatprep.mubr.f32.mxu0 0.0
        %8374 = vmatmul.mubr.f32.gmra.mrb[0].mxu0 %v7365
        %v8375 = vpop.f32.mrb[0].mxu0
        %v8376 = vadd.f32 0.0, %v8375
        %v8377 = vpop.f32.mrb[0].mxu0
        %8378 = vmatprep.mubr.f32.mxu0 0.0
        %8379 = vmatmul.mubr.f32.gmra.mrb[0].mxu0 %v7367
        %v8380 = vpop.f32.mrb[0].mxu0
        %v8381 = vadd.f32 0.0, %v8380
        %v8382 = vpop.f32.mrb[0].mxu0
        %8383 = vmatprep.mubr.f32.mxu0 0.0
        %8384 = vmatmul.mubr.f32.gmra.mrb[0].mxu0 %v7369
        %v8385 = vpop.f32.mrb[0].mxu0
        %v8386 = vadd.f32 0.0, %v8385
        %v8387 = vpop.f32.mrb[0].mxu0
        %8388 = vmatprep.mubr.f32.mxu0 0.0
        %8389 = vmatmul.mubr.f32.gmra.mrb[0].mxu0 %v7371
        %v8390 = vpop.f32.mrb[0].mxu0
        %v8391 = vadd.f32 0.0, %v8390
        %v8392 = vpop.f32.mrb[0].mxu0
        %8393 = vmatprep.mubr.f32.mxu0 0.0
        %8394 = vmatmul.mubr.f32.gmra.mrb[0].mxu0 %v8175
        %v8395 = vpop.f32.mrb[0].mxu0
        %v8396 = vadd.f32 0.0, %v8395
        %v8397 = vpop.f32.mrb[0].mxu0
        %8398 = vmatprep.mubr.f32.mxu0 0.0
        %8399 = vmatmul.mubr.f32.gmra.mrb[0].mxu0 %v8177
        %v8400 = vpop.f32.mrb[0].mxu0
        %v8401 = vadd.f32 0.0, %v8400
        %v8402 = vpop.f32.mrb[0].mxu0
        %8403 = vdwg.mxu0
        %v8404 = vadd.f32 %v8134, %v8246
        %v8405 = vadd.f32 %v8135, %v8251
        %v8406 = vadd.f32 %v8136, %v8256
        %v8407 = vadd.f32 %v8137, %v8261
        %v8408 = vadd.f32 %v8138, %v8266
        %v8409 = vadd.f32 %v8139, %v8271
        %v8410 = vadd.f32 %v8140, %v8276
        %v8411 = vadd.f32 %v8141, %v8281
        %v8412 = vadd.f32 %v8142, %v8286
        %v8413 = vadd.f32 %v8143, %v8291
        %v8414 = vadd.f32 %v8144, %v8296
        %v8415 = vadd.f32 %v8145, %v8301
        %v8416 = vadd.f32 %v8146, %v8306
        %v8417 = vadd.f32 %v8147, %v8311
        %v8418 = vadd.f32 %v8148, %v8316
        %v8419 = vadd.f32 %v8149, %v8321
        %v8420 = vadd.f32 %v8150, %v8326
        %v8421 = vadd.f32 %v8151, %v8331
        %v8422 = vadd.f32 %v8152, %v8336
        %v8423 = vadd.f32 %v8153, %v8341
        %v8424 = vadd.f32 %v8154, %v8346
        %v8425 = vadd.f32 %v8155, %v8351
        %v8426 = vadd.f32 %v8156, %v8356
        %v8427 = vadd.f32 %v8157, %v8361
        %v8428 = vadd.f32 %v8158, %v8366
        %v8429 = vadd.f32 %v8159, %v8371
        %v8430 = vadd.f32 %v8160, %v8376
        %v8431 = vadd.f32 %v8161, %v8381
        %v8432 = vadd.f32 %v8162, %v8386
        %v8433 = vadd.f32 %v8163, %v8391
        %v8434 = vadd.f32 %v8164, %v8396
        %v8435 = vadd.f32 %v8165, %v8401
        %v8439 = vrot.slane %v6495, 7
        %v8440 = vrot.slane %v6496, 7
        %v8441 = vsel %vm697, %v8439, %v8440
        %v8442 = vrot.slane %v6497, 7
        %v8443 = vsel %vm697, %v8440, %v8442
        %s8444 = scalar_lea.vmem %s5, 96
        %v8445 = vld [vmem:[%s8444] sm:$0xff]
        %v8446 = vld [vmem:[%s8444 + $0x8] sm:$0xff]
        %v8447 = vsel %vm6394, %v8441, 0
        %v8449 = vsel %vm6394, %v8443, 0
        %8451 = vmatprep.subr.mxu0 0.0
        %8452 = vmatpush1.msra.mxu0 %v8445
        %8453 = vmatprep.subr.mxu0 0.0
        %8454 = vmatpush1.msra.mxu0 %v8446
        %8455 = vmatprep.subr.mxu0 0.0
        %8456 = vmatpush1.msra.mxu0 0.0
        %8457 = vmatprep.subr.mxu0 0.0
        %8458 = vmatpush1.msra.mxu0 0.0
        %8459 = vmatprep.subr.mxu0 0.0
        %8460 = vmatpush1.msra.mxu0 0.0
        %8461 = vmatprep.subr.mxu0 0.0
        %8462 = vmatpush1.msra.mxu0 0.0
        %8463 = vmatprep.subr.mxu0 0.0
        %8464 = vmatpush1.msra.mxu0 0.0
        %8465 = vmatprep.subr.mxu0 0.0
        %8466 = vmatpush1.msra.mxu0 0.0
        %8467 = vmatprep.subr.mxu0 0.0
        %8468 = vmatpush1.msra.mxu0 0.0
        %8469 = vmatprep.subr.mxu0 0.0
        %8470 = vmatpush1.msra.mxu0 0.0
        %8471 = vmatprep.subr.mxu0 0.0
        %8472 = vmatpush1.msra.mxu0 0.0
        %8473 = vmatprep.subr.mxu0 0.0
        %8474 = vmatpush1.msra.mxu0 0.0
        %8475 = vmatprep.subr.mxu0 0.0
        %8476 = vmatpush1.msra.mxu0 0.0
        %8477 = vmatprep.subr.mxu0 0.0
        %8478 = vmatpush1.msra.mxu0 0.0
        %8479 = vmatprep.subr.mxu0 0.0
        %8480 = vmatpush1.msra.mxu0 0.0
        %8481 = vmatprep.subr.mxu0 0.0
        %8482 = vmatpush1.msra.mxu0 0.0
        %8483 = vmatprep.subr.mxu0 0.0
        %8484 = vmatpush1.msra.mxu0 0.0
        %8485 = vmatprep.subr.mxu0 0.0
        %8486 = vmatpush1.msra.mxu0 0.0
        %8487 = vmatprep.subr.mxu0 0.0
        %8488 = vmatpush1.msra.mxu0 0.0
        %8489 = vmatprep.subr.mxu0 0.0
        %8490 = vmatpush1.msra.mxu0 0.0
        %8491 = vmatprep.subr.mxu0 0.0
        %8492 = vmatpush1.msra.mxu0 0.0
        %8493 = vmatprep.subr.mxu0 0.0
        %8494 = vmatpush1.msra.mxu0 0.0
        %8495 = vmatprep.subr.mxu0 0.0
        %8496 = vmatpush1.msra.mxu0 0.0
        %8497 = vmatprep.subr.mxu0 0.0
        %8498 = vmatpush1.msra.mxu0 0.0
        %8499 = vmatprep.subr.mxu0 0.0
        %8500 = vmatpush1.msra.mxu0 0.0
        %8501 = vmatprep.subr.mxu0 0.0
        %8502 = vmatpush1.msra.mxu0 0.0
        %8503 = vmatprep.subr.mxu0 0.0
        %8504 = vmatpush1.msra.mxu0 0.0
        %8505 = vmatprep.subr.mxu0 0.0
        %8506 = vmatpush1.msra.mxu0 0.0
        %8507 = vmatprep.subr.mxu0 0.0
        %8508 = vmatpush1.msra.mxu0 0.0
        %8509 = vmatprep.subr.mxu0 0.0
        %8510 = vmatpush1.msra.mxu0 0.0
        %8511 = vmatprep.subr.mxu0 0.0
        %8512 = vmatpush1.msra.mxu0 0.0
        %8513 = vmatprep.subr.mxu0 0.0
        %8514 = vmatpush1.msra.mxu0 0.0
        %8515 = vmatprep.mubr.f32.mxu0 0.0
        %8516 = vmatmul.mubr.f32.gmra.mrb[0].mxu0 %v6929
        %v8517 = vpop.f32.mrb[0].mxu0
        %v8518 = vadd.f32 0.0, %v8517
        %v8519 = vpop.f32.mrb[0].mxu0
        %8520 = vmatprep.mubr.f32.mxu0 0.0
        %8521 = vmatmul.mubr.f32.gmra.mrb[0].mxu0 %v6931
        %v8522 = vpop.f32.mrb[0].mxu0
        %v8523 = vadd.f32 0.0, %v8522
        %v8524 = vpop.f32.mrb[0].mxu0
        %8525 = vmatprep.mubr.f32.mxu0 0.0
        %8526 = vmatmul.mubr.f32.gmra.mrb[0].mxu0 %v6933
        %v8527 = vpop.f32.mrb[0].mxu0
        %v8528 = vadd.f32 0.0, %v8527
        %v8529 = vpop.f32.mrb[0].mxu0
        %8530 = vmatprep.mubr.f32.mxu0 0.0
        %8531 = vmatmul.mubr.f32.gmra.mrb[0].mxu0 %v6935
        %v8532 = vpop.f32.mrb[0].mxu0
        %v8533 = vadd.f32 0.0, %v8532
        %v8534 = vpop.f32.mrb[0].mxu0
        %8535 = vmatprep.mubr.f32.mxu0 0.0
        %8536 = vmatmul.mubr.f32.gmra.mrb[0].mxu0 %v6937
        %v8537 = vpop.f32.mrb[0].mxu0
        %v8538 = vadd.f32 0.0, %v8537
        %v8539 = vpop.f32.mrb[0].mxu0
        %8540 = vmatprep.mubr.f32.mxu0 0.0
        %8541 = vmatmul.mubr.f32.gmra.mrb[0].mxu0 %v6939
        %v8542 = vpop.f32.mrb[0].mxu0
        %v8543 = vadd.f32 0.0, %v8542
        %v8544 = vpop.f32.mrb[0].mxu0
        %8545 = vmatprep.mubr.f32.mxu0 0.0
        %8546 = vmatmul.mubr.f32.gmra.mrb[0].mxu0 %v6941
        %v8547 = vpop.f32.mrb[0].mxu0
        %v8548 = vadd.f32 0.0, %v8547
        %v8549 = vpop.f32.mrb[0].mxu0
        %8550 = vmatprep.mubr.f32.mxu0 0.0
        %8551 = vmatmul.mubr.f32.gmra.mrb[0].mxu0 %v6943
        %v8552 = vpop.f32.mrb[0].mxu0
        %v8553 = vadd.f32 0.0, %v8552
        %v8554 = vpop.f32.mrb[0].mxu0
        %8555 = vmatprep.mubr.f32.mxu0 0.0
        %8556 = vmatmul.mubr.f32.gmra.mrb[0].mxu0 %v6945
        %v8557 = vpop.f32.mrb[0].mxu0
        %v8558 = vadd.f32 0.0, %v8557
        %v8559 = vpop.f32.mrb[0].mxu0
        %8560 = vmatprep.mubr.f32.mxu0 0.0
        %8561 = vmatmul.mubr.f32.gmra.mrb[0].mxu0 %v6947
        %v8562 = vpop.f32.mrb[0].mxu0
        %v8563 = vadd.f32 0.0, %v8562
        %v8564 = vpop.f32.mrb[0].mxu0
        %8565 = vmatprep.mubr.f32.mxu0 0.0
        %8566 = vmatmul.mubr.f32.gmra.mrb[0].mxu0 %v6949
        %v8567 = vpop.f32.mrb[0].mxu0
        %v8568 = vadd.f32 0.0, %v8567
        %v8569 = vpop.f32.mrb[0].mxu0
        %8570 = vmatprep.mubr.f32.mxu0 0.0
        %8571 = vmatmul.mubr.f32.gmra.mrb[0].mxu0 %v6951
        %v8572 = vpop.f32.mrb[0].mxu0
        %v8573 = vadd.f32 0.0, %v8572
        %v8574 = vpop.f32.mrb[0].mxu0
        %8575 = vmatprep.mubr.f32.mxu0 0.0
        %8576 = vmatmul.mubr.f32.gmra.mrb[0].mxu0 %v6953
        %v8577 = vpop.f32.mrb[0].mxu0
        %v8578 = vadd.f32 0.0, %v8577
        %v8579 = vpop.f32.mrb[0].mxu0
        %8580 = vmatprep.mubr.f32.mxu0 0.0
        %8581 = vmatmul.mubr.f32.gmra.mrb[0].mxu0 %v6955
        %v8582 = vpop.f32.mrb[0].mxu0
        %v8583 = vadd.f32 0.0, %v8582
        %v8584 = vpop.f32.mrb[0].mxu0
        %8585 = vmatprep.mubr.f32.mxu0 0.0
        %8586 = vmatmul.mubr.f32.gmra.mrb[0].mxu0 %v6957
        %v8587 = vpop.f32.mrb[0].mxu0
        %v8588 = vadd.f32 0.0, %v8587
        %v8589 = vpop.f32.mrb[0].mxu0
        %8590 = vmatprep.mubr.f32.mxu0 0.0
        %8591 = vmatmul.mubr.f32.gmra.mrb[0].mxu0 %v6959
        %v8592 = vpop.f32.mrb[0].mxu0
        %v8593 = vadd.f32 0.0, %v8592
        %v8594 = vpop.f32.mrb[0].mxu0
        %8595 = vmatprep.mubr.f32.mxu0 0.0
        %8596 = vmatmul.mubr.f32.gmra.mrb[0].mxu0 %v6961
        %v8597 = vpop.f32.mrb[0].mxu0
        %v8598 = vadd.f32 0.0, %v8597
        %v8599 = vpop.f32.mrb[0].mxu0
        %8600 = vmatprep.mubr.f32.mxu0 0.0
        %8601 = vmatmul.mubr.f32.gmra.mrb[0].mxu0 %v6963
        %v8602 = vpop.f32.mrb[0].mxu0
        %v8603 = vadd.f32 0.0, %v8602
        %v8604 = vpop.f32.mrb[0].mxu0
        %8605 = vmatprep.mubr.f32.mxu0 0.0
        %8606 = vmatmul.mubr.f32.gmra.mrb[0].mxu0 %v6965
        %v8607 = vpop.f32.mrb[0].mxu0
        %v8608 = vadd.f32 0.0, %v8607
        %v8609 = vpop.f32.mrb[0].mxu0
        %8610 = vmatprep.mubr.f32.mxu0 0.0
        %8611 = vmatmul.mubr.f32.gmra.mrb[0].mxu0 %v6967
        %v8612 = vpop.f32.mrb[0].mxu0
        %v8613 = vadd.f32 0.0, %v8612
        %v8614 = vpop.f32.mrb[0].mxu0
        %8615 = vmatprep.mubr.f32.mxu0 0.0
        %8616 = vmatmul.mubr.f32.gmra.mrb[0].mxu0 %v6969
        %v8617 = vpop.f32.mrb[0].mxu0
        %v8618 = vadd.f32 0.0, %v8617
        %v8619 = vpop.f32.mrb[0].mxu0
        %8620 = vmatprep.mubr.f32.mxu0 0.0
        %8621 = vmatmul.mubr.f32.gmra.mrb[0].mxu0 %v6971
        %v8622 = vpop.f32.mrb[0].mxu0
        %v8623 = vadd.f32 0.0, %v8622
        %v8624 = vpop.f32.mrb[0].mxu0
        %8625 = vmatprep.mubr.f32.mxu0 0.0
        %8626 = vmatmul.mubr.f32.gmra.mrb[0].mxu0 %v6973
        %v8627 = vpop.f32.mrb[0].mxu0
        %v8628 = vadd.f32 0.0, %v8627
        %v8629 = vpop.f32.mrb[0].mxu0
        %8630 = vmatprep.mubr.f32.mxu0 0.0
        %8631 = vmatmul.mubr.f32.gmra.mrb[0].mxu0 %v6975
        %v8632 = vpop.f32.mrb[0].mxu0
        %v8633 = vadd.f32 0.0, %v8632
        %v8634 = vpop.f32.mrb[0].mxu0
        %8635 = vmatprep.mubr.f32.mxu0 0.0
        %8636 = vmatmul.mubr.f32.gmra.mrb[0].mxu0 %v6977
        %v8637 = vpop.f32.mrb[0].mxu0
        %v8638 = vadd.f32 0.0, %v8637
        %v8639 = vpop.f32.mrb[0].mxu0
        %8640 = vmatprep.mubr.f32.mxu0 0.0
        %8641 = vmatmul.mubr.f32.gmra.mrb[0].mxu0 %v6979
        %v8642 = vpop.f32.mrb[0].mxu0
        %v8643 = vadd.f32 0.0, %v8642
        %v8644 = vpop.f32.mrb[0].mxu0
        %8645 = vmatprep.mubr.f32.mxu0 0.0
        %8646 = vmatmul.mubr.f32.gmra.mrb[0].mxu0 %v6981
        %v8647 = vpop.f32.mrb[0].mxu0
        %v8648 = vadd.f32 0.0, %v8647
        %v8649 = vpop.f32.mrb[0].mxu0
        %8650 = vmatprep.mubr.f32.mxu0 0.0
        %8651 = vmatmul.mubr.f32.gmra.mrb[0].mxu0 %v6983
        %v8652 = vpop.f32.mrb[0].mxu0
        %v8653 = vadd.f32 0.0, %v8652
        %v8654 = vpop.f32.mrb[0].mxu0
        %8655 = vmatprep.mubr.f32.mxu0 0.0
        %8656 = vmatmul.mubr.f32.gmra.mrb[0].mxu0 %v7641
        %v8657 = vpop.f32.mrb[0].mxu0
        %v8658 = vadd.f32 0.0, %v8657
        %v8659 = vpop.f32.mrb[0].mxu0
        %8660 = vmatprep.mubr.f32.mxu0 0.0
        %8661 = vmatmul.mubr.f32.gmra.mrb[0].mxu0 %v7643
        %v8662 = vpop.f32.mrb[0].mxu0
        %v8663 = vadd.f32 0.0, %v8662
        %v8664 = vpop.f32.mrb[0].mxu0
        %8665 = vmatprep.mubr.f32.mxu0 0.0
        %8666 = vmatmul.mubr.f32.gmra.mrb[0].mxu0 %v8447
        %v8667 = vpop.f32.mrb[0].mxu0
        %v8668 = vadd.f32 0.0, %v8667
        %v8669 = vpop.f32.mrb[0].mxu0
        %8670 = vmatprep.mubr.f32.mxu0 0.0
        %8671 = vmatmul.mubr.f32.gmra.mrb[0].mxu0 %v8449
        %v8672 = vpop.f32.mrb[0].mxu0
        %v8673 = vadd.f32 0.0, %v8672
        %v8674 = vpop.f32.mrb[0].mxu0
        %8675 = vdwg.mxu0
        %v8676 = vadd.f32 %v8404, %v8518
        %v8677 = vadd.f32 %v8405, %v8523
        %v8678 = vadd.f32 %v8406, %v8528
        %v8679 = vadd.f32 %v8407, %v8533
        %v8680 = vadd.f32 %v8408, %v8538
        %v8681 = vadd.f32 %v8409, %v8543
        %v8682 = vadd.f32 %v8410, %v8548
        %v8683 = vadd.f32 %v8411, %v8553
        %v8684 = vadd.f32 %v8412, %v8558
        %v8685 = vadd.f32 %v8413, %v8563
        %v8686 = vadd.f32 %v8414, %v8568
        %v8687 = vadd.f32 %v8415, %v8573
        %v8688 = vadd.f32 %v8416, %v8578
        %v8689 = vadd.f32 %v8417, %v8583
        %v8690 = vadd.f32 %v8418, %v8588
        %v8691 = vadd.f32 %v8419, %v8593
        %v8692 = vadd.f32 %v8420, %v8598
        %v8693 = vadd.f32 %v8421, %v8603
        %v8694 = vadd.f32 %v8422, %v8608
        %v8695 = vadd.f32 %v8423, %v8613
        %v8696 = vadd.f32 %v8424, %v8618
        %v8697 = vadd.f32 %v8425, %v8623
        %v8698 = vadd.f32 %v8426, %v8628
        %v8699 = vadd.f32 %v8427, %v8633
        %v8700 = vadd.f32 %v8428, %v8638
        %v8701 = vadd.f32 %v8429, %v8643
        %v8702 = vadd.f32 %v8430, %v8648
        %v8703 = vadd.f32 %v8431, %v8653
        %v8704 = vadd.f32 %v8432, %v8658
        %v8705 = vadd.f32 %v8433, %v8663
        %v8706 = vadd.f32 %v8434, %v8668
        %v8707 = vadd.f32 %v8435, %v8673
        %s8708 = scalar_lea.vmem %s5, 112
        %v8709 = vld [vmem:[%s8708] sm:$0xff]
        %v8710 = vld [vmem:[%s8708 + $0x8] sm:$0xff]
        %v8711 = vsel %vm6394, %v6496, 0
        %v8713 = vsel %vm6394, %v6497, 0
        %8715 = vmatprep.subr.mxu0 0.0
        %8716 = vmatpush1.msra.mxu0 %v8709
        %8717 = vmatprep.subr.mxu0 0.0
        %8718 = vmatpush1.msra.mxu0 %v8710
        %8719 = vmatprep.subr.mxu0 0.0
        %8720 = vmatpush1.msra.mxu0 0.0
        %8721 = vmatprep.subr.mxu0 0.0
        %8722 = vmatpush1.msra.mxu0 0.0
        %8723 = vmatprep.subr.mxu0 0.0
        %8724 = vmatpush1.msra.mxu0 0.0
        %8725 = vmatprep.subr.mxu0 0.0
        %8726 = vmatpush1.msra.mxu0 0.0
        %8727 = vmatprep.subr.mxu0 0.0
        %8728 = vmatpush1.msra.mxu0 0.0
        %8729 = vmatprep.subr.mxu0 0.0
        %8730 = vmatpush1.msra.mxu0 0.0
        %8731 = vmatprep.subr.mxu0 0.0
        %8732 = vmatpush1.msra.mxu0 0.0
        %8733 = vmatprep.subr.mxu0 0.0
        %8734 = vmatpush1.msra.mxu0 0.0
        %8735 = vmatprep.subr.mxu0 0.0
        %8736 = vmatpush1.msra.mxu0 0.0
        %8737 = vmatprep.subr.mxu0 0.0
        %8738 = vmatpush1.msra.mxu0 0.0
        %8739 = vmatprep.subr.mxu0 0.0
        %8740 = vmatpush1.msra.mxu0 0.0
        %8741 = vmatprep.subr.mxu0 0.0
        %8742 = vmatpush1.msra.mxu0 0.0
        %8743 = vmatprep.subr.mxu0 0.0
        %8744 = vmatpush1.msra.mxu0 0.0
        %8745 = vmatprep.subr.mxu0 0.0
        %8746 = vmatpush1.msra.mxu0 0.0
        %8747 = vmatprep.subr.mxu0 0.0
        %8748 = vmatpush1.msra.mxu0 0.0
        %8749 = vmatprep.subr.mxu0 0.0
        %8750 = vmatpush1.msra.mxu0 0.0
        %8751 = vmatprep.subr.mxu0 0.0
        %8752 = vmatpush1.msra.mxu0 0.0
        %8753 = vmatprep.subr.mxu0 0.0
        %8754 = vmatpush1.msra.mxu0 0.0
        %8755 = vmatprep.subr.mxu0 0.0
        %8756 = vmatpush1.msra.mxu0 0.0
        %8757 = vmatprep.subr.mxu0 0.0
        %8758 = vmatpush1.msra.mxu0 0.0
        %8759 = vmatprep.subr.mxu0 0.0
        %8760 = vmatpush1.msra.mxu0 0.0
        %8761 = vmatprep.subr.mxu0 0.0
        %8762 = vmatpush1.msra.mxu0 0.0
        %8763 = vmatprep.subr.mxu0 0.0
        %8764 = vmatpush1.msra.mxu0 0.0
        %8765 = vmatprep.subr.mxu0 0.0
        %8766 = vmatpush1.msra.mxu0 0.0
        %8767 = vmatprep.subr.mxu0 0.0
        %8768 = vmatpush1.msra.mxu0 0.0
        %8769 = vmatprep.subr.mxu0 0.0
        %8770 = vmatpush1.msra.mxu0 0.0
        %8771 = vmatprep.subr.mxu0 0.0
        %8772 = vmatpush1.msra.mxu0 0.0
        %8773 = vmatprep.subr.mxu0 0.0
        %8774 = vmatpush1.msra.mxu0 0.0
        %8775 = vmatprep.subr.mxu0 0.0
        %8776 = vmatpush1.msra.mxu0 0.0
        %8777 = vmatprep.subr.mxu0 0.0
        %8778 = vmatpush1.msra.mxu0 0.0
        %8779 = vmatprep.mubr.f32.mxu0 0.0
        %8780 = vmatmul.mubr.f32.gmra.mrb[0].mxu0 %v6640
        %v8781 = vpop.f32.mrb[0].mxu0
        %v8782 = vadd.f32 0.0, %v8781
        %v8783 = vpop.f32.mrb[0].mxu0
        %8784 = vmatprep.mubr.f32.mxu0 0.0
        %8785 = vmatmul.mubr.f32.gmra.mrb[0].mxu0 %v6642
        %v8786 = vpop.f32.mrb[0].mxu0
        %v8787 = vadd.f32 0.0, %v8786
        %v8788 = vpop.f32.mrb[0].mxu0
        %8789 = vmatprep.mubr.f32.mxu0 0.0
        %8790 = vmatmul.mubr.f32.gmra.mrb[0].mxu0 %v6644
        %v8791 = vpop.f32.mrb[0].mxu0
        %v8792 = vadd.f32 0.0, %v8791
        %v8793 = vpop.f32.mrb[0].mxu0
        %8794 = vmatprep.mubr.f32.mxu0 0.0
        %8795 = vmatmul.mubr.f32.gmra.mrb[0].mxu0 %v6646
        %v8796 = vpop.f32.mrb[0].mxu0
        %v8797 = vadd.f32 0.0, %v8796
        %v8798 = vpop.f32.mrb[0].mxu0
        %8799 = vmatprep.mubr.f32.mxu0 0.0
        %8800 = vmatmul.mubr.f32.gmra.mrb[0].mxu0 %v6648
        %v8801 = vpop.f32.mrb[0].mxu0
        %v8802 = vadd.f32 0.0, %v8801
        %v8803 = vpop.f32.mrb[0].mxu0
        %8804 = vmatprep.mubr.f32.mxu0 0.0
        %8805 = vmatmul.mubr.f32.gmra.mrb[0].mxu0 %v6650
        %v8806 = vpop.f32.mrb[0].mxu0
        %v8807 = vadd.f32 0.0, %v8806
        %v8808 = vpop.f32.mrb[0].mxu0
        %8809 = vmatprep.mubr.f32.mxu0 0.0
        %8810 = vmatmul.mubr.f32.gmra.mrb[0].mxu0 %v6652
        %v8811 = vpop.f32.mrb[0].mxu0
        %v8812 = vadd.f32 0.0, %v8811
        %v8813 = vpop.f32.mrb[0].mxu0
        %8814 = vmatprep.mubr.f32.mxu0 0.0
        %8815 = vmatmul.mubr.f32.gmra.mrb[0].mxu0 %v6654
        %v8816 = vpop.f32.mrb[0].mxu0
        %v8817 = vadd.f32 0.0, %v8816
        %v8818 = vpop.f32.mrb[0].mxu0
        %8819 = vmatprep.mubr.f32.mxu0 0.0
        %8820 = vmatmul.mubr.f32.gmra.mrb[0].mxu0 %v6656
        %v8821 = vpop.f32.mrb[0].mxu0
        %v8822 = vadd.f32 0.0, %v8821
        %v8823 = vpop.f32.mrb[0].mxu0
        %8824 = vmatprep.mubr.f32.mxu0 0.0
        %8825 = vmatmul.mubr.f32.gmra.mrb[0].mxu0 %v6658
        %v8826 = vpop.f32.mrb[0].mxu0
        %v8827 = vadd.f32 0.0, %v8826
        %v8828 = vpop.f32.mrb[0].mxu0
        %8829 = vmatprep.mubr.f32.mxu0 0.0
        %8830 = vmatmul.mubr.f32.gmra.mrb[0].mxu0 %v6660
        %v8831 = vpop.f32.mrb[0].mxu0
        %v8832 = vadd.f32 0.0, %v8831
        %v8833 = vpop.f32.mrb[0].mxu0
        %8834 = vmatprep.mubr.f32.mxu0 0.0
        %8835 = vmatmul.mubr.f32.gmra.mrb[0].mxu0 %v6662
        %v8836 = vpop.f32.mrb[0].mxu0
        %v8837 = vadd.f32 0.0, %v8836
        %v8838 = vpop.f32.mrb[0].mxu0
        %8839 = vmatprep.mubr.f32.mxu0 0.0
        %8840 = vmatmul.mubr.f32.gmra.mrb[0].mxu0 %v6664
        %v8841 = vpop.f32.mrb[0].mxu0
        %v8842 = vadd.f32 0.0, %v8841
        %v8843 = vpop.f32.mrb[0].mxu0
        %8844 = vmatprep.mubr.f32.mxu0 0.0
        %8845 = vmatmul.mubr.f32.gmra.mrb[0].mxu0 %v6666
        %v8846 = vpop.f32.mrb[0].mxu0
        %v8847 = vadd.f32 0.0, %v8846
        %v8848 = vpop.f32.mrb[0].mxu0
        %8849 = vmatprep.mubr.f32.mxu0 0.0
        %8850 = vmatmul.mubr.f32.gmra.mrb[0].mxu0 %v6668
        %v8851 = vpop.f32.mrb[0].mxu0
        %v8852 = vadd.f32 0.0, %v8851
        %v8853 = vpop.f32.mrb[0].mxu0
        %8854 = vmatprep.mubr.f32.mxu0 0.0
        %8855 = vmatmul.mubr.f32.gmra.mrb[0].mxu0 %v6670
        %v8856 = vpop.f32.mrb[0].mxu0
        %v8857 = vadd.f32 0.0, %v8856
        %v8858 = vpop.f32.mrb[0].mxu0
        %8859 = vmatprep.mubr.f32.mxu0 0.0
        %8860 = vmatmul.mubr.f32.gmra.mrb[0].mxu0 %v6672
        %v8861 = vpop.f32.mrb[0].mxu0
        %v8862 = vadd.f32 0.0, %v8861
        %v8863 = vpop.f32.mrb[0].mxu0
        %8864 = vmatprep.mubr.f32.mxu0 0.0
        %8865 = vmatmul.mubr.f32.gmra.mrb[0].mxu0 %v6674
        %v8866 = vpop.f32.mrb[0].mxu0
        %v8867 = vadd.f32 0.0, %v8866
        %v8868 = vpop.f32.mrb[0].mxu0
        %8869 = vmatprep.mubr.f32.mxu0 0.0
        %8870 = vmatmul.mubr.f32.gmra.mrb[0].mxu0 %v6676
        %v8871 = vpop.f32.mrb[0].mxu0
        %v8872 = vadd.f32 0.0, %v8871
        %v8873 = vpop.f32.mrb[0].mxu0
        %8874 = vmatprep.mubr.f32.mxu0 0.0
        %8875 = vmatmul.mubr.f32.gmra.mrb[0].mxu0 %v6678
        %v8876 = vpop.f32.mrb[0].mxu0
        %v8877 = vadd.f32 0.0, %v8876
        %v8878 = vpop.f32.mrb[0].mxu0
        %8879 = vmatprep.mubr.f32.mxu0 0.0
        %8880 = vmatmul.mubr.f32.gmra.mrb[0].mxu0 %v6680
        %v8881 = vpop.f32.mrb[0].mxu0
        %v8882 = vadd.f32 0.0, %v8881
        %v8883 = vpop.f32.mrb[0].mxu0
        %8884 = vmatprep.mubr.f32.mxu0 0.0
        %8885 = vmatmul.mubr.f32.gmra.mrb[0].mxu0 %v6682
        %v8886 = vpop.f32.mrb[0].mxu0
        %v8887 = vadd.f32 0.0, %v8886
        %v8888 = vpop.f32.mrb[0].mxu0
        %8889 = vmatprep.mubr.f32.mxu0 0.0
        %8890 = vmatmul.mubr.f32.gmra.mrb[0].mxu0 %v6684
        %v8891 = vpop.f32.mrb[0].mxu0
        %v8892 = vadd.f32 0.0, %v8891
        %v8893 = vpop.f32.mrb[0].mxu0
        %8894 = vmatprep.mubr.f32.mxu0 0.0
        %8895 = vmatmul.mubr.f32.gmra.mrb[0].mxu0 %v6686
        %v8896 = vpop.f32.mrb[0].mxu0
        %v8897 = vadd.f32 0.0, %v8896
        %v8898 = vpop.f32.mrb[0].mxu0
        %8899 = vmatprep.mubr.f32.mxu0 0.0
        %8900 = vmatmul.mubr.f32.gmra.mrb[0].mxu0 %v6688
        %v8901 = vpop.f32.mrb[0].mxu0
        %v8902 = vadd.f32 0.0, %v8901
        %v8903 = vpop.f32.mrb[0].mxu0
        %8904 = vmatprep.mubr.f32.mxu0 0.0
        %8905 = vmatmul.mubr.f32.gmra.mrb[0].mxu0 %v6690
        %v8906 = vpop.f32.mrb[0].mxu0
        %v8907 = vadd.f32 0.0, %v8906
        %v8908 = vpop.f32.mrb[0].mxu0
        %8909 = vmatprep.mubr.f32.mxu0 0.0
        %8910 = vmatmul.mubr.f32.gmra.mrb[0].mxu0 %v6692
        %v8911 = vpop.f32.mrb[0].mxu0
        %v8912 = vadd.f32 0.0, %v8911
        %v8913 = vpop.f32.mrb[0].mxu0
        %8914 = vmatprep.mubr.f32.mxu0 0.0
        %8915 = vmatmul.mubr.f32.gmra.mrb[0].mxu0 %v6694
        %v8916 = vpop.f32.mrb[0].mxu0
        %v8917 = vadd.f32 0.0, %v8916
        %v8918 = vpop.f32.mrb[0].mxu0
        %8919 = vmatprep.mubr.f32.mxu0 0.0
        %8920 = vmatmul.mubr.f32.gmra.mrb[0].mxu0 %v7905
        %v8921 = vpop.f32.mrb[0].mxu0
        %v8922 = vadd.f32 0.0, %v8921
        %v8923 = vpop.f32.mrb[0].mxu0
        %8924 = vmatprep.mubr.f32.mxu0 0.0
        %8925 = vmatmul.mubr.f32.gmra.mrb[0].mxu0 %v7907
        %v8926 = vpop.f32.mrb[0].mxu0
        %v8927 = vadd.f32 0.0, %v8926
        %v8928 = vpop.f32.mrb[0].mxu0
        %8929 = vmatprep.mubr.f32.mxu0 0.0
        %8930 = vmatmul.mubr.f32.gmra.mrb[0].mxu0 %v8711
        %v8931 = vpop.f32.mrb[0].mxu0
        %v8932 = vadd.f32 0.0, %v8931
        %v8933 = vpop.f32.mrb[0].mxu0
        %8934 = vmatprep.mubr.f32.mxu0 0.0
        %8935 = vmatmul.mubr.f32.gmra.mrb[0].mxu0 %v8713
        %v8936 = vpop.f32.mrb[0].mxu0
        %v8937 = vadd.f32 0.0, %v8936
        %v8938 = vpop.f32.mrb[0].mxu0
        %8939 = vdwg.mxu0
        %v8940 = vadd.f32 %v8676, %v8782
        %v8941 = vadd.f32 %v8677, %v8787
        %v8942 = vadd.f32 %v8678, %v8792
        %v8943 = vadd.f32 %v8679, %v8797
        %v8944 = vadd.f32 %v8680, %v8802
        %v8945 = vadd.f32 %v8681, %v8807
        %v8946 = vadd.f32 %v8682, %v8812
        %v8947 = vadd.f32 %v8683, %v8817
        %v8948 = vadd.f32 %v8684, %v8822
        %v8949 = vadd.f32 %v8685, %v8827
        %v8950 = vadd.f32 %v8686, %v8832
        %v8951 = vadd.f32 %v8687, %v8837
        %v8952 = vadd.f32 %v8688, %v8842
        %v8953 = vadd.f32 %v8689, %v8847
        %v8954 = vadd.f32 %v8690, %v8852
        %v8955 = vadd.f32 %v8691, %v8857
        %v8956 = vadd.f32 %v8692, %v8862
        %v8957 = vadd.f32 %v8693, %v8867
        %v8958 = vadd.f32 %v8694, %v8872
        %v8959 = vadd.f32 %v8695, %v8877
        %v8960 = vadd.f32 %v8696, %v8882
        %v8961 = vadd.f32 %v8697, %v8887
        %v8962 = vadd.f32 %v8698, %v8892
        %v8963 = vadd.f32 %v8699, %v8897
        %v8964 = vadd.f32 %v8700, %v8902
        %v8965 = vadd.f32 %v8701, %v8907
        %v8966 = vadd.f32 %v8702, %v8912
        %v8967 = vadd.f32 %v8703, %v8917
        %v8968 = vadd.f32 %v8704, %v8922
        %v8969 = vadd.f32 %v8705, %v8927
        %v8970 = vadd.f32 %v8706, %v8932
        %v8971 = vadd.f32 %v8707, %v8937
        %v8973 = vrot.slane %v6496, 1
        %v8974 = vrot.slane %v6497, 1
        %v8975 = vsel %vm1382, %v8973, %v8974
        %v8976 = vrot.slane %v6498, 1
        %v8977 = vsel %vm1382, %v8974, %v8976
        %s8978 = scalar_lea.vmem %s5, 128
        %v8979 = vld [vmem:[%s8978] sm:$0xff]
        %v8980 = vld [vmem:[%s8978 + $0x8] sm:$0xff]
        %v8981 = vsel %vm6394, %v8975, 0
        %v8983 = vsel %vm6394, %v8977, 0
        %8985 = vmatprep.subr.mxu0 0.0
        %8986 = vmatpush1.msra.mxu0 %v8979
        %8987 = vmatprep.subr.mxu0 0.0
        %8988 = vmatpush1.msra.mxu0 %v8980
        %8989 = vmatprep.subr.mxu0 0.0
        %8990 = vmatpush1.msra.mxu0 0.0
        %8991 = vmatprep.subr.mxu0 0.0
        %8992 = vmatpush1.msra.mxu0 0.0
        %8993 = vmatprep.subr.mxu0 0.0
        %8994 = vmatpush1.msra.mxu0 0.0
        %8995 = vmatprep.subr.mxu0 0.0
        %8996 = vmatpush1.msra.mxu0 0.0
        %8997 = vmatprep.subr.mxu0 0.0
        %8998 = vmatpush1.msra.mxu0 0.0
        %8999 = vmatprep.subr.mxu0 0.0
        %9000 = vmatpush1.msra.mxu0 0.0
        %9001 = vmatprep.subr.mxu0 0.0
        %9002 = vmatpush1.msra.mxu0 0.0
        %9003 = vmatprep.subr.mxu0 0.0
        %9004 = vmatpush1.msra.mxu0 0.0
        %9005 = vmatprep.subr.mxu0 0.0
        %9006 = vmatpush1.msra.mxu0 0.0
        %9007 = vmatprep.subr.mxu0 0.0
        %9008 = vmatpush1.msra.mxu0 0.0
        %9009 = vmatprep.subr.mxu0 0.0
        %9010 = vmatpush1.msra.mxu0 0.0
        %9011 = vmatprep.subr.mxu0 0.0
        %9012 = vmatpush1.msra.mxu0 0.0
        %9013 = vmatprep.subr.mxu0 0.0
        %9014 = vmatpush1.msra.mxu0 0.0
        %9015 = vmatprep.subr.mxu0 0.0
        %9016 = vmatpush1.msra.mxu0 0.0
        %9017 = vmatprep.subr.mxu0 0.0
        %9018 = vmatpush1.msra.mxu0 0.0
        %9019 = vmatprep.subr.mxu0 0.0
        %9020 = vmatpush1.msra.mxu0 0.0
        %9021 = vmatprep.subr.mxu0 0.0
        %9022 = vmatpush1.msra.mxu0 0.0
        %9023 = vmatprep.subr.mxu0 0.0
        %9024 = vmatpush1.msra.mxu0 0.0
        %9025 = vmatprep.subr.mxu0 0.0
        %9026 = vmatpush1.msra.mxu0 0.0
        %9027 = vmatprep.subr.mxu0 0.0
        %9028 = vmatpush1.msra.mxu0 0.0
        %9029 = vmatprep.subr.mxu0 0.0
        %9030 = vmatpush1.msra.mxu0 0.0
        %9031 = vmatprep.subr.mxu0 0.0
        %9032 = vmatpush1.msra.mxu0 0.0
        %9033 = vmatprep.subr.mxu0 0.0
        %9034 = vmatpush1.msra.mxu0 0.0
        %9035 = vmatprep.subr.mxu0 0.0
        %9036 = vmatpush1.msra.mxu0 0.0
        %9037 = vmatprep.subr.mxu0 0.0
        %9038 = vmatpush1.msra.mxu0 0.0
        %9039 = vmatprep.subr.mxu0 0.0
        %9040 = vmatpush1.msra.mxu0 0.0
        %9041 = vmatprep.subr.mxu0 0.0
        %9042 = vmatpush1.msra.mxu0 0.0
        %9043 = vmatprep.subr.mxu0 0.0
        %9044 = vmatpush1.msra.mxu0 0.0
        %9045 = vmatprep.subr.mxu0 0.0
        %9046 = vmatpush1.msra.mxu0 0.0
        %9047 = vmatprep.subr.mxu0 0.0
        %9048 = vmatpush1.msra.mxu0 0.0
        %9049 = vmatprep.mubr.f32.mxu0 0.0
        %9050 = vmatmul.mubr.f32.gmra.mrb[0].mxu0 %v7317
        %v9051 = vpop.f32.mrb[0].mxu0
        %v9052 = vadd.f32 0.0, %v9051
        %v9053 = vpop.f32.mrb[0].mxu0
        %9054 = vmatprep.mubr.f32.mxu0 0.0
        %9055 = vmatmul.mubr.f32.gmra.mrb[0].mxu0 %v7319
        %v9056 = vpop.f32.mrb[0].mxu0
        %v9057 = vadd.f32 0.0, %v9056
        %v9058 = vpop.f32.mrb[0].mxu0
        %9059 = vmatprep.mubr.f32.mxu0 0.0
        %9060 = vmatmul.mubr.f32.gmra.mrb[0].mxu0 %v7321
        %v9061 = vpop.f32.mrb[0].mxu0
        %v9062 = vadd.f32 0.0, %v9061
        %v9063 = vpop.f32.mrb[0].mxu0
        %9064 = vmatprep.mubr.f32.mxu0 0.0
        %9065 = vmatmul.mubr.f32.gmra.mrb[0].mxu0 %v7323
        %v9066 = vpop.f32.mrb[0].mxu0
        %v9067 = vadd.f32 0.0, %v9066
        %v9068 = vpop.f32.mrb[0].mxu0
        %9069 = vmatprep.mubr.f32.mxu0 0.0
        %9070 = vmatmul.mubr.f32.gmra.mrb[0].mxu0 %v7325
        %v9071 = vpop.f32.mrb[0].mxu0
        %v9072 = vadd.f32 0.0, %v9071
        %v9073 = vpop.f32.mrb[0].mxu0
        %9074 = vmatprep.mubr.f32.mxu0 0.0
        %9075 = vmatmul.mubr.f32.gmra.mrb[0].mxu0 %v7327
        %v9076 = vpop.f32.mrb[0].mxu0
        %v9077 = vadd.f32 0.0, %v9076
        %v9078 = vpop.f32.mrb[0].mxu0
        %9079 = vmatprep.mubr.f32.mxu0 0.0
        %9080 = vmatmul.mubr.f32.gmra.mrb[0].mxu0 %v7329
        %v9081 = vpop.f32.mrb[0].mxu0
        %v9082 = vadd.f32 0.0, %v9081
        %v9083 = vpop.f32.mrb[0].mxu0
        %9084 = vmatprep.mubr.f32.mxu0 0.0
        %9085 = vmatmul.mubr.f32.gmra.mrb[0].mxu0 %v7331
        %v9086 = vpop.f32.mrb[0].mxu0
        %v9087 = vadd.f32 0.0, %v9086
        %v9088 = vpop.f32.mrb[0].mxu0
        %9089 = vmatprep.mubr.f32.mxu0 0.0
        %9090 = vmatmul.mubr.f32.gmra.mrb[0].mxu0 %v7333
        %v9091 = vpop.f32.mrb[0].mxu0
        %v9092 = vadd.f32 0.0, %v9091
        %v9093 = vpop.f32.mrb[0].mxu0
        %9094 = vmatprep.mubr.f32.mxu0 0.0
        %9095 = vmatmul.mubr.f32.gmra.mrb[0].mxu0 %v7335
        %v9096 = vpop.f32.mrb[0].mxu0
        %v9097 = vadd.f32 0.0, %v9096
        %v9098 = vpop.f32.mrb[0].mxu0
        %9099 = vmatprep.mubr.f32.mxu0 0.0
        %9100 = vmatmul.mubr.f32.gmra.mrb[0].mxu0 %v7337
        %v9101 = vpop.f32.mrb[0].mxu0
        %v9102 = vadd.f32 0.0, %v9101
        %v9103 = vpop.f32.mrb[0].mxu0
        %9104 = vmatprep.mubr.f32.mxu0 0.0
        %9105 = vmatmul.mubr.f32.gmra.mrb[0].mxu0 %v7339
        %v9106 = vpop.f32.mrb[0].mxu0
        %v9107 = vadd.f32 0.0, %v9106
        %v9108 = vpop.f32.mrb[0].mxu0
        %9109 = vmatprep.mubr.f32.mxu0 0.0
        %9110 = vmatmul.mubr.f32.gmra.mrb[0].mxu0 %v7341
        %v9111 = vpop.f32.mrb[0].mxu0
        %v9112 = vadd.f32 0.0, %v9111
        %v9113 = vpop.f32.mrb[0].mxu0
        %9114 = vmatprep.mubr.f32.mxu0 0.0
        %9115 = vmatmul.mubr.f32.gmra.mrb[0].mxu0 %v7343
        %v9116 = vpop.f32.mrb[0].mxu0
        %v9117 = vadd.f32 0.0, %v9116
        %v9118 = vpop.f32.mrb[0].mxu0
        %9119 = vmatprep.mubr.f32.mxu0 0.0
        %9120 = vmatmul.mubr.f32.gmra.mrb[0].mxu0 %v7345
        %v9121 = vpop.f32.mrb[0].mxu0
        %v9122 = vadd.f32 0.0, %v9121
        %v9123 = vpop.f32.mrb[0].mxu0
        %9124 = vmatprep.mubr.f32.mxu0 0.0
        %9125 = vmatmul.mubr.f32.gmra.mrb[0].mxu0 %v7347
        %v9126 = vpop.f32.mrb[0].mxu0
        %v9127 = vadd.f32 0.0, %v9126
        %v9128 = vpop.f32.mrb[0].mxu0
        %9129 = vmatprep.mubr.f32.mxu0 0.0
        %9130 = vmatmul.mubr.f32.gmra.mrb[0].mxu0 %v7349
        %v9131 = vpop.f32.mrb[0].mxu0
        %v9132 = vadd.f32 0.0, %v9131
        %v9133 = vpop.f32.mrb[0].mxu0
        %9134 = vmatprep.mubr.f32.mxu0 0.0
        %9135 = vmatmul.mubr.f32.gmra.mrb[0].mxu0 %v7351
        %v9136 = vpop.f32.mrb[0].mxu0
        %v9137 = vadd.f32 0.0, %v9136
        %v9138 = vpop.f32.mrb[0].mxu0
        %9139 = vmatprep.mubr.f32.mxu0 0.0
        %9140 = vmatmul.mubr.f32.gmra.mrb[0].mxu0 %v7353
        %v9141 = vpop.f32.mrb[0].mxu0
        %v9142 = vadd.f32 0.0, %v9141
        %v9143 = vpop.f32.mrb[0].mxu0
        %9144 = vmatprep.mubr.f32.mxu0 0.0
        %9145 = vmatmul.mubr.f32.gmra.mrb[0].mxu0 %v7355
        %v9146 = vpop.f32.mrb[0].mxu0
        %v9147 = vadd.f32 0.0, %v9146
        %v9148 = vpop.f32.mrb[0].mxu0
        %9149 = vmatprep.mubr.f32.mxu0 0.0
        %9150 = vmatmul.mubr.f32.gmra.mrb[0].mxu0 %v7357
        %v9151 = vpop.f32.mrb[0].mxu0
        %v9152 = vadd.f32 0.0, %v9151
        %v9153 = vpop.f32.mrb[0].mxu0
        %9154 = vmatprep.mubr.f32.mxu0 0.0
        %9155 = vmatmul.mubr.f32.gmra.mrb[0].mxu0 %v7359
        %v9156 = vpop.f32.mrb[0].mxu0
        %v9157 = vadd.f32 0.0, %v9156
        %v9158 = vpop.f32.mrb[0].mxu0
        %9159 = vmatprep.mubr.f32.mxu0 0.0
        %9160 = vmatmul.mubr.f32.gmra.mrb[0].mxu0 %v7361
        %v9161 = vpop.f32.mrb[0].mxu0
        %v9162 = vadd.f32 0.0, %v9161
        %v9163 = vpop.f32.mrb[0].mxu0
        %9164 = vmatprep.mubr.f32.mxu0 0.0
        %9165 = vmatmul.mubr.f32.gmra.mrb[0].mxu0 %v7363
        %v9166 = vpop.f32.mrb[0].mxu0
        %v9167 = vadd.f32 0.0, %v9166
        %v9168 = vpop.f32.mrb[0].mxu0
        %9169 = vmatprep.mubr.f32.mxu0 0.0
        %9170 = vmatmul.mubr.f32.gmra.mrb[0].mxu0 %v7365
        %v9171 = vpop.f32.mrb[0].mxu0
        %v9172 = vadd.f32 0.0, %v9171
        %v9173 = vpop.f32.mrb[0].mxu0
        %9174 = vmatprep.mubr.f32.mxu0 0.0
        %9175 = vmatmul.mubr.f32.gmra.mrb[0].mxu0 %v7367
        %v9176 = vpop.f32.mrb[0].mxu0
        %v9177 = vadd.f32 0.0, %v9176
        %v9178 = vpop.f32.mrb[0].mxu0
        %9179 = vmatprep.mubr.f32.mxu0 0.0
        %9180 = vmatmul.mubr.f32.gmra.mrb[0].mxu0 %v7369
        %v9181 = vpop.f32.mrb[0].mxu0
        %v9182 = vadd.f32 0.0, %v9181
        %v9183 = vpop.f32.mrb[0].mxu0
        %9184 = vmatprep.mubr.f32.mxu0 0.0
        %9185 = vmatmul.mubr.f32.gmra.mrb[0].mxu0 %v7371
        %v9186 = vpop.f32.mrb[0].mxu0
        %v9187 = vadd.f32 0.0, %v9186
        %v9188 = vpop.f32.mrb[0].mxu0
        %9189 = vmatprep.mubr.f32.mxu0 0.0
        %9190 = vmatmul.mubr.f32.gmra.mrb[0].mxu0 %v8175
        %v9191 = vpop.f32.mrb[0].mxu0
        %v9192 = vadd.f32 0.0, %v9191
        %v9193 = vpop.f32.mrb[0].mxu0
        %9194 = vmatprep.mubr.f32.mxu0 0.0
        %9195 = vmatmul.mubr.f32.gmra.mrb[0].mxu0 %v8177
        %v9196 = vpop.f32.mrb[0].mxu0
        %v9197 = vadd.f32 0.0, %v9196
        %v9198 = vpop.f32.mrb[0].mxu0
        %9199 = vmatprep.mubr.f32.mxu0 0.0
        %9200 = vmatmul.mubr.f32.gmra.mrb[0].mxu0 %v8981
        %v9201 = vpop.f32.mrb[0].mxu0
        %v9202 = vadd.f32 0.0, %v9201
        %v9203 = vpop.f32.mrb[0].mxu0
        %9204 = vmatprep.mubr.f32.mxu0 0.0
        %9205 = vmatmul.mubr.f32.gmra.mrb[0].mxu0 %v8983
        %v9206 = vpop.f32.mrb[0].mxu0
        %v9207 = vadd.f32 0.0, %v9206
        %v9208 = vpop.f32.mrb[0].mxu0
        %9209 = vdwg.mxu0
        %v9210 = vadd.f32 %v8940, %v9052
        %v9211 = vadd.f32 %v8941, %v9057
        %v9212 = vadd.f32 %v8942, %v9062
        %v9213 = vadd.f32 %v8943, %v9067
        %v9214 = vadd.f32 %v8944, %v9072
        %v9215 = vadd.f32 %v8945, %v9077
        %v9216 = vadd.f32 %v8946, %v9082
        %v9217 = vadd.f32 %v8947, %v9087
        %v9218 = vadd.f32 %v8948, %v9092
        %v9219 = vadd.f32 %v8949, %v9097
        %v9220 = vadd.f32 %v8950, %v9102
        %v9221 = vadd.f32 %v8951, %v9107
        %v9222 = vadd.f32 %v8952, %v9112
        %v9223 = vadd.f32 %v8953, %v9117
        %v9224 = vadd.f32 %v8954, %v9122
        %v9225 = vadd.f32 %v8955, %v9127
        %v9226 = vadd.f32 %v8956, %v9132
        %v9227 = vadd.f32 %v8957, %v9137
        %v9228 = vadd.f32 %v8958, %v9142
        %v9229 = vadd.f32 %v8959, %v9147
        %v9230 = vadd.f32 %v8960, %v9152
        %v9231 = vadd.f32 %v8961, %v9157
        %v9232 = vadd.f32 %v8962, %v9162
        %v9233 = vadd.f32 %v8963, %v9167
        %v9234 = vadd.f32 %v8964, %v9172
        %v9235 = vadd.f32 %v8965, %v9177
        %v9236 = vadd.f32 %v8966, %v9182
        %v9237 = vadd.f32 %v8967, %v9187
        %v9238 = vadd.f32 %v8968, %v9192
        %v9239 = vadd.f32 %v8969, %v9197
        %v9240 = vadd.f32 %v8970, %v9202
        %v9241 = vadd.f32 %v8971, %v9207
        %v9242 = vld [vmem:[%s6] sm:$0x1]
        %v9244 = vlaneseq
        %v9245 = vshrl.u32 %v9244, 7
        %v9246 = vsub.s32 0, %v9245
        %v9247 = vrot.slane %v9242, %v9246
        %v9249 = vadd.f32 %v9210, %v9247
        %v9250 = vadd.f32 %v9211, %v9247
        %v9251 = vadd.f32 %v9212, %v9247
        %v9252 = vadd.f32 %v9213, %v9247
        %v9253 = vadd.f32 %v9214, %v9247
        %v9254 = vadd.f32 %v9215, %v9247
        %v9255 = vadd.f32 %v9216, %v9247
        %v9256 = vadd.f32 %v9217, %v9247
        %v9257 = vadd.f32 %v9218, %v9247
        %v9258 = vadd.f32 %v9219, %v9247
        %v9259 = vadd.f32 %v9220, %v9247
        %v9260 = vadd.f32 %v9221, %v9247
        %v9261 = vadd.f32 %v9222, %v9247
        %v9262 = vadd.f32 %v9223, %v9247
        %v9263 = vadd.f32 %v9224, %v9247
        %v9264 = vadd.f32 %v9225, %v9247
        %v9265 = vadd.f32 %v9226, %v9247
        %v9266 = vadd.f32 %v9227, %v9247
        %v9267 = vadd.f32 %v9228, %v9247
        %v9268 = vadd.f32 %v9229, %v9247
        %v9269 = vadd.f32 %v9230, %v9247
        %v9270 = vadd.f32 %v9231, %v9247
        %v9271 = vadd.f32 %v9232, %v9247
        %v9272 = vadd.f32 %v9233, %v9247
        %v9273 = vadd.f32 %v9234, %v9247
        %v9274 = vadd.f32 %v9235, %v9247
        %v9275 = vadd.f32 %v9236, %v9247
        %v9276 = vadd.f32 %v9237, %v9247
        %v9277 = vadd.f32 %v9238, %v9247
        %v9278 = vadd.f32 %v9239, %v9247
        %v9279 = vadd.f32 %v9240, %v9247
        %v9280 = vadd.f32 %v9241, %v9247
        %v9281 = vmax.f32 %v9249, 0.0
        %v9282 = vmax.f32 %v9250, 0.0
        %v9283 = vmax.f32 %v9251, 0.0
        %v9284 = vmax.f32 %v9252, 0.0
        %v9285 = vmax.f32 %v9253, 0.0
        %v9286 = vmax.f32 %v9254, 0.0
        %v9287 = vmax.f32 %v9255, 0.0
        %v9288 = vmax.f32 %v9256, 0.0
        %v9289 = vmax.f32 %v9257, 0.0
        %v9290 = vmax.f32 %v9258, 0.0
        %v9291 = vmax.f32 %v9259, 0.0
        %v9292 = vmax.f32 %v9260, 0.0
        %v9293 = vmax.f32 %v9261, 0.0
        %v9294 = vmax.f32 %v9262, 0.0
        %v9295 = vmax.f32 %v9263, 0.0
        %v9296 = vmax.f32 %v9264, 0.0
        %v9297 = vmax.f32 %v9265, 0.0
        %v9298 = vmax.f32 %v9266, 0.0
        %v9299 = vmax.f32 %v9267, 0.0
        %v9300 = vmax.f32 %v9268, 0.0
        %v9301 = vmax.f32 %v9269, 0.0
        %v9302 = vmax.f32 %v9270, 0.0
        %v9303 = vmax.f32 %v9271, 0.0
        %v9304 = vmax.f32 %v9272, 0.0
        %v9305 = vmax.f32 %v9273, 0.0
        %v9306 = vmax.f32 %v9274, 0.0
        %v9307 = vmax.f32 %v9275, 0.0
        %v9308 = vmax.f32 %v9276, 0.0
        %v9309 = vmax.f32 %v9277, 0.0
        %v9310 = vmax.f32 %v9278, 0.0
        %v9311 = vmax.f32 %v9279, 0.0
        %v9312 = vmax.f32 %v9280, 0.0
        %v9313 = vsel %vm438, %v9281, 0.0
        %v9314 = vsel %vm438, %v9282, 0.0
        %v9315 = vadd.f32 %v9313, %v9314
        %v9316 = vsel %vm438, %v9283, 0.0
        %v9317 = vadd.f32 %v9315, %v9316
        %v9318 = vsel %vm438, %v9284, 0.0
        %v9319 = vadd.f32 %v9317, %v9318
        %v9320 = vsel %vm438, %v9285, 0.0
        %v9321 = vadd.f32 %v9319, %v9320
        %v9322 = vsel %vm438, %v9286, 0.0
        %v9323 = vadd.f32 %v9321, %v9322
        %v9324 = vsel %vm438, %v9287, 0.0
        %v9325 = vadd.f32 %v9323, %v9324
        %v9326 = vsel %vm438, %v9288, 0.0
        %v9327 = vadd.f32 %v9325, %v9326
        %v9328 = vsel %vm438, %v9289, 0.0
        %v9329 = vadd.f32 %v9327, %v9328
        %v9330 = vsel %vm438, %v9290, 0.0
        %v9331 = vadd.f32 %v9329, %v9330
        %v9332 = vsel %vm438, %v9291, 0.0
        %v9333 = vadd.f32 %v9331, %v9332
        %v9334 = vsel %vm438, %v9292, 0.0
        %v9335 = vadd.f32 %v9333, %v9334
        %v9336 = vsel %vm438, %v9293, 0.0
        %v9337 = vadd.f32 %v9335, %v9336
        %v9338 = vsel %vm438, %v9294, 0.0
        %v9339 = vadd.f32 %v9337, %v9338
        %v9340 = vsel %vm438, %v9295, 0.0
        %v9341 = vadd.f32 %v9339, %v9340
        %v9342 = vsel %vm438, %v9296, 0.0
        %v9343 = vadd.f32 %v9341, %v9342
        %v9344 = vsel %vm438, %v9297, 0.0
        %v9345 = vadd.f32 %v9343, %v9344
        %v9346 = vsel %vm438, %v9298, 0.0
        %v9347 = vadd.f32 %v9345, %v9346
        %v9348 = vsel %vm438, %v9299, 0.0
        %v9349 = vadd.f32 %v9347, %v9348
        %v9350 = vsel %vm438, %v9300, 0.0
        %v9351 = vadd.f32 %v9349, %v9350
        %v9352 = vsel %vm438, %v9301, 0.0
        %v9353 = vadd.f32 %v9351, %v9352
        %v9354 = vsel %vm438, %v9302, 0.0
        %v9355 = vadd.f32 %v9353, %v9354
        %v9356 = vsel %vm438, %v9303, 0.0
        %v9357 = vadd.f32 %v9355, %v9356
        %v9358 = vsel %vm438, %v9304, 0.0
        %v9359 = vadd.f32 %v9357, %v9358
        %v9360 = vsel %vm438, %v9305, 0.0
        %v9361 = vadd.f32 %v9359, %v9360
        %v9362 = vsel %vm438, %v9306, 0.0
        %v9363 = vadd.f32 %v9361, %v9362
        %v9364 = vsel %vm438, %v9307, 0.0
        %v9365 = vadd.f32 %v9363, %v9364
        %v9366 = vsel %vm438, %v9308, 0.0
        %v9367 = vadd.f32 %v9365, %v9366
        %v9368 = vsel %vm438, %v9309, 0.0
        %v9369 = vadd.f32 %v9367, %v9368
        %v9370 = vsel %vm438, %v9310, 0.0
        %v9371 = vadd.f32 %v9369, %v9370
        %v9372 = vsel %vm438, %v9311, 0.0
        %v9373 = vadd.f32 %v9371, %v9372
        %v9374 = vsel %vm438, %v9312, 0.0
        %v9375 = vadd.f32 %v9373, %v9374
        %v9376 = vrot.slane %v9375, 4
        %v9377 = vadd.f32 %v9375, %v9376
        %v9378 = vrot.slane %v9377, 2
        %v9379 = vadd.f32 %v9377, %v9378
        %v9380 = vrot.slane %v9379, 1
        %v9381 = vadd.f32 %v9379, %v9380
        %v9382 = vmul.f32 %v9381, 0.00390625
        %v9383 = vld [vmem:[%s7] sm:$0xff]
        %v9384 = vld [vmem:[%s7 + $0x8] sm:$0xff]
        %v9385 = vld [vmem:[%s7 + $0x10] sm:$0xff]
        %v9386 = vld [vmem:[%s7 + $0x18] sm:$0xff]
        %v9387 = vld [vmem:[%s8] sm:$0x1]
        %v9389 = vsel %vm438, %v9382, 0
        %9391 = vmatprep.subr.mxu0 0.0
        %9392 = vmatpush1.msra.mxu0 %v9383
        %9393 = vmatprep.subr.mxu0 0.0
        %9394 = vmatpush1.msra.mxu0 %v9384
        %9395 = vmatprep.subr.mxu0 0.0
        %9396 = vmatpush1.msra.mxu0 %v9385
        %9397 = vmatprep.subr.mxu0 0.0
        %9398 = vmatpush1.msra.mxu0 %v9386
        %9399 = vmatprep.subr.mxu0 0.0
        %9400 = vmatpush1.msra.mxu0 0.0
        %9401 = vmatprep.subr.mxu0 0.0
        %9402 = vmatpush1.msra.mxu0 0.0
        %9403 = vmatprep.subr.mxu0 0.0
        %9404 = vmatpush1.msra.mxu0 0.0
        %9405 = vmatprep.subr.mxu0 0.0
        %9406 = vmatpush1.msra.mxu0 0.0
        %9407 = vmatprep.subr.mxu0 0.0
        %9408 = vmatpush1.msra.mxu0 0.0
        %9409 = vmatprep.subr.mxu0 0.0
        %9410 = vmatpush1.msra.mxu0 0.0
        %9411 = vmatprep.subr.mxu0 0.0
        %9412 = vmatpush1.msra.mxu0 0.0
        %9413 = vmatprep.subr.mxu0 0.0
        %9414 = vmatpush1.msra.mxu0 0.0
        %9415 = vmatprep.subr.mxu0 0.0
        %9416 = vmatpush1.msra.mxu0 0.0
        %9417 = vmatprep.subr.mxu0 0.0
        %9418 = vmatpush1.msra.mxu0 0.0
        %9419 = vmatprep.subr.mxu0 0.0
        %9420 = vmatpush1.msra.mxu0 0.0
        %9421 = vmatprep.subr.mxu0 0.0
        %9422 = vmatpush1.msra.mxu0 0.0
        %9423 = vmatprep.subr.mxu0 0.0
        %9424 = vmatpush1.msra.mxu0 0.0
        %9425 = vmatprep.subr.mxu0 0.0
        %9426 = vmatpush1.msra.mxu0 0.0
        %9427 = vmatprep.subr.mxu0 0.0
        %9428 = vmatpush1.msra.mxu0 0.0
        %9429 = vmatprep.subr.mxu0 0.0
        %9430 = vmatpush1.msra.mxu0 0.0
        %9431 = vmatprep.subr.mxu0 0.0
        %9432 = vmatpush1.msra.mxu0 0.0
        %9433 = vmatprep.subr.mxu0 0.0
        %9434 = vmatpush1.msra.mxu0 0.0
        %9435 = vmatprep.subr.mxu0 0.0
        %9436 = vmatpush1.msra.mxu0 0.0
        %9437 = vmatprep.subr.mxu0 0.0
        %9438 = vmatpush1.msra.mxu0 0.0
        %9439 = vmatprep.subr.mxu0 0.0
        %9440 = vmatpush1.msra.mxu0 0.0
        %9441 = vmatprep.subr.mxu0 0.0
        %9442 = vmatpush1.msra.mxu0 0.0
        %9443 = vmatprep.subr.mxu0 0.0
        %9444 = vmatpush1.msra.mxu0 0.0
        %9445 = vmatprep.subr.mxu0 0.0
        %9446 = vmatpush1.msra.mxu0 0.0
        %9447 = vmatprep.subr.mxu0 0.0
        %9448 = vmatpush1.msra.mxu0 0.0
        %9449 = vmatprep.subr.mxu0 0.0
        %9450 = vmatpush1.msra.mxu0 0.0
        %9451 = vmatprep.subr.mxu0 0.0
        %9452 = vmatpush1.msra.mxu0 0.0
        %9453 = vmatprep.subr.mxu0 0.0
        %9454 = vmatpush1.msra.mxu0 0.0
        %9455 = vmatprep.mubr.f32.mxu0 0.0
        %9456 = vmatmul.mubr.f32.gmra.mrb[0].mxu0 %v9389
        %v9457 = vpop.f32.mrb[0].mxu0
        %v9458 = vadd.f32 %v9387, %v9457
        %v9459 = vpop.f32.mrb[0].mxu0
        %9460 = vdwg.mxu0
        %v9461 = vld [vmem:[%s9] sm:$0xff]
        %v9462 = vld [vmem:[%s9 + $0x8] sm:$0xff]
        %v9463 = vld [vmem:[%s9 + $0x10] sm:$0xff]
        %v9464 = vld [vmem:[%s9 + $0x18] sm:$0xff]
        %v9465 = vld [vmem:[%s10] sm:$0x1]
        %v9467 = vsel %vm438, %v9458, 0
        %9469 = vmatprep.subr.mxu0 0.0
        %9470 = vmatpush1.msra.mxu0 %v9461
        %9471 = vmatprep.subr.mxu0 0.0
        %9472 = vmatpush1.msra.mxu0 %v9462
        %9473 = vmatprep.subr.mxu0 0.0
        %9474 = vmatpush1.msra.mxu0 %v9463
        %9475 = vmatprep.subr.mxu0 0.0
        %9476 = vmatpush1.msra.mxu0 %v9464
        %9477 = vmatprep.subr.mxu0 0.0
        %9478 = vmatpush1.msra.mxu0 0.0
        %9479 = vmatprep.subr.mxu0 0.0
        %9480 = vmatpush1.msra.mxu0 0.0
        %9481 = vmatprep.subr.mxu0 0.0
        %9482 = vmatpush1.msra.mxu0 0.0
        %9483 = vmatprep.subr.mxu0 0.0
        %9484 = vmatpush1.msra.mxu0 0.0
        %9485 = vmatprep.subr.mxu0 0.0
        %9486 = vmatpush1.msra.mxu0 0.0
        %9487 = vmatprep.subr.mxu0 0.0
        %9488 = vmatpush1.msra.mxu0 0.0
        %9489 = vmatprep.subr.mxu0 0.0
        %9490 = vmatpush1.msra.mxu0 0.0
        %9491 = vmatprep.subr.mxu0 0.0
        %9492 = vmatpush1.msra.mxu0 0.0
        %9493 = vmatprep.subr.mxu0 0.0
        %9494 = vmatpush1.msra.mxu0 0.0
        %9495 = vmatprep.subr.mxu0 0.0
        %9496 = vmatpush1.msra.mxu0 0.0
        %9497 = vmatprep.subr.mxu0 0.0
        %9498 = vmatpush1.msra.mxu0 0.0
        %9499 = vmatprep.subr.mxu0 0.0
        %9500 = vmatpush1.msra.mxu0 0.0
        %9501 = vmatprep.subr.mxu0 0.0
        %9502 = vmatpush1.msra.mxu0 0.0
        %9503 = vmatprep.subr.mxu0 0.0
        %9504 = vmatpush1.msra.mxu0 0.0
        %9505 = vmatprep.subr.mxu0 0.0
        %9506 = vmatpush1.msra.mxu0 0.0
        %9507 = vmatprep.subr.mxu0 0.0
        %9508 = vmatpush1.msra.mxu0 0.0
        %9509 = vmatprep.subr.mxu0 0.0
        %9510 = vmatpush1.msra.mxu0 0.0
        %9511 = vmatprep.subr.mxu0 0.0
        %9512 = vmatpush1.msra.mxu0 0.0
        %9513 = vmatprep.subr.mxu0 0.0
        %9514 = vmatpush1.msra.mxu0 0.0
        %9515 = vmatprep.subr.mxu0 0.0
        %9516 = vmatpush1.msra.mxu0 0.0
        %9517 = vmatprep.subr.mxu0 0.0
        %9518 = vmatpush1.msra.mxu0 0.0
        %9519 = vmatprep.subr.mxu0 0.0
        %9520 = vmatpush1.msra.mxu0 0.0
        %9521 = vmatprep.subr.mxu0 0.0
        %9522 = vmatpush1.msra.mxu0 0.0
        %9523 = vmatprep.subr.mxu0 0.0
        %9524 = vmatpush1.msra.mxu0 0.0
        %9525 = vmatprep.subr.mxu0 0.0
        %9526 = vmatpush1.msra.mxu0 0.0
        %9527 = vmatprep.subr.mxu0 0.0
        %9528 = vmatpush1.msra.mxu0 0.0
        %9529 = vmatprep.subr.mxu0 0.0
        %9530 = vmatpush1.msra.mxu0 0.0
        %9531 = vmatprep.subr.mxu0 0.0
        %9532 = vmatpush1.msra.mxu0 0.0
        %9533 = vmatprep.mubr.f32.mxu0 0.0
        %9534 = vmatmul.mubr.f32.gmra.mrb[0].mxu0 %v9467
        %v9535 = vpop.f32.mrb[0].mxu0
        %v9536 = vadd.f32 %v9465, %v9535
        %v9537 = vpop.f32.mrb[0].mxu0
        %9538 = vdwg.mxu0
        %v9539 = vmax.f32 %v9536, 0.0
        %v9540 = vld [vmem:[%s11] sm:$0xff]
        %v9541 = vld [vmem:[%s11 + $0x8] sm:$0xff]
        %v9542 = vld [vmem:[%s11 + $0x10] sm:$0xff]
        %v9543 = vld [vmem:[%s11 + $0x18] sm:$0xff]
        %v9544 = vld [vmem:[%s12] sm:$0x1]
        %v9546 = vsel %vm438, %v9539, 0
        %9548 = vmatprep.subr.mxu0 0.0
        %9549 = vmatpush1.msra.mxu0 %v9540
        %9550 = vmatprep.subr.mxu0 0.0
        %9551 = vmatpush1.msra.mxu0 %v9541
        %9552 = vmatprep.subr.mxu0 0.0
        %9553 = vmatpush1.msra.mxu0 %v9542
        %9554 = vmatprep.subr.mxu0 0.0
        %9555 = vmatpush1.msra.mxu0 %v9543
        %9556 = vmatprep.subr.mxu0 0.0
        %9557 = vmatpush1.msra.mxu0 0.0
        %9558 = vmatprep.subr.mxu0 0.0
        %9559 = vmatpush1.msra.mxu0 0.0
        %9560 = vmatprep.subr.mxu0 0.0
        %9561 = vmatpush1.msra.mxu0 0.0
        %9562 = vmatprep.subr.mxu0 0.0
        %9563 = vmatpush1.msra.mxu0 0.0
        %9564 = vmatprep.subr.mxu0 0.0
        %9565 = vmatpush1.msra.mxu0 0.0
        %9566 = vmatprep.subr.mxu0 0.0
        %9567 = vmatpush1.msra.mxu0 0.0
        %9568 = vmatprep.subr.mxu0 0.0
        %9569 = vmatpush1.msra.mxu0 0.0
        %9570 = vmatprep.subr.mxu0 0.0
        %9571 = vmatpush1.msra.mxu0 0.0
        %9572 = vmatprep.subr.mxu0 0.0
        %9573 = vmatpush1.msra.mxu0 0.0
        %9574 = vmatprep.subr.mxu0 0.0
        %9575 = vmatpush1.msra.mxu0 0.0
        %9576 = vmatprep.subr.mxu0 0.0
        %9577 = vmatpush1.msra.mxu0 0.0
        %9578 = vmatprep.subr.mxu0 0.0
        %9579 = vmatpush1.msra.mxu0 0.0
        %9580 = vmatprep.subr.mxu0 0.0
        %9581 = vmatpush1.msra.mxu0 0.0
        %9582 = vmatprep.subr.mxu0 0.0
        %9583 = vmatpush1.msra.mxu0 0.0
        %9584 = vmatprep.subr.mxu0 0.0
        %9585 = vmatpush1.msra.mxu0 0.0
        %9586 = vmatprep.subr.mxu0 0.0
        %9587 = vmatpush1.msra.mxu0 0.0
        %9588 = vmatprep.subr.mxu0 0.0
        %9589 = vmatpush1.msra.mxu0 0.0
        %9590 = vmatprep.subr.mxu0 0.0
        %9591 = vmatpush1.msra.mxu0 0.0
        %9592 = vmatprep.subr.mxu0 0.0
        %9593 = vmatpush1.msra.mxu0 0.0
        %9594 = vmatprep.subr.mxu0 0.0
        %9595 = vmatpush1.msra.mxu0 0.0
        %9596 = vmatprep.subr.mxu0 0.0
        %9597 = vmatpush1.msra.mxu0 0.0
        %9598 = vmatprep.subr.mxu0 0.0
        %9599 = vmatpush1.msra.mxu0 0.0
        %9600 = vmatprep.subr.mxu0 0.0
        %9601 = vmatpush1.msra.mxu0 0.0
        %9602 = vmatprep.subr.mxu0 0.0
        %9603 = vmatpush1.msra.mxu0 0.0
        %9604 = vmatprep.subr.mxu0 0.0
        %9605 = vmatpush1.msra.mxu0 0.0
        %9606 = vmatprep.subr.mxu0 0.0
        %9607 = vmatpush1.msra.mxu0 0.0
        %9608 = vmatprep.subr.mxu0 0.0
        %9609 = vmatpush1.msra.mxu0 0.0
        %9610 = vmatprep.subr.mxu0 0.0
        %9611 = vmatpush1.msra.mxu0 0.0
        %9612 = vmatprep.mubr.f32.mxu0 0.0
        %9613 = vmatmul.mubr.f32.gmra.mrb[0].mxu0 %v9546
        %v9614 = vpop.f32.mrb[0].mxu0
        %v9615 = vadd.f32 %v9544, %v9614
        %v9616 = vpop.f32.mrb[0].mxu0
        %9617 = vdwg.mxu0
        %vm9618 = vcmask 40960
        %9619 = vst.msk [vmem:[%s432] sm:$0x1] %vm9618, %v9615
        %s9620 = sand.u32 %s313, 1
        %s9621 = scalar_lea.sflag [#allocation4], %s9620
        %s9622 = sand.u32 %s313, 1
        %s9623 = scalar_lea.vmem [#allocation3], %s9622
        // Predicated region
        $region73: #{cn_policy_forward.1} parent=71 // pred_check
          %p9624 = pneg %p323
        $region74: #{cn_policy_forward.1} parent=71 // pred_check_branch
          %9626 = sbr.rel (%p9624) target = $region76
        $region75: #{cn_policy_forward.1} parent=71 // pred_region
          %s9628 = ssub.s32 16, 16
          %9629 = vsyncadd %s9621, %s9628
          %s9630 = smul.addr %s27, 16
          %s9631 = scalar_lea.hbm %s13, %s9630
          %s9633 = sshll.u32 %s9623, 4
          %s9634 = int_to_ptr.vmem [resolvable:$true] %s9633
          %9636 = dma.vmem_to_hbm [thread:$0]  %s9634, 16, %s9631, %s9621
        $region76: #{cn_policy_forward.1} parent=71 // pred_fallthru
          _
      $region72: #{cn_policy_forward.1} parent=5 // pred_fallthru
        _
      %p9637 = scmp.le.s32.totalorder 2, %s22
      // Predicated region
      $region77: #{cn_policy_forward.1} parent=5 // pred_check
        %p9638 = pneg %p9637
      $region78: #{cn_policy_forward.1} parent=5 // pred_check_branch
        %9640 = sbr.rel (%p9638) target = $region80
      $region79: #{cn_policy_forward.1} parent=5 // pred_region
        %s9641 = ssub.s32 %s22, 2
        // Predicated region
        $region81: #{cn_policy_forward.1} parent=79 // pred_check
          %p9642 = pneg %p329
        $region82: #{cn_policy_forward.1} parent=79 // pred_check_branch
          %9644 = sbr.rel (%p9642) target = $region84
        $region83: #{cn_policy_forward.1} parent=79 // pred_region
          %s9645 = sand.u32 %s314, 1
          %s9646 = scalar_lea.sflag [#allocation4], %s9645
          %s9647 = sand.u32 %s314, 1
          %s9648 = scalar_lea.vmem [#allocation3], %s9647
          %9649 = dma.done %s9646, 16
        $region84: #{cn_policy_forward.1} parent=79 // pred_fallthru
          _
      $region80: #{cn_policy_forward.1} parent=5 // pred_fallthru
        _
    $region6: #{cn_policy_forward.1} parent=1 // loop_footer
      %s26 = sadd.s32 1, %s22
    $region7: #{cn_policy_forward.1} parent=1 // loop_footer_branch
      %21 = sbr.rel target = $region3
    $region8: #{cn_policy_forward.1} parent=1 // loop_exit
      _
    %9650 = vsyncpa [#allocation4], 1
    %s9651 = scalar_lea.sflag [#allocation4], 1
    %9652 = vsyncpa %s9651, 1

</llo_original>
